<compile_context>
chip_gen: v5e
topology: v5e:2x2
jax: 0.10.0
libtpu: 0.0.40
codegen_flags: <defaults>
</compile_context>

<pallas_src>
import functools
import math

import jax
import jax.numpy as jnp
from jax.experimental import pallas as pl
from jax.experimental.pallas import tpu as pltpu

_BF16 = jnp.bfloat16

# ---------------------------------------------------------------------------
# In-kernel value helpers (operate on loaded VMEM values)
# ---------------------------------------------------------------------------


def _ln(x, g, b):
    # LayerNorm with PyTorch default eps=1e-5; x is f32, stats in f32.
    mu = jnp.mean(x, axis=-1, keepdims=True)
    var = jnp.mean((x - mu) ** 2, axis=-1, keepdims=True)
    return (x - mu) * jax.lax.rsqrt(var + 1e-5) * g + b


def _attend(q3, k3, v3, heads):
    # q3: (B, Sq, D) bf16 already scaled by 1/sqrt(head_dim); k3, v3: (B, Sk, D) bf16.
    # Per-head scores via static lane masks + full-width batched einsums; the disjoint
    # masked columns of each head's p@v sum directly into the output (no concatenate).
    B, Sq, D = q3.shape
    dh = D // heads
    lane = jax.lax.broadcasted_iota(jnp.int32, (1, 1, D), 2)
    out = jnp.zeros((B, Sq, D), jnp.float32)
    for h in range(heads):
        m = ((lane >= h * dh) & (lane < (h + 1) * dh)).astype(_BF16)
        s = jnp.einsum('bqd,bkd->bqk', q3, k3 * m,
                       preferred_element_type=jnp.float32)
        s = s - jnp.max(s, axis=-1, keepdims=True)
        p = jnp.exp(s)
        p = p * pl.reciprocal(jnp.sum(p, axis=-1, keepdims=True), approx=True)
        out = out + jnp.einsum('bqk,bkd->bqd', p.astype(_BF16), v3 * m,
                               preferred_element_type=jnp.float32)
    return out  # (B, Sq, D) f32


def _self_attn(h2, wqkv, bqkv, wo, bo, B, S, heads):
    # h2: (B*S, D) f32 (already LayerNormed); weights bf16, biases f32.
    D = h2.shape[-1]
    scale = 1.0 / math.sqrt(D // heads)
    qkv = jnp.dot(h2.astype(_BF16), wqkv, preferred_element_type=jnp.float32) + bqkv
    q3 = (qkv[:, :D] * scale).astype(_BF16).reshape(B, S, D)
    k3 = qkv[:, D:2 * D].astype(_BF16).reshape(B, S, D)
    v3 = qkv[:, 2 * D:].astype(_BF16).reshape(B, S, D)
    o2 = _attend(q3, k3, v3, heads).reshape(B * S, D).astype(_BF16)
    return jnp.dot(o2, wo, preferred_element_type=jnp.float32) + bo


def _cross_attn(h2, mem_bf, wq, bq, wkv, bkv, wo, bo, B, St, Ss, heads):
    # h2: (B*St, D) f32; mem_bf: (B*Ss, D) bf16 (encoder memory, VMEM-resident).
    D = h2.shape[-1]
    scale = 1.0 / math.sqrt(D // heads)
    q = (jnp.dot(h2.astype(_BF16), wq, preferred_element_type=jnp.float32) + bq) * scale
    kv = jnp.dot(mem_bf, wkv, preferred_element_type=jnp.float32) + bkv
    q3 = q.astype(_BF16).reshape(B, St, D)
    k3 = kv[:, :D].astype(_BF16).reshape(B, Ss, D)
    v3 = kv[:, D:].astype(_BF16).reshape(B, Ss, D)
    o2 = _attend(q3, k3, v3, heads).reshape(B * St, D).astype(_BF16)
    return jnp.dot(o2, wo, preferred_element_type=jnp.float32) + bo


def _ffn(h2, w1, b1, w2, b2):
    hh = jnp.maximum(
        jnp.dot(h2.astype(_BF16), w1, preferred_element_type=jnp.float32) + b1, 0.0)
    return jnp.dot(hh.astype(_BF16), w2, preferred_element_type=jnp.float32) + b2


# ---------------------------------------------------------------------------
# Fused stack kernels (grid over layers; activation carried in VMEM scratch)
# ---------------------------------------------------------------------------


def _encoder_stack_kernel(src_ref,
                          ln1g, ln1b, wqkv, bqkv, wo, bo,
                          ln2g, ln2b, w1, b1, w2, b2,
                          fng, fnb,
                          mem_ref, x_scr, *, heads, B, S):
    l = pl.program_id(0)

    @pl.when(l == 0)
    def _():
        x_scr[...] = src_ref[...].astype(jnp.float32)

    x = x_scr[...]
    x = x + _self_attn(_ln(x, ln1g[...], ln1b[...]),
                       wqkv[...], bqkv[...], wo[...], bo[...], B, S, heads)
    x = x + _ffn(_ln(x, ln2g[...], ln2b[...]),
                 w1[...], b1[...], w2[...], b2[...])
    x_scr[...] = x

    @pl.when(l == pl.num_programs(0) - 1)
    def _():
        # encoder stack's final LayerNorm -> memory
        mem_ref[...] = _ln(x, fng[...], fnb[...]).astype(mem_ref.dtype)


def _decoder_stack_kernel(tgt_ref, mem_ref,
                          ln1g, ln1b, wqkv_s, bqkv_s, wo_s, bo_s,
                          ln2g, ln2b, wq_c, bq_c, wkv_c, bkv_c, wo_c, bo_c,
                          ln3g, ln3b, w1, b1, w2, b2,
                          fng, fnb, out_w, out_b,
                          logits_ref, x_scr, *, heads, B, St, Ss):
    l = pl.program_id(0)

    @pl.when(l == 0)
    def _():
        x_scr[...] = tgt_ref[...].astype(jnp.float32)

    x = x_scr[...]
    mem_bf = mem_ref[...].astype(_BF16)
    x = x + _self_attn(_ln(x, ln1g[...], ln1b[...]),
                       wqkv_s[...], bqkv_s[...], wo_s[...], bo_s[...], B, St, heads)
    x = x + _cross_attn(_ln(x, ln2g[...], ln2b[...]), mem_bf,
                        wq_c[...], bq_c[...], wkv_c[...], bkv_c[...],
                        wo_c[...], bo_c[...], B, St, Ss, heads)
    x = x + _ffn(_ln(x, ln3g[...], ln3b[...]),
                 w1[...], b1[...], w2[...], b2[...])
    x_scr[...] = x

    @pl.when(l == pl.num_programs(0) - 1)
    def _():
        # decoder final LayerNorm + vocab projection (lane-dense padded V)
        h = _ln(x, fng[...], fnb[...]).astype(_BF16)
        logits_ref[...] = (jnp.dot(h, out_w[...], preferred_element_type=jnp.float32)
                           + out_b[...]).astype(logits_ref.dtype)


# ---------------------------------------------------------------------------
# pallas_call wrappers
# ---------------------------------------------------------------------------

_ENC_KEYS = ('ln1_g', 'ln1_b', 'wqkv', 'bqkv', 'wo', 'bo',
             'ln2_g', 'ln2_b', 'w1', 'b1', 'w2', 'b2')
_DEC_KEYS = ('ln1_g', 'ln1_b', 'wqkv_s', 'bqkv_s', 'wo_s', 'bo_s',
             'ln2_g', 'ln2_b', 'wq_c', 'bq_c', 'wkv_c', 'bkv_c', 'wo_c', 'bo_c',
             'ln3_g', 'ln3_b', 'w1', 'b1', 'w2', 'b2')

_ARBITRARY = pltpu.CompilerParams(dimension_semantics=("arbitrary",))


def _const_spec(shape):
    # Constant block index across the layer grid -> fetched once, stays VMEM-resident.
    nd = len(shape)
    return pl.BlockSpec(tuple(shape), lambda l, nd=nd: (0,) * nd)


def _stacked_spec(shape):
    # Per-layer weight slab: leading layer axis squeezed out of the kernel ref.
    nd = len(shape) - 1
    return pl.BlockSpec((None,) + tuple(shape[1:]), lambda l, nd=nd: (l,) + (0,) * nd)


def _encoder_stack(src2, enc, fng, fnb, *, heads, B, S):
    D = src2.shape[-1]
    L = enc['wqkv'].shape[0]
    weights = [enc[k] for k in _ENC_KEYS]
    return pl.pallas_call(
        functools.partial(_encoder_stack_kernel, heads=heads, B=B, S=S),
        out_shape=jax.ShapeDtypeStruct((B * S, D), jnp.float32),
        grid=(L,),
        in_specs=([_const_spec(src2.shape)]
                  + [_stacked_spec(w.shape) for w in weights]
                  + [_const_spec(fng.shape), _const_spec(fnb.shape)]),
        out_specs=_const_spec((B * S, D)),
        scratch_shapes=[pltpu.VMEM((B * S, D), jnp.float32)],
        compiler_params=_ARBITRARY,
    )(src2, *weights, fng, fnb)


def _decoder_stack(tgt2, mem2, dec, fng, fnb, out_w, out_b, *, heads, B, St, Ss):
    D = tgt2.shape[-1]
    L = dec['wqkv_s'].shape[0]
    Vpad = out_w.shape[-1]
    weights = [dec[k] for k in _DEC_KEYS]
    tail = [fng, fnb, out_w, out_b]
    return pl.pallas_call(
        functools.partial(_decoder_stack_kernel, heads=heads, B=B, St=St, Ss=Ss),
        out_shape=jax.ShapeDtypeStruct((B * St, Vpad), jnp.float32),
        grid=(L,),
        in_specs=([_const_spec(tgt2.shape), _const_spec(mem2.shape)]
                  + [_stacked_spec(w.shape) for w in weights]
                  + [_const_spec(t.shape) for t in tail]),
        out_specs=_const_spec((B * St, Vpad)),
        scratch_shapes=[pltpu.VMEM((B * St, D), jnp.float32)],
        compiler_params=_ARBITRARY,
    )(tgt2, mem2, *weights, *tail)


# ---------------------------------------------------------------------------
# Full forward pass (2 pallas_calls total)
# ---------------------------------------------------------------------------


def decision_forward(params, src, tgt, *, heads, vocab_size):
    B, Ss, D = src.shape
    St = tgt.shape[1]
    src2 = src.reshape(B * Ss, D)
    tgt2 = tgt.reshape(B * St, D)
    mem2 = _encoder_stack(src2, params['enc'], params['enc_norm_g'],
                          params['enc_norm_b'], heads=heads, B=B, S=Ss)
    logits2 = _decoder_stack(tgt2, mem2, params['dec'],
                             params['dec_norm_g'], params['dec_norm_b'],
                             params['out_w'], params['out_b'],
                             heads=heads, B=B, St=St, Ss=Ss)
    return logits2[:, :vocab_size].reshape(B, St, vocab_size)


# ---------------------------------------------------------------------------
# Deterministic parameter init (weights pre-fused, pre-stacked over layers, bf16)
# ---------------------------------------------------------------------------


def _init_enc_layer(key, dim, inner):
    ks = jax.random.split(key, 6)
    s = 0.02
    wq, wk, wv, wo = (s * jax.random.normal(k, (dim, dim), jnp.float32) for k in ks[:4])
    ones = jnp.ones((1, dim), jnp.float32)
    zeros = jnp.zeros((1, dim), jnp.float32)
    return dict(
        ln1_g=ones, ln1_b=zeros,
        wqkv=jnp.concatenate([wq, wk, wv], axis=1).astype(_BF16),
        bqkv=jnp.zeros((1, 3 * dim), jnp.float32),
        wo=wo.astype(_BF16), bo=zeros,
        ln2_g=ones, ln2_b=zeros,
        w1=(s * jax.random.normal(ks[4], (dim, inner), jnp.float32)).astype(_BF16),
        b1=jnp.zeros((1, inner), jnp.float32),
        w2=(s * jax.random.normal(ks[5], (inner, dim), jnp.float32)).astype(_BF16),
        b2=zeros,
    )


def _init_dec_layer(key, dim, inner):
    ks = jax.random.split(key, 10)
    s = 0.02
    wq_s, wk_s, wv_s, wo_s = (s * jax.random.normal(k, (dim, dim), jnp.float32)
                              for k in ks[:4])
    wq_c, wk_c, wv_c, wo_c = (s * jax.random.normal(k, (dim, dim), jnp.float32)
                              for k in ks[4:8])
    ones = jnp.ones((1, dim), jnp.float32)
    zeros = jnp.zeros((1, dim), jnp.float32)
    return dict(
        ln1_g=ones, ln1_b=zeros,
        wqkv_s=jnp.concatenate([wq_s, wk_s, wv_s], axis=1).astype(_BF16),
        bqkv_s=jnp.zeros((1, 3 * dim), jnp.float32),
        wo_s=wo_s.astype(_BF16), bo_s=zeros,
        ln2_g=ones, ln2_b=zeros,
        wq_c=wq_c.astype(_BF16), bq_c=zeros,
        wkv_c=jnp.concatenate([wk_c, wv_c], axis=1).astype(_BF16),
        bkv_c=jnp.zeros((1, 2 * dim), jnp.float32),
        wo_c=wo_c.astype(_BF16), bo_c=zeros,
        ln3_g=ones, ln3_b=zeros,
        w1=(s * jax.random.normal(ks[8], (dim, inner), jnp.float32)).astype(_BF16),
        b1=jnp.zeros((1, inner), jnp.float32),
        w2=(s * jax.random.normal(ks[9], (inner, dim), jnp.float32)).astype(_BF16),
        b2=zeros,
    )


def _stack(layer_dicts):
    return {k: jnp.stack([d[k] for d in layer_dicts], axis=0) for k in layer_dicts[0]}


def init_decision_params(key, dim, layers, vocab_size, inner_dim):
    keys = jax.random.split(key, 2 * layers + 1)
    enc = _stack([_init_enc_layer(keys[i], dim, inner_dim) for i in range(layers)])
    dec = _stack([_init_dec_layer(keys[layers + i], dim, inner_dim)
                  for i in range(layers)])
    vpad = max(128, -(-vocab_size // 128) * 128)   # lane-dense vocab padding
    out_w = jnp.zeros((dim, vpad), jnp.float32).at[:, :vocab_size].set(
        0.02 * jax.random.normal(keys[-1], (dim, vocab_size), jnp.float32))
    ones = jnp.ones((1, dim), jnp.float32)
    zeros = jnp.zeros((1, dim), jnp.float32)
    return dict(
        enc=enc, dec=dec,
        enc_norm_g=ones, enc_norm_b=zeros,
        dec_norm_g=ones, dec_norm_b=zeros,
        out_w=out_w.astype(_BF16),
        out_b=jnp.zeros((1, vpad), jnp.float32),
    )


# ---------------------------------------------------------------------------
# Main
# ---------------------------------------------------------------------------

if __name__ == "__main__":
    dim, layers, vocab_size, inner_dim, heads = 32, 2, 16, 64, 8
    B, S_src, S_tgt = 2, 8, 8

    root = jax.random.PRNGKey(0)
    k_param, k_src, k_tgt = jax.random.split(root, 3)

    params = init_decision_params(k_param, dim, layers, vocab_size, inner_dim)
    src = jax.random.normal(k_src, (B, S_src, dim), jnp.float32)
    tgt = jax.random.normal(k_tgt, (B, S_tgt, dim), jnp.float32)

    fwd = jax.jit(functools.partial(decision_forward, heads=heads,
                                    vocab_size=vocab_size))
    out = fwd(params, src, tgt)
    out = jax.block_until_ready(out)

    assert out.shape == (B, S_tgt, vocab_size), out.shape
    assert jnp.all(jnp.isfinite(out))
    print("KERNEL_OK")
</pallas_src>

<mosaic_0001>
module attributes {stable_mosaic.version = 11 : i64} {
  func.func @_encoder_stack_kernel(%arg0: i32, %arg1: memref<16x32xf32, #tpu.memory_space<vmem>>, %arg2: memref<1x1x32xf32, #tpu.memory_space<vmem>>, %arg3: memref<1x1x32xf32, #tpu.memory_space<vmem>>, %arg4: memref<1x32x96xbf16, #tpu.memory_space<vmem>>, %arg5: memref<1x1x96xf32, #tpu.memory_space<vmem>>, %arg6: memref<1x32x32xbf16, #tpu.memory_space<vmem>>, %arg7: memref<1x1x32xf32, #tpu.memory_space<vmem>>, %arg8: memref<1x1x32xf32, #tpu.memory_space<vmem>>, %arg9: memref<1x1x32xf32, #tpu.memory_space<vmem>>, %arg10: memref<1x32x64xbf16, #tpu.memory_space<vmem>>, %arg11: memref<1x1x64xf32, #tpu.memory_space<vmem>>, %arg12: memref<1x64x32xbf16, #tpu.memory_space<vmem>>, %arg13: memref<1x1x32xf32, #tpu.memory_space<vmem>>, %arg14: memref<1x32xf32, #tpu.memory_space<vmem>>, %arg15: memref<1x32xf32, #tpu.memory_space<vmem>>, %arg16: memref<16x32xf32, #tpu.memory_space<vmem>>, %arg17: memref<16x32xf32, #tpu.memory_space<vmem>>) attributes {dimension_semantics = [#tpu.dimension_semantics<arbitrary>], iteration_bounds = array<i64: 2>, scalar_prefetch = 0 : i64, scratch_operands = 1 : i64, tpu.core_type = #tpu.core_type<tc>, window_params = [{pipeline_mode = #tpu.pipeline_mode<synchronous>, transform_indices = @transform_0, window_bounds = array<i64: 16, 32>}, {transform_indices = @transform_1, window_bounds = array<i64: 1, 1, 32>}, {transform_indices = @transform_2, window_bounds = array<i64: 1, 1, 32>}, {transform_indices = @transform_3, window_bounds = array<i64: 1, 32, 96>}, {transform_indices = @transform_4, window_bounds = array<i64: 1, 1, 96>}, {transform_indices = @transform_5, window_bounds = array<i64: 1, 32, 32>}, {transform_indices = @transform_6, window_bounds = array<i64: 1, 1, 32>}, {transform_indices = @transform_7, window_bounds = array<i64: 1, 1, 32>}, {transform_indices = @transform_8, window_bounds = array<i64: 1, 1, 32>}, {transform_indices = @transform_9, window_bounds = array<i64: 1, 32, 64>}, {transform_indices = @transform_10, window_bounds = array<i64: 1, 1, 64>}, {transform_indices = @transform_11, window_bounds = array<i64: 1, 64, 32>}, {transform_indices = @transform_12, window_bounds = array<i64: 1, 1, 32>}, {pipeline_mode = #tpu.pipeline_mode<synchronous>, transform_indices = @transform_13, window_bounds = array<i64: 1, 32>}, {pipeline_mode = #tpu.pipeline_mode<synchronous>, transform_indices = @transform_14, window_bounds = array<i64: 1, 32>}, {pipeline_mode = #tpu.pipeline_mode<synchronous>, transform_indices = @transform_15, window_bounds = array<i64: 16, 32>}]} {
    %c0_i32 = arith.constant 0 : i32
    %0 = arith.cmpi eq, %arg0, %c0_i32 : i32
    %1 = arith.extui %0 : i1 to i32
    %c0_i32_0 = arith.constant 0 : i32
    %2 = arith.cmpi ne, %1, %c0_i32_0 : i32
    scf.if %2 {
      %c0_97 = arith.constant 0 : index
      %c0_98 = arith.constant 0 : index
      %318 = vector.load %arg1[%c0_97, %c0_98] : memref<16x32xf32, #tpu.memory_space<vmem>>, vector<16x32xf32>
      %c0_99 = arith.constant 0 : index
      %c0_100 = arith.constant 0 : index
      %319 = vector.load %arg17[%c0_99, %c0_100] : memref<16x32xf32, #tpu.memory_space<vmem>>, vector<16x32xf32>
      tpu.vector_store %arg17[%c0_99, %c0_100], %318 {strides = array<i32>} : memref<16x32xf32, #tpu.memory_space<vmem>>, vector<16x32xf32>,
    } else {
    }
    %c0 = arith.constant 0 : index
    %c0_1 = arith.constant 0 : index
    %3 = vector.load %arg17[%c0, %c0_1] : memref<16x32xf32, #tpu.memory_space<vmem>>, vector<16x32xf32>
    %c0_2 = arith.constant 0 : index
    %c0_3 = arith.constant 0 : index
    %c0_4 = arith.constant 0 : index
    %4 = vector.load %arg2[%c0_2, %c0_3, %c0_4] : memref<1x1x32xf32, #tpu.memory_space<vmem>>, vector<1x1x32xf32>
    %5 = vector.shape_cast %4 : vector<1x1x32xf32> to vector<1x32xf32>
    %c0_5 = arith.constant 0 : index
    %c0_6 = arith.constant 0 : index
    %c0_7 = arith.constant 0 : index
    %6 = vector.load %arg3[%c0_5, %c0_6, %c0_7] : memref<1x1x32xf32, #tpu.memory_space<vmem>>, vector<1x1x32xf32>
    %7 = vector.shape_cast %6 : vector<1x1x32xf32> to vector<1x32xf32>
    %cst = arith.constant dense<0.000000e+00> : vector<16xf32>
    %8 = vector.multi_reduction <add>, %3, %cst [1] : vector<16x32xf32> to vector<16xf32>
    %9 = vector.shape_cast %8 : vector<16xf32> to vector<16x1xf32>
    %cst_8 = arith.constant 3.200000e+01 : f32
    %10 = vector.broadcast %cst_8 : f32 to vector<16x1xf32>
    %11 = arith.divf %9, %10 : vector<16x1xf32>
    %12 = vector.broadcast %11 : vector<16x1xf32> to vector<16x32xf32>
    %13 = arith.subf %3, %12 : vector<16x32xf32>
    %14 = arith.mulf %13, %13 : vector<16x32xf32>
    %cst_9 = arith.constant dense<0.000000e+00> : vector<16xf32>
    %15 = vector.multi_reduction <add>, %14, %cst_9 [1] : vector<16x32xf32> to vector<16xf32>
    %16 = vector.shape_cast %15 : vector<16xf32> to vector<16x1xf32>
    %cst_10 = arith.constant 3.200000e+01 : f32
    %17 = vector.broadcast %cst_10 : f32 to vector<16x1xf32>
    %18 = arith.divf %16, %17 : vector<16x1xf32>
    %19 = vector.broadcast %11 : vector<16x1xf32> to vector<16x32xf32>
    %20 = arith.subf %3, %19 : vector<16x32xf32>
    %cst_11 = arith.constant 9.99999974E-6 : f32
    %21 = vector.broadcast %cst_11 : f32 to vector<16x1xf32>
    %22 = arith.addf %18, %21 : vector<16x1xf32>
    %23 = math.rsqrt %22 : vector<16x1xf32>
    %24 = vector.broadcast %23 : vector<16x1xf32> to vector<16x32xf32>
    %25 = arith.mulf %20, %24 : vector<16x32xf32>
    %26 = vector.broadcast %5 : vector<1x32xf32> to vector<16x32xf32>
    %27 = arith.mulf %25, %26 : vector<16x32xf32>
    %28 = vector.broadcast %7 : vector<1x32xf32> to vector<16x32xf32>
    %29 = arith.addf %27, %28 : vector<16x32xf32>
    %c0_12 = arith.constant 0 : index
    %c0_13 = arith.constant 0 : index
    %c0_14 = arith.constant 0 : index
    %30 = vector.load %arg4[%c0_12, %c0_13, %c0_14] : memref<1x32x96xbf16, #tpu.memory_space<vmem>>, vector<1x32x96xbf16>
    %31 = vector.shape_cast %30 : vector<1x32x96xbf16> to vector<32x96xbf16>
    %c0_15 = arith.constant 0 : index
    %c0_16 = arith.constant 0 : index
    %c0_17 = arith.constant 0 : index
    %32 = vector.load %arg5[%c0_15, %c0_16, %c0_17] : memref<1x1x96xf32, #tpu.memory_space<vmem>>, vector<1x1x96xf32>
    %33 = vector.shape_cast %32 : vector<1x1x96xf32> to vector<1x96xf32>
    %c0_18 = arith.constant 0 : index
    %c0_19 = arith.constant 0 : index
    %c0_20 = arith.constant 0 : index
    %34 = vector.load %arg6[%c0_18, %c0_19, %c0_20] : memref<1x32x32xbf16, #tpu.memory_space<vmem>>, vector<1x32x32xbf16>
    %35 = vector.shape_cast %34 : vector<1x32x32xbf16> to vector<32x32xbf16>
    %c0_21 = arith.constant 0 : index
    %c0_22 = arith.constant 0 : index
    %c0_23 = arith.constant 0 : index
    %36 = vector.load %arg7[%c0_21, %c0_22, %c0_23] : memref<1x1x32xf32, #tpu.memory_space<vmem>>, vector<1x1x32xf32>
    %37 = vector.shape_cast %36 : vector<1x1x32xf32> to vector<1x32xf32>
    %38 = arith.truncf %29 : vector<16x32xf32> to vector<16x32xbf16>
    %cst_24 = arith.constant dense<0.000000e+00> : vector<16x96xf32>
    %39 = tpu.matmul %38, %31, %cst_24 {dimension_numbers = #tpu.dot_dimension_numbers<[1], [0], [0], [1], [0, 0, 1, 1], [], []>} : vector<16x32xbf16>, vector<32x96xbf16>, vector<16x96xf32> -> vector<16x96xf32>
    %40 = vector.broadcast %33 : vector<1x96xf32> to vector<16x96xf32>
    %41 = arith.addf %39, %40 : vector<16x96xf32>
    %42 = vector.extract_strided_slice %41 {offsets = [0, 0], sizes = [16, 32], strides = [1, 1]} : vector<16x96xf32> to vector<16x32xf32>
    %cst_25 = arith.constant 5.000000e-01 : f32
    %43 = vector.broadcast %cst_25 : f32 to vector<16x32xf32>
    %44 = arith.mulf %42, %43 : vector<16x32xf32>
    %45 = arith.truncf %44 : vector<16x32xf32> to vector<16x32xbf16>
    %46 = vector.shape_cast %45 : vector<16x32xbf16> to vector<2x8x32xbf16>
    %47 = vector.extract_strided_slice %41 {offsets = [0, 32], sizes = [16, 32], strides = [1, 1]} : vector<16x96xf32> to vector<16x32xf32>
    %48 = arith.truncf %47 : vector<16x32xf32> to vector<16x32xbf16>
    %49 = vector.shape_cast %48 : vector<16x32xbf16> to vector<2x8x32xbf16>
    %50 = vector.extract_strided_slice %41 {offsets = [0, 64], sizes = [16, 32], strides = [1, 1]} : vector<16x96xf32> to vector<16x32xf32>
    %51 = arith.truncf %50 : vector<16x32xf32> to vector<16x32xbf16>
    %52 = vector.shape_cast %51 : vector<16x32xbf16> to vector<2x8x32xbf16>
    %53 = tpu.iota {dimensions = array<i32: 2>} : vector<1x1x32xi32>
    %cst_26 = arith.constant 0.000000e+00 : f32
    %54 = vector.broadcast %cst_26 : f32 to vector<2x8x32xf32>
    %c0_i32_27 = arith.constant 0 : i32
    %55 = vector.broadcast %c0_i32_27 : i32 to vector<1x1x32xi32>
    %56 = arith.cmpi sge, %53, %55 : vector<1x1x32xi32>
    %c4_i32 = arith.constant 4 : i32
    %57 = vector.broadcast %c4_i32 : i32 to vector<1x1x32xi32>
    %58 = arith.cmpi slt, %53, %57 : vector<1x1x32xi32>
    %59 = arith.andi %56, %58 : vector<1x1x32xi1>
    %60 = arith.extui %59 : vector<1x1x32xi1> to vector<1x1x32xi32>
    %61 = arith.sitofp %60 : vector<1x1x32xi32> to vector<1x1x32xf32>
    %62 = arith.truncf %61 : vector<1x1x32xf32> to vector<1x1x32xbf16>
    %63 = vector.broadcast %62 : vector<1x1x32xbf16> to vector<2x8x32xbf16>
    %64 = arith.mulf %49, %63 : vector<2x8x32xbf16>
    "tpu.trace_start"() <{level = 10 : i32, message = "bqd,bkd->bqk"}> : () -> ()
    %cst_28 = arith.constant dense<0.000000e+00> : vector<2x8x8xf32>
    %65 = tpu.matmul %46, %64, %cst_28 {dimension_numbers = #tpu.dot_dimension_numbers<[2], [2], [1], [1], [0, 0, 0, 1, 1, 1], [0], [0]>} : vector<2x8x32xbf16>, vector<2x8x32xbf16>, vector<2x8x8xf32> -> vector<2x8x8xf32>
    "tpu.trace_stop"() : () -> ()
    %cst_29 = arith.constant dense<0xFF800000> : vector<2x8xf32>
    %66 = vector.multi_reduction <maximumf>, %65, %cst_29 [2] : vector<2x8x8xf32> to vector<2x8xf32>
    %67 = vector.shape_cast %66 : vector<2x8xf32> to vector<2x8x1xf32>
    %68 = vector.broadcast %67 : vector<2x8x1xf32> to vector<2x8x8xf32>
    %69 = arith.subf %65, %68 : vector<2x8x8xf32>
    %70 = math.exp %69 : vector<2x8x8xf32>
    %cst_30 = arith.constant dense<0.000000e+00> : vector<2x8xf32>
    %71 = vector.multi_reduction <add>, %70, %cst_30 [2] : vector<2x8x8xf32> to vector<2x8xf32>
    %72 = vector.shape_cast %71 : vector<2x8xf32> to vector<2x8x1xf32>
    %73 = tpu.reciprocal %72 {approx = true} : vector<2x8x1xf32> -> vector<2x8x1xf32>
    %74 = vector.broadcast %73 : vector<2x8x1xf32> to vector<2x8x8xf32>
    %75 = arith.mulf %70, %74 : vector<2x8x8xf32>
    %76 = arith.truncf %75 : vector<2x8x8xf32> to vector<2x8x8xbf16>
    %77 = vector.broadcast %62 : vector<1x1x32xbf16> to vector<2x8x32xbf16>
    %78 = arith.mulf %52, %77 : vector<2x8x32xbf16>
    "tpu.trace_start"() <{level = 10 : i32, message = "bqk,bkd->bqd"}> : () -> ()
    %cst_31 = arith.constant dense<0.000000e+00> : vector<2x8x32xf32>
    %79 = tpu.matmul %76, %78, %cst_31 {dimension_numbers = #tpu.dot_dimension_numbers<[2], [1], [1], [2], [0, 0, 0, 1, 1, 2], [0], [0]>} : vector<2x8x8xbf16>, vector<2x8x32xbf16>, vector<2x8x32xf32> -> vector<2x8x32xf32>
    "tpu.trace_stop"() : () -> ()
    %80 = arith.addf %54, %79 : vector<2x8x32xf32>
    %c4_i32_32 = arith.constant 4 : i32
    %81 = vector.broadcast %c4_i32_32 : i32 to vector<1x1x32xi32>
    %82 = arith.cmpi sge, %53, %81 : vector<1x1x32xi32>
    %c8_i32 = arith.constant 8 : i32
    %83 = vector.broadcast %c8_i32 : i32 to vector<1x1x32xi32>
    %84 = arith.cmpi slt, %53, %83 : vector<1x1x32xi32>
    %85 = arith.andi %82, %84 : vector<1x1x32xi1>
    %86 = arith.extui %85 : vector<1x1x32xi1> to vector<1x1x32xi32>
    %87 = arith.sitofp %86 : vector<1x1x32xi32> to vector<1x1x32xf32>
    %88 = arith.truncf %87 : vector<1x1x32xf32> to vector<1x1x32xbf16>
    %89 = vector.broadcast %88 : vector<1x1x32xbf16> to vector<2x8x32xbf16>
    %90 = arith.mulf %49, %89 : vector<2x8x32xbf16>
    "tpu.trace_start"() <{level = 10 : i32, message = "bqd,bkd->bqk"}> : () -> ()
    %cst_33 = arith.constant dense<0.000000e+00> : vector<2x8x8xf32>
    %91 = tpu.matmul %46, %90, %cst_33 {dimension_numbers = #tpu.dot_dimension_numbers<[2], [2], [1], [1], [0, 0, 0, 1, 1, 1], [0], [0]>} : vector<2x8x32xbf16>, vector<2x8x32xbf16>, vector<2x8x8xf32> -> vector<2x8x8xf32>
    "tpu.trace_stop"() : () -> ()
    %cst_34 = arith.constant dense<0xFF800000> : vector<2x8xf32>
    %92 = vector.multi_reduction <maximumf>, %91, %cst_34 [2] : vector<2x8x8xf32> to vector<2x8xf32>
    %93 = vector.shape_cast %92 : vector<2x8xf32> to vector<2x8x1xf32>
    %94 = vector.broadcast %93 : vector<2x8x1xf32> to vector<2x8x8xf32>
    %95 = arith.subf %91, %94 : vector<2x8x8xf32>
    %96 = math.exp %95 : vector<2x8x8xf32>
    %cst_35 = arith.constant dense<0.000000e+00> : vector<2x8xf32>
    %97 = vector.multi_reduction <add>, %96, %cst_35 [2] : vector<2x8x8xf32> to vector<2x8xf32>
    %98 = vector.shape_cast %97 : vector<2x8xf32> to vector<2x8x1xf32>
    %99 = tpu.reciprocal %98 {approx = true} : vector<2x8x1xf32> -> vector<2x8x1xf32>
    %100 = vector.broadcast %99 : vector<2x8x1xf32> to vector<2x8x8xf32>
    %101 = arith.mulf %96, %100 : vector<2x8x8xf32>
    %102 = arith.truncf %101 : vector<2x8x8xf32> to vector<2x8x8xbf16>
    %103 = vector.broadcast %88 : vector<1x1x32xbf16> to vector<2x8x32xbf16>
    %104 = arith.mulf %52, %103 : vector<2x8x32xbf16>
    "tpu.trace_start"() <{level = 10 : i32, message = "bqk,bkd->bqd"}> : () -> ()
    %cst_36 = arith.constant dense<0.000000e+00> : vector<2x8x32xf32>
    %105 = tpu.matmul %102, %104, %cst_36 {dimension_numbers = #tpu.dot_dimension_numbers<[2], [1], [1], [2], [0, 0, 0, 1, 1, 2], [0], [0]>} : vector<2x8x8xbf16>, vector<2x8x32xbf16>, vector<2x8x32xf32> -> vector<2x8x32xf32>
    "tpu.trace_stop"() : () -> ()
    %106 = arith.addf %80, %105 : vector<2x8x32xf32>
    %c8_i32_37 = arith.constant 8 : i32
    %107 = vector.broadcast %c8_i32_37 : i32 to vector<1x1x32xi32>
    %108 = arith.cmpi sge, %53, %107 : vector<1x1x32xi32>
    %c12_i32 = arith.constant 12 : i32
    %109 = vector.broadcast %c12_i32 : i32 to vector<1x1x32xi32>
    %110 = arith.cmpi slt, %53, %109 : vector<1x1x32xi32>
    %111 = arith.andi %108, %110 : vector<1x1x32xi1>
    %112 = arith.extui %111 : vector<1x1x32xi1> to vector<1x1x32xi32>
    %113 = arith.sitofp %112 : vector<1x1x32xi32> to vector<1x1x32xf32>
    %114 = arith.truncf %113 : vector<1x1x32xf32> to vector<1x1x32xbf16>
    %115 = vector.broadcast %114 : vector<1x1x32xbf16> to vector<2x8x32xbf16>
    %116 = arith.mulf %49, %115 : vector<2x8x32xbf16>
    "tpu.trace_start"() <{level = 10 : i32, message = "bqd,bkd->bqk"}> : () -> ()
    %cst_38 = arith.constant dense<0.000000e+00> : vector<2x8x8xf32>
    %117 = tpu.matmul %46, %116, %cst_38 {dimension_numbers = #tpu.dot_dimension_numbers<[2], [2], [1], [1], [0, 0, 0, 1, 1, 1], [0], [0]>} : vector<2x8x32xbf16>, vector<2x8x32xbf16>, vector<2x8x8xf32> -> vector<2x8x8xf32>
    "tpu.trace_stop"() : () -> ()
    %cst_39 = arith.constant dense<0xFF800000> : vector<2x8xf32>
    %118 = vector.multi_reduction <maximumf>, %117, %cst_39 [2] : vector<2x8x8xf32> to vector<2x8xf32>
    %119 = vector.shape_cast %118 : vector<2x8xf32> to vector<2x8x1xf32>
    %120 = vector.broadcast %119 : vector<2x8x1xf32> to vector<2x8x8xf32>
    %121 = arith.subf %117, %120 : vector<2x8x8xf32>
    %122 = math.exp %121 : vector<2x8x8xf32>
    %cst_40 = arith.constant dense<0.000000e+00> : vector<2x8xf32>
    %123 = vector.multi_reduction <add>, %122, %cst_40 [2] : vector<2x8x8xf32> to vector<2x8xf32>
    %124 = vector.shape_cast %123 : vector<2x8xf32> to vector<2x8x1xf32>
    %125 = tpu.reciprocal %124 {approx = true} : vector<2x8x1xf32> -> vector<2x8x1xf32>
    %126 = vector.broadcast %125 : vector<2x8x1xf32> to vector<2x8x8xf32>
    %127 = arith.mulf %122, %126 : vector<2x8x8xf32>
    %128 = arith.truncf %127 : vector<2x8x8xf32> to vector<2x8x8xbf16>
    %129 = vector.broadcast %114 : vector<1x1x32xbf16> to vector<2x8x32xbf16>
    %130 = arith.mulf %52, %129 : vector<2x8x32xbf16>
    "tpu.trace_start"() <{level = 10 : i32, message = "bqk,bkd->bqd"}> : () -> ()
    %cst_41 = arith.constant dense<0.000000e+00> : vector<2x8x32xf32>
    %131 = tpu.matmul %128, %130, %cst_41 {dimension_numbers = #tpu.dot_dimension_numbers<[2], [1], [1], [2], [0, 0, 0, 1, 1, 2], [0], [0]>} : vector<2x8x8xbf16>, vector<2x8x32xbf16>, vector<2x8x32xf32> -> vector<2x8x32xf32>
    "tpu.trace_stop"() : () -> ()
    %132 = arith.addf %106, %131 : vector<2x8x32xf32>
    %c12_i32_42 = arith.constant 12 : i32
    %133 = vector.broadcast %c12_i32_42 : i32 to vector<1x1x32xi32>
    %134 = arith.cmpi sge, %53, %133 : vector<1x1x32xi32>
    %c16_i32 = arith.constant 16 : i32
    %135 = vector.broadcast %c16_i32 : i32 to vector<1x1x32xi32>
    %136 = arith.cmpi slt, %53, %135 : vector<1x1x32xi32>
    %137 = arith.andi %134, %136 : vector<1x1x32xi1>
    %138 = arith.extui %137 : vector<1x1x32xi1> to vector<1x1x32xi32>
    %139 = arith.sitofp %138 : vector<1x1x32xi32> to vector<1x1x32xf32>
    %140 = arith.truncf %139 : vector<1x1x32xf32> to vector<1x1x32xbf16>
    %141 = vector.broadcast %140 : vector<1x1x32xbf16> to vector<2x8x32xbf16>
    %142 = arith.mulf %49, %141 : vector<2x8x32xbf16>
    "tpu.trace_start"() <{level = 10 : i32, message = "bqd,bkd->bqk"}> : () -> ()
    %cst_43 = arith.constant dense<0.000000e+00> : vector<2x8x8xf32>
    %143 = tpu.matmul %46, %142, %cst_43 {dimension_numbers = #tpu.dot_dimension_numbers<[2], [2], [1], [1], [0, 0, 0, 1, 1, 1], [0], [0]>} : vector<2x8x32xbf16>, vector<2x8x32xbf16>, vector<2x8x8xf32> -> vector<2x8x8xf32>
    "tpu.trace_stop"() : () -> ()
    %cst_44 = arith.constant dense<0xFF800000> : vector<2x8xf32>
    %144 = vector.multi_reduction <maximumf>, %143, %cst_44 [2] : vector<2x8x8xf32> to vector<2x8xf32>
    %145 = vector.shape_cast %144 : vector<2x8xf32> to vector<2x8x1xf32>
    %146 = vector.broadcast %145 : vector<2x8x1xf32> to vector<2x8x8xf32>
    %147 = arith.subf %143, %146 : vector<2x8x8xf32>
    %148 = math.exp %147 : vector<2x8x8xf32>
    %cst_45 = arith.constant dense<0.000000e+00> : vector<2x8xf32>
    %149 = vector.multi_reduction <add>, %148, %cst_45 [2] : vector<2x8x8xf32> to vector<2x8xf32>
    %150 = vector.shape_cast %149 : vector<2x8xf32> to vector<2x8x1xf32>
    %151 = tpu.reciprocal %150 {approx = true} : vector<2x8x1xf32> -> vector<2x8x1xf32>
    %152 = vector.broadcast %151 : vector<2x8x1xf32> to vector<2x8x8xf32>
    %153 = arith.mulf %148, %152 : vector<2x8x8xf32>
    %154 = arith.truncf %153 : vector<2x8x8xf32> to vector<2x8x8xbf16>
    %155 = vector.broadcast %140 : vector<1x1x32xbf16> to vector<2x8x32xbf16>
    %156 = arith.mulf %52, %155 : vector<2x8x32xbf16>
    "tpu.trace_start"() <{level = 10 : i32, message = "bqk,bkd->bqd"}> : () -> ()
    %cst_46 = arith.constant dense<0.000000e+00> : vector<2x8x32xf32>
    %157 = tpu.matmul %154, %156, %cst_46 {dimension_numbers = #tpu.dot_dimension_numbers<[2], [1], [1], [2], [0, 0, 0, 1, 1, 2], [0], [0]>} : vector<2x8x8xbf16>, vector<2x8x32xbf16>, vector<2x8x32xf32> -> vector<2x8x32xf32>
    "tpu.trace_stop"() : () -> ()
    %158 = arith.addf %132, %157 : vector<2x8x32xf32>
    %c16_i32_47 = arith.constant 16 : i32
    %159 = vector.broadcast %c16_i32_47 : i32 to vector<1x1x32xi32>
    %160 = arith.cmpi sge, %53, %159 : vector<1x1x32xi32>
    %c20_i32 = arith.constant 20 : i32
    %161 = vector.broadcast %c20_i32 : i32 to vector<1x1x32xi32>
    %162 = arith.cmpi slt, %53, %161 : vector<1x1x32xi32>
    %163 = arith.andi %160, %162 : vector<1x1x32xi1>
    %164 = arith.extui %163 : vector<1x1x32xi1> to vector<1x1x32xi32>
    %165 = arith.sitofp %164 : vector<1x1x32xi32> to vector<1x1x32xf32>
    %166 = arith.truncf %165 : vector<1x1x32xf32> to vector<1x1x32xbf16>
    %167 = vector.broadcast %166 : vector<1x1x32xbf16> to vector<2x8x32xbf16>
    %168 = arith.mulf %49, %167 : vector<2x8x32xbf16>
    "tpu.trace_start"() <{level = 10 : i32, message = "bqd,bkd->bqk"}> : () -> ()
    %cst_48 = arith.constant dense<0.000000e+00> : vector<2x8x8xf32>
    %169 = tpu.matmul %46, %168, %cst_48 {dimension_numbers = #tpu.dot_dimension_numbers<[2], [2], [1], [1], [0, 0, 0, 1, 1, 1], [0], [0]>} : vector<2x8x32xbf16>, vector<2x8x32xbf16>, vector<2x8x8xf32> -> vector<2x8x8xf32>
    "tpu.trace_stop"() : () -> ()
    %cst_49 = arith.constant dense<0xFF800000> : vector<2x8xf32>
    %170 = vector.multi_reduction <maximumf>, %169, %cst_49 [2] : vector<2x8x8xf32> to vector<2x8xf32>
    %171 = vector.shape_cast %170 : vector<2x8xf32> to vector<2x8x1xf32>
    %172 = vector.broadcast %171 : vector<2x8x1xf32> to vector<2x8x8xf32>
    %173 = arith.subf %169, %172 : vector<2x8x8xf32>
    %174 = math.exp %173 : vector<2x8x8xf32>
    %cst_50 = arith.constant dense<0.000000e+00> : vector<2x8xf32>
    %175 = vector.multi_reduction <add>, %174, %cst_50 [2] : vector<2x8x8xf32> to vector<2x8xf32>
    %176 = vector.shape_cast %175 : vector<2x8xf32> to vector<2x8x1xf32>
    %177 = tpu.reciprocal %176 {approx = true} : vector<2x8x1xf32> -> vector<2x8x1xf32>
    %178 = vector.broadcast %177 : vector<2x8x1xf32> to vector<2x8x8xf32>
    %179 = arith.mulf %174, %178 : vector<2x8x8xf32>
    %180 = arith.truncf %179 : vector<2x8x8xf32> to vector<2x8x8xbf16>
    %181 = vector.broadcast %166 : vector<1x1x32xbf16> to vector<2x8x32xbf16>
    %182 = arith.mulf %52, %181 : vector<2x8x32xbf16>
    "tpu.trace_start"() <{level = 10 : i32, message = "bqk,bkd->bqd"}> : () -> ()
    %cst_51 = arith.constant dense<0.000000e+00> : vector<2x8x32xf32>
    %183 = tpu.matmul %180, %182, %cst_51 {dimension_numbers = #tpu.dot_dimension_numbers<[2], [1], [1], [2], [0, 0, 0, 1, 1, 2], [0], [0]>} : vector<2x8x8xbf16>, vector<2x8x32xbf16>, vector<2x8x32xf32> -> vector<2x8x32xf32>
    "tpu.trace_stop"() : () -> ()
    %184 = arith.addf %158, %183 : vector<2x8x32xf32>
    %c20_i32_52 = arith.constant 20 : i32
    %185 = vector.broadcast %c20_i32_52 : i32 to vector<1x1x32xi32>
    %186 = arith.cmpi sge, %53, %185 : vector<1x1x32xi32>
    %c24_i32 = arith.constant 24 : i32
    %187 = vector.broadcast %c24_i32 : i32 to vector<1x1x32xi32>
    %188 = arith.cmpi slt, %53, %187 : vector<1x1x32xi32>
    %189 = arith.andi %186, %188 : vector<1x1x32xi1>
    %190 = arith.extui %189 : vector<1x1x32xi1> to vector<1x1x32xi32>
    %191 = arith.sitofp %190 : vector<1x1x32xi32> to vector<1x1x32xf32>
    %192 = arith.truncf %191 : vector<1x1x32xf32> to vector<1x1x32xbf16>
    %193 = vector.broadcast %192 : vector<1x1x32xbf16> to vector<2x8x32xbf16>
    %194 = arith.mulf %49, %193 : vector<2x8x32xbf16>
    "tpu.trace_start"() <{level = 10 : i32, message = "bqd,bkd->bqk"}> : () -> ()
    %cst_53 = arith.constant dense<0.000000e+00> : vector<2x8x8xf32>
    %195 = tpu.matmul %46, %194, %cst_53 {dimension_numbers = #tpu.dot_dimension_numbers<[2], [2], [1], [1], [0, 0, 0, 1, 1, 1], [0], [0]>} : vector<2x8x32xbf16>, vector<2x8x32xbf16>, vector<2x8x8xf32> -> vector<2x8x8xf32>
    "tpu.trace_stop"() : () -> ()
    %cst_54 = arith.constant dense<0xFF800000> : vector<2x8xf32>
    %196 = vector.multi_reduction <maximumf>, %195, %cst_54 [2] : vector<2x8x8xf32> to vector<2x8xf32>
    %197 = vector.shape_cast %196 : vector<2x8xf32> to vector<2x8x1xf32>
    %198 = vector.broadcast %197 : vector<2x8x1xf32> to vector<2x8x8xf32>
    %199 = arith.subf %195, %198 : vector<2x8x8xf32>
    %200 = math.exp %199 : vector<2x8x8xf32>
    %cst_55 = arith.constant dense<0.000000e+00> : vector<2x8xf32>
    %201 = vector.multi_reduction <add>, %200, %cst_55 [2] : vector<2x8x8xf32> to vector<2x8xf32>
    %202 = vector.shape_cast %201 : vector<2x8xf32> to vector<2x8x1xf32>
    %203 = tpu.reciprocal %202 {approx = true} : vector<2x8x1xf32> -> vector<2x8x1xf32>
    %204 = vector.broadcast %203 : vector<2x8x1xf32> to vector<2x8x8xf32>
    %205 = arith.mulf %200, %204 : vector<2x8x8xf32>
    %206 = arith.truncf %205 : vector<2x8x8xf32> to vector<2x8x8xbf16>
    %207 = vector.broadcast %192 : vector<1x1x32xbf16> to vector<2x8x32xbf16>
    %208 = arith.mulf %52, %207 : vector<2x8x32xbf16>
    "tpu.trace_start"() <{level = 10 : i32, message = "bqk,bkd->bqd"}> : () -> ()
    %cst_56 = arith.constant dense<0.000000e+00> : vector<2x8x32xf32>
    %209 = tpu.matmul %206, %208, %cst_56 {dimension_numbers = #tpu.dot_dimension_numbers<[2], [1], [1], [2], [0, 0, 0, 1, 1, 2], [0], [0]>} : vector<2x8x8xbf16>, vector<2x8x32xbf16>, vector<2x8x32xf32> -> vector<2x8x32xf32>
    "tpu.trace_stop"() : () -> ()
    %210 = arith.addf %184, %209 : vector<2x8x32xf32>
    %c24_i32_57 = arith.constant 24 : i32
    %211 = vector.broadcast %c24_i32_57 : i32 to vector<1x1x32xi32>
    %212 = arith.cmpi sge, %53, %211 : vector<1x1x32xi32>
    %c28_i32 = arith.constant 28 : i32
    %213 = vector.broadcast %c28_i32 : i32 to vector<1x1x32xi32>
    %214 = arith.cmpi slt, %53, %213 : vector<1x1x32xi32>
    %215 = arith.andi %212, %214 : vector<1x1x32xi1>
    %216 = arith.extui %215 : vector<1x1x32xi1> to vector<1x1x32xi32>
    %217 = arith.sitofp %216 : vector<1x1x32xi32> to vector<1x1x32xf32>
    %218 = arith.truncf %217 : vector<1x1x32xf32> to vector<1x1x32xbf16>
    %219 = vector.broadcast %218 : vector<1x1x32xbf16> to vector<2x8x32xbf16>
    %220 = arith.mulf %49, %219 : vector<2x8x32xbf16>
    "tpu.trace_start"() <{level = 10 : i32, message = "bqd,bkd->bqk"}> : () -> ()
    %cst_58 = arith.constant dense<0.000000e+00> : vector<2x8x8xf32>
    %221 = tpu.matmul %46, %220, %cst_58 {dimension_numbers = #tpu.dot_dimension_numbers<[2], [2], [1], [1], [0, 0, 0, 1, 1, 1], [0], [0]>} : vector<2x8x32xbf16>, vector<2x8x32xbf16>, vector<2x8x8xf32> -> vector<2x8x8xf32>
    "tpu.trace_stop"() : () -> ()
    %cst_59 = arith.constant dense<0xFF800000> : vector<2x8xf32>
    %222 = vector.multi_reduction <maximumf>, %221, %cst_59 [2] : vector<2x8x8xf32> to vector<2x8xf32>
    %223 = vector.shape_cast %222 : vector<2x8xf32> to vector<2x8x1xf32>
    %224 = vector.broadcast %223 : vector<2x8x1xf32> to vector<2x8x8xf32>
    %225 = arith.subf %221, %224 : vector<2x8x8xf32>
    %226 = math.exp %225 : vector<2x8x8xf32>
    %cst_60 = arith.constant dense<0.000000e+00> : vector<2x8xf32>
    %227 = vector.multi_reduction <add>, %226, %cst_60 [2] : vector<2x8x8xf32> to vector<2x8xf32>
    %228 = vector.shape_cast %227 : vector<2x8xf32> to vector<2x8x1xf32>
    %229 = tpu.reciprocal %228 {approx = true} : vector<2x8x1xf32> -> vector<2x8x1xf32>
    %230 = vector.broadcast %229 : vector<2x8x1xf32> to vector<2x8x8xf32>
    %231 = arith.mulf %226, %230 : vector<2x8x8xf32>
    %232 = arith.truncf %231 : vector<2x8x8xf32> to vector<2x8x8xbf16>
    %233 = vector.broadcast %218 : vector<1x1x32xbf16> to vector<2x8x32xbf16>
    %234 = arith.mulf %52, %233 : vector<2x8x32xbf16>
    "tpu.trace_start"() <{level = 10 : i32, message = "bqk,bkd->bqd"}> : () -> ()
    %cst_61 = arith.constant dense<0.000000e+00> : vector<2x8x32xf32>
    %235 = tpu.matmul %232, %234, %cst_61 {dimension_numbers = #tpu.dot_dimension_numbers<[2], [1], [1], [2], [0, 0, 0, 1, 1, 2], [0], [0]>} : vector<2x8x8xbf16>, vector<2x8x32xbf16>, vector<2x8x32xf32> -> vector<2x8x32xf32>
    "tpu.trace_stop"() : () -> ()
    %236 = arith.addf %210, %235 : vector<2x8x32xf32>
    %c28_i32_62 = arith.constant 28 : i32
    %237 = vector.broadcast %c28_i32_62 : i32 to vector<1x1x32xi32>
    %238 = arith.cmpi sge, %53, %237 : vector<1x1x32xi32>
    %c32_i32 = arith.constant 32 : i32
    %239 = vector.broadcast %c32_i32 : i32 to vector<1x1x32xi32>
    %240 = arith.cmpi slt, %53, %239 : vector<1x1x32xi32>
    %241 = arith.andi %238, %240 : vector<1x1x32xi1>
    %242 = arith.extui %241 : vector<1x1x32xi1> to vector<1x1x32xi32>
    %243 = arith.sitofp %242 : vector<1x1x32xi32> to vector<1x1x32xf32>
    %244 = arith.truncf %243 : vector<1x1x32xf32> to vector<1x1x32xbf16>
    %245 = vector.broadcast %244 : vector<1x1x32xbf16> to vector<2x8x32xbf16>
    %246 = arith.mulf %49, %245 : vector<2x8x32xbf16>
    "tpu.trace_start"() <{level = 10 : i32, message = "bqd,bkd->bqk"}> : () -> ()
    %cst_63 = arith.constant dense<0.000000e+00> : vector<2x8x8xf32>
    %247 = tpu.matmul %46, %246, %cst_63 {dimension_numbers = #tpu.dot_dimension_numbers<[2], [2], [1], [1], [0, 0, 0, 1, 1, 1], [0], [0]>} : vector<2x8x32xbf16>, vector<2x8x32xbf16>, vector<2x8x8xf32> -> vector<2x8x8xf32>
    "tpu.trace_stop"() : () -> ()
    %cst_64 = arith.constant dense<0xFF800000> : vector<2x8xf32>
    %248 = vector.multi_reduction <maximumf>, %247, %cst_64 [2] : vector<2x8x8xf32> to vector<2x8xf32>
    %249 = vector.shape_cast %248 : vector<2x8xf32> to vector<2x8x1xf32>
    %250 = vector.broadcast %249 : vector<2x8x1xf32> to vector<2x8x8xf32>
    %251 = arith.subf %247, %250 : vector<2x8x8xf32>
    %252 = math.exp %251 : vector<2x8x8xf32>
    %cst_65 = arith.constant dense<0.000000e+00> : vector<2x8xf32>
    %253 = vector.multi_reduction <add>, %252, %cst_65 [2] : vector<2x8x8xf32> to vector<2x8xf32>
    %254 = vector.shape_cast %253 : vector<2x8xf32> to vector<2x8x1xf32>
    %255 = tpu.reciprocal %254 {approx = true} : vector<2x8x1xf32> -> vector<2x8x1xf32>
    %256 = vector.broadcast %255 : vector<2x8x1xf32> to vector<2x8x8xf32>
    %257 = arith.mulf %252, %256 : vector<2x8x8xf32>
    %258 = arith.truncf %257 : vector<2x8x8xf32> to vector<2x8x8xbf16>
    %259 = vector.broadcast %244 : vector<1x1x32xbf16> to vector<2x8x32xbf16>
    %260 = arith.mulf %52, %259 : vector<2x8x32xbf16>
    "tpu.trace_start"() <{level = 10 : i32, message = "bqk,bkd->bqd"}> : () -> ()
    %cst_66 = arith.constant dense<0.000000e+00> : vector<2x8x32xf32>
    %261 = tpu.matmul %258, %260, %cst_66 {dimension_numbers = #tpu.dot_dimension_numbers<[2], [1], [1], [2], [0, 0, 0, 1, 1, 2], [0], [0]>} : vector<2x8x8xbf16>, vector<2x8x32xbf16>, vector<2x8x32xf32> -> vector<2x8x32xf32>
    "tpu.trace_stop"() : () -> ()
    %262 = arith.addf %236, %261 : vector<2x8x32xf32>
    %263 = vector.shape_cast %262 : vector<2x8x32xf32> to vector<16x32xf32>
    %264 = arith.truncf %263 : vector<16x32xf32> to vector<16x32xbf16>
    %cst_67 = arith.constant dense<0.000000e+00> : vector<16x32xf32>
    %265 = tpu.matmul %264, %35, %cst_67 {dimension_numbers = #tpu.dot_dimension_numbers<[1], [0], [0], [1], [0, 0, 1, 1], [], []>} : vector<16x32xbf16>, vector<32x32xbf16>, vector<16x32xf32> -> vector<16x32xf32>
    %266 = vector.broadcast %37 : vector<1x32xf32> to vector<16x32xf32>
    %267 = arith.addf %265, %266 : vector<16x32xf32>
    %268 = arith.addf %3, %267 : vector<16x32xf32>
    %c0_68 = arith.constant 0 : index
    %c0_69 = arith.constant 0 : index
    %c0_70 = arith.constant 0 : index
    %269 = vector.load %arg8[%c0_68, %c0_69, %c0_70] : memref<1x1x32xf32, #tpu.memory_space<vmem>>, vector<1x1x32xf32>
    %270 = vector.shape_cast %269 : vector<1x1x32xf32> to vector<1x32xf32>
    %c0_71 = arith.constant 0 : index
    %c0_72 = arith.constant 0 : index
    %c0_73 = arith.constant 0 : index
    %271 = vector.load %arg9[%c0_71, %c0_72, %c0_73] : memref<1x1x32xf32, #tpu.memory_space<vmem>>, vector<1x1x32xf32>
    %272 = vector.shape_cast %271 : vector<1x1x32xf32> to vector<1x32xf32>
    %cst_74 = arith.constant dense<0.000000e+00> : vector<16xf32>
    %273 = vector.multi_reduction <add>, %268, %cst_74 [1] : vector<16x32xf32> to vector<16xf32>
    %274 = vector.shape_cast %273 : vector<16xf32> to vector<16x1xf32>
    %cst_75 = arith.constant 3.200000e+01 : f32
    %275 = vector.broadcast %cst_75 : f32 to vector<16x1xf32>
    %276 = arith.divf %274, %275 : vector<16x1xf32>
    %277 = vector.broadcast %276 : vector<16x1xf32> to vector<16x32xf32>
    %278 = arith.subf %268, %277 : vector<16x32xf32>
    %279 = arith.mulf %278, %278 : vector<16x32xf32>
    %cst_76 = arith.constant dense<0.000000e+00> : vector<16xf32>
    %280 = vector.multi_reduction <add>, %279, %cst_76 [1] : vector<16x32xf32> to vector<16xf32>
    %281 = vector.shape_cast %280 : vector<16xf32> to vector<16x1xf32>
    %cst_77 = arith.constant 3.200000e+01 : f32
    %282 = vector.broadcast %cst_77 : f32 to vector<16x1xf32>
    %283 = arith.divf %281, %282 : vector<16x1xf32>
    %284 = vector.broadcast %276 : vector<16x1xf32> to vector<16x32xf32>
    %285 = arith.subf %268, %284 : vector<16x32xf32>
    %cst_78 = arith.constant 9.99999974E-6 : f32
    %286 = vector.broadcast %cst_78 : f32 to vector<16x1xf32>
    %287 = arith.addf %283, %286 : vector<16x1xf32>
    %288 = math.rsqrt %287 : vector<16x1xf32>
    %289 = vector.broadcast %288 : vector<16x1xf32> to vector<16x32xf32>
    %290 = arith.mulf %285, %289 : vector<16x32xf32>
    %291 = vector.broadcast %270 : vector<1x32xf32> to vector<16x32xf32>
    %292 = arith.mulf %290, %291 : vector<16x32xf32>
    %293 = vector.broadcast %272 : vector<1x32xf32> to vector<16x32xf32>
    %294 = arith.addf %292, %293 : vector<16x32xf32>
    %c0_79 = arith.constant 0 : index
    %c0_80 = arith.constant 0 : index
    %c0_81 = arith.constant 0 : index
    %295 = vector.load %arg10[%c0_79, %c0_80, %c0_81] : memref<1x32x64xbf16, #tpu.memory_space<vmem>>, vector<1x32x64xbf16>
    %296 = vector.shape_cast %295 : vector<1x32x64xbf16> to vector<32x64xbf16>
    %c0_82 = arith.constant 0 : index
    %c0_83 = arith.constant 0 : index
    %c0_84 = arith.constant 0 : index
    %297 = vector.load %arg11[%c0_82, %c0_83, %c0_84] : memref<1x1x64xf32, #tpu.memory_space<vmem>>, vector<1x1x64xf32>
    %298 = vector.shape_cast %297 : vector<1x1x64xf32> to vector<1x64xf32>
    %c0_85 = arith.constant 0 : index
    %c0_86 = arith.constant 0 : index
    %c0_87 = arith.constant 0 : index
    %299 = vector.load %arg12[%c0_85, %c0_86, %c0_87] : memref<1x64x32xbf16, #tpu.memory_space<vmem>>, vector<1x64x32xbf16>
    %300 = vector.shape_cast %299 : vector<1x64x32xbf16> to vector<64x32xbf16>
    %c0_88 = arith.constant 0 : index
    %c0_89 = arith.constant 0 : index
    %c0_90 = arith.constant 0 : index
    %301 = vector.load %arg13[%c0_88, %c0_89, %c0_90] : memref<1x1x32xf32, #tpu.memory_space<vmem>>, vector<1x1x32xf32>
    %302 = vector.shape_cast %301 : vector<1x1x32xf32> to vector<1x32xf32>
    %303 = arith.truncf %294 : vector<16x32xf32> to vector<16x32xbf16>
    %cst_91 = arith.constant dense<0.000000e+00> : vector<16x64xf32>
    %304 = tpu.matmul %303, %296, %cst_91 {dimension_numbers = #tpu.dot_dimension_numbers<[1], [0], [0], [1], [0, 0, 1, 1], [], []>} : vector<16x32xbf16>, vector<32x64xbf16>, vector<16x64xf32> -> vector<16x64xf32>
    %305 = vector.broadcast %298 : vector<1x64xf32> to vector<16x64xf32>
    %306 = arith.addf %304, %305 : vector<16x64xf32>
    %cst_92 = arith.constant 0.000000e+00 : f32
    %307 = vector.broadcast %cst_92 : f32 to vector<16x64xf32>
    %308 = arith.maximumf %306, %307 : vector<16x64xf32>
    %309 = arith.truncf %308 : vector<16x64xf32> to vector<16x64xbf16>
    %cst_93 = arith.constant dense<0.000000e+00> : vector<16x32xf32>
    %310 = tpu.matmul %309, %300, %cst_93 {dimension_numbers = #tpu.dot_dimension_numbers<[1], [0], [0], [1], [0, 0, 1, 1], [], []>} : vector<16x64xbf16>, vector<64x32xbf16>, vector<16x32xf32> -> vector<16x32xf32>
    %311 = vector.broadcast %302 : vector<1x32xf32> to vector<16x32xf32>
    %312 = arith.addf %310, %311 : vector<16x32xf32>
    %313 = arith.addf %268, %312 : vector<16x32xf32>
    %c0_94 = arith.constant 0 : index
    %c0_95 = arith.constant 0 : index
    %314 = vector.load %arg17[%c0_94, %c0_95] : memref<16x32xf32, #tpu.memory_space<vmem>>, vector<16x32xf32>
    tpu.vector_store %arg17[%c0_94, %c0_95], %313 {strides = array<i32>} : memref<16x32xf32, #tpu.memory_space<vmem>>, vector<16x32xf32>,
    %c1_i32 = arith.constant 1 : i32
    %315 = arith.cmpi eq, %arg0, %c1_i32 : i32
    %316 = arith.extui %315 : i1 to i32
    %c0_i32_96 = arith.constant 0 : i32
    %317 = arith.cmpi ne, %316, %c0_i32_96 : i32
    scf.if %317 {
      %c0_97 = arith.constant 0 : index
      %c0_98 = arith.constant 0 : index
      %318 = vector.load %arg14[%c0_97, %c0_98] : memref<1x32xf32, #tpu.memory_space<vmem>>, vector<1x32xf32>
      %c0_99 = arith.constant 0 : index
      %c0_100 = arith.constant 0 : index
      %319 = vector.load %arg15[%c0_99, %c0_100] : memref<1x32xf32, #tpu.memory_space<vmem>>, vector<1x32xf32>
      %cst_101 = arith.constant dense<0.000000e+00> : vector<16xf32>
      %320 = vector.multi_reduction <add>, %313, %cst_101 [1] : vector<16x32xf32> to vector<16xf32>
      %321 = vector.shape_cast %320 : vector<16xf32> to vector<16x1xf32>
      %cst_102 = arith.constant 3.200000e+01 : f32
      %322 = vector.broadcast %cst_102 : f32 to vector<16x1xf32>
      %323 = arith.divf %321, %322 : vector<16x1xf32>
      %324 = vector.broadcast %323 : vector<16x1xf32> to vector<16x32xf32>
      %325 = arith.subf %313, %324 : vector<16x32xf32>
      %326 = arith.mulf %325, %325 : vector<16x32xf32>
      %cst_103 = arith.constant dense<0.000000e+00> : vector<16xf32>
      %327 = vector.multi_reduction <add>, %326, %cst_103 [1] : vector<16x32xf32> to vector<16xf32>
      %328 = vector.shape_cast %327 : vector<16xf32> to vector<16x1xf32>
      %cst_104 = arith.constant 3.200000e+01 : f32
      %329 = vector.broadcast %cst_104 : f32 to vector<16x1xf32>
      %330 = arith.divf %328, %329 : vector<16x1xf32>
      %331 = vector.broadcast %323 : vector<16x1xf32> to vector<16x32xf32>
      %332 = arith.subf %313, %331 : vector<16x32xf32>
      %cst_105 = arith.constant 9.99999974E-6 : f32
      %333 = vector.broadcast %cst_105 : f32 to vector<16x1xf32>
      %334 = arith.addf %330, %333 : vector<16x1xf32>
      %335 = math.rsqrt %334 : vector<16x1xf32>
      %336 = vector.broadcast %335 : vector<16x1xf32> to vector<16x32xf32>
      %337 = arith.mulf %332, %336 : vector<16x32xf32>
      %338 = vector.broadcast %318 : vector<1x32xf32> to vector<16x32xf32>
      %339 = arith.mulf %337, %338 : vector<16x32xf32>
      %340 = vector.broadcast %319 : vector<1x32xf32> to vector<16x32xf32>
      %341 = arith.addf %339, %340 : vector<16x32xf32>
      %c0_106 = arith.constant 0 : index
      %c0_107 = arith.constant 0 : index
      %342 = vector.load %arg16[%c0_106, %c0_107] : memref<16x32xf32, #tpu.memory_space<vmem>>, vector<16x32xf32>
      tpu.vector_store %arg16[%c0_106, %c0_107], %341 {strides = array<i32>} : memref<16x32xf32, #tpu.memory_space<vmem>>, vector<16x32xf32>,
    } else {
    }
    return
  }
  func.func @transform_0(%arg0: i32) -> (i32, i32) {
    %c0_i32 = arith.constant 0 : i32
    %c0_i32_0 = arith.constant 0 : i32
    %c0_i32_1 = arith.constant 0 : i32
    return %c0_i32, %c0_i32_0 : i32, i32
  }
  func.func @transform_1(%arg0: i32) -> (i32, i32, i32) {
    %c0_i32 = arith.constant 0 : i32
    %c0_i32_0 = arith.constant 0 : i32
    %c0_i32_1 = arith.constant 0 : i32
    return %arg0, %c0_i32, %c0_i32_0 : i32, i32, i32
  }
  func.func @transform_2(%arg0: i32) -> (i32, i32, i32) {
    %c0_i32 = arith.constant 0 : i32
    %c0_i32_0 = arith.constant 0 : i32
    %c0_i32_1 = arith.constant 0 : i32
    return %arg0, %c0_i32, %c0_i32_0 : i32, i32, i32
  }
  func.func @transform_3(%arg0: i32) -> (i32, i32, i32) {
    %c0_i32 = arith.constant 0 : i32
    %c0_i32_0 = arith.constant 0 : i32
    %c0_i32_1 = arith.constant 0 : i32
    return %arg0, %c0_i32, %c0_i32_0 : i32, i32, i32
  }
  func.func @transform_4(%arg0: i32) -> (i32, i32, i32) {
    %c0_i32 = arith.constant 0 : i32
    %c0_i32_0 = arith.constant 0 : i32
    %c0_i32_1 = arith.constant 0 : i32
    return %arg0, %c0_i32, %c0_i32_0 : i32, i32, i32
  }
  func.func @transform_5(%arg0: i32) -> (i32, i32, i32) {
    %c0_i32 = arith.constant 0 : i32
    %c0_i32_0 = arith.constant 0 : i32
    %c0_i32_1 = arith.constant 0 : i32
    return %arg0, %c0_i32, %c0_i32_0 : i32, i32, i32
  }
  func.func @transform_6(%arg0: i32) -> (i32, i32, i32) {
    %c0_i32 = arith.constant 0 : i32
    %c0_i32_0 = arith.constant 0 : i32
    %c0_i32_1 = arith.constant 0 : i32
    return %arg0, %c0_i32, %c0_i32_0 : i32, i32, i32
  }
  func.func @transform_7(%arg0: i32) -> (i32, i32, i32) {
    %c0_i32 = arith.constant 0 : i32
    %c0_i32_0 = arith.constant 0 : i32
    %c0_i32_1 = arith.constant 0 : i32
    return %arg0, %c0_i32, %c0_i32_0 : i32, i32, i32
  }
  func.func @transform_8(%arg0: i32) -> (i32, i32, i32) {
    %c0_i32 = arith.constant 0 : i32
    %c0_i32_0 = arith.constant 0 : i32
    %c0_i32_1 = arith.constant 0 : i32
    return %arg0, %c0_i32, %c0_i32_0 : i32, i32, i32
  }
  func.func @transform_9(%arg0: i32) -> (i32, i32, i32) {
    %c0_i32 = arith.constant 0 : i32
    %c0_i32_0 = arith.constant 0 : i32
    %c0_i32_1 = arith.constant 0 : i32
    return %arg0, %c0_i32, %c0_i32_0 : i32, i32, i32
  }
  func.func @transform_10(%arg0: i32) -> (i32, i32, i32) {
    %c0_i32 = arith.constant 0 : i32
    %c0_i32_0 = arith.constant 0 : i32
    %c0_i32_1 = arith.constant 0 : i32
    return %arg0, %c0_i32, %c0_i32_0 : i32, i32, i32
  }
  func.func @transform_11(%arg0: i32) -> (i32, i32, i32) {
    %c0_i32 = arith.constant 0 : i32
    %c0_i32_0 = arith.constant 0 : i32
    %c0_i32_1 = arith.constant 0 : i32
    return %arg0, %c0_i32, %c0_i32_0 : i32, i32, i32
  }
  func.func @transform_12(%arg0: i32) -> (i32, i32, i32) {
    %c0_i32 = arith.constant 0 : i32
    %c0_i32_0 = arith.constant 0 : i32
    %c0_i32_1 = arith.constant 0 : i32
    return %arg0, %c0_i32, %c0_i32_0 : i32, i32, i32
  }
  func.func @transform_13(%arg0: i32) -> (i32, i32) {
    %c0_i32 = arith.constant 0 : i32
    %c0_i32_0 = arith.constant 0 : i32
    %c0_i32_1 = arith.constant 0 : i32
    return %c0_i32, %c0_i32_0 : i32, i32
  }
  func.func @transform_14(%arg0: i32) -> (i32, i32) {
    %c0_i32 = arith.constant 0 : i32
    %c0_i32_0 = arith.constant 0 : i32
    %c0_i32_1 = arith.constant 0 : i32
    return %c0_i32, %c0_i32_0 : i32, i32
  }
  func.func @transform_15(%arg0: i32) -> (i32, i32) {
    %c0_i32 = arith.constant 0 : i32
    %c0_i32_0 = arith.constant 0 : i32
    %c0_i32_1 = arith.constant 0 : i32
    return %c0_i32, %c0_i32_0 : i32, i32
  }
}

module attributes {stable_mosaic.version = 11 : i64} {
  func.func @_decoder_stack_kernel(%arg0: i32, %arg1: memref<16x32xf32, #tpu.memory_space<vmem>>, %arg2: memref<16x32xf32, #tpu.memory_space<vmem>>, %arg3: memref<1x1x32xf32, #tpu.memory_space<vmem>>, %arg4: memref<1x1x32xf32, #tpu.memory_space<vmem>>, %arg5: memref<1x32x96xbf16, #tpu.memory_space<vmem>>, %arg6: memref<1x1x96xf32, #tpu.memory_space<vmem>>, %arg7: memref<1x32x32xbf16, #tpu.memory_space<vmem>>, %arg8: memref<1x1x32xf32, #tpu.memory_space<vmem>>, %arg9: memref<1x1x32xf32, #tpu.memory_space<vmem>>, %arg10: memref<1x1x32xf32, #tpu.memory_space<vmem>>, %arg11: memref<1x32x32xbf16, #tpu.memory_space<vmem>>, %arg12: memref<1x1x32xf32, #tpu.memory_space<vmem>>, %arg13: memref<1x32x64xbf16, #tpu.memory_space<vmem>>, %arg14: memref<1x1x64xf32, #tpu.memory_space<vmem>>, %arg15: memref<1x32x32xbf16, #tpu.memory_space<vmem>>, %arg16: memref<1x1x32xf32, #tpu.memory_space<vmem>>, %arg17: memref<1x1x32xf32, #tpu.memory_space<vmem>>, %arg18: memref<1x1x32xf32, #tpu.memory_space<vmem>>, %arg19: memref<1x32x64xbf16, #tpu.memory_space<vmem>>, %arg20: memref<1x1x64xf32, #tpu.memory_space<vmem>>, %arg21: memref<1x64x32xbf16, #tpu.memory_space<vmem>>, %arg22: memref<1x1x32xf32, #tpu.memory_space<vmem>>, %arg23: memref<1x32xf32, #tpu.memory_space<vmem>>, %arg24: memref<1x32xf32, #tpu.memory_space<vmem>>, %arg25: memref<32x128xbf16, #tpu.memory_space<vmem>>, %arg26: memref<1x128xf32, #tpu.memory_space<vmem>>, %arg27: memref<16x128xf32, #tpu.memory_space<vmem>>, %arg28: memref<16x32xf32, #tpu.memory_space<vmem>>) attributes {dimension_semantics = [#tpu.dimension_semantics<arbitrary>], iteration_bounds = array<i64: 2>, scalar_prefetch = 0 : i64, scratch_operands = 1 : i64, tpu.core_type = #tpu.core_type<tc>, window_params = [{pipeline_mode = #tpu.pipeline_mode<synchronous>, transform_indices = @transform_0, window_bounds = array<i64: 16, 32>}, {pipeline_mode = #tpu.pipeline_mode<synchronous>, transform_indices = @transform_1, window_bounds = array<i64: 16, 32>}, {transform_indices = @transform_2, window_bounds = array<i64: 1, 1, 32>}, {transform_indices = @transform_3, window_bounds = array<i64: 1, 1, 32>}, {transform_indices = @transform_4, window_bounds = array<i64: 1, 32, 96>}, {transform_indices = @transform_5, window_bounds = array<i64: 1, 1, 96>}, {transform_indices = @transform_6, window_bounds = array<i64: 1, 32, 32>}, {transform_indices = @transform_7, window_bounds = array<i64: 1, 1, 32>}, {transform_indices = @transform_8, window_bounds = array<i64: 1, 1, 32>}, {transform_indices = @transform_9, window_bounds = array<i64: 1, 1, 32>}, {transform_indices = @transform_10, window_bounds = array<i64: 1, 32, 32>}, {transform_indices = @transform_11, window_bounds = array<i64: 1, 1, 32>}, {transform_indices = @transform_12, window_bounds = array<i64: 1, 32, 64>}, {transform_indices = @transform_13, window_bounds = array<i64: 1, 1, 64>}, {transform_indices = @transform_14, window_bounds = array<i64: 1, 32, 32>}, {transform_indices = @transform_15, window_bounds = array<i64: 1, 1, 32>}, {transform_indices = @transform_16, window_bounds = array<i64: 1, 1, 32>}, {transform_indices = @transform_17, window_bounds = array<i64: 1, 1, 32>}, {transform_indices = @transform_18, window_bounds = array<i64: 1, 32, 64>}, {transform_indices = @transform_19, window_bounds = array<i64: 1, 1, 64>}, {transform_indices = @transform_20, window_bounds = array<i64: 1, 64, 32>}, {transform_indices = @transform_21, window_bounds = array<i64: 1, 1, 32>}, {pipeline_mode = #tpu.pipeline_mode<synchronous>, transform_indices = @transform_22, window_bounds = array<i64: 1, 32>}, {pipeline_mode = #tpu.pipeline_mode<synchronous>, transform_indices = @transform_23, window_bounds = array<i64: 1, 32>}, {pipeline_mode = #tpu.pipeline_mode<synchronous>, transform_indices = @transform_24, window_bounds = array<i64: 32, 128>}, {pipeline_mode = #tpu.pipeline_mode<synchronous>, transform_indices = @transform_25, window_bounds = array<i64: 1, 128>}, {pipeline_mode = #tpu.pipeline_mode<synchronous>, transform_indices = @transform_26, window_bounds = array<i64: 16, 128>}]} {
    %c0_i32 = arith.constant 0 : i32
    %0 = arith.cmpi eq, %arg0, %c0_i32 : i32
    %1 = arith.extui %0 : i1 to i32
    %c0_i32_0 = arith.constant 0 : i32
    %2 = arith.cmpi ne, %1, %c0_i32_0 : i32
    scf.if %2 {
      %c0_181 = arith.constant 0 : index
      %c0_182 = arith.constant 0 : index
      %591 = vector.load %arg1[%c0_181, %c0_182] : memref<16x32xf32, #tpu.memory_space<vmem>>, vector<16x32xf32>
      %c0_183 = arith.constant 0 : index
      %c0_184 = arith.constant 0 : index
      %592 = vector.load %arg28[%c0_183, %c0_184] : memref<16x32xf32, #tpu.memory_space<vmem>>, vector<16x32xf32>
      tpu.vector_store %arg28[%c0_183, %c0_184], %591 {strides = array<i32>} : memref<16x32xf32, #tpu.memory_space<vmem>>, vector<16x32xf32>,
    } else {
    }
    %c0 = arith.constant 0 : index
    %c0_1 = arith.constant 0 : index
    %3 = vector.load %arg28[%c0, %c0_1] : memref<16x32xf32, #tpu.memory_space<vmem>>, vector<16x32xf32>
    %c0_2 = arith.constant 0 : index
    %c0_3 = arith.constant 0 : index
    %4 = vector.load %arg2[%c0_2, %c0_3] : memref<16x32xf32, #tpu.memory_space<vmem>>, vector<16x32xf32>
    %5 = arith.truncf %4 : vector<16x32xf32> to vector<16x32xbf16>
    %c0_4 = arith.constant 0 : index
    %c0_5 = arith.constant 0 : index
    %c0_6 = arith.constant 0 : index
    %6 = vector.load %arg3[%c0_4, %c0_5, %c0_6] : memref<1x1x32xf32, #tpu.memory_space<vmem>>, vector<1x1x32xf32>
    %7 = vector.shape_cast %6 : vector<1x1x32xf32> to vector<1x32xf32>
    %c0_7 = arith.constant 0 : index
    %c0_8 = arith.constant 0 : index
    %c0_9 = arith.constant 0 : index
    %8 = vector.load %arg4[%c0_7, %c0_8, %c0_9] : memref<1x1x32xf32, #tpu.memory_space<vmem>>, vector<1x1x32xf32>
    %9 = vector.shape_cast %8 : vector<1x1x32xf32> to vector<1x32xf32>
    %cst = arith.constant dense<0.000000e+00> : vector<16xf32>
    %10 = vector.multi_reduction <add>, %3, %cst [1] : vector<16x32xf32> to vector<16xf32>
    %11 = vector.shape_cast %10 : vector<16xf32> to vector<16x1xf32>
    %cst_10 = arith.constant 3.200000e+01 : f32
    %12 = vector.broadcast %cst_10 : f32 to vector<16x1xf32>
    %13 = arith.divf %11, %12 : vector<16x1xf32>
    %14 = vector.broadcast %13 : vector<16x1xf32> to vector<16x32xf32>
    %15 = arith.subf %3, %14 : vector<16x32xf32>
    %16 = arith.mulf %15, %15 : vector<16x32xf32>
    %cst_11 = arith.constant dense<0.000000e+00> : vector<16xf32>
    %17 = vector.multi_reduction <add>, %16, %cst_11 [1] : vector<16x32xf32> to vector<16xf32>
    %18 = vector.shape_cast %17 : vector<16xf32> to vector<16x1xf32>
    %cst_12 = arith.constant 3.200000e+01 : f32
    %19 = vector.broadcast %cst_12 : f32 to vector<16x1xf32>
    %20 = arith.divf %18, %19 : vector<16x1xf32>
    %21 = vector.broadcast %13 : vector<16x1xf32> to vector<16x32xf32>
    %22 = arith.subf %3, %21 : vector<16x32xf32>
    %cst_13 = arith.constant 9.99999974E-6 : f32
    %23 = vector.broadcast %cst_13 : f32 to vector<16x1xf32>
    %24 = arith.addf %20, %23 : vector<16x1xf32>
    %25 = math.rsqrt %24 : vector<16x1xf32>
    %26 = vector.broadcast %25 : vector<16x1xf32> to vector<16x32xf32>
    %27 = arith.mulf %22, %26 : vector<16x32xf32>
    %28 = vector.broadcast %7 : vector<1x32xf32> to vector<16x32xf32>
    %29 = arith.mulf %27, %28 : vector<16x32xf32>
    %30 = vector.broadcast %9 : vector<1x32xf32> to vector<16x32xf32>
    %31 = arith.addf %29, %30 : vector<16x32xf32>
    %c0_14 = arith.constant 0 : index
    %c0_15 = arith.constant 0 : index
    %c0_16 = arith.constant 0 : index
    %32 = vector.load %arg5[%c0_14, %c0_15, %c0_16] : memref<1x32x96xbf16, #tpu.memory_space<vmem>>, vector<1x32x96xbf16>
    %33 = vector.shape_cast %32 : vector<1x32x96xbf16> to vector<32x96xbf16>
    %c0_17 = arith.constant 0 : index
    %c0_18 = arith.constant 0 : index
    %c0_19 = arith.constant 0 : index
    %34 = vector.load %arg6[%c0_17, %c0_18, %c0_19] : memref<1x1x96xf32, #tpu.memory_space<vmem>>, vector<1x1x96xf32>
    %35 = vector.shape_cast %34 : vector<1x1x96xf32> to vector<1x96xf32>
    %c0_20 = arith.constant 0 : index
    %c0_21 = arith.constant 0 : index
    %c0_22 = arith.constant 0 : index
    %36 = vector.load %arg7[%c0_20, %c0_21, %c0_22] : memref<1x32x32xbf16, #tpu.memory_space<vmem>>, vector<1x32x32xbf16>
    %37 = vector.shape_cast %36 : vector<1x32x32xbf16> to vector<32x32xbf16>
    %c0_23 = arith.constant 0 : index
    %c0_24 = arith.constant 0 : index
    %c0_25 = arith.constant 0 : index
    %38 = vector.load %arg8[%c0_23, %c0_24, %c0_25] : memref<1x1x32xf32, #tpu.memory_space<vmem>>, vector<1x1x32xf32>
    %39 = vector.shape_cast %38 : vector<1x1x32xf32> to vector<1x32xf32>
    %40 = arith.truncf %31 : vector<16x32xf32> to vector<16x32xbf16>
    %cst_26 = arith.constant dense<0.000000e+00> : vector<16x96xf32>
    %41 = tpu.matmul %40, %33, %cst_26 {dimension_numbers = #tpu.dot_dimension_numbers<[1], [0], [0], [1], [0, 0, 1, 1], [], []>} : vector<16x32xbf16>, vector<32x96xbf16>, vector<16x96xf32> -> vector<16x96xf32>
    %42 = vector.broadcast %35 : vector<1x96xf32> to vector<16x96xf32>
    %43 = arith.addf %41, %42 : vector<16x96xf32>
    %44 = vector.extract_strided_slice %43 {offsets = [0, 0], sizes = [16, 32], strides = [1, 1]} : vector<16x96xf32> to vector<16x32xf32>
    %cst_27 = arith.constant 5.000000e-01 : f32
    %45 = vector.broadcast %cst_27 : f32 to vector<16x32xf32>
    %46 = arith.mulf %44, %45 : vector<16x32xf32>
    %47 = arith.truncf %46 : vector<16x32xf32> to vector<16x32xbf16>
    %48 = vector.shape_cast %47 : vector<16x32xbf16> to vector<2x8x32xbf16>
    %49 = vector.extract_strided_slice %43 {offsets = [0, 32], sizes = [16, 32], strides = [1, 1]} : vector<16x96xf32> to vector<16x32xf32>
    %50 = arith.truncf %49 : vector<16x32xf32> to vector<16x32xbf16>
    %51 = vector.shape_cast %50 : vector<16x32xbf16> to vector<2x8x32xbf16>
    %52 = vector.extract_strided_slice %43 {offsets = [0, 64], sizes = [16, 32], strides = [1, 1]} : vector<16x96xf32> to vector<16x32xf32>
    %53 = arith.truncf %52 : vector<16x32xf32> to vector<16x32xbf16>
    %54 = vector.shape_cast %53 : vector<16x32xbf16> to vector<2x8x32xbf16>
    %55 = tpu.iota {dimensions = array<i32: 2>} : vector<1x1x32xi32>
    %cst_28 = arith.constant 0.000000e+00 : f32
    %56 = vector.broadcast %cst_28 : f32 to vector<2x8x32xf32>
    %c0_i32_29 = arith.constant 0 : i32
    %57 = vector.broadcast %c0_i32_29 : i32 to vector<1x1x32xi32>
    %58 = arith.cmpi sge, %55, %57 : vector<1x1x32xi32>
    %c4_i32 = arith.constant 4 : i32
    %59 = vector.broadcast %c4_i32 : i32 to vector<1x1x32xi32>
    %60 = arith.cmpi slt, %55, %59 : vector<1x1x32xi32>
    %61 = arith.andi %58, %60 : vector<1x1x32xi1>
    %62 = arith.extui %61 : vector<1x1x32xi1> to vector<1x1x32xi32>
    %63 = arith.sitofp %62 : vector<1x1x32xi32> to vector<1x1x32xf32>
    %64 = arith.truncf %63 : vector<1x1x32xf32> to vector<1x1x32xbf16>
    %65 = vector.broadcast %64 : vector<1x1x32xbf16> to vector<2x8x32xbf16>
    %66 = arith.mulf %51, %65 : vector<2x8x32xbf16>
    "tpu.trace_start"() <{level = 10 : i32, message = "bqd,bkd->bqk"}> : () -> ()
    %cst_30 = arith.constant dense<0.000000e+00> : vector<2x8x8xf32>
    %67 = tpu.matmul %48, %66, %cst_30 {dimension_numbers = #tpu.dot_dimension_numbers<[2], [2], [1], [1], [0, 0, 0, 1, 1, 1], [0], [0]>} : vector<2x8x32xbf16>, vector<2x8x32xbf16>, vector<2x8x8xf32> -> vector<2x8x8xf32>
    "tpu.trace_stop"() : () -> ()
    %cst_31 = arith.constant dense<0xFF800000> : vector<2x8xf32>
    %68 = vector.multi_reduction <maximumf>, %67, %cst_31 [2] : vector<2x8x8xf32> to vector<2x8xf32>
    %69 = vector.shape_cast %68 : vector<2x8xf32> to vector<2x8x1xf32>
    %70 = vector.broadcast %69 : vector<2x8x1xf32> to vector<2x8x8xf32>
    %71 = arith.subf %67, %70 : vector<2x8x8xf32>
    %72 = math.exp %71 : vector<2x8x8xf32>
    %cst_32 = arith.constant dense<0.000000e+00> : vector<2x8xf32>
    %73 = vector.multi_reduction <add>, %72, %cst_32 [2] : vector<2x8x8xf32> to vector<2x8xf32>
    %74 = vector.shape_cast %73 : vector<2x8xf32> to vector<2x8x1xf32>
    %75 = tpu.reciprocal %74 {approx = true} : vector<2x8x1xf32> -> vector<2x8x1xf32>
    %76 = vector.broadcast %75 : vector<2x8x1xf32> to vector<2x8x8xf32>
    %77 = arith.mulf %72, %76 : vector<2x8x8xf32>
    %78 = arith.truncf %77 : vector<2x8x8xf32> to vector<2x8x8xbf16>
    %79 = vector.broadcast %64 : vector<1x1x32xbf16> to vector<2x8x32xbf16>
    %80 = arith.mulf %54, %79 : vector<2x8x32xbf16>
    "tpu.trace_start"() <{level = 10 : i32, message = "bqk,bkd->bqd"}> : () -> ()
    %cst_33 = arith.constant dense<0.000000e+00> : vector<2x8x32xf32>
    %81 = tpu.matmul %78, %80, %cst_33 {dimension_numbers = #tpu.dot_dimension_numbers<[2], [1], [1], [2], [0, 0, 0, 1, 1, 2], [0], [0]>} : vector<2x8x8xbf16>, vector<2x8x32xbf16>, vector<2x8x32xf32> -> vector<2x8x32xf32>
    "tpu.trace_stop"() : () -> ()
    %82 = arith.addf %56, %81 : vector<2x8x32xf32>
    %c4_i32_34 = arith.constant 4 : i32
    %83 = vector.broadcast %c4_i32_34 : i32 to vector<1x1x32xi32>
    %84 = arith.cmpi sge, %55, %83 : vector<1x1x32xi32>
    %c8_i32 = arith.constant 8 : i32
    %85 = vector.broadcast %c8_i32 : i32 to vector<1x1x32xi32>
    %86 = arith.cmpi slt, %55, %85 : vector<1x1x32xi32>
    %87 = arith.andi %84, %86 : vector<1x1x32xi1>
    %88 = arith.extui %87 : vector<1x1x32xi1> to vector<1x1x32xi32>
    %89 = arith.sitofp %88 : vector<1x1x32xi32> to vector<1x1x32xf32>
    %90 = arith.truncf %89 : vector<1x1x32xf32> to vector<1x1x32xbf16>
    %91 = vector.broadcast %90 : vector<1x1x32xbf16> to vector<2x8x32xbf16>
    %92 = arith.mulf %51, %91 : vector<2x8x32xbf16>
    "tpu.trace_start"() <{level = 10 : i32, message = "bqd,bkd->bqk"}> : () -> ()
    %cst_35 = arith.constant dense<0.000000e+00> : vector<2x8x8xf32>
    %93 = tpu.matmul %48, %92, %cst_35 {dimension_numbers = #tpu.dot_dimension_numbers<[2], [2], [1], [1], [0, 0, 0, 1, 1, 1], [0], [0]>} : vector<2x8x32xbf16>, vector<2x8x32xbf16>, vector<2x8x8xf32> -> vector<2x8x8xf32>
    "tpu.trace_stop"() : () -> ()
    %cst_36 = arith.constant dense<0xFF800000> : vector<2x8xf32>
    %94 = vector.multi_reduction <maximumf>, %93, %cst_36 [2] : vector<2x8x8xf32> to vector<2x8xf32>
    %95 = vector.shape_cast %94 : vector<2x8xf32> to vector<2x8x1xf32>
    %96 = vector.broadcast %95 : vector<2x8x1xf32> to vector<2x8x8xf32>
    %97 = arith.subf %93, %96 : vector<2x8x8xf32>
    %98 = math.exp %97 : vector<2x8x8xf32>
    %cst_37 = arith.constant dense<0.000000e+00> : vector<2x8xf32>
    %99 = vector.multi_reduction <add>, %98, %cst_37 [2] : vector<2x8x8xf32> to vector<2x8xf32>
    %100 = vector.shape_cast %99 : vector<2x8xf32> to vector<2x8x1xf32>
    %101 = tpu.reciprocal %100 {approx = true} : vector<2x8x1xf32> -> vector<2x8x1xf32>
    %102 = vector.broadcast %101 : vector<2x8x1xf32> to vector<2x8x8xf32>
    %103 = arith.mulf %98, %102 : vector<2x8x8xf32>
    %104 = arith.truncf %103 : vector<2x8x8xf32> to vector<2x8x8xbf16>
    %105 = vector.broadcast %90 : vector<1x1x32xbf16> to vector<2x8x32xbf16>
    %106 = arith.mulf %54, %105 : vector<2x8x32xbf16>
    "tpu.trace_start"() <{level = 10 : i32, message = "bqk,bkd->bqd"}> : () -> ()
    %cst_38 = arith.constant dense<0.000000e+00> : vector<2x8x32xf32>
    %107 = tpu.matmul %104, %106, %cst_38 {dimension_numbers = #tpu.dot_dimension_numbers<[2], [1], [1], [2], [0, 0, 0, 1, 1, 2], [0], [0]>} : vector<2x8x8xbf16>, vector<2x8x32xbf16>, vector<2x8x32xf32> -> vector<2x8x32xf32>
    "tpu.trace_stop"() : () -> ()
    %108 = arith.addf %82, %107 : vector<2x8x32xf32>
    %c8_i32_39 = arith.constant 8 : i32
    %109 = vector.broadcast %c8_i32_39 : i32 to vector<1x1x32xi32>
    %110 = arith.cmpi sge, %55, %109 : vector<1x1x32xi32>
    %c12_i32 = arith.constant 12 : i32
    %111 = vector.broadcast %c12_i32 : i32 to vector<1x1x32xi32>
    %112 = arith.cmpi slt, %55, %111 : vector<1x1x32xi32>
    %113 = arith.andi %110, %112 : vector<1x1x32xi1>
    %114 = arith.extui %113 : vector<1x1x32xi1> to vector<1x1x32xi32>
    %115 = arith.sitofp %114 : vector<1x1x32xi32> to vector<1x1x32xf32>
    %116 = arith.truncf %115 : vector<1x1x32xf32> to vector<1x1x32xbf16>
    %117 = vector.broadcast %116 : vector<1x1x32xbf16> to vector<2x8x32xbf16>
    %118 = arith.mulf %51, %117 : vector<2x8x32xbf16>
    "tpu.trace_start"() <{level = 10 : i32, message = "bqd,bkd->bqk"}> : () -> ()
    %cst_40 = arith.constant dense<0.000000e+00> : vector<2x8x8xf32>
    %119 = tpu.matmul %48, %118, %cst_40 {dimension_numbers = #tpu.dot_dimension_numbers<[2], [2], [1], [1], [0, 0, 0, 1, 1, 1], [0], [0]>} : vector<2x8x32xbf16>, vector<2x8x32xbf16>, vector<2x8x8xf32> -> vector<2x8x8xf32>
    "tpu.trace_stop"() : () -> ()
    %cst_41 = arith.constant dense<0xFF800000> : vector<2x8xf32>
    %120 = vector.multi_reduction <maximumf>, %119, %cst_41 [2] : vector<2x8x8xf32> to vector<2x8xf32>
    %121 = vector.shape_cast %120 : vector<2x8xf32> to vector<2x8x1xf32>
    %122 = vector.broadcast %121 : vector<2x8x1xf32> to vector<2x8x8xf32>
    %123 = arith.subf %119, %122 : vector<2x8x8xf32>
    %124 = math.exp %123 : vector<2x8x8xf32>
    %cst_42 = arith.constant dense<0.000000e+00> : vector<2x8xf32>
    %125 = vector.multi_reduction <add>, %124, %cst_42 [2] : vector<2x8x8xf32> to vector<2x8xf32>
    %126 = vector.shape_cast %125 : vector<2x8xf32> to vector<2x8x1xf32>
    %127 = tpu.reciprocal %126 {approx = true} : vector<2x8x1xf32> -> vector<2x8x1xf32>
    %128 = vector.broadcast %127 : vector<2x8x1xf32> to vector<2x8x8xf32>
    %129 = arith.mulf %124, %128 : vector<2x8x8xf32>
    %130 = arith.truncf %129 : vector<2x8x8xf32> to vector<2x8x8xbf16>
    %131 = vector.broadcast %116 : vector<1x1x32xbf16> to vector<2x8x32xbf16>
    %132 = arith.mulf %54, %131 : vector<2x8x32xbf16>
    "tpu.trace_start"() <{level = 10 : i32, message = "bqk,bkd->bqd"}> : () -> ()
    %cst_43 = arith.constant dense<0.000000e+00> : vector<2x8x32xf32>
    %133 = tpu.matmul %130, %132, %cst_43 {dimension_numbers = #tpu.dot_dimension_numbers<[2], [1], [1], [2], [0, 0, 0, 1, 1, 2], [0], [0]>} : vector<2x8x8xbf16>, vector<2x8x32xbf16>, vector<2x8x32xf32> -> vector<2x8x32xf32>
    "tpu.trace_stop"() : () -> ()
    %134 = arith.addf %108, %133 : vector<2x8x32xf32>
    %c12_i32_44 = arith.constant 12 : i32
    %135 = vector.broadcast %c12_i32_44 : i32 to vector<1x1x32xi32>
    %136 = arith.cmpi sge, %55, %135 : vector<1x1x32xi32>
    %c16_i32 = arith.constant 16 : i32
    %137 = vector.broadcast %c16_i32 : i32 to vector<1x1x32xi32>
    %138 = arith.cmpi slt, %55, %137 : vector<1x1x32xi32>
    %139 = arith.andi %136, %138 : vector<1x1x32xi1>
    %140 = arith.extui %139 : vector<1x1x32xi1> to vector<1x1x32xi32>
    %141 = arith.sitofp %140 : vector<1x1x32xi32> to vector<1x1x32xf32>
    %142 = arith.truncf %141 : vector<1x1x32xf32> to vector<1x1x32xbf16>
    %143 = vector.broadcast %142 : vector<1x1x32xbf16> to vector<2x8x32xbf16>
    %144 = arith.mulf %51, %143 : vector<2x8x32xbf16>
    "tpu.trace_start"() <{level = 10 : i32, message = "bqd,bkd->bqk"}> : () -> ()
    %cst_45 = arith.constant dense<0.000000e+00> : vector<2x8x8xf32>
    %145 = tpu.matmul %48, %144, %cst_45 {dimension_numbers = #tpu.dot_dimension_numbers<[2], [2], [1], [1], [0, 0, 0, 1, 1, 1], [0], [0]>} : vector<2x8x32xbf16>, vector<2x8x32xbf16>, vector<2x8x8xf32> -> vector<2x8x8xf32>
    "tpu.trace_stop"() : () -> ()
    %cst_46 = arith.constant dense<0xFF800000> : vector<2x8xf32>
    %146 = vector.multi_reduction <maximumf>, %145, %cst_46 [2] : vector<2x8x8xf32> to vector<2x8xf32>
    %147 = vector.shape_cast %146 : vector<2x8xf32> to vector<2x8x1xf32>
    %148 = vector.broadcast %147 : vector<2x8x1xf32> to vector<2x8x8xf32>
    %149 = arith.subf %145, %148 : vector<2x8x8xf32>
    %150 = math.exp %149 : vector<2x8x8xf32>
    %cst_47 = arith.constant dense<0.000000e+00> : vector<2x8xf32>
    %151 = vector.multi_reduction <add>, %150, %cst_47 [2] : vector<2x8x8xf32> to vector<2x8xf32>
    %152 = vector.shape_cast %151 : vector<2x8xf32> to vector<2x8x1xf32>
    %153 = tpu.reciprocal %152 {approx = true} : vector<2x8x1xf32> -> vector<2x8x1xf32>
    %154 = vector.broadcast %153 : vector<2x8x1xf32> to vector<2x8x8xf32>
    %155 = arith.mulf %150, %154 : vector<2x8x8xf32>
    %156 = arith.truncf %155 : vector<2x8x8xf32> to vector<2x8x8xbf16>
    %157 = vector.broadcast %142 : vector<1x1x32xbf16> to vector<2x8x32xbf16>
    %158 = arith.mulf %54, %157 : vector<2x8x32xbf16>
    "tpu.trace_start"() <{level = 10 : i32, message = "bqk,bkd->bqd"}> : () -> ()
    %cst_48 = arith.constant dense<0.000000e+00> : vector<2x8x32xf32>
    %159 = tpu.matmul %156, %158, %cst_48 {dimension_numbers = #tpu.dot_dimension_numbers<[2], [1], [1], [2], [0, 0, 0, 1, 1, 2], [0], [0]>} : vector<2x8x8xbf16>, vector<2x8x32xbf16>, vector<2x8x32xf32> -> vector<2x8x32xf32>
    "tpu.trace_stop"() : () -> ()
    %160 = arith.addf %134, %159 : vector<2x8x32xf32>
    %c16_i32_49 = arith.constant 16 : i32
    %161 = vector.broadcast %c16_i32_49 : i32 to vector<1x1x32xi32>
    %162 = arith.cmpi sge, %55, %161 : vector<1x1x32xi32>
    %c20_i32 = arith.constant 20 : i32
    %163 = vector.broadcast %c20_i32 : i32 to vector<1x1x32xi32>
    %164 = arith.cmpi slt, %55, %163 : vector<1x1x32xi32>
    %165 = arith.andi %162, %164 : vector<1x1x32xi1>
    %166 = arith.extui %165 : vector<1x1x32xi1> to vector<1x1x32xi32>
    %167 = arith.sitofp %166 : vector<1x1x32xi32> to vector<1x1x32xf32>
    %168 = arith.truncf %167 : vector<1x1x32xf32> to vector<1x1x32xbf16>
    %169 = vector.broadcast %168 : vector<1x1x32xbf16> to vector<2x8x32xbf16>
    %170 = arith.mulf %51, %169 : vector<2x8x32xbf16>
    "tpu.trace_start"() <{level = 10 : i32, message = "bqd,bkd->bqk"}> : () -> ()
    %cst_50 = arith.constant dense<0.000000e+00> : vector<2x8x8xf32>
    %171 = tpu.matmul %48, %170, %cst_50 {dimension_numbers = #tpu.dot_dimension_numbers<[2], [2], [1], [1], [0, 0, 0, 1, 1, 1], [0], [0]>} : vector<2x8x32xbf16>, vector<2x8x32xbf16>, vector<2x8x8xf32> -> vector<2x8x8xf32>
    "tpu.trace_stop"() : () -> ()
    %cst_51 = arith.constant dense<0xFF800000> : vector<2x8xf32>
    %172 = vector.multi_reduction <maximumf>, %171, %cst_51 [2] : vector<2x8x8xf32> to vector<2x8xf32>
    %173 = vector.shape_cast %172 : vector<2x8xf32> to vector<2x8x1xf32>
    %174 = vector.broadcast %173 : vector<2x8x1xf32> to vector<2x8x8xf32>
    %175 = arith.subf %171, %174 : vector<2x8x8xf32>
    %176 = math.exp %175 : vector<2x8x8xf32>
    %cst_52 = arith.constant dense<0.000000e+00> : vector<2x8xf32>
    %177 = vector.multi_reduction <add>, %176, %cst_52 [2] : vector<2x8x8xf32> to vector<2x8xf32>
    %178 = vector.shape_cast %177 : vector<2x8xf32> to vector<2x8x1xf32>
    %179 = tpu.reciprocal %178 {approx = true} : vector<2x8x1xf32> -> vector<2x8x1xf32>
    %180 = vector.broadcast %179 : vector<2x8x1xf32> to vector<2x8x8xf32>
    %181 = arith.mulf %176, %180 : vector<2x8x8xf32>
    %182 = arith.truncf %181 : vector<2x8x8xf32> to vector<2x8x8xbf16>
    %183 = vector.broadcast %168 : vector<1x1x32xbf16> to vector<2x8x32xbf16>
    %184 = arith.mulf %54, %183 : vector<2x8x32xbf16>
    "tpu.trace_start"() <{level = 10 : i32, message = "bqk,bkd->bqd"}> : () -> ()
    %cst_53 = arith.constant dense<0.000000e+00> : vector<2x8x32xf32>
    %185 = tpu.matmul %182, %184, %cst_53 {dimension_numbers = #tpu.dot_dimension_numbers<[2], [1], [1], [2], [0, 0, 0, 1, 1, 2], [0], [0]>} : vector<2x8x8xbf16>, vector<2x8x32xbf16>, vector<2x8x32xf32> -> vector<2x8x32xf32>
    "tpu.trace_stop"() : () -> ()
    %186 = arith.addf %160, %185 : vector<2x8x32xf32>
    %c20_i32_54 = arith.constant 20 : i32
    %187 = vector.broadcast %c20_i32_54 : i32 to vector<1x1x32xi32>
    %188 = arith.cmpi sge, %55, %187 : vector<1x1x32xi32>
    %c24_i32 = arith.constant 24 : i32
    %189 = vector.broadcast %c24_i32 : i32 to vector<1x1x32xi32>
    %190 = arith.cmpi slt, %55, %189 : vector<1x1x32xi32>
    %191 = arith.andi %188, %190 : vector<1x1x32xi1>
    %192 = arith.extui %191 : vector<1x1x32xi1> to vector<1x1x32xi32>
    %193 = arith.sitofp %192 : vector<1x1x32xi32> to vector<1x1x32xf32>
    %194 = arith.truncf %193 : vector<1x1x32xf32> to vector<1x1x32xbf16>
    %195 = vector.broadcast %194 : vector<1x1x32xbf16> to vector<2x8x32xbf16>
    %196 = arith.mulf %51, %195 : vector<2x8x32xbf16>
    "tpu.trace_start"() <{level = 10 : i32, message = "bqd,bkd->bqk"}> : () -> ()
    %cst_55 = arith.constant dense<0.000000e+00> : vector<2x8x8xf32>
    %197 = tpu.matmul %48, %196, %cst_55 {dimension_numbers = #tpu.dot_dimension_numbers<[2], [2], [1], [1], [0, 0, 0, 1, 1, 1], [0], [0]>} : vector<2x8x32xbf16>, vector<2x8x32xbf16>, vector<2x8x8xf32> -> vector<2x8x8xf32>
    "tpu.trace_stop"() : () -> ()
    %cst_56 = arith.constant dense<0xFF800000> : vector<2x8xf32>
    %198 = vector.multi_reduction <maximumf>, %197, %cst_56 [2] : vector<2x8x8xf32> to vector<2x8xf32>
    %199 = vector.shape_cast %198 : vector<2x8xf32> to vector<2x8x1xf32>
    %200 = vector.broadcast %199 : vector<2x8x1xf32> to vector<2x8x8xf32>
    %201 = arith.subf %197, %200 : vector<2x8x8xf32>
    %202 = math.exp %201 : vector<2x8x8xf32>
    %cst_57 = arith.constant dense<0.000000e+00> : vector<2x8xf32>
    %203 = vector.multi_reduction <add>, %202, %cst_57 [2] : vector<2x8x8xf32> to vector<2x8xf32>
    %204 = vector.shape_cast %203 : vector<2x8xf32> to vector<2x8x1xf32>
    %205 = tpu.reciprocal %204 {approx = true} : vector<2x8x1xf32> -> vector<2x8x1xf32>
    %206 = vector.broadcast %205 : vector<2x8x1xf32> to vector<2x8x8xf32>
    %207 = arith.mulf %202, %206 : vector<2x8x8xf32>
    %208 = arith.truncf %207 : vector<2x8x8xf32> to vector<2x8x8xbf16>
    %209 = vector.broadcast %194 : vector<1x1x32xbf16> to vector<2x8x32xbf16>
    %210 = arith.mulf %54, %209 : vector<2x8x32xbf16>
    "tpu.trace_start"() <{level = 10 : i32, message = "bqk,bkd->bqd"}> : () -> ()
    %cst_58 = arith.constant dense<0.000000e+00> : vector<2x8x32xf32>
    %211 = tpu.matmul %208, %210, %cst_58 {dimension_numbers = #tpu.dot_dimension_numbers<[2], [1], [1], [2], [0, 0, 0, 1, 1, 2], [0], [0]>} : vector<2x8x8xbf16>, vector<2x8x32xbf16>, vector<2x8x32xf32> -> vector<2x8x32xf32>
    "tpu.trace_stop"() : () -> ()
    %212 = arith.addf %186, %211 : vector<2x8x32xf32>
    %c24_i32_59 = arith.constant 24 : i32
    %213 = vector.broadcast %c24_i32_59 : i32 to vector<1x1x32xi32>
    %214 = arith.cmpi sge, %55, %213 : vector<1x1x32xi32>
    %c28_i32 = arith.constant 28 : i32
    %215 = vector.broadcast %c28_i32 : i32 to vector<1x1x32xi32>
    %216 = arith.cmpi slt, %55, %215 : vector<1x1x32xi32>
    %217 = arith.andi %214, %216 : vector<1x1x32xi1>
    %218 = arith.extui %217 : vector<1x1x32xi1> to vector<1x1x32xi32>
    %219 = arith.sitofp %218 : vector<1x1x32xi32> to vector<1x1x32xf32>
    %220 = arith.truncf %219 : vector<1x1x32xf32> to vector<1x1x32xbf16>
    %221 = vector.broadcast %220 : vector<1x1x32xbf16> to vector<2x8x32xbf16>
    %222 = arith.mulf %51, %221 : vector<2x8x32xbf16>
    "tpu.trace_start"() <{level = 10 : i32, message = "bqd,bkd->bqk"}> : () -> ()
    %cst_60 = arith.constant dense<0.000000e+00> : vector<2x8x8xf32>
    %223 = tpu.matmul %48, %222, %cst_60 {dimension_numbers = #tpu.dot_dimension_numbers<[2], [2], [1], [1], [0, 0, 0, 1, 1, 1], [0], [0]>} : vector<2x8x32xbf16>, vector<2x8x32xbf16>, vector<2x8x8xf32> -> vector<2x8x8xf32>
    "tpu.trace_stop"() : () -> ()
    %cst_61 = arith.constant dense<0xFF800000> : vector<2x8xf32>
    %224 = vector.multi_reduction <maximumf>, %223, %cst_61 [2] : vector<2x8x8xf32> to vector<2x8xf32>
    %225 = vector.shape_cast %224 : vector<2x8xf32> to vector<2x8x1xf32>
    %226 = vector.broadcast %225 : vector<2x8x1xf32> to vector<2x8x8xf32>
    %227 = arith.subf %223, %226 : vector<2x8x8xf32>
    %228 = math.exp %227 : vector<2x8x8xf32>
    %cst_62 = arith.constant dense<0.000000e+00> : vector<2x8xf32>
    %229 = vector.multi_reduction <add>, %228, %cst_62 [2] : vector<2x8x8xf32> to vector<2x8xf32>
    %230 = vector.shape_cast %229 : vector<2x8xf32> to vector<2x8x1xf32>
    %231 = tpu.reciprocal %230 {approx = true} : vector<2x8x1xf32> -> vector<2x8x1xf32>
    %232 = vector.broadcast %231 : vector<2x8x1xf32> to vector<2x8x8xf32>
    %233 = arith.mulf %228, %232 : vector<2x8x8xf32>
    %234 = arith.truncf %233 : vector<2x8x8xf32> to vector<2x8x8xbf16>
    %235 = vector.broadcast %220 : vector<1x1x32xbf16> to vector<2x8x32xbf16>
    %236 = arith.mulf %54, %235 : vector<2x8x32xbf16>
    "tpu.trace_start"() <{level = 10 : i32, message = "bqk,bkd->bqd"}> : () -> ()
    %cst_63 = arith.constant dense<0.000000e+00> : vector<2x8x32xf32>
    %237 = tpu.matmul %234, %236, %cst_63 {dimension_numbers = #tpu.dot_dimension_numbers<[2], [1], [1], [2], [0, 0, 0, 1, 1, 2], [0], [0]>} : vector<2x8x8xbf16>, vector<2x8x32xbf16>, vector<2x8x32xf32> -> vector<2x8x32xf32>
    "tpu.trace_stop"() : () -> ()
    %238 = arith.addf %212, %237 : vector<2x8x32xf32>
    %c28_i32_64 = arith.constant 28 : i32
    %239 = vector.broadcast %c28_i32_64 : i32 to vector<1x1x32xi32>
    %240 = arith.cmpi sge, %55, %239 : vector<1x1x32xi32>
    %c32_i32 = arith.constant 32 : i32
    %241 = vector.broadcast %c32_i32 : i32 to vector<1x1x32xi32>
    %242 = arith.cmpi slt, %55, %241 : vector<1x1x32xi32>
    %243 = arith.andi %240, %242 : vector<1x1x32xi1>
    %244 = arith.extui %243 : vector<1x1x32xi1> to vector<1x1x32xi32>
    %245 = arith.sitofp %244 : vector<1x1x32xi32> to vector<1x1x32xf32>
    %246 = arith.truncf %245 : vector<1x1x32xf32> to vector<1x1x32xbf16>
    %247 = vector.broadcast %246 : vector<1x1x32xbf16> to vector<2x8x32xbf16>
    %248 = arith.mulf %51, %247 : vector<2x8x32xbf16>
    "tpu.trace_start"() <{level = 10 : i32, message = "bqd,bkd->bqk"}> : () -> ()
    %cst_65 = arith.constant dense<0.000000e+00> : vector<2x8x8xf32>
    %249 = tpu.matmul %48, %248, %cst_65 {dimension_numbers = #tpu.dot_dimension_numbers<[2], [2], [1], [1], [0, 0, 0, 1, 1, 1], [0], [0]>} : vector<2x8x32xbf16>, vector<2x8x32xbf16>, vector<2x8x8xf32> -> vector<2x8x8xf32>
    "tpu.trace_stop"() : () -> ()
    %cst_66 = arith.constant dense<0xFF800000> : vector<2x8xf32>
    %250 = vector.multi_reduction <maximumf>, %249, %cst_66 [2] : vector<2x8x8xf32> to vector<2x8xf32>
    %251 = vector.shape_cast %250 : vector<2x8xf32> to vector<2x8x1xf32>
    %252 = vector.broadcast %251 : vector<2x8x1xf32> to vector<2x8x8xf32>
    %253 = arith.subf %249, %252 : vector<2x8x8xf32>
    %254 = math.exp %253 : vector<2x8x8xf32>
    %cst_67 = arith.constant dense<0.000000e+00> : vector<2x8xf32>
    %255 = vector.multi_reduction <add>, %254, %cst_67 [2] : vector<2x8x8xf32> to vector<2x8xf32>
    %256 = vector.shape_cast %255 : vector<2x8xf32> to vector<2x8x1xf32>
    %257 = tpu.reciprocal %256 {approx = true} : vector<2x8x1xf32> -> vector<2x8x1xf32>
    %258 = vector.broadcast %257 : vector<2x8x1xf32> to vector<2x8x8xf32>
    %259 = arith.mulf %254, %258 : vector<2x8x8xf32>
    %260 = arith.truncf %259 : vector<2x8x8xf32> to vector<2x8x8xbf16>
    %261 = vector.broadcast %246 : vector<1x1x32xbf16> to vector<2x8x32xbf16>
    %262 = arith.mulf %54, %261 : vector<2x8x32xbf16>
    "tpu.trace_start"() <{level = 10 : i32, message = "bqk,bkd->bqd"}> : () -> ()
    %cst_68 = arith.constant dense<0.000000e+00> : vector<2x8x32xf32>
    %263 = tpu.matmul %260, %262, %cst_68 {dimension_numbers = #tpu.dot_dimension_numbers<[2], [1], [1], [2], [0, 0, 0, 1, 1, 2], [0], [0]>} : vector<2x8x8xbf16>, vector<2x8x32xbf16>, vector<2x8x32xf32> -> vector<2x8x32xf32>
    "tpu.trace_stop"() : () -> ()
    %264 = arith.addf %238, %263 : vector<2x8x32xf32>
    %265 = vector.shape_cast %264 : vector<2x8x32xf32> to vector<16x32xf32>
    %266 = arith.truncf %265 : vector<16x32xf32> to vector<16x32xbf16>
    %cst_69 = arith.constant dense<0.000000e+00> : vector<16x32xf32>
    %267 = tpu.matmul %266, %37, %cst_69 {dimension_numbers = #tpu.dot_dimension_numbers<[1], [0], [0], [1], [0, 0, 1, 1], [], []>} : vector<16x32xbf16>, vector<32x32xbf16>, vector<16x32xf32> -> vector<16x32xf32>
    %268 = vector.broadcast %39 : vector<1x32xf32> to vector<16x32xf32>
    %269 = arith.addf %267, %268 : vector<16x32xf32>
    %270 = arith.addf %3, %269 : vector<16x32xf32>
    %c0_70 = arith.constant 0 : index
    %c0_71 = arith.constant 0 : index
    %c0_72 = arith.constant 0 : index
    %271 = vector.load %arg9[%c0_70, %c0_71, %c0_72] : memref<1x1x32xf32, #tpu.memory_space<vmem>>, vector<1x1x32xf32>
    %272 = vector.shape_cast %271 : vector<1x1x32xf32> to vector<1x32xf32>
    %c0_73 = arith.constant 0 : index
    %c0_74 = arith.constant 0 : index
    %c0_75 = arith.constant 0 : index
    %273 = vector.load %arg10[%c0_73, %c0_74, %c0_75] : memref<1x1x32xf32, #tpu.memory_space<vmem>>, vector<1x1x32xf32>
    %274 = vector.shape_cast %273 : vector<1x1x32xf32> to vector<1x32xf32>
    %cst_76 = arith.constant dense<0.000000e+00> : vector<16xf32>
    %275 = vector.multi_reduction <add>, %270, %cst_76 [1] : vector<16x32xf32> to vector<16xf32>
    %276 = vector.shape_cast %275 : vector<16xf32> to vector<16x1xf32>
    %cst_77 = arith.constant 3.200000e+01 : f32
    %277 = vector.broadcast %cst_77 : f32 to vector<16x1xf32>
    %278 = arith.divf %276, %277 : vector<16x1xf32>
    %279 = vector.broadcast %278 : vector<16x1xf32> to vector<16x32xf32>
    %280 = arith.subf %270, %279 : vector<16x32xf32>
    %281 = arith.mulf %280, %280 : vector<16x32xf32>
    %cst_78 = arith.constant dense<0.000000e+00> : vector<16xf32>
    %282 = vector.multi_reduction <add>, %281, %cst_78 [1] : vector<16x32xf32> to vector<16xf32>
    %283 = vector.shape_cast %282 : vector<16xf32> to vector<16x1xf32>
    %cst_79 = arith.constant 3.200000e+01 : f32
    %284 = vector.broadcast %cst_79 : f32 to vector<16x1xf32>
    %285 = arith.divf %283, %284 : vector<16x1xf32>
    %286 = vector.broadcast %278 : vector<16x1xf32> to vector<16x32xf32>
    %287 = arith.subf %270, %286 : vector<16x32xf32>
    %cst_80 = arith.constant 9.99999974E-6 : f32
    %288 = vector.broadcast %cst_80 : f32 to vector<16x1xf32>
    %289 = arith.addf %285, %288 : vector<16x1xf32>
    %290 = math.rsqrt %289 : vector<16x1xf32>
    %291 = vector.broadcast %290 : vector<16x1xf32> to vector<16x32xf32>
    %292 = arith.mulf %287, %291 : vector<16x32xf32>
    %293 = vector.broadcast %272 : vector<1x32xf32> to vector<16x32xf32>
    %294 = arith.mulf %292, %293 : vector<16x32xf32>
    %295 = vector.broadcast %274 : vector<1x32xf32> to vector<16x32xf32>
    %296 = arith.addf %294, %295 : vector<16x32xf32>
    %c0_81 = arith.constant 0 : index
    %c0_82 = arith.constant 0 : index
    %c0_83 = arith.constant 0 : index
    %297 = vector.load %arg11[%c0_81, %c0_82, %c0_83] : memref<1x32x32xbf16, #tpu.memory_space<vmem>>, vector<1x32x32xbf16>
    %298 = vector.shape_cast %297 : vector<1x32x32xbf16> to vector<32x32xbf16>
    %c0_84 = arith.constant 0 : index
    %c0_85 = arith.constant 0 : index
    %c0_86 = arith.constant 0 : index
    %299 = vector.load %arg12[%c0_84, %c0_85, %c0_86] : memref<1x1x32xf32, #tpu.memory_space<vmem>>, vector<1x1x32xf32>
    %300 = vector.shape_cast %299 : vector<1x1x32xf32> to vector<1x32xf32>
    %c0_87 = arith.constant 0 : index
    %c0_88 = arith.constant 0 : index
    %c0_89 = arith.constant 0 : index
    %301 = vector.load %arg13[%c0_87, %c0_88, %c0_89] : memref<1x32x64xbf16, #tpu.memory_space<vmem>>, vector<1x32x64xbf16>
    %302 = vector.shape_cast %301 : vector<1x32x64xbf16> to vector<32x64xbf16>
    %c0_90 = arith.constant 0 : index
    %c0_91 = arith.constant 0 : index
    %c0_92 = arith.constant 0 : index
    %303 = vector.load %arg14[%c0_90, %c0_91, %c0_92] : memref<1x1x64xf32, #tpu.memory_space<vmem>>, vector<1x1x64xf32>
    %304 = vector.shape_cast %303 : vector<1x1x64xf32> to vector<1x64xf32>
    %c0_93 = arith.constant 0 : index
    %c0_94 = arith.constant 0 : index
    %c0_95 = arith.constant 0 : index
    %305 = vector.load %arg15[%c0_93, %c0_94, %c0_95] : memref<1x32x32xbf16, #tpu.memory_space<vmem>>, vector<1x32x32xbf16>
    %306 = vector.shape_cast %305 : vector<1x32x32xbf16> to vector<32x32xbf16>
    %c0_96 = arith.constant 0 : index
    %c0_97 = arith.constant 0 : index
    %c0_98 = arith.constant 0 : index
    %307 = vector.load %arg16[%c0_96, %c0_97, %c0_98] : memref<1x1x32xf32, #tpu.memory_space<vmem>>, vector<1x1x32xf32>
    %308 = vector.shape_cast %307 : vector<1x1x32xf32> to vector<1x32xf32>
    %309 = arith.truncf %296 : vector<16x32xf32> to vector<16x32xbf16>
    %cst_99 = arith.constant dense<0.000000e+00> : vector<16x32xf32>
    %310 = tpu.matmul %309, %298, %cst_99 {dimension_numbers = #tpu.dot_dimension_numbers<[1], [0], [0], [1], [0, 0, 1, 1], [], []>} : vector<16x32xbf16>, vector<32x32xbf16>, vector<16x32xf32> -> vector<16x32xf32>
    %311 = vector.broadcast %300 : vector<1x32xf32> to vector<16x32xf32>
    %312 = arith.addf %310, %311 : vector<16x32xf32>
    %cst_100 = arith.constant 5.000000e-01 : f32
    %313 = vector.broadcast %cst_100 : f32 to vector<16x32xf32>
    %314 = arith.mulf %312, %313 : vector<16x32xf32>
    %cst_101 = arith.constant dense<0.000000e+00> : vector<16x64xf32>
    %315 = tpu.matmul %5, %302, %cst_101 {dimension_numbers = #tpu.dot_dimension_numbers<[1], [0], [0], [1], [0, 0, 1, 1], [], []>} : vector<16x32xbf16>, vector<32x64xbf16>, vector<16x64xf32> -> vector<16x64xf32>
    %316 = vector.broadcast %304 : vector<1x64xf32> to vector<16x64xf32>
    %317 = arith.addf %315, %316 : vector<16x64xf32>
    %318 = arith.truncf %314 : vector<16x32xf32> to vector<16x32xbf16>
    %319 = vector.shape_cast %318 : vector<16x32xbf16> to vector<2x8x32xbf16>
    %320 = vector.extract_strided_slice %317 {offsets = [0, 0], sizes = [16, 32], strides = [1, 1]} : vector<16x64xf32> to vector<16x32xf32>
    %321 = arith.truncf %320 : vector<16x32xf32> to vector<16x32xbf16>
    %322 = vector.shape_cast %321 : vector<16x32xbf16> to vector<2x8x32xbf16>
    %323 = vector.extract_strided_slice %317 {offsets = [0, 32], sizes = [16, 32], strides = [1, 1]} : vector<16x64xf32> to vector<16x32xf32>
    %324 = arith.truncf %323 : vector<16x32xf32> to vector<16x32xbf16>
    %325 = vector.shape_cast %324 : vector<16x32xbf16> to vector<2x8x32xbf16>
    %326 = tpu.iota {dimensions = array<i32: 2>} : vector<1x1x32xi32>
    %cst_102 = arith.constant 0.000000e+00 : f32
    %327 = vector.broadcast %cst_102 : f32 to vector<2x8x32xf32>
    %c0_i32_103 = arith.constant 0 : i32
    %328 = vector.broadcast %c0_i32_103 : i32 to vector<1x1x32xi32>
    %329 = arith.cmpi sge, %326, %328 : vector<1x1x32xi32>
    %c4_i32_104 = arith.constant 4 : i32
    %330 = vector.broadcast %c4_i32_104 : i32 to vector<1x1x32xi32>
    %331 = arith.cmpi slt, %326, %330 : vector<1x1x32xi32>
    %332 = arith.andi %329, %331 : vector<1x1x32xi1>
    %333 = arith.extui %332 : vector<1x1x32xi1> to vector<1x1x32xi32>
    %334 = arith.sitofp %333 : vector<1x1x32xi32> to vector<1x1x32xf32>
    %335 = arith.truncf %334 : vector<1x1x32xf32> to vector<1x1x32xbf16>
    %336 = vector.broadcast %335 : vector<1x1x32xbf16> to vector<2x8x32xbf16>
    %337 = arith.mulf %322, %336 : vector<2x8x32xbf16>
    "tpu.trace_start"() <{level = 10 : i32, message = "bqd,bkd->bqk"}> : () -> ()
    %cst_105 = arith.constant dense<0.000000e+00> : vector<2x8x8xf32>
    %338 = tpu.matmul %319, %337, %cst_105 {dimension_numbers = #tpu.dot_dimension_numbers<[2], [2], [1], [1], [0, 0, 0, 1, 1, 1], [0], [0]>} : vector<2x8x32xbf16>, vector<2x8x32xbf16>, vector<2x8x8xf32> -> vector<2x8x8xf32>
    "tpu.trace_stop"() : () -> ()
    %cst_106 = arith.constant dense<0xFF800000> : vector<2x8xf32>
    %339 = vector.multi_reduction <maximumf>, %338, %cst_106 [2] : vector<2x8x8xf32> to vector<2x8xf32>
    %340 = vector.shape_cast %339 : vector<2x8xf32> to vector<2x8x1xf32>
    %341 = vector.broadcast %340 : vector<2x8x1xf32> to vector<2x8x8xf32>
    %342 = arith.subf %338, %341 : vector<2x8x8xf32>
    %343 = math.exp %342 : vector<2x8x8xf32>
    %cst_107 = arith.constant dense<0.000000e+00> : vector<2x8xf32>
    %344 = vector.multi_reduction <add>, %343, %cst_107 [2] : vector<2x8x8xf32> to vector<2x8xf32>
    %345 = vector.shape_cast %344 : vector<2x8xf32> to vector<2x8x1xf32>
    %346 = tpu.reciprocal %345 {approx = true} : vector<2x8x1xf32> -> vector<2x8x1xf32>
    %347 = vector.broadcast %346 : vector<2x8x1xf32> to vector<2x8x8xf32>
    %348 = arith.mulf %343, %347 : vector<2x8x8xf32>
    %349 = arith.truncf %348 : vector<2x8x8xf32> to vector<2x8x8xbf16>
    %350 = vector.broadcast %335 : vector<1x1x32xbf16> to vector<2x8x32xbf16>
    %351 = arith.mulf %325, %350 : vector<2x8x32xbf16>
    "tpu.trace_start"() <{level = 10 : i32, message = "bqk,bkd->bqd"}> : () -> ()
    %cst_108 = arith.constant dense<0.000000e+00> : vector<2x8x32xf32>
    %352 = tpu.matmul %349, %351, %cst_108 {dimension_numbers = #tpu.dot_dimension_numbers<[2], [1], [1], [2], [0, 0, 0, 1, 1, 2], [0], [0]>} : vector<2x8x8xbf16>, vector<2x8x32xbf16>, vector<2x8x32xf32> -> vector<2x8x32xf32>
    "tpu.trace_stop"() : () -> ()
    %353 = arith.addf %327, %352 : vector<2x8x32xf32>
    %c4_i32_109 = arith.constant 4 : i32
    %354 = vector.broadcast %c4_i32_109 : i32 to vector<1x1x32xi32>
    %355 = arith.cmpi sge, %326, %354 : vector<1x1x32xi32>
    %c8_i32_110 = arith.constant 8 : i32
    %356 = vector.broadcast %c8_i32_110 : i32 to vector<1x1x32xi32>
    %357 = arith.cmpi slt, %326, %356 : vector<1x1x32xi32>
    %358 = arith.andi %355, %357 : vector<1x1x32xi1>
    %359 = arith.extui %358 : vector<1x1x32xi1> to vector<1x1x32xi32>
    %360 = arith.sitofp %359 : vector<1x1x32xi32> to vector<1x1x32xf32>
    %361 = arith.truncf %360 : vector<1x1x32xf32> to vector<1x1x32xbf16>
    %362 = vector.broadcast %361 : vector<1x1x32xbf16> to vector<2x8x32xbf16>
    %363 = arith.mulf %322, %362 : vector<2x8x32xbf16>
    "tpu.trace_start"() <{level = 10 : i32, message = "bqd,bkd->bqk"}> : () -> ()
    %cst_111 = arith.constant dense<0.000000e+00> : vector<2x8x8xf32>
    %364 = tpu.matmul %319, %363, %cst_111 {dimension_numbers = #tpu.dot_dimension_numbers<[2], [2], [1], [1], [0, 0, 0, 1, 1, 1], [0], [0]>} : vector<2x8x32xbf16>, vector<2x8x32xbf16>, vector<2x8x8xf32> -> vector<2x8x8xf32>
    "tpu.trace_stop"() : () -> ()
    %cst_112 = arith.constant dense<0xFF800000> : vector<2x8xf32>
    %365 = vector.multi_reduction <maximumf>, %364, %cst_112 [2] : vector<2x8x8xf32> to vector<2x8xf32>
    %366 = vector.shape_cast %365 : vector<2x8xf32> to vector<2x8x1xf32>
    %367 = vector.broadcast %366 : vector<2x8x1xf32> to vector<2x8x8xf32>
    %368 = arith.subf %364, %367 : vector<2x8x8xf32>
    %369 = math.exp %368 : vector<2x8x8xf32>
    %cst_113 = arith.constant dense<0.000000e+00> : vector<2x8xf32>
    %370 = vector.multi_reduction <add>, %369, %cst_113 [2] : vector<2x8x8xf32> to vector<2x8xf32>
    %371 = vector.shape_cast %370 : vector<2x8xf32> to vector<2x8x1xf32>
    %372 = tpu.reciprocal %371 {approx = true} : vector<2x8x1xf32> -> vector<2x8x1xf32>
    %373 = vector.broadcast %372 : vector<2x8x1xf32> to vector<2x8x8xf32>
    %374 = arith.mulf %369, %373 : vector<2x8x8xf32>
    %375 = arith.truncf %374 : vector<2x8x8xf32> to vector<2x8x8xbf16>
    %376 = vector.broadcast %361 : vector<1x1x32xbf16> to vector<2x8x32xbf16>
    %377 = arith.mulf %325, %376 : vector<2x8x32xbf16>
    "tpu.trace_start"() <{level = 10 : i32, message = "bqk,bkd->bqd"}> : () -> ()
    %cst_114 = arith.constant dense<0.000000e+00> : vector<2x8x32xf32>
    %378 = tpu.matmul %375, %377, %cst_114 {dimension_numbers = #tpu.dot_dimension_numbers<[2], [1], [1], [2], [0, 0, 0, 1, 1, 2], [0], [0]>} : vector<2x8x8xbf16>, vector<2x8x32xbf16>, vector<2x8x32xf32> -> vector<2x8x32xf32>
    "tpu.trace_stop"() : () -> ()
    %379 = arith.addf %353, %378 : vector<2x8x32xf32>
    %c8_i32_115 = arith.constant 8 : i32
    %380 = vector.broadcast %c8_i32_115 : i32 to vector<1x1x32xi32>
    %381 = arith.cmpi sge, %326, %380 : vector<1x1x32xi32>
    %c12_i32_116 = arith.constant 12 : i32
    %382 = vector.broadcast %c12_i32_116 : i32 to vector<1x1x32xi32>
    %383 = arith.cmpi slt, %326, %382 : vector<1x1x32xi32>
    %384 = arith.andi %381, %383 : vector<1x1x32xi1>
    %385 = arith.extui %384 : vector<1x1x32xi1> to vector<1x1x32xi32>
    %386 = arith.sitofp %385 : vector<1x1x32xi32> to vector<1x1x32xf32>
    %387 = arith.truncf %386 : vector<1x1x32xf32> to vector<1x1x32xbf16>
    %388 = vector.broadcast %387 : vector<1x1x32xbf16> to vector<2x8x32xbf16>
    %389 = arith.mulf %322, %388 : vector<2x8x32xbf16>
    "tpu.trace_start"() <{level = 10 : i32, message = "bqd,bkd->bqk"}> : () -> ()
    %cst_117 = arith.constant dense<0.000000e+00> : vector<2x8x8xf32>
    %390 = tpu.matmul %319, %389, %cst_117 {dimension_numbers = #tpu.dot_dimension_numbers<[2], [2], [1], [1], [0, 0, 0, 1, 1, 1], [0], [0]>} : vector<2x8x32xbf16>, vector<2x8x32xbf16>, vector<2x8x8xf32> -> vector<2x8x8xf32>
    "tpu.trace_stop"() : () -> ()
    %cst_118 = arith.constant dense<0xFF800000> : vector<2x8xf32>
    %391 = vector.multi_reduction <maximumf>, %390, %cst_118 [2] : vector<2x8x8xf32> to vector<2x8xf32>
    %392 = vector.shape_cast %391 : vector<2x8xf32> to vector<2x8x1xf32>
    %393 = vector.broadcast %392 : vector<2x8x1xf32> to vector<2x8x8xf32>
    %394 = arith.subf %390, %393 : vector<2x8x8xf32>
    %395 = math.exp %394 : vector<2x8x8xf32>
    %cst_119 = arith.constant dense<0.000000e+00> : vector<2x8xf32>
    %396 = vector.multi_reduction <add>, %395, %cst_119 [2] : vector<2x8x8xf32> to vector<2x8xf32>
    %397 = vector.shape_cast %396 : vector<2x8xf32> to vector<2x8x1xf32>
    %398 = tpu.reciprocal %397 {approx = true} : vector<2x8x1xf32> -> vector<2x8x1xf32>
    %399 = vector.broadcast %398 : vector<2x8x1xf32> to vector<2x8x8xf32>
    %400 = arith.mulf %395, %399 : vector<2x8x8xf32>
    %401 = arith.truncf %400 : vector<2x8x8xf32> to vector<2x8x8xbf16>
    %402 = vector.broadcast %387 : vector<1x1x32xbf16> to vector<2x8x32xbf16>
    %403 = arith.mulf %325, %402 : vector<2x8x32xbf16>
    "tpu.trace_start"() <{level = 10 : i32, message = "bqk,bkd->bqd"}> : () -> ()
    %cst_120 = arith.constant dense<0.000000e+00> : vector<2x8x32xf32>
    %404 = tpu.matmul %401, %403, %cst_120 {dimension_numbers = #tpu.dot_dimension_numbers<[2], [1], [1], [2], [0, 0, 0, 1, 1, 2], [0], [0]>} : vector<2x8x8xbf16>, vector<2x8x32xbf16>, vector<2x8x32xf32> -> vector<2x8x32xf32>
    "tpu.trace_stop"() : () -> ()
    %405 = arith.addf %379, %404 : vector<2x8x32xf32>
    %c12_i32_121 = arith.constant 12 : i32
    %406 = vector.broadcast %c12_i32_121 : i32 to vector<1x1x32xi32>
    %407 = arith.cmpi sge, %326, %406 : vector<1x1x32xi32>
    %c16_i32_122 = arith.constant 16 : i32
    %408 = vector.broadcast %c16_i32_122 : i32 to vector<1x1x32xi32>
    %409 = arith.cmpi slt, %326, %408 : vector<1x1x32xi32>
    %410 = arith.andi %407, %409 : vector<1x1x32xi1>
    %411 = arith.extui %410 : vector<1x1x32xi1> to vector<1x1x32xi32>
    %412 = arith.sitofp %411 : vector<1x1x32xi32> to vector<1x1x32xf32>
    %413 = arith.truncf %412 : vector<1x1x32xf32> to vector<1x1x32xbf16>
    %414 = vector.broadcast %413 : vector<1x1x32xbf16> to vector<2x8x32xbf16>
    %415 = arith.mulf %322, %414 : vector<2x8x32xbf16>
    "tpu.trace_start"() <{level = 10 : i32, message = "bqd,bkd->bqk"}> : () -> ()
    %cst_123 = arith.constant dense<0.000000e+00> : vector<2x8x8xf32>
    %416 = tpu.matmul %319, %415, %cst_123 {dimension_numbers = #tpu.dot_dimension_numbers<[2], [2], [1], [1], [0, 0, 0, 1, 1, 1], [0], [0]>} : vector<2x8x32xbf16>, vector<2x8x32xbf16>, vector<2x8x8xf32> -> vector<2x8x8xf32>
    "tpu.trace_stop"() : () -> ()
    %cst_124 = arith.constant dense<0xFF800000> : vector<2x8xf32>
    %417 = vector.multi_reduction <maximumf>, %416, %cst_124 [2] : vector<2x8x8xf32> to vector<2x8xf32>
    %418 = vector.shape_cast %417 : vector<2x8xf32> to vector<2x8x1xf32>
    %419 = vector.broadcast %418 : vector<2x8x1xf32> to vector<2x8x8xf32>
    %420 = arith.subf %416, %419 : vector<2x8x8xf32>
    %421 = math.exp %420 : vector<2x8x8xf32>
    %cst_125 = arith.constant dense<0.000000e+00> : vector<2x8xf32>
    %422 = vector.multi_reduction <add>, %421, %cst_125 [2] : vector<2x8x8xf32> to vector<2x8xf32>
    %423 = vector.shape_cast %422 : vector<2x8xf32> to vector<2x8x1xf32>
    %424 = tpu.reciprocal %423 {approx = true} : vector<2x8x1xf32> -> vector<2x8x1xf32>
    %425 = vector.broadcast %424 : vector<2x8x1xf32> to vector<2x8x8xf32>
    %426 = arith.mulf %421, %425 : vector<2x8x8xf32>
    %427 = arith.truncf %426 : vector<2x8x8xf32> to vector<2x8x8xbf16>
    %428 = vector.broadcast %413 : vector<1x1x32xbf16> to vector<2x8x32xbf16>
    %429 = arith.mulf %325, %428 : vector<2x8x32xbf16>
    "tpu.trace_start"() <{level = 10 : i32, message = "bqk,bkd->bqd"}> : () -> ()
    %cst_126 = arith.constant dense<0.000000e+00> : vector<2x8x32xf32>
    %430 = tpu.matmul %427, %429, %cst_126 {dimension_numbers = #tpu.dot_dimension_numbers<[2], [1], [1], [2], [0, 0, 0, 1, 1, 2], [0], [0]>} : vector<2x8x8xbf16>, vector<2x8x32xbf16>, vector<2x8x32xf32> -> vector<2x8x32xf32>
    "tpu.trace_stop"() : () -> ()
    %431 = arith.addf %405, %430 : vector<2x8x32xf32>
    %c16_i32_127 = arith.constant 16 : i32
    %432 = vector.broadcast %c16_i32_127 : i32 to vector<1x1x32xi32>
    %433 = arith.cmpi sge, %326, %432 : vector<1x1x32xi32>
    %c20_i32_128 = arith.constant 20 : i32
    %434 = vector.broadcast %c20_i32_128 : i32 to vector<1x1x32xi32>
    %435 = arith.cmpi slt, %326, %434 : vector<1x1x32xi32>
    %436 = arith.andi %433, %435 : vector<1x1x32xi1>
    %437 = arith.extui %436 : vector<1x1x32xi1> to vector<1x1x32xi32>
    %438 = arith.sitofp %437 : vector<1x1x32xi32> to vector<1x1x32xf32>
    %439 = arith.truncf %438 : vector<1x1x32xf32> to vector<1x1x32xbf16>
    %440 = vector.broadcast %439 : vector<1x1x32xbf16> to vector<2x8x32xbf16>
    %441 = arith.mulf %322, %440 : vector<2x8x32xbf16>
    "tpu.trace_start"() <{level = 10 : i32, message = "bqd,bkd->bqk"}> : () -> ()
    %cst_129 = arith.constant dense<0.000000e+00> : vector<2x8x8xf32>
    %442 = tpu.matmul %319, %441, %cst_129 {dimension_numbers = #tpu.dot_dimension_numbers<[2], [2], [1], [1], [0, 0, 0, 1, 1, 1], [0], [0]>} : vector<2x8x32xbf16>, vector<2x8x32xbf16>, vector<2x8x8xf32> -> vector<2x8x8xf32>
    "tpu.trace_stop"() : () -> ()
    %cst_130 = arith.constant dense<0xFF800000> : vector<2x8xf32>
    %443 = vector.multi_reduction <maximumf>, %442, %cst_130 [2] : vector<2x8x8xf32> to vector<2x8xf32>
    %444 = vector.shape_cast %443 : vector<2x8xf32> to vector<2x8x1xf32>
    %445 = vector.broadcast %444 : vector<2x8x1xf32> to vector<2x8x8xf32>
    %446 = arith.subf %442, %445 : vector<2x8x8xf32>
    %447 = math.exp %446 : vector<2x8x8xf32>
    %cst_131 = arith.constant dense<0.000000e+00> : vector<2x8xf32>
    %448 = vector.multi_reduction <add>, %447, %cst_131 [2] : vector<2x8x8xf32> to vector<2x8xf32>
    %449 = vector.shape_cast %448 : vector<2x8xf32> to vector<2x8x1xf32>
    %450 = tpu.reciprocal %449 {approx = true} : vector<2x8x1xf32> -> vector<2x8x1xf32>
    %451 = vector.broadcast %450 : vector<2x8x1xf32> to vector<2x8x8xf32>
    %452 = arith.mulf %447, %451 : vector<2x8x8xf32>
    %453 = arith.truncf %452 : vector<2x8x8xf32> to vector<2x8x8xbf16>
    %454 = vector.broadcast %439 : vector<1x1x32xbf16> to vector<2x8x32xbf16>
    %455 = arith.mulf %325, %454 : vector<2x8x32xbf16>
    "tpu.trace_start"() <{level = 10 : i32, message = "bqk,bkd->bqd"}> : () -> ()
    %cst_132 = arith.constant dense<0.000000e+00> : vector<2x8x32xf32>
    %456 = tpu.matmul %453, %455, %cst_132 {dimension_numbers = #tpu.dot_dimension_numbers<[2], [1], [1], [2], [0, 0, 0, 1, 1, 2], [0], [0]>} : vector<2x8x8xbf16>, vector<2x8x32xbf16>, vector<2x8x32xf32> -> vector<2x8x32xf32>
    "tpu.trace_stop"() : () -> ()
    %457 = arith.addf %431, %456 : vector<2x8x32xf32>
    %c20_i32_133 = arith.constant 20 : i32
    %458 = vector.broadcast %c20_i32_133 : i32 to vector<1x1x32xi32>
    %459 = arith.cmpi sge, %326, %458 : vector<1x1x32xi32>
    %c24_i32_134 = arith.constant 24 : i32
    %460 = vector.broadcast %c24_i32_134 : i32 to vector<1x1x32xi32>
    %461 = arith.cmpi slt, %326, %460 : vector<1x1x32xi32>
    %462 = arith.andi %459, %461 : vector<1x1x32xi1>
    %463 = arith.extui %462 : vector<1x1x32xi1> to vector<1x1x32xi32>
    %464 = arith.sitofp %463 : vector<1x1x32xi32> to vector<1x1x32xf32>
    %465 = arith.truncf %464 : vector<1x1x32xf32> to vector<1x1x32xbf16>
    %466 = vector.broadcast %465 : vector<1x1x32xbf16> to vector<2x8x32xbf16>
    %467 = arith.mulf %322, %466 : vector<2x8x32xbf16>
    "tpu.trace_start"() <{level = 10 : i32, message = "bqd,bkd->bqk"}> : () -> ()
    %cst_135 = arith.constant dense<0.000000e+00> : vector<2x8x8xf32>
    %468 = tpu.matmul %319, %467, %cst_135 {dimension_numbers = #tpu.dot_dimension_numbers<[2], [2], [1], [1], [0, 0, 0, 1, 1, 1], [0], [0]>} : vector<2x8x32xbf16>, vector<2x8x32xbf16>, vector<2x8x8xf32> -> vector<2x8x8xf32>
    "tpu.trace_stop"() : () -> ()
    %cst_136 = arith.constant dense<0xFF800000> : vector<2x8xf32>
    %469 = vector.multi_reduction <maximumf>, %468, %cst_136 [2] : vector<2x8x8xf32> to vector<2x8xf32>
    %470 = vector.shape_cast %469 : vector<2x8xf32> to vector<2x8x1xf32>
    %471 = vector.broadcast %470 : vector<2x8x1xf32> to vector<2x8x8xf32>
    %472 = arith.subf %468, %471 : vector<2x8x8xf32>
    %473 = math.exp %472 : vector<2x8x8xf32>
    %cst_137 = arith.constant dense<0.000000e+00> : vector<2x8xf32>
    %474 = vector.multi_reduction <add>, %473, %cst_137 [2] : vector<2x8x8xf32> to vector<2x8xf32>
    %475 = vector.shape_cast %474 : vector<2x8xf32> to vector<2x8x1xf32>
    %476 = tpu.reciprocal %475 {approx = true} : vector<2x8x1xf32> -> vector<2x8x1xf32>
    %477 = vector.broadcast %476 : vector<2x8x1xf32> to vector<2x8x8xf32>
    %478 = arith.mulf %473, %477 : vector<2x8x8xf32>
    %479 = arith.truncf %478 : vector<2x8x8xf32> to vector<2x8x8xbf16>
    %480 = vector.broadcast %465 : vector<1x1x32xbf16> to vector<2x8x32xbf16>
    %481 = arith.mulf %325, %480 : vector<2x8x32xbf16>
    "tpu.trace_start"() <{level = 10 : i32, message = "bqk,bkd->bqd"}> : () -> ()
    %cst_138 = arith.constant dense<0.000000e+00> : vector<2x8x32xf32>
    %482 = tpu.matmul %479, %481, %cst_138 {dimension_numbers = #tpu.dot_dimension_numbers<[2], [1], [1], [2], [0, 0, 0, 1, 1, 2], [0], [0]>} : vector<2x8x8xbf16>, vector<2x8x32xbf16>, vector<2x8x32xf32> -> vector<2x8x32xf32>
    "tpu.trace_stop"() : () -> ()
    %483 = arith.addf %457, %482 : vector<2x8x32xf32>
    %c24_i32_139 = arith.constant 24 : i32
    %484 = vector.broadcast %c24_i32_139 : i32 to vector<1x1x32xi32>
    %485 = arith.cmpi sge, %326, %484 : vector<1x1x32xi32>
    %c28_i32_140 = arith.constant 28 : i32
    %486 = vector.broadcast %c28_i32_140 : i32 to vector<1x1x32xi32>
    %487 = arith.cmpi slt, %326, %486 : vector<1x1x32xi32>
    %488 = arith.andi %485, %487 : vector<1x1x32xi1>
    %489 = arith.extui %488 : vector<1x1x32xi1> to vector<1x1x32xi32>
    %490 = arith.sitofp %489 : vector<1x1x32xi32> to vector<1x1x32xf32>
    %491 = arith.truncf %490 : vector<1x1x32xf32> to vector<1x1x32xbf16>
    %492 = vector.broadcast %491 : vector<1x1x32xbf16> to vector<2x8x32xbf16>
    %493 = arith.mulf %322, %492 : vector<2x8x32xbf16>
    "tpu.trace_start"() <{level = 10 : i32, message = "bqd,bkd->bqk"}> : () -> ()
    %cst_141 = arith.constant dense<0.000000e+00> : vector<2x8x8xf32>
    %494 = tpu.matmul %319, %493, %cst_141 {dimension_numbers = #tpu.dot_dimension_numbers<[2], [2], [1], [1], [0, 0, 0, 1, 1, 1], [0], [0]>} : vector<2x8x32xbf16>, vector<2x8x32xbf16>, vector<2x8x8xf32> -> vector<2x8x8xf32>
    "tpu.trace_stop"() : () -> ()
    %cst_142 = arith.constant dense<0xFF800000> : vector<2x8xf32>
    %495 = vector.multi_reduction <maximumf>, %494, %cst_142 [2] : vector<2x8x8xf32> to vector<2x8xf32>
    %496 = vector.shape_cast %495 : vector<2x8xf32> to vector<2x8x1xf32>
    %497 = vector.broadcast %496 : vector<2x8x1xf32> to vector<2x8x8xf32>
    %498 = arith.subf %494, %497 : vector<2x8x8xf32>
    %499 = math.exp %498 : vector<2x8x8xf32>
    %cst_143 = arith.constant dense<0.000000e+00> : vector<2x8xf32>
    %500 = vector.multi_reduction <add>, %499, %cst_143 [2] : vector<2x8x8xf32> to vector<2x8xf32>
    %501 = vector.shape_cast %500 : vector<2x8xf32> to vector<2x8x1xf32>
    %502 = tpu.reciprocal %501 {approx = true} : vector<2x8x1xf32> -> vector<2x8x1xf32>
    %503 = vector.broadcast %502 : vector<2x8x1xf32> to vector<2x8x8xf32>
    %504 = arith.mulf %499, %503 : vector<2x8x8xf32>
    %505 = arith.truncf %504 : vector<2x8x8xf32> to vector<2x8x8xbf16>
    %506 = vector.broadcast %491 : vector<1x1x32xbf16> to vector<2x8x32xbf16>
    %507 = arith.mulf %325, %506 : vector<2x8x32xbf16>
    "tpu.trace_start"() <{level = 10 : i32, message = "bqk,bkd->bqd"}> : () -> ()
    %cst_144 = arith.constant dense<0.000000e+00> : vector<2x8x32xf32>
    %508 = tpu.matmul %505, %507, %cst_144 {dimension_numbers = #tpu.dot_dimension_numbers<[2], [1], [1], [2], [0, 0, 0, 1, 1, 2], [0], [0]>} : vector<2x8x8xbf16>, vector<2x8x32xbf16>, vector<2x8x32xf32> -> vector<2x8x32xf32>
    "tpu.trace_stop"() : () -> ()
    %509 = arith.addf %483, %508 : vector<2x8x32xf32>
    %c28_i32_145 = arith.constant 28 : i32
    %510 = vector.broadcast %c28_i32_145 : i32 to vector<1x1x32xi32>
    %511 = arith.cmpi sge, %326, %510 : vector<1x1x32xi32>
    %c32_i32_146 = arith.constant 32 : i32
    %512 = vector.broadcast %c32_i32_146 : i32 to vector<1x1x32xi32>
    %513 = arith.cmpi slt, %326, %512 : vector<1x1x32xi32>
    %514 = arith.andi %511, %513 : vector<1x1x32xi1>
    %515 = arith.extui %514 : vector<1x1x32xi1> to vector<1x1x32xi32>
    %516 = arith.sitofp %515 : vector<1x1x32xi32> to vector<1x1x32xf32>
    %517 = arith.truncf %516 : vector<1x1x32xf32> to vector<1x1x32xbf16>
    %518 = vector.broadcast %517 : vector<1x1x32xbf16> to vector<2x8x32xbf16>
    %519 = arith.mulf %322, %518 : vector<2x8x32xbf16>
    "tpu.trace_start"() <{level = 10 : i32, message = "bqd,bkd->bqk"}> : () -> ()
    %cst_147 = arith.constant dense<0.000000e+00> : vector<2x8x8xf32>
    %520 = tpu.matmul %319, %519, %cst_147 {dimension_numbers = #tpu.dot_dimension_numbers<[2], [2], [1], [1], [0, 0, 0, 1, 1, 1], [0], [0]>} : vector<2x8x32xbf16>, vector<2x8x32xbf16>, vector<2x8x8xf32> -> vector<2x8x8xf32>
    "tpu.trace_stop"() : () -> ()
    %cst_148 = arith.constant dense<0xFF800000> : vector<2x8xf32>
    %521 = vector.multi_reduction <maximumf>, %520, %cst_148 [2] : vector<2x8x8xf32> to vector<2x8xf32>
    %522 = vector.shape_cast %521 : vector<2x8xf32> to vector<2x8x1xf32>
    %523 = vector.broadcast %522 : vector<2x8x1xf32> to vector<2x8x8xf32>
    %524 = arith.subf %520, %523 : vector<2x8x8xf32>
    %525 = math.exp %524 : vector<2x8x8xf32>
    %cst_149 = arith.constant dense<0.000000e+00> : vector<2x8xf32>
    %526 = vector.multi_reduction <add>, %525, %cst_149 [2] : vector<2x8x8xf32> to vector<2x8xf32>
    %527 = vector.shape_cast %526 : vector<2x8xf32> to vector<2x8x1xf32>
    %528 = tpu.reciprocal %527 {approx = true} : vector<2x8x1xf32> -> vector<2x8x1xf32>
    %529 = vector.broadcast %528 : vector<2x8x1xf32> to vector<2x8x8xf32>
    %530 = arith.mulf %525, %529 : vector<2x8x8xf32>
    %531 = arith.truncf %530 : vector<2x8x8xf32> to vector<2x8x8xbf16>
    %532 = vector.broadcast %517 : vector<1x1x32xbf16> to vector<2x8x32xbf16>
    %533 = arith.mulf %325, %532 : vector<2x8x32xbf16>
    "tpu.trace_start"() <{level = 10 : i32, message = "bqk,bkd->bqd"}> : () -> ()
    %cst_150 = arith.constant dense<0.000000e+00> : vector<2x8x32xf32>
    %534 = tpu.matmul %531, %533, %cst_150 {dimension_numbers = #tpu.dot_dimension_numbers<[2], [1], [1], [2], [0, 0, 0, 1, 1, 2], [0], [0]>} : vector<2x8x8xbf16>, vector<2x8x32xbf16>, vector<2x8x32xf32> -> vector<2x8x32xf32>
    "tpu.trace_stop"() : () -> ()
    %535 = arith.addf %509, %534 : vector<2x8x32xf32>
    %536 = vector.shape_cast %535 : vector<2x8x32xf32> to vector<16x32xf32>
    %537 = arith.truncf %536 : vector<16x32xf32> to vector<16x32xbf16>
    %cst_151 = arith.constant dense<0.000000e+00> : vector<16x32xf32>
    %538 = tpu.matmul %537, %306, %cst_151 {dimension_numbers = #tpu.dot_dimension_numbers<[1], [0], [0], [1], [0, 0, 1, 1], [], []>} : vector<16x32xbf16>, vector<32x32xbf16>, vector<16x32xf32> -> vector<16x32xf32>
    %539 = vector.broadcast %308 : vector<1x32xf32> to vector<16x32xf32>
    %540 = arith.addf %538, %539 : vector<16x32xf32>
    %541 = arith.addf %270, %540 : vector<16x32xf32>
    %c0_152 = arith.constant 0 : index
    %c0_153 = arith.constant 0 : index
    %c0_154 = arith.constant 0 : index
    %542 = vector.load %arg17[%c0_152, %c0_153, %c0_154] : memref<1x1x32xf32, #tpu.memory_space<vmem>>, vector<1x1x32xf32>
    %543 = vector.shape_cast %542 : vector<1x1x32xf32> to vector<1x32xf32>
    %c0_155 = arith.constant 0 : index
    %c0_156 = arith.constant 0 : index
    %c0_157 = arith.constant 0 : index
    %544 = vector.load %arg18[%c0_155, %c0_156, %c0_157] : memref<1x1x32xf32, #tpu.memory_space<vmem>>, vector<1x1x32xf32>
    %545 = vector.shape_cast %544 : vector<1x1x32xf32> to vector<1x32xf32>
    %cst_158 = arith.constant dense<0.000000e+00> : vector<16xf32>
    %546 = vector.multi_reduction <add>, %541, %cst_158 [1] : vector<16x32xf32> to vector<16xf32>
    %547 = vector.shape_cast %546 : vector<16xf32> to vector<16x1xf32>
    %cst_159 = arith.constant 3.200000e+01 : f32
    %548 = vector.broadcast %cst_159 : f32 to vector<16x1xf32>
    %549 = arith.divf %547, %548 : vector<16x1xf32>
    %550 = vector.broadcast %549 : vector<16x1xf32> to vector<16x32xf32>
    %551 = arith.subf %541, %550 : vector<16x32xf32>
    %552 = arith.mulf %551, %551 : vector<16x32xf32>
    %cst_160 = arith.constant dense<0.000000e+00> : vector<16xf32>
    %553 = vector.multi_reduction <add>, %552, %cst_160 [1] : vector<16x32xf32> to vector<16xf32>
    %554 = vector.shape_cast %553 : vector<16xf32> to vector<16x1xf32>
    %cst_161 = arith.constant 3.200000e+01 : f32
    %555 = vector.broadcast %cst_161 : f32 to vector<16x1xf32>
    %556 = arith.divf %554, %555 : vector<16x1xf32>
    %557 = vector.broadcast %549 : vector<16x1xf32> to vector<16x32xf32>
    %558 = arith.subf %541, %557 : vector<16x32xf32>
    %cst_162 = arith.constant 9.99999974E-6 : f32
    %559 = vector.broadcast %cst_162 : f32 to vector<16x1xf32>
    %560 = arith.addf %556, %559 : vector<16x1xf32>
    %561 = math.rsqrt %560 : vector<16x1xf32>
    %562 = vector.broadcast %561 : vector<16x1xf32> to vector<16x32xf32>
    %563 = arith.mulf %558, %562 : vector<16x32xf32>
    %564 = vector.broadcast %543 : vector<1x32xf32> to vector<16x32xf32>
    %565 = arith.mulf %563, %564 : vector<16x32xf32>
    %566 = vector.broadcast %545 : vector<1x32xf32> to vector<16x32xf32>
    %567 = arith.addf %565, %566 : vector<16x32xf32>
    %c0_163 = arith.constant 0 : index
    %c0_164 = arith.constant 0 : index
    %c0_165 = arith.constant 0 : index
    %568 = vector.load %arg19[%c0_163, %c0_164, %c0_165] : memref<1x32x64xbf16, #tpu.memory_space<vmem>>, vector<1x32x64xbf16>
    %569 = vector.shape_cast %568 : vector<1x32x64xbf16> to vector<32x64xbf16>
    %c0_166 = arith.constant 0 : index
    %c0_167 = arith.constant 0 : index
    %c0_168 = arith.constant 0 : index
    %570 = vector.load %arg20[%c0_166, %c0_167, %c0_168] : memref<1x1x64xf32, #tpu.memory_space<vmem>>, vector<1x1x64xf32>
    %571 = vector.shape_cast %570 : vector<1x1x64xf32> to vector<1x64xf32>
    %c0_169 = arith.constant 0 : index
    %c0_170 = arith.constant 0 : index
    %c0_171 = arith.constant 0 : index
    %572 = vector.load %arg21[%c0_169, %c0_170, %c0_171] : memref<1x64x32xbf16, #tpu.memory_space<vmem>>, vector<1x64x32xbf16>
    %573 = vector.shape_cast %572 : vector<1x64x32xbf16> to vector<64x32xbf16>
    %c0_172 = arith.constant 0 : index
    %c0_173 = arith.constant 0 : index
    %c0_174 = arith.constant 0 : index
    %574 = vector.load %arg22[%c0_172, %c0_173, %c0_174] : memref<1x1x32xf32, #tpu.memory_space<vmem>>, vector<1x1x32xf32>
    %575 = vector.shape_cast %574 : vector<1x1x32xf32> to vector<1x32xf32>
    %576 = arith.truncf %567 : vector<16x32xf32> to vector<16x32xbf16>
    %cst_175 = arith.constant dense<0.000000e+00> : vector<16x64xf32>
    %577 = tpu.matmul %576, %569, %cst_175 {dimension_numbers = #tpu.dot_dimension_numbers<[1], [0], [0], [1], [0, 0, 1, 1], [], []>} : vector<16x32xbf16>, vector<32x64xbf16>, vector<16x64xf32> -> vector<16x64xf32>
    %578 = vector.broadcast %571 : vector<1x64xf32> to vector<16x64xf32>
    %579 = arith.addf %577, %578 : vector<16x64xf32>
    %cst_176 = arith.constant 0.000000e+00 : f32
    %580 = vector.broadcast %cst_176 : f32 to vector<16x64xf32>
    %581 = arith.maximumf %579, %580 : vector<16x64xf32>
    %582 = arith.truncf %581 : vector<16x64xf32> to vector<16x64xbf16>
    %cst_177 = arith.constant dense<0.000000e+00> : vector<16x32xf32>
    %583 = tpu.matmul %582, %573, %cst_177 {dimension_numbers = #tpu.dot_dimension_numbers<[1], [0], [0], [1], [0, 0, 1, 1], [], []>} : vector<16x64xbf16>, vector<64x32xbf16>, vector<16x32xf32> -> vector<16x32xf32>
    %584 = vector.broadcast %575 : vector<1x32xf32> to vector<16x32xf32>
    %585 = arith.addf %583, %584 : vector<16x32xf32>
    %586 = arith.addf %541, %585 : vector<16x32xf32>
    %c0_178 = arith.constant 0 : index
    %c0_179 = arith.constant 0 : index
    %587 = vector.load %arg28[%c0_178, %c0_179] : memref<16x32xf32, #tpu.memory_space<vmem>>, vector<16x32xf32>
    tpu.vector_store %arg28[%c0_178, %c0_179], %586 {strides = array<i32>} : memref<16x32xf32, #tpu.memory_space<vmem>>, vector<16x32xf32>,
    %c1_i32 = arith.constant 1 : i32
    %588 = arith.cmpi eq, %arg0, %c1_i32 : i32
    %589 = arith.extui %588 : i1 to i32
    %c0_i32_180 = arith.constant 0 : i32
    %590 = arith.cmpi ne, %589, %c0_i32_180 : i32
    scf.if %590 {
      %c0_181 = arith.constant 0 : index
      %c0_182 = arith.constant 0 : index
      %591 = vector.load %arg23[%c0_181, %c0_182] : memref<1x32xf32, #tpu.memory_space<vmem>>, vector<1x32xf32>
      %c0_183 = arith.constant 0 : index
      %c0_184 = arith.constant 0 : index
      %592 = vector.load %arg24[%c0_183, %c0_184] : memref<1x32xf32, #tpu.memory_space<vmem>>, vector<1x32xf32>
      %cst_185 = arith.constant dense<0.000000e+00> : vector<16xf32>
      %593 = vector.multi_reduction <add>, %586, %cst_185 [1] : vector<16x32xf32> to vector<16xf32>
      %594 = vector.shape_cast %593 : vector<16xf32> to vector<16x1xf32>
      %cst_186 = arith.constant 3.200000e+01 : f32
      %595 = vector.broadcast %cst_186 : f32 to vector<16x1xf32>
      %596 = arith.divf %594, %595 : vector<16x1xf32>
      %597 = vector.broadcast %596 : vector<16x1xf32> to vector<16x32xf32>
      %598 = arith.subf %586, %597 : vector<16x32xf32>
      %599 = arith.mulf %598, %598 : vector<16x32xf32>
      %cst_187 = arith.constant dense<0.000000e+00> : vector<16xf32>
      %600 = vector.multi_reduction <add>, %599, %cst_187 [1] : vector<16x32xf32> to vector<16xf32>
      %601 = vector.shape_cast %600 : vector<16xf32> to vector<16x1xf32>
      %cst_188 = arith.constant 3.200000e+01 : f32
      %602 = vector.broadcast %cst_188 : f32 to vector<16x1xf32>
      %603 = arith.divf %601, %602 : vector<16x1xf32>
      %604 = vector.broadcast %596 : vector<16x1xf32> to vector<16x32xf32>
      %605 = arith.subf %586, %604 : vector<16x32xf32>
      %cst_189 = arith.constant 9.99999974E-6 : f32
      %606 = vector.broadcast %cst_189 : f32 to vector<16x1xf32>
      %607 = arith.addf %603, %606 : vector<16x1xf32>
      %608 = math.rsqrt %607 : vector<16x1xf32>
      %609 = vector.broadcast %608 : vector<16x1xf32> to vector<16x32xf32>
      %610 = arith.mulf %605, %609 : vector<16x32xf32>
      %611 = vector.broadcast %591 : vector<1x32xf32> to vector<16x32xf32>
      %612 = arith.mulf %610, %611 : vector<16x32xf32>
      %613 = vector.broadcast %592 : vector<1x32xf32> to vector<16x32xf32>
      %614 = arith.addf %612, %613 : vector<16x32xf32>
      %615 = arith.truncf %614 : vector<16x32xf32> to vector<16x32xbf16>
      %c0_190 = arith.constant 0 : index
      %c0_191 = arith.constant 0 : index
      %616 = vector.load %arg25[%c0_190, %c0_191] : memref<32x128xbf16, #tpu.memory_space<vmem>>, vector<32x128xbf16>
      %cst_192 = arith.constant dense<0.000000e+00> : vector<16x128xf32>
      %617 = tpu.matmul %615, %616, %cst_192 {dimension_numbers = #tpu.dot_dimension_numbers<[1], [0], [0], [1], [0, 0, 1, 1], [], []>} : vector<16x32xbf16>, vector<32x128xbf16>, vector<16x128xf32> -> vector<16x128xf32>
      %c0_193 = arith.constant 0 : index
      %c0_194 = arith.constant 0 : index
      %618 = vector.load %arg26[%c0_193, %c0_194] : memref<1x128xf32, #tpu.memory_space<vmem>>, vector<1x128xf32>
      %619 = vector.broadcast %618 : vector<1x128xf32> to vector<16x128xf32>
      %620 = arith.addf %617, %619 : vector<16x128xf32>
      %c0_195 = arith.constant 0 : index
      %c0_196 = arith.constant 0 : index
      %621 = vector.load %arg27[%c0_195, %c0_196] : memref<16x128xf32, #tpu.memory_space<vmem>>, vector<16x128xf32>
      tpu.vector_store %arg27[%c0_195, %c0_196], %620 {strides = array<i32>} : memref<16x128xf32, #tpu.memory_space<vmem>>, vector<16x128xf32>,
    } else {
    }
    return
  }
  func.func @transform_0(%arg0: i32) -> (i32, i32) {
    %c0_i32 = arith.constant 0 : i32
    %c0_i32_0 = arith.constant 0 : i32
    %c0_i32_1 = arith.constant 0 : i32
    return %c0_i32, %c0_i32_0 : i32, i32
  }
  func.func @transform_1(%arg0: i32) -> (i32, i32) {
    %c0_i32 = arith.constant 0 : i32
    %c0_i32_0 = arith.constant 0 : i32
    %c0_i32_1 = arith.constant 0 : i32
    return %c0_i32, %c0_i32_0 : i32, i32
  }
  func.func @transform_2(%arg0: i32) -> (i32, i32, i32) {
    %c0_i32 = arith.constant 0 : i32
    %c0_i32_0 = arith.constant 0 : i32
    %c0_i32_1 = arith.constant 0 : i32
    return %arg0, %c0_i32, %c0_i32_0 : i32, i32, i32
  }
  func.func @transform_3(%arg0: i32) -> (i32, i32, i32) {
    %c0_i32 = arith.constant 0 : i32
    %c0_i32_0 = arith.constant 0 : i32
    %c0_i32_1 = arith.constant 0 : i32
    return %arg0, %c0_i32, %c0_i32_0 : i32, i32, i32
  }
  func.func @transform_4(%arg0: i32) -> (i32, i32, i32) {
    %c0_i32 = arith.constant 0 : i32
    %c0_i32_0 = arith.constant 0 : i32
    %c0_i32_1 = arith.constant 0 : i32
    return %arg0, %c0_i32, %c0_i32_0 : i32, i32, i32
  }
  func.func @transform_5(%arg0: i32) -> (i32, i32, i32) {
    %c0_i32 = arith.constant 0 : i32
    %c0_i32_0 = arith.constant 0 : i32
    %c0_i32_1 = arith.constant 0 : i32
    return %arg0, %c0_i32, %c0_i32_0 : i32, i32, i32
  }
  func.func @transform_6(%arg0: i32) -> (i32, i32, i32) {
    %c0_i32 = arith.constant 0 : i32
    %c0_i32_0 = arith.constant 0 : i32
    %c0_i32_1 = arith.constant 0 : i32
    return %arg0, %c0_i32, %c0_i32_0 : i32, i32, i32
  }
  func.func @transform_7(%arg0: i32) -> (i32, i32, i32) {
    %c0_i32 = arith.constant 0 : i32
    %c0_i32_0 = arith.constant 0 : i32
    %c0_i32_1 = arith.constant 0 : i32
    return %arg0, %c0_i32, %c0_i32_0 : i32, i32, i32
  }
  func.func @transform_8(%arg0: i32) -> (i32, i32, i32) {
    %c0_i32 = arith.constant 0 : i32
    %c0_i32_0 = arith.constant 0 : i32
    %c0_i32_1 = arith.constant 0 : i32
    return %arg0, %c0_i32, %c0_i32_0 : i32, i32, i32
  }
  func.func @transform_9(%arg0: i32) -> (i32, i32, i32) {
    %c0_i32 = arith.constant 0 : i32
    %c0_i32_0 = arith.constant 0 : i32
    %c0_i32_1 = arith.constant 0 : i32
    return %arg0, %c0_i32, %c0_i32_0 : i32, i32, i32
  }
  func.func @transform_10(%arg0: i32) -> (i32, i32, i32) {
    %c0_i32 = arith.constant 0 : i32
    %c0_i32_0 = arith.constant 0 : i32
    %c0_i32_1 = arith.constant 0 : i32
    return %arg0, %c0_i32, %c0_i32_0 : i32, i32, i32
  }
  func.func @transform_11(%arg0: i32) -> (i32, i32, i32) {
    %c0_i32 = arith.constant 0 : i32
    %c0_i32_0 = arith.constant 0 : i32
    %c0_i32_1 = arith.constant 0 : i32
    return %arg0, %c0_i32, %c0_i32_0 : i32, i32, i32
  }
  func.func @transform_12(%arg0: i32) -> (i32, i32, i32) {
    %c0_i32 = arith.constant 0 : i32
    %c0_i32_0 = arith.constant 0 : i32
    %c0_i32_1 = arith.constant 0 : i32
    return %arg0, %c0_i32, %c0_i32_0 : i32, i32, i32
  }
  func.func @transform_13(%arg0: i32) -> (i32, i32, i32) {
    %c0_i32 = arith.constant 0 : i32
    %c0_i32_0 = arith.constant 0 : i32
    %c0_i32_1 = arith.constant 0 : i32
    return %arg0, %c0_i32, %c0_i32_0 : i32, i32, i32
  }
  func.func @transform_14(%arg0: i32) -> (i32, i32, i32) {
    %c0_i32 = arith.constant 0 : i32
    %c0_i32_0 = arith.constant 0 : i32
    %c0_i32_1 = arith.constant 0 : i32
    return %arg0, %c0_i32, %c0_i32_0 : i32, i32, i32
  }
  func.func @transform_15(%arg0: i32) -> (i32, i32, i32) {
    %c0_i32 = arith.constant 0 : i32
    %c0_i32_0 = arith.constant 0 : i32
    %c0_i32_1 = arith.constant 0 : i32
    return %arg0, %c0_i32, %c0_i32_0 : i32, i32, i32
  }
  func.func @transform_16(%arg0: i32) -> (i32, i32, i32) {
    %c0_i32 = arith.constant 0 : i32
    %c0_i32_0 = arith.constant 0 : i32
    %c0_i32_1 = arith.constant 0 : i32
    return %arg0, %c0_i32, %c0_i32_0 : i32, i32, i32
  }
  func.func @transform_17(%arg0: i32) -> (i32, i32, i32) {
    %c0_i32 = arith.constant 0 : i32
    %c0_i32_0 = arith.constant 0 : i32
    %c0_i32_1 = arith.constant 0 : i32
    return %arg0, %c0_i32, %c0_i32_0 : i32, i32, i32
  }
  func.func @transform_18(%arg0: i32) -> (i32, i32, i32) {
    %c0_i32 = arith.constant 0 : i32
    %c0_i32_0 = arith.constant 0 : i32
    %c0_i32_1 = arith.constant 0 : i32
    return %arg0, %c0_i32, %c0_i32_0 : i32, i32, i32
  }
  func.func @transform_19(%arg0: i32) -> (i32, i32, i32) {
    %c0_i32 = arith.constant 0 : i32
    %c0_i32_0 = arith.constant 0 : i32
    %c0_i32_1 = arith.constant 0 : i32
    return %arg0, %c0_i32, %c0_i32_0 : i32, i32, i32
  }
  func.func @transform_20(%arg0: i32) -> (i32, i32, i32) {
    %c0_i32 = arith.constant 0 : i32
    %c0_i32_0 = arith.constant 0 : i32
    %c0_i32_1 = arith.constant 0 : i32
    return %arg0, %c0_i32, %c0_i32_0 : i32, i32, i32
  }
  func.func @transform_21(%arg0: i32) -> (i32, i32, i32) {
    %c0_i32 = arith.constant 0 : i32
    %c0_i32_0 = arith.constant 0 : i32
    %c0_i32_1 = arith.constant 0 : i32
    return %arg0, %c0_i32, %c0_i32_0 : i32, i32, i32
  }
  func.func @transform_22(%arg0: i32) -> (i32, i32) {
    %c0_i32 = arith.constant 0 : i32
    %c0_i32_0 = arith.constant 0 : i32
    %c0_i32_1 = arith.constant 0 : i32
    return %c0_i32, %c0_i32_0 : i32, i32
  }
  func.func @transform_23(%arg0: i32) -> (i32, i32) {
    %c0_i32 = arith.constant 0 : i32
    %c0_i32_0 = arith.constant 0 : i32
    %c0_i32_1 = arith.constant 0 : i32
    return %c0_i32, %c0_i32_0 : i32, i32
  }
  func.func @transform_24(%arg0: i32) -> (i32, i32) {
    %c0_i32 = arith.constant 0 : i32
    %c0_i32_0 = arith.constant 0 : i32
    %c0_i32_1 = arith.constant 0 : i32
    return %c0_i32, %c0_i32_0 : i32, i32
  }
  func.func @transform_25(%arg0: i32) -> (i32, i32) {
    %c0_i32 = arith.constant 0 : i32
    %c0_i32_0 = arith.constant 0 : i32
    %c0_i32_1 = arith.constant 0 : i32
    return %c0_i32, %c0_i32_0 : i32, i32
  }
  func.func @transform_26(%arg0: i32) -> (i32, i32) {
    %c0_i32 = arith.constant 0 : i32
    %c0_i32_0 = arith.constant 0 : i32
    %c0_i32_1 = arith.constant 0 : i32
    return %c0_i32, %c0_i32_0 : i32, i32
  }
}

</mosaic_0001>

<llo_original>
// kernel: decision_forward.2
$region0: #{decision_forward.2}
  #allocation0 [shape = 'u32[]', space=smem, size = 0x4, offset = 0x4, fixed_abs, tag = 'smem constant byte address 0x4 - core index']
  #allocation1 [shape = 'u32[72,128]{1,0:T(1,128)}', space=vmem, size = 0x9000, scoped, tag = 'internal scratch']
  #allocation2 [shape = 'f32[16,32]{1,0:T(8,128)}', space=vmem, size = 0x2000, scoped, tag = 'scratch operand']
  %s0 = inlined_call_operand.hbm [shape: f32[16,32], index: 0, kind: input, shape index: {}]
  %s1 = inlined_call_operand.vmem [shape: f32[2,1,32], index: 1, kind: input, shape index: {}]
  %s2 = inlined_call_operand.vmem [shape: f32[2,1,32], index: 2, kind: input, shape index: {}]
  %s3 = inlined_call_operand.vmem [shape: bf16[2,32,96], index: 3, kind: input, shape index: {}]
  %s4 = inlined_call_operand.vmem [shape: f32[2,1,96], index: 4, kind: input, shape index: {}]
  %s5 = inlined_call_operand.vmem [shape: bf16[2,32,32], index: 5, kind: input, shape index: {}]
  %s6 = inlined_call_operand.hbm [shape: f32[2,1,32], index: 6, kind: input, shape index: {}]
  %s7 = inlined_call_operand.hbm [shape: f32[2,1,32], index: 7, kind: input, shape index: {}]
  %s8 = inlined_call_operand.hbm [shape: f32[2,1,32], index: 8, kind: input, shape index: {}]
  %s9 = inlined_call_operand.hbm [shape: bf16[2,32,64], index: 9, kind: input, shape index: {}]
  %s10 = inlined_call_operand.hbm [shape: f32[2,1,64], index: 10, kind: input, shape index: {}]
  %s11 = inlined_call_operand.vmem [shape: bf16[2,64,32], index: 11, kind: input, shape index: {}]
  %s12 = inlined_call_operand.hbm [shape: f32[2,1,32], index: 12, kind: input, shape index: {}]
  %s13 = inlined_call_operand.hbm [shape: f32[1,32], index: 13, kind: input, shape index: {}]
  %s14 = inlined_call_operand.hbm [shape: f32[1,32], index: 14, kind: input, shape index: {}]
  %s15 = inlined_call_operand.vmem [shape: f32[16,32], index: 15, kind: output, shape index: {}]
  %s16 = sld [smem:[#allocation0]]
  $region137: #{decision_forward.2} parent=0
    _
  %s18 = ssub.s32 1, %s16
  %s19 = scalar_select 0, %s18, %s16
  $region1: #{decision_forward.2} parent=0
    #allocation3 [shape = 'u8[8192]{0}', space=vmem, size = 0x2000, scoped, tag = 'input window, operand 0, single buffered']
    #allocation4 [shape = 's32[2]{0}', space=sflag, size = 0x8, scoped, tag = 'scoped memory for decision_forward.2']
    #allocation5 [shape = 'u8[1024]{0}', space=vmem, size = 0x400, scoped, tag = 'input window, operand 6']
    #allocation6 [shape = 's32[2]{0}', space=sflag, size = 0x8, scoped, tag = 'scoped memory for decision_forward.2']
    #allocation7 [shape = 'u8[1024]{0}', space=vmem, size = 0x400, scoped, tag = 'input window, operand 7']
    #allocation8 [shape = 'u8[1024]{0}', space=vmem, size = 0x400, scoped, tag = 'input window, operand 8']
    #allocation9 [shape = 's32[2]{0}', space=sflag, size = 0x8, scoped, tag = 'scoped memory for decision_forward.2']
    #allocation10 [shape = 'u8[16384]{0}', space=vmem, size = 0x4000, scoped, tag = 'input window, operand 9']
    #allocation11 [shape = 'u8[1024]{0}', space=vmem, size = 0x400, scoped, tag = 'input window, operand 10']
    #allocation12 [shape = 's32[2]{0}', space=sflag, size = 0x8, scoped, tag = 'scoped memory for decision_forward.2']
    #allocation13 [shape = 'u8[1024]{0}', space=vmem, size = 0x400, scoped, tag = 'input window, operand 12']
    #allocation14 [shape = 'u8[512]{0}', space=vmem, size = 0x400, scoped, tag = 'input window, operand 13, single buffered']
    #allocation15 [shape = 's32[1]{0}', space=sflag, size = 0x4, scoped, tag = 'scoped memory for decision_forward.2']
    #allocation16 [shape = 'u8[512]{0}', space=vmem, size = 0x400, scoped, tag = 'input window, operand 14, single buffered']
    %20 = vsyncpa [#allocation4], 0
    %21 = vsyncpa [#allocation6], 0
    %s22 = scalar_lea.sflag [#allocation6], 1
    %23 = vsyncpa %s22, 0
    %24 = vsyncpa [#allocation9], 0
    %s25 = scalar_lea.sflag [#allocation9], 1
    %26 = vsyncpa %s25, 0
    %27 = vsyncpa [#allocation12], 0
    %s28 = scalar_lea.sflag [#allocation12], 1
    %29 = vsyncpa %s28, 0
    %30 = vsyncpa [#allocation15], 0
    loop: start=0, step=1, limit=4
    $region2: #{decision_forward.2} parent=1 // loop_pre_header
      _
    $region3: #{decision_forward.2} parent=1 // loop_header
      %s32 = sphi 0, %s36
      %p33 = scmp.ge.s32.totalorder %s32, 4
      %s40 = sphi 0, %s40
      %s42 = sphi 0, %s40
      %s43 = sphi 0, %s42
      %s57 = sphi 0, %s43
      %s63 = sphi 0, %s65
      %s66 = sphi 0, %s63
      %s67 = sphi 0, %s66
      %s83 = sphi 0, %s67
      %s89 = sphi 0, %s91
      %s92 = sphi 0, %s89
      %s93 = sphi 0, %s92
      %s109 = sphi 0, %s93
      %s115 = sphi 0, %s117
      %s118 = sphi 0, %s115
      %s119 = sphi 0, %s118
      %s135 = sphi 0, %s119
      %s141 = sphi 0, %s143
      %s144 = sphi 0, %s141
      %s145 = sphi 0, %s144
      %s161 = sphi 0, %s145
      %s167 = sphi 0, %s169
      %s170 = sphi 0, %s167
      %s171 = sphi 0, %s170
      %s187 = sphi 0, %s171
      %s193 = sphi 0, %s195
      %s196 = sphi 0, %s193
      %s197 = sphi 0, %s196
      %s213 = sphi 0, %s197
      %s219 = sphi 0, %s221
      %s222 = sphi 0, %s219
      %s223 = sphi 0, %s222
      %s239 = sphi 0, %s223
      %s245 = sphi 0, %s247
      %s248 = sphi 0, %s245
      %s249 = sphi 0, %s248
      %s265 = sphi 0, %s249
      %s271 = sphi 0, %s273
      %s274 = sphi 0, %s271
      %s275 = sphi 0, %s274
      %s291 = sphi 0, %s275
      %s297 = sphi 0, %s299
      %s300 = sphi 0, %s297
      %s301 = sphi 0, %s300
      %s317 = sphi 0, %s301
      %s323 = sphi 0, %s325
      %s326 = sphi 0, %s323
      %s327 = sphi 0, %s326
      %s343 = sphi 0, %s327
      %s349 = sphi 0, %s351
      %s352 = sphi 0, %s349
      %s353 = sphi 0, %s352
      %s369 = sphi 0, %s353
      %s373 = sphi 0, %s373
      %s375 = sphi 0, %s373
      %s376 = sphi 0, %s375
      %s390 = sphi 0, %s376
      %s394 = sphi 0, %s394
      %s396 = sphi 0, %s394
      %s397 = sphi 0, %s396
      %s411 = sphi 0, %s397
      %s415 = sphi 0, %s415
      %s417 = sphi 0, %s415
      %s418 = sphi 0, %s417
      %s432 = sphi 0, %s418
    $region4: #{decision_forward.2} parent=1 // loop_header_branch
      %35 = sbr.rel (%p33) target = $region8
    $region5: #{decision_forward.2} parent=1 // loop_body
      %s37 = ssub.s32 %s32, 1
      %s38 = ssub.s32 %s32, 2
      %s39 = sadd.s32 %s32, 1
      %s41 = sadd.s32 %s40, 1
      %p44 = scmp.eq.s32.totalorder %s32, 1
      %p45 = scmp.ne.s32.totalorder %s40, %s42
      %p46 = scmp.eq.s32.totalorder %s32, 0
      %p47 = por %p45, %p46
      %p48 = scmp.ne.s32.totalorder %s40, %s42
      %p49 = scmp.eq.s32.totalorder %s37, 1
      %p50 = por %p48, %p49
      %p51 = scmp.ne.s32.totalorder %s42, %s43
      %p52 = scmp.eq.s32.totalorder %s37, 0
      %p53 = por %p51, %p52
      %p54 = scmp.ne.s32.totalorder %s42, %s43
      %p55 = scmp.eq.s32.totalorder %s38, 1
      %p56 = por %p54, %p55
      %p58 = scmp.ne.s32.totalorder %s43, %s57
      %p59 = scmp.eq.s32.totalorder %s38, 0
      %p60 = por %p58, %p59
      %s61 = ssub.s32 %s32, %s39
      %p62 = scmp.eq.s32.totalorder %s61, 0
      %s64 = sadd.s32 %s63, 1
      %s65 = scalar_select %p62, %s63, %s64
      %p68 = pneg %p62
      %p69 = scmp.eq.s32.totalorder %s32, 1
      %p70 = por %p68, %p69
      %p71 = scmp.ne.s32.totalorder %s63, %s66
      %p72 = scmp.eq.s32.totalorder %s32, 0
      %p73 = por %p71, %p72
      %p74 = scmp.ne.s32.totalorder %s63, %s66
      %p75 = scmp.eq.s32.totalorder %s37, 1
      %p76 = por %p74, %p75
      %p77 = scmp.ne.s32.totalorder %s66, %s67
      %p78 = scmp.eq.s32.totalorder %s37, 0
      %p79 = por %p77, %p78
      %p80 = scmp.ne.s32.totalorder %s66, %s67
      %p81 = scmp.eq.s32.totalorder %s38, 1
      %p82 = por %p80, %p81
      %p84 = scmp.ne.s32.totalorder %s67, %s83
      %p85 = scmp.eq.s32.totalorder %s38, 0
      %p86 = por %p84, %p85
      %s87 = ssub.s32 %s32, %s39
      %p88 = scmp.eq.s32.totalorder %s87, 0
      %s90 = sadd.s32 %s89, 1
      %s91 = scalar_select %p88, %s89, %s90
      %p94 = pneg %p88
      %p95 = scmp.eq.s32.totalorder %s32, 1
      %p96 = por %p94, %p95
      %p97 = scmp.ne.s32.totalorder %s89, %s92
      %p98 = scmp.eq.s32.totalorder %s32, 0
      %p99 = por %p97, %p98
      %p100 = scmp.ne.s32.totalorder %s89, %s92
      %p101 = scmp.eq.s32.totalorder %s37, 1
      %p102 = por %p100, %p101
      %p103 = scmp.ne.s32.totalorder %s92, %s93
      %p104 = scmp.eq.s32.totalorder %s37, 0
      %p105 = por %p103, %p104
      %p106 = scmp.ne.s32.totalorder %s92, %s93
      %p107 = scmp.eq.s32.totalorder %s38, 1
      %p108 = por %p106, %p107
      %p110 = scmp.ne.s32.totalorder %s93, %s109
      %p111 = scmp.eq.s32.totalorder %s38, 0
      %p112 = por %p110, %p111
      %s113 = ssub.s32 %s32, %s39
      %p114 = scmp.eq.s32.totalorder %s113, 0
      %s116 = sadd.s32 %s115, 1
      %s117 = scalar_select %p114, %s115, %s116
      %p120 = pneg %p114
      %p121 = scmp.eq.s32.totalorder %s32, 1
      %p122 = por %p120, %p121
      %p123 = scmp.ne.s32.totalorder %s115, %s118
      %p124 = scmp.eq.s32.totalorder %s32, 0
      %p125 = por %p123, %p124
      %p126 = scmp.ne.s32.totalorder %s115, %s118
      %p127 = scmp.eq.s32.totalorder %s37, 1
      %p128 = por %p126, %p127
      %p129 = scmp.ne.s32.totalorder %s118, %s119
      %p130 = scmp.eq.s32.totalorder %s37, 0
      %p131 = por %p129, %p130
      %p132 = scmp.ne.s32.totalorder %s118, %s119
      %p133 = scmp.eq.s32.totalorder %s38, 1
      %p134 = por %p132, %p133
      %p136 = scmp.ne.s32.totalorder %s119, %s135
      %p137 = scmp.eq.s32.totalorder %s38, 0
      %p138 = por %p136, %p137
      %s139 = ssub.s32 %s32, %s39
      %p140 = scmp.eq.s32.totalorder %s139, 0
      %s142 = sadd.s32 %s141, 1
      %s143 = scalar_select %p140, %s141, %s142
      %p146 = pneg %p140
      %p147 = scmp.eq.s32.totalorder %s32, 1
      %p148 = por %p146, %p147
      %p149 = scmp.ne.s32.totalorder %s141, %s144
      %p150 = scmp.eq.s32.totalorder %s32, 0
      %p151 = por %p149, %p150
      %p152 = scmp.ne.s32.totalorder %s141, %s144
      %p153 = scmp.eq.s32.totalorder %s37, 1
      %p154 = por %p152, %p153
      %p155 = scmp.ne.s32.totalorder %s144, %s145
      %p156 = scmp.eq.s32.totalorder %s37, 0
      %p157 = por %p155, %p156
      %p158 = scmp.ne.s32.totalorder %s144, %s145
      %p159 = scmp.eq.s32.totalorder %s38, 1
      %p160 = por %p158, %p159
      %p162 = scmp.ne.s32.totalorder %s145, %s161
      %p163 = scmp.eq.s32.totalorder %s38, 0
      %p164 = por %p162, %p163
      %s165 = ssub.s32 %s32, %s39
      %p166 = scmp.eq.s32.totalorder %s165, 0
      %s168 = sadd.s32 %s167, 1
      %s169 = scalar_select %p166, %s167, %s168
      %p172 = pneg %p166
      %p173 = scmp.eq.s32.totalorder %s32, 1
      %p174 = por %p172, %p173
      %p175 = scmp.ne.s32.totalorder %s167, %s170
      %p176 = scmp.eq.s32.totalorder %s32, 0
      %p177 = por %p175, %p176
      %p178 = scmp.ne.s32.totalorder %s167, %s170
      %p179 = scmp.eq.s32.totalorder %s37, 1
      %p180 = por %p178, %p179
      %p181 = scmp.ne.s32.totalorder %s170, %s171
      %p182 = scmp.eq.s32.totalorder %s37, 0
      %p183 = por %p181, %p182
      %p184 = scmp.ne.s32.totalorder %s170, %s171
      %p185 = scmp.eq.s32.totalorder %s38, 1
      %p186 = por %p184, %p185
      %p188 = scmp.ne.s32.totalorder %s171, %s187
      %p189 = scmp.eq.s32.totalorder %s38, 0
      %p190 = por %p188, %p189
      %s191 = ssub.s32 %s32, %s39
      %p192 = scmp.eq.s32.totalorder %s191, 0
      %s194 = sadd.s32 %s193, 1
      %s195 = scalar_select %p192, %s193, %s194
      %p198 = pneg %p192
      %p199 = scmp.eq.s32.totalorder %s32, 1
      %p200 = por %p198, %p199
      %p201 = scmp.ne.s32.totalorder %s193, %s196
      %p202 = scmp.eq.s32.totalorder %s32, 0
      %p203 = por %p201, %p202
      %p204 = scmp.ne.s32.totalorder %s193, %s196
      %p205 = scmp.eq.s32.totalorder %s37, 1
      %p206 = por %p204, %p205
      %p207 = scmp.ne.s32.totalorder %s196, %s197
      %p208 = scmp.eq.s32.totalorder %s37, 0
      %p209 = por %p207, %p208
      %p210 = scmp.ne.s32.totalorder %s196, %s197
      %p211 = scmp.eq.s32.totalorder %s38, 1
      %p212 = por %p210, %p211
      %p214 = scmp.ne.s32.totalorder %s197, %s213
      %p215 = scmp.eq.s32.totalorder %s38, 0
      %p216 = por %p214, %p215
      %s217 = ssub.s32 %s32, %s39
      %p218 = scmp.eq.s32.totalorder %s217, 0
      %s220 = sadd.s32 %s219, 1
      %s221 = scalar_select %p218, %s219, %s220
      %p224 = pneg %p218
      %p225 = scmp.eq.s32.totalorder %s32, 1
      %p226 = por %p224, %p225
      %p227 = scmp.ne.s32.totalorder %s219, %s222
      %p228 = scmp.eq.s32.totalorder %s32, 0
      %p229 = por %p227, %p228
      %p230 = scmp.ne.s32.totalorder %s219, %s222
      %p231 = scmp.eq.s32.totalorder %s37, 1
      %p232 = por %p230, %p231
      %p233 = scmp.ne.s32.totalorder %s222, %s223
      %p234 = scmp.eq.s32.totalorder %s37, 0
      %p235 = por %p233, %p234
      %p236 = scmp.ne.s32.totalorder %s222, %s223
      %p237 = scmp.eq.s32.totalorder %s38, 1
      %p238 = por %p236, %p237
      %p240 = scmp.ne.s32.totalorder %s223, %s239
      %p241 = scmp.eq.s32.totalorder %s38, 0
      %p242 = por %p240, %p241
      %s243 = ssub.s32 %s32, %s39
      %p244 = scmp.eq.s32.totalorder %s243, 0
      %s246 = sadd.s32 %s245, 1
      %s247 = scalar_select %p244, %s245, %s246
      %p250 = pneg %p244
      %p251 = scmp.eq.s32.totalorder %s32, 1
      %p252 = por %p250, %p251
      %p253 = scmp.ne.s32.totalorder %s245, %s248
      %p254 = scmp.eq.s32.totalorder %s32, 0
      %p255 = por %p253, %p254
      %p256 = scmp.ne.s32.totalorder %s245, %s248
      %p257 = scmp.eq.s32.totalorder %s37, 1
      %p258 = por %p256, %p257
      %p259 = scmp.ne.s32.totalorder %s248, %s249
      %p260 = scmp.eq.s32.totalorder %s37, 0
      %p261 = por %p259, %p260
      %p262 = scmp.ne.s32.totalorder %s248, %s249
      %p263 = scmp.eq.s32.totalorder %s38, 1
      %p264 = por %p262, %p263
      %p266 = scmp.ne.s32.totalorder %s249, %s265
      %p267 = scmp.eq.s32.totalorder %s38, 0
      %p268 = por %p266, %p267
      %s269 = ssub.s32 %s32, %s39
      %p270 = scmp.eq.s32.totalorder %s269, 0
      %s272 = sadd.s32 %s271, 1
      %s273 = scalar_select %p270, %s271, %s272
      %p276 = pneg %p270
      %p277 = scmp.eq.s32.totalorder %s32, 1
      %p278 = por %p276, %p277
      %p279 = scmp.ne.s32.totalorder %s271, %s274
      %p280 = scmp.eq.s32.totalorder %s32, 0
      %p281 = por %p279, %p280
      %p282 = scmp.ne.s32.totalorder %s271, %s274
      %p283 = scmp.eq.s32.totalorder %s37, 1
      %p284 = por %p282, %p283
      %p285 = scmp.ne.s32.totalorder %s274, %s275
      %p286 = scmp.eq.s32.totalorder %s37, 0
      %p287 = por %p285, %p286
      %p288 = scmp.ne.s32.totalorder %s274, %s275
      %p289 = scmp.eq.s32.totalorder %s38, 1
      %p290 = por %p288, %p289
      %p292 = scmp.ne.s32.totalorder %s275, %s291
      %p293 = scmp.eq.s32.totalorder %s38, 0
      %p294 = por %p292, %p293
      %s295 = ssub.s32 %s32, %s39
      %p296 = scmp.eq.s32.totalorder %s295, 0
      %s298 = sadd.s32 %s297, 1
      %s299 = scalar_select %p296, %s297, %s298
      %p302 = pneg %p296
      %p303 = scmp.eq.s32.totalorder %s32, 1
      %p304 = por %p302, %p303
      %p305 = scmp.ne.s32.totalorder %s297, %s300
      %p306 = scmp.eq.s32.totalorder %s32, 0
      %p307 = por %p305, %p306
      %p308 = scmp.ne.s32.totalorder %s297, %s300
      %p309 = scmp.eq.s32.totalorder %s37, 1
      %p310 = por %p308, %p309
      %p311 = scmp.ne.s32.totalorder %s300, %s301
      %p312 = scmp.eq.s32.totalorder %s37, 0
      %p313 = por %p311, %p312
      %p314 = scmp.ne.s32.totalorder %s300, %s301
      %p315 = scmp.eq.s32.totalorder %s38, 1
      %p316 = por %p314, %p315
      %p318 = scmp.ne.s32.totalorder %s301, %s317
      %p319 = scmp.eq.s32.totalorder %s38, 0
      %p320 = por %p318, %p319
      %s321 = ssub.s32 %s32, %s39
      %p322 = scmp.eq.s32.totalorder %s321, 0
      %s324 = sadd.s32 %s323, 1
      %s325 = scalar_select %p322, %s323, %s324
      %p328 = pneg %p322
      %p329 = scmp.eq.s32.totalorder %s32, 1
      %p330 = por %p328, %p329
      %p331 = scmp.ne.s32.totalorder %s323, %s326
      %p332 = scmp.eq.s32.totalorder %s32, 0
      %p333 = por %p331, %p332
      %p334 = scmp.ne.s32.totalorder %s323, %s326
      %p335 = scmp.eq.s32.totalorder %s37, 1
      %p336 = por %p334, %p335
      %p337 = scmp.ne.s32.totalorder %s326, %s327
      %p338 = scmp.eq.s32.totalorder %s37, 0
      %p339 = por %p337, %p338
      %p340 = scmp.ne.s32.totalorder %s326, %s327
      %p341 = scmp.eq.s32.totalorder %s38, 1
      %p342 = por %p340, %p341
      %p344 = scmp.ne.s32.totalorder %s327, %s343
      %p345 = scmp.eq.s32.totalorder %s38, 0
      %p346 = por %p344, %p345
      %s347 = ssub.s32 %s32, %s39
      %p348 = scmp.eq.s32.totalorder %s347, 0
      %s350 = sadd.s32 %s349, 1
      %s351 = scalar_select %p348, %s349, %s350
      %p354 = pneg %p348
      %p355 = scmp.eq.s32.totalorder %s32, 1
      %p356 = por %p354, %p355
      %p357 = scmp.ne.s32.totalorder %s349, %s352
      %p358 = scmp.eq.s32.totalorder %s32, 0
      %p359 = por %p357, %p358
      %p360 = scmp.ne.s32.totalorder %s349, %s352
      %p361 = scmp.eq.s32.totalorder %s37, 1
      %p362 = por %p360, %p361
      %p363 = scmp.ne.s32.totalorder %s352, %s353
      %p364 = scmp.eq.s32.totalorder %s37, 0
      %p365 = por %p363, %p364
      %p366 = scmp.ne.s32.totalorder %s352, %s353
      %p367 = scmp.eq.s32.totalorder %s38, 1
      %p368 = por %p366, %p367
      %p370 = scmp.ne.s32.totalorder %s353, %s369
      %p371 = scmp.eq.s32.totalorder %s38, 0
      %p372 = por %p370, %p371
      %s374 = sadd.s32 %s373, 1
      %p377 = scmp.eq.s32.totalorder %s32, 1
      %p378 = scmp.ne.s32.totalorder %s373, %s375
      %p379 = scmp.eq.s32.totalorder %s32, 0
      %p380 = por %p378, %p379
      %p381 = scmp.ne.s32.totalorder %s373, %s375
      %p382 = scmp.eq.s32.totalorder %s37, 1
      %p383 = por %p381, %p382
      %p384 = scmp.ne.s32.totalorder %s375, %s376
      %p385 = scmp.eq.s32.totalorder %s37, 0
      %p386 = por %p384, %p385
      %p387 = scmp.ne.s32.totalorder %s375, %s376
      %p388 = scmp.eq.s32.totalorder %s38, 1
      %p389 = por %p387, %p388
      %p391 = scmp.ne.s32.totalorder %s376, %s390
      %p392 = scmp.eq.s32.totalorder %s38, 0
      %p393 = por %p391, %p392
      %s395 = sadd.s32 %s394, 1
      %p398 = scmp.eq.s32.totalorder %s32, 1
      %p399 = scmp.ne.s32.totalorder %s394, %s396
      %p400 = scmp.eq.s32.totalorder %s32, 0
      %p401 = por %p399, %p400
      %p402 = scmp.ne.s32.totalorder %s394, %s396
      %p403 = scmp.eq.s32.totalorder %s37, 1
      %p404 = por %p402, %p403
      %p405 = scmp.ne.s32.totalorder %s396, %s397
      %p406 = scmp.eq.s32.totalorder %s37, 0
      %p407 = por %p405, %p406
      %p408 = scmp.ne.s32.totalorder %s396, %s397
      %p409 = scmp.eq.s32.totalorder %s38, 1
      %p410 = por %p408, %p409
      %p412 = scmp.ne.s32.totalorder %s397, %s411
      %p413 = scmp.eq.s32.totalorder %s38, 0
      %p414 = por %p412, %p413
      %s416 = sadd.s32 %s415, 1
      %p419 = scmp.eq.s32.totalorder %s32, 1
      %p420 = scmp.ne.s32.totalorder %s415, %s417
      %p421 = scmp.eq.s32.totalorder %s32, 0
      %p422 = por %p420, %p421
      %p423 = scmp.ne.s32.totalorder %s415, %s417
      %p424 = scmp.eq.s32.totalorder %s37, 1
      %p425 = por %p423, %p424
      %p426 = scmp.ne.s32.totalorder %s417, %s418
      %p427 = scmp.eq.s32.totalorder %s37, 0
      %p428 = por %p426, %p427
      %p429 = scmp.ne.s32.totalorder %s417, %s418
      %p430 = scmp.eq.s32.totalorder %s38, 1
      %p431 = por %p429, %p430
      %p433 = scmp.ne.s32.totalorder %s418, %s432
      %p434 = scmp.eq.s32.totalorder %s38, 0
      %p435 = por %p433, %p434
      %p436 = scmp.le.s32.totalorder 1, %s32
      %p437 = scmp.lt.s32.totalorder %s32, 3
      %p438 = pnand %p436, %p437
      %p439 = pneg %p438
      // Predicated region
      $region9: #{decision_forward.2} parent=5 // pred_check
        _
      $region10: #{decision_forward.2} parent=5 // pred_check_branch
        %441 = sbr.rel (%p438) target = $region12
      $region11: #{decision_forward.2} parent=5 // pred_region
        %s442 = ssub.s32 %s32, 1
        // Predicated region
        $region13: #{decision_forward.2} parent=11 // pred_check
          %p443 = pneg %p53
        $region14: #{decision_forward.2} parent=11 // pred_check_branch
          %445 = sbr.rel (%p443) target = $region16
        $region15: #{decision_forward.2} parent=11 // pred_region
          %447 = vsyncadd [#allocation4], 0
          %s448 = sshll.u32 %s0, 4
          %s449 = int_to_ptr.hbm [resolvable:$true] %s448
          %s450 = sshll.u32 [#allocation3], 4
          %s451 = int_to_ptr.vmem [resolvable:$true] %s450
          %456 = dma.hbm_to_vmem [thread:$0]  %s449, 256, %s451, [#allocation4], 128, 128, 8
        $region16: #{decision_forward.2} parent=11 // pred_fallthru
          _
        // Predicated region
        $region17: #{decision_forward.2} parent=11 // pred_check
          %p457 = pneg %p386
        $region18: #{decision_forward.2} parent=11 // pred_check_branch
          %459 = sbr.rel (%p457) target = $region20
        $region19: #{decision_forward.2} parent=11 // pred_region
          %461 = vsyncadd [#allocation15], 0
          %s463 = sshll.u32 %s13, 4
          %s464 = int_to_ptr.hbm [resolvable:$true] %s463
          %s465 = sshll.u32 [#allocation14], 4
          %s466 = int_to_ptr.vmem [resolvable:$true] %s465
          %468 = dma.hbm_to_vmem [thread:$0]  %s464, 16, %s466, [#allocation15]
        $region20: #{decision_forward.2} parent=11 // pred_fallthru
          _
        // Predicated region
        $region21: #{decision_forward.2} parent=11 // pred_check
          %p469 = pneg %p407
        $region22: #{decision_forward.2} parent=11 // pred_check_branch
          %471 = sbr.rel (%p469) target = $region24
        $region23: #{decision_forward.2} parent=11 // pred_region
          %473 = vsyncadd [#allocation15], 0
          %s475 = sshll.u32 %s14, 4
          %s476 = int_to_ptr.hbm [resolvable:$true] %s475
          %s477 = sshll.u32 [#allocation16], 4
          %s478 = int_to_ptr.vmem [resolvable:$true] %s477
          %480 = dma.hbm_to_vmem [thread:$0]  %s476, 16, %s478, [#allocation15]
        $region24: #{decision_forward.2} parent=11 // pred_fallthru
          _
      $region12: #{decision_forward.2} parent=5 // pred_fallthru
        _
      %p481 = scmp.lt.s32.totalorder %s32, 2
      // Predicated region
      $region25: #{decision_forward.2} parent=5 // pred_check
        %p482 = pneg %p481
      $region26: #{decision_forward.2} parent=5 // pred_check_branch
        %484 = sbr.rel (%p482) target = $region28
      $region27: #{decision_forward.2} parent=5 // pred_region
        // Predicated region
        $region29: #{decision_forward.2} parent=27 // pred_check
          %p485 = pneg %p73
        $region30: #{decision_forward.2} parent=27 // pred_check_branch
          %487 = sbr.rel (%p485) target = $region32
        $region31: #{decision_forward.2} parent=27 // pred_region
          %p488 = scmp.lt.s32.totalorder %s32, 1
          %s489 = scalar_select %p488, %s32, 1
          %s490 = scalar_lea.vmem %s1, %s489
        $region32: #{decision_forward.2} parent=27 // pred_fallthru
          _
        // Predicated region
        $region33: #{decision_forward.2} parent=27 // pred_check
          %p491 = pneg %p99
        $region34: #{decision_forward.2} parent=27 // pred_check_branch
          %493 = sbr.rel (%p491) target = $region36
        $region35: #{decision_forward.2} parent=27 // pred_region
          %p494 = scmp.lt.s32.totalorder %s32, 1
          %s495 = scalar_select %p494, %s32, 1
          %s496 = scalar_lea.vmem %s2, %s495
        $region36: #{decision_forward.2} parent=27 // pred_fallthru
          _
        // Predicated region
        $region37: #{decision_forward.2} parent=27 // pred_check
          %p497 = pneg %p125
        $region38: #{decision_forward.2} parent=27 // pred_check_branch
          %499 = sbr.rel (%p497) target = $region40
        $region39: #{decision_forward.2} parent=27 // pred_region
          %p500 = scmp.lt.s32.totalorder %s32, 1
          %s501 = scalar_select %p500, %s32, 1
          %s502 = smul.addr %s501, 4
          %s503 = smul.addr %s502, 4
          %s504 = scalar_lea.vmem %s3, %s503
        $region40: #{decision_forward.2} parent=27 // pred_fallthru
          _
        // Predicated region
        $region41: #{decision_forward.2} parent=27 // pred_check
          %p505 = pneg %p151
        $region42: #{decision_forward.2} parent=27 // pred_check_branch
          %507 = sbr.rel (%p505) target = $region44
        $region43: #{decision_forward.2} parent=27 // pred_region
          %p508 = scmp.lt.s32.totalorder %s32, 1
          %s509 = scalar_select %p508, %s32, 1
          %s510 = scalar_lea.vmem %s4, %s509
        $region44: #{decision_forward.2} parent=27 // pred_fallthru
          _
        // Predicated region
        $region45: #{decision_forward.2} parent=27 // pred_check
          %p511 = pneg %p177
        $region46: #{decision_forward.2} parent=27 // pred_check_branch
          %513 = sbr.rel (%p511) target = $region48
        $region47: #{decision_forward.2} parent=27 // pred_region
          %p514 = scmp.lt.s32.totalorder %s32, 1
          %s515 = scalar_select %p514, %s32, 1
          %s516 = smul.addr %s515, 4
          %s517 = smul.addr %s516, 4
          %s518 = scalar_lea.vmem %s5, %s517
        $region48: #{decision_forward.2} parent=27 // pred_fallthru
          _
        // Predicated region
        $region49: #{decision_forward.2} parent=27 // pred_check
          %p519 = pneg %p203
        $region50: #{decision_forward.2} parent=27 // pred_check_branch
          %521 = sbr.rel (%p519) target = $region52
        $region51: #{decision_forward.2} parent=27 // pred_region
          %s522 = sand.u32 %s32, 1
          %s523 = scalar_lea.sflag [#allocation6], %s522
          %s524 = sand.u32 %s193, 1
          %s525 = scalar_lea.vmem [#allocation5], %s524
          %527 = vsyncadd %s523, 0
          %s528 = scalar_lea.hbm %s6, %s32
          %s530 = sshll.u32 %s528, 4
          %s531 = int_to_ptr.hbm [resolvable:$true] %s530
          %s532 = sshll.u32 %s525, 4
          %s533 = int_to_ptr.vmem [resolvable:$true] %s532
          %535 = dma.hbm_to_vmem [thread:$0]  %s531, 16, %s533, %s523
        $region52: #{decision_forward.2} parent=27 // pred_fallthru
          _
        // Predicated region
        $region53: #{decision_forward.2} parent=27 // pred_check
          %p536 = pneg %p229
        $region54: #{decision_forward.2} parent=27 // pred_check_branch
          %538 = sbr.rel (%p536) target = $region56
        $region55: #{decision_forward.2} parent=27 // pred_region
          %s539 = sand.u32 %s32, 1
          %s540 = scalar_lea.sflag [#allocation6], %s539
          %s541 = sand.u32 %s219, 1
          %s542 = scalar_lea.vmem [#allocation7], %s541
          %544 = vsyncadd %s540, 0
          %s545 = scalar_lea.hbm %s7, %s32
          %s547 = sshll.u32 %s545, 4
          %s548 = int_to_ptr.hbm [resolvable:$true] %s547
          %s549 = sshll.u32 %s542, 4
          %s550 = int_to_ptr.vmem [resolvable:$true] %s549
          %552 = dma.hbm_to_vmem [thread:$0]  %s548, 16, %s550, %s540
        $region56: #{decision_forward.2} parent=27 // pred_fallthru
          _
        // Predicated region
        $region57: #{decision_forward.2} parent=27 // pred_check
          %p553 = pneg %p255
        $region58: #{decision_forward.2} parent=27 // pred_check_branch
          %555 = sbr.rel (%p553) target = $region60
        $region59: #{decision_forward.2} parent=27 // pred_region
          %s556 = sand.u32 %s32, 1
          %s557 = scalar_lea.sflag [#allocation9], %s556
          %s558 = sand.u32 %s245, 1
          %s559 = scalar_lea.vmem [#allocation8], %s558
          %561 = vsyncadd %s557, 0
          %s562 = scalar_lea.hbm %s8, %s32
          %s564 = sshll.u32 %s562, 4
          %s565 = int_to_ptr.hbm [resolvable:$true] %s564
          %s566 = sshll.u32 %s559, 4
          %s567 = int_to_ptr.vmem [resolvable:$true] %s566
          %569 = dma.hbm_to_vmem [thread:$0]  %s565, 16, %s567, %s557
        $region60: #{decision_forward.2} parent=27 // pred_fallthru
          _
        // Predicated region
        $region61: #{decision_forward.2} parent=27 // pred_check
          %p570 = pneg %p281
        $region62: #{decision_forward.2} parent=27 // pred_check_branch
          %572 = sbr.rel (%p570) target = $region64
        $region63: #{decision_forward.2} parent=27 // pred_region
          %s573 = sand.u32 %s32, 1
          %s574 = scalar_lea.sflag [#allocation9], %s573
          %s575 = sand.u32 %s271, 1
          %s576 = smul.addr %s575, 16
          %s577 = scalar_lea.vmem [#allocation10], %s576
          %579 = vsyncadd %s574, 0
          %s580 = smul.addr %s32, 4
          %s581 = smul.addr %s580, 4
          %s582 = scalar_lea.hbm %s9, %s581
          %s583 = sshll.u32 %s582, 4
          %s584 = int_to_ptr.hbm [resolvable:$true] %s583
          %s585 = sshll.u32 %s577, 4
          %s586 = int_to_ptr.vmem [resolvable:$true] %s585
          %591 = dma.hbm_to_vmem [thread:$0]  %s584, 256, %s586, %s574, 64, 64, 4
        $region64: #{decision_forward.2} parent=27 // pred_fallthru
          _
        // Predicated region
        $region65: #{decision_forward.2} parent=27 // pred_check
          %p592 = pneg %p307
        $region66: #{decision_forward.2} parent=27 // pred_check_branch
          %594 = sbr.rel (%p592) target = $region68
        $region67: #{decision_forward.2} parent=27 // pred_region
          %s595 = sand.u32 %s32, 1
          %s596 = scalar_lea.sflag [#allocation12], %s595
          %s597 = sand.u32 %s297, 1
          %s598 = scalar_lea.vmem [#allocation11], %s597
          %600 = vsyncadd %s596, 0
          %s601 = scalar_lea.hbm %s10, %s32
          %s603 = sshll.u32 %s601, 4
          %s604 = int_to_ptr.hbm [resolvable:$true] %s603
          %s605 = sshll.u32 %s598, 4
          %s606 = int_to_ptr.vmem [resolvable:$true] %s605
          %608 = dma.hbm_to_vmem [thread:$0]  %s604, 16, %s606, %s596
        $region68: #{decision_forward.2} parent=27 // pred_fallthru
          _
        // Predicated region
        $region69: #{decision_forward.2} parent=27 // pred_check
          %p609 = pneg %p333
        $region70: #{decision_forward.2} parent=27 // pred_check_branch
          %611 = sbr.rel (%p609) target = $region72
        $region71: #{decision_forward.2} parent=27 // pred_region
          %p612 = scmp.lt.s32.totalorder %s32, 1
          %s613 = scalar_select %p612, %s32, 1
          %s614 = smul.addr %s613, 8
          %s615 = smul.addr %s614, 4
          %s616 = scalar_lea.vmem %s11, %s615
        $region72: #{decision_forward.2} parent=27 // pred_fallthru
          _
        // Predicated region
        $region73: #{decision_forward.2} parent=27 // pred_check
          %p617 = pneg %p359
        $region74: #{decision_forward.2} parent=27 // pred_check_branch
          %619 = sbr.rel (%p617) target = $region76
        $region75: #{decision_forward.2} parent=27 // pred_region
          %s620 = sand.u32 %s32, 1
          %s621 = scalar_lea.sflag [#allocation12], %s620
          %s622 = sand.u32 %s349, 1
          %s623 = scalar_lea.vmem [#allocation13], %s622
          %625 = vsyncadd %s621, 0
          %s626 = scalar_lea.hbm %s12, %s32
          %s628 = sshll.u32 %s626, 4
          %s629 = int_to_ptr.hbm [resolvable:$true] %s628
          %s630 = sshll.u32 %s623, 4
          %s631 = int_to_ptr.vmem [resolvable:$true] %s630
          %633 = dma.hbm_to_vmem [thread:$0]  %s629, 16, %s631, %s621
        $region76: #{decision_forward.2} parent=27 // pred_fallthru
          _
      $region28: #{decision_forward.2} parent=5 // pred_fallthru
        _
      %p634 = scmp.le.s32.totalorder 1, %s32
      %p635 = scmp.lt.s32.totalorder %s32, 3
      %p636 = pnand %p634, %p635
      %p637 = pneg %p636
      // Predicated region
      $region77: #{decision_forward.2} parent=5 // pred_check
        _
      $region78: #{decision_forward.2} parent=5 // pred_check_branch
        %639 = sbr.rel (%p636) target = $region80
      $region79: #{decision_forward.2} parent=5 // pred_region
        %s640 = ssub.s32 %s32, 1
        // Predicated region
        $region81: #{decision_forward.2} parent=79 // pred_check
          %p641 = pneg %p53
        $region82: #{decision_forward.2} parent=79 // pred_check_branch
          %643 = sbr.rel (%p641) target = $region84
        $region83: #{decision_forward.2} parent=79 // pred_region
          %645 = dma.done [#allocation4], 256
        $region84: #{decision_forward.2} parent=79 // pred_fallthru
          _
        %s646 = sand.u32 %s37, 1
        %s647 = scalar_lea.sflag [#allocation6], %s646
        %s648 = sand.u32 %s196, 1
        %s649 = scalar_lea.vmem [#allocation5], %s648
        // Predicated region
        $region85: #{decision_forward.2} parent=79 // pred_check
          %p650 = pneg %p209
        $region86: #{decision_forward.2} parent=79 // pred_check_branch
          %652 = sbr.rel (%p650) target = $region88
        $region87: #{decision_forward.2} parent=79 // pred_region
          %654 = dma.done %s647, 16
        $region88: #{decision_forward.2} parent=79 // pred_fallthru
          _
        %s655 = sand.u32 %s37, 1
        %s656 = scalar_lea.sflag [#allocation6], %s655
        %s657 = sand.u32 %s222, 1
        %s658 = scalar_lea.vmem [#allocation7], %s657
        // Predicated region
        $region89: #{decision_forward.2} parent=79 // pred_check
          %p659 = pneg %p235
        $region90: #{decision_forward.2} parent=79 // pred_check_branch
          %661 = sbr.rel (%p659) target = $region92
        $region91: #{decision_forward.2} parent=79 // pred_region
          %663 = dma.done %s656, 16
        $region92: #{decision_forward.2} parent=79 // pred_fallthru
          _
        %s664 = sand.u32 %s37, 1
        %s665 = scalar_lea.sflag [#allocation9], %s664
        %s666 = sand.u32 %s248, 1
        %s667 = scalar_lea.vmem [#allocation8], %s666
        // Predicated region
        $region93: #{decision_forward.2} parent=79 // pred_check
          %p668 = pneg %p261
        $region94: #{decision_forward.2} parent=79 // pred_check_branch
          %670 = sbr.rel (%p668) target = $region96
        $region95: #{decision_forward.2} parent=79 // pred_region
          %672 = dma.done %s665, 16
        $region96: #{decision_forward.2} parent=79 // pred_fallthru
          _
        %s673 = sand.u32 %s37, 1
        %s674 = scalar_lea.sflag [#allocation9], %s673
        %s675 = sand.u32 %s274, 1
        %s676 = smul.addr %s675, 16
        %s677 = scalar_lea.vmem [#allocation10], %s676
        // Predicated region
        $region97: #{decision_forward.2} parent=79 // pred_check
          %p678 = pneg %p287
        $region98: #{decision_forward.2} parent=79 // pred_check_branch
          %680 = sbr.rel (%p678) target = $region100
        $region99: #{decision_forward.2} parent=79 // pred_region
          %682 = dma.done %s674, 256
        $region100: #{decision_forward.2} parent=79 // pred_fallthru
          _
        %s683 = sand.u32 %s37, 1
        %s684 = scalar_lea.sflag [#allocation12], %s683
        %s685 = sand.u32 %s300, 1
        %s686 = scalar_lea.vmem [#allocation11], %s685
        // Predicated region
        $region101: #{decision_forward.2} parent=79 // pred_check
          %p687 = pneg %p313
        $region102: #{decision_forward.2} parent=79 // pred_check_branch
          %689 = sbr.rel (%p687) target = $region104
        $region103: #{decision_forward.2} parent=79 // pred_region
          %691 = dma.done %s684, 16
        $region104: #{decision_forward.2} parent=79 // pred_fallthru
          _
        %s692 = sand.u32 %s37, 1
        %s693 = scalar_lea.sflag [#allocation12], %s692
        %s694 = sand.u32 %s352, 1
        %s695 = scalar_lea.vmem [#allocation13], %s694
        // Predicated region
        $region105: #{decision_forward.2} parent=79 // pred_check
          %p696 = pneg %p365
        $region106: #{decision_forward.2} parent=79 // pred_check_branch
          %698 = sbr.rel (%p696) target = $region108
        $region107: #{decision_forward.2} parent=79 // pred_region
          %700 = dma.done %s693, 16
        $region108: #{decision_forward.2} parent=79 // pred_fallthru
          _
        // Predicated region
        $region109: #{decision_forward.2} parent=79 // pred_check
          %p701 = pneg %p386
        $region110: #{decision_forward.2} parent=79 // pred_check_branch
          %703 = sbr.rel (%p701) target = $region112
        $region111: #{decision_forward.2} parent=79 // pred_region
          %705 = dma.done [#allocation15], 16
        $region112: #{decision_forward.2} parent=79 // pred_fallthru
          _
        // Predicated region
        $region113: #{decision_forward.2} parent=79 // pred_check
          %p706 = pneg %p407
        $region114: #{decision_forward.2} parent=79 // pred_check_branch
          %708 = sbr.rel (%p706) target = $region116
        $region115: #{decision_forward.2} parent=79 // pred_region
          %710 = dma.done [#allocation15], 16
        $region116: #{decision_forward.2} parent=79 // pred_fallthru
          _
        %p711 = pneg %p53
        %p712 = pneg %p50
        %p713 = scmp.lt.s32.totalorder %s37, 1
        %s714 = scalar_select %p713, %s37, 1
        %s715 = scalar_lea.vmem %s1, %s714
        %p716 = pneg %p79
        %p717 = pneg %p76
        %p718 = scmp.lt.s32.totalorder %s37, 1
        %s719 = scalar_select %p718, %s37, 1
        %s720 = scalar_lea.vmem %s2, %s719
        %p721 = pneg %p105
        %p722 = pneg %p102
        %p723 = scmp.lt.s32.totalorder %s37, 1
        %s724 = scalar_select %p723, %s37, 1
        %s725 = smul.addr %s724, 4
        %s726 = smul.addr %s725, 4
        %s727 = scalar_lea.vmem %s3, %s726
        %p728 = pneg %p131
        %p729 = pneg %p128
        %p730 = scmp.lt.s32.totalorder %s37, 1
        %s731 = scalar_select %p730, %s37, 1
        %s732 = scalar_lea.vmem %s4, %s731
        %p733 = pneg %p157
        %p734 = pneg %p154
        %p735 = scmp.lt.s32.totalorder %s37, 1
        %s736 = scalar_select %p735, %s37, 1
        %s737 = smul.addr %s736, 4
        %s738 = smul.addr %s737, 4
        %s739 = scalar_lea.vmem %s5, %s738
        %p740 = pneg %p183
        %p741 = pneg %p180
        %s742 = sand.u32 %s37, 1
        %s743 = scalar_lea.sflag [#allocation6], %s742
        %s744 = sand.u32 %s196, 1
        %s745 = scalar_lea.vmem [#allocation5], %s744
        %p746 = pneg %p209
        %p747 = pneg %p206
        %s748 = sand.u32 %s37, 1
        %s749 = scalar_lea.sflag [#allocation6], %s748
        %s750 = sand.u32 %s222, 1
        %s751 = scalar_lea.vmem [#allocation7], %s750
        %p752 = pneg %p235
        %p753 = pneg %p232
        %s754 = sand.u32 %s37, 1
        %s755 = scalar_lea.sflag [#allocation9], %s754
        %s756 = sand.u32 %s248, 1
        %s757 = scalar_lea.vmem [#allocation8], %s756
        %p758 = pneg %p261
        %p759 = pneg %p258
        %s760 = sand.u32 %s37, 1
        %s761 = scalar_lea.sflag [#allocation9], %s760
        %s762 = sand.u32 %s274, 1
        %s763 = smul.addr %s762, 16
        %s764 = scalar_lea.vmem [#allocation10], %s763
        %p765 = pneg %p287
        %p766 = pneg %p284
        %s767 = sand.u32 %s37, 1
        %s768 = scalar_lea.sflag [#allocation12], %s767
        %s769 = sand.u32 %s300, 1
        %s770 = scalar_lea.vmem [#allocation11], %s769
        %p771 = pneg %p313
        %p772 = pneg %p310
        %p773 = scmp.lt.s32.totalorder %s37, 1
        %s774 = scalar_select %p773, %s37, 1
        %s775 = smul.addr %s774, 8
        %s776 = smul.addr %s775, 4
        %s777 = scalar_lea.vmem %s11, %s776
        %p778 = pneg %p339
        %p779 = pneg %p336
        %s780 = sand.u32 %s37, 1
        %s781 = scalar_lea.sflag [#allocation12], %s780
        %s782 = sand.u32 %s352, 1
        %s783 = scalar_lea.vmem [#allocation13], %s782
        %p784 = pneg %p365
        %p785 = pneg %p362
        %p786 = pneg %p386
        %p787 = pneg %p383
        %p788 = pneg %p407
        %p789 = pneg %p404
        %p790 = pneg %p428
        %p791 = pneg %p425
        %p792 = scmp.lt.s32.totalorder %s37, 1
        %s793 = scalar_select %p792, %s37, 1
        %s794 = scalar_lea.vmem %s1, %s793
        %p795 = scmp.lt.s32.totalorder %s37, 1
        %s796 = scalar_select %p795, %s37, 1
        %s797 = scalar_lea.vmem %s2, %s796
        %p798 = scmp.lt.s32.totalorder %s37, 1
        %s799 = scalar_select %p798, %s37, 1
        %s800 = smul.addr %s799, 4
        %s801 = smul.addr %s800, 4
        %s802 = scalar_lea.vmem %s3, %s801
        %p803 = scmp.lt.s32.totalorder %s37, 1
        %s804 = scalar_select %p803, %s37, 1
        %s805 = scalar_lea.vmem %s4, %s804
        %p806 = scmp.lt.s32.totalorder %s37, 1
        %s807 = scalar_select %p806, %s37, 1
        %s808 = smul.addr %s807, 4
        %s809 = smul.addr %s808, 4
        %s810 = scalar_lea.vmem %s5, %s809
        %p811 = scmp.lt.s32.totalorder %s37, 1
        %s812 = scalar_select %p811, %s37, 1
        %s813 = smul.addr %s812, 8
        %s814 = smul.addr %s813, 4
        %s815 = scalar_lea.vmem %s11, %s814
        %p817 = scmp.eq.s32.totalorder %s37, 0
        // Predicated region
        $region117: #{decision_forward.2} parent=79 // pred_check
          %p818 = pneg %p817
        $region118: #{decision_forward.2} parent=79 // pred_check_branch
          %820 = sbr.rel (%p818) target = $region120
        $region119: #{decision_forward.2} parent=79 // pred_region
          %v821 = vld [vmem:[#allocation3] sm:$0xff]
          %v822 = vld [vmem:[#allocation3 + $0x8] sm:$0xff]
          %vm823 = vcmask 261120
          %824 = vst.msk [vmem:[#allocation2] sm:$0xff] %vm823, %v821
          %825 = vst.msk [vmem:[#allocation2 + $0x8] sm:$0xff] %vm823, %v822
        $region120: #{decision_forward.2} parent=79 // pred_fallthru
          _
        %v826 = vld [vmem:[#allocation2] sm:$0xff]
        %v827 = vld [vmem:[#allocation2 + $0x8] sm:$0xff]
        %v828 = vld [vmem:[%s794] sm:$0x1]
        %v829 = vld [vmem:[%s797] sm:$0x1]
        %vm830 = vcmask 261120
        %v831 = vsel %vm830, %v826, 0.0
        %832 = vadd.xlane.f32.xlu0 %v831
        %v833 = vpop.xlane.xlu0 %832
        %v834 = vsel %vm830, %v827, 0.0
        %835 = vadd.xlane.f32.xlu0 %v834
        %v836 = vpop.xlane.xlu0 %835
        %v837 = vrcp.pop 32.0
        %v838 = vmul.f32 32.0, %v837
        %v839 = vsub.f32 1.0, %v838
        %v840 = vmul.f32 %v837, %v839
        %v841 = vadd.f32 %v837, %v840
        %vm842 = vweird.f32 %v837
        %v843 = vsel %vm842, %v837, %v841
        %v844 = vmul.f32 %v833, %v843
        %v845 = vmul.f32 %v836, %v843
        %v846 = vsub.f32 %v826, %v844
        %v847 = vsub.f32 %v827, %v845
        %v848 = vmul.f32 %v846, %v846
        %v849 = vmul.f32 %v847, %v847
        %v850 = vsel %vm830, %v848, 0.0
        %851 = vadd.xlane.f32.xlu0 %v850
        %v852 = vpop.xlane.xlu0 %851
        %v853 = vsel %vm830, %v849, 0.0
        %854 = vadd.xlane.f32.xlu0 %v853
        %v855 = vpop.xlane.xlu0 %854
        %v856 = vmul.f32 %v852, %v843
        %v857 = vmul.f32 %v855, %v843
        %v858 = vadd.f32 %v856, 1e-05
        %v859 = vadd.f32 %v857, 1e-05
        %v860 = vrsqrt.pop %v858
        %v861 = vmul.f32 %v860, %v858
        %v862 = vmul.f32 %v861, %v860
        %v863 = vmul.f32 0.5, %v862
        %v864 = vsub.f32 1.5, %v863
        %v865 = vmul.f32 %v860, %v864
        %vm866 = vweird.f32 %v858
        %vm867 = vweird.f32 %v860
        %vm868 = vmor %vm866, %vm867
        %v869 = vsel %vm868, %v860, %v865
        %v870 = vrsqrt.pop %v859
        %v871 = vmul.f32 %v870, %v859
        %v872 = vmul.f32 %v871, %v870
        %v873 = vmul.f32 0.5, %v872
        %v874 = vsub.f32 1.5, %v873
        %v875 = vmul.f32 %v870, %v874
        %vm876 = vweird.f32 %v859
        %vm877 = vweird.f32 %v870
        %vm878 = vmor %vm876, %vm877
        %v879 = vsel %vm878, %v870, %v875
        %v880 = vmul.f32 %v846, %v869
        %v881 = vmul.f32 %v847, %v879
        %v883 = vperm.slane %v828, 0
        %v885 = vmul.f32 %v880, %v883
        %v886 = vmul.f32 %v881, %v883
        %v888 = vperm.slane %v829, 0
        %v890 = vadd.f32 %v885, %v888
        %v891 = vadd.f32 %v886, %v888
        %v892 = vld [vmem:[%s802] sm:$0xf]
        %v893 = vld [vmem:[%s802 + $0x4] sm:$0xf]
        %v894 = vld [vmem:[%s802 + $0x8] sm:$0xf]
        %v895 = vld [vmem:[%s802 + $0xc] sm:$0xf]
        %v896 = vld [vmem:[%s805] sm:$0x1]
        %v897 = vld [vmem:[%s810] sm:$0xf]
        %v898 = vld [vmem:[%s810 + $0x4] sm:$0xf]
        %v899 = vld [vmem:[%s810 + $0x8] sm:$0xf]
        %v900 = vld [vmem:[%s810 + $0xc] sm:$0xf]
        %v901 = vld [vmem:[%s649] sm:$0x1]
        %v902 = vpack.c.bf16 %v891, %v890
        %v904 = vperm.slane %v896, 0
        %v910 = vunpack.c.l.b16 %v892
        %v911 = vunpack.c.l.b16 %v893
        %v912 = vunpack.c.l.b16 %v894
        %v913 = vunpack.c.l.b16 %v895
        %v914 = vpack.c.b16 %v911, %v910
        %v915 = vpack.c.b16 %v913, %v912
        %v919 = vsel %vm830, %v902, 0
        %921 = vmatpush.bf16.msra.mxu0 0
        %922 = vmatpush.bf16.msra.mxu0 0
        %923 = vmatpush.bf16.msra.mxu0 0
        %924 = vmatpush.bf16.msra.mxu0 0
        %925 = vmatpush.bf16.msra.mxu0 0
        %926 = vmatpush.bf16.msra.mxu0 0
        %927 = vmatpush.bf16.msra.mxu0 %v915
        %928 = vmatpush.bf16.msra.mxu0 %v914
        %929 = vmatmul.bf16.gmra.mxu0 %v919
        %v930 = vpop.f32.mrf.mxu0
        %v931 = vadd.f32 %v904, %v930
        %v932 = vpop.f32.mrf.mxu0
        %v933 = vadd.f32 %v904, %v932
        %934 = vdwg.mxu0
        %v935 = vmul.f32 %v931, 0.5
        %v936 = vmul.f32 %v933, 0.5
        %v937 = vpack.c.bf16 %v935, %v935
        %v938 = vpack.c.bf16 %v936, %v936
        %v939 = vpack.c.bf16 %v931, %v931
        %v940 = vpack.c.bf16 %v933, %v933
        %v941 = vlaneseq
        %v942 = vand.u32 %v941, 127
        %vm943 = vcmp.ge.s32.totalorder %v942, 0
        %vm944 = vcmp.lt.s32.totalorder %v942, 4
        %vm945 = vmand %vm943, %vm944
        %v946 = vsel %vm945, 1, 0
        %v947 = vcvt.s32.f32 %v946
        %v948 = vpack.c.bf16 %v947, %v947
        %v949 = vunpack.c.l.bf16 %v939
        %v950 = vunpack.c.l.bf16 %v940
        %v951 = vunpack.c.l.bf16 %v948
        %953 = vrot.lane.b32.xlu0 %v951, 32
        %v954 = vpop.permute.xlu0 %953
        %v956 = vmul.f32 %v949, %v954
        %v957 = vmul.f32 %v950, %v954
        %v958 = vpack.c.bf16 %v956, %v956
        %v959 = vpack.c.bf16 %v957, %v957
        %v961 = vunpack.c.l.b16 %v958
        %v962 = vpack.c.b16 %v961, %v961
        %963 = vrot.lane.b32.xlu0 %v962, 96
        %v964 = vpop.permute.xlu0 %963
        %v966 = vsel %vm830, %v937, 0
        %v969 = vsel %vm830, %v964, 0
        %971 = vmatpush.bf16.xpose.msra.mxu0 0
        %972 = vmatpush.bf16.xpose.msra.mxu0 0
        %973 = vmatpush.bf16.xpose.msra.mxu0 0
        %974 = vmatpush.bf16.xpose.msra.mxu0 0
        %975 = vmatpush.bf16.xpose.msra.mxu0 0
        %976 = vmatpush.bf16.xpose.msra.mxu0 0
        %977 = vmatpush.bf16.xpose.msra.mxu0 0
        %978 = vmatpush.bf16.xpose.msra.mxu0 %v969
        %979 = vmatmul.bf16.gmra.mxu0 %v966
        %v980 = vpop.f32.mrf.mxu0
        %v981 = vadd.f32 0.0, %v980
        %v982 = vpop.f32.mrf.mxu0
        %983 = vdwg.mxu0
        %v985 = vunpack.c.l.b16 %v959
        %v986 = vpack.c.b16 %v985, %v985
        %987 = vrot.lane.b32.xlu0 %v986, 96
        %v988 = vpop.permute.xlu0 %987
        %v990 = vsel %vm830, %v938, 0
        %v993 = vsel %vm830, %v988, 0
        %995 = vmatpush.bf16.xpose.msra.mxu0 0
        %996 = vmatpush.bf16.xpose.msra.mxu0 0
        %997 = vmatpush.bf16.xpose.msra.mxu0 0
        %998 = vmatpush.bf16.xpose.msra.mxu0 0
        %999 = vmatpush.bf16.xpose.msra.mxu0 0
        %1000 = vmatpush.bf16.xpose.msra.mxu0 0
        %1001 = vmatpush.bf16.xpose.msra.mxu0 0
        %1002 = vmatpush.bf16.xpose.msra.mxu0 %v993
        %1003 = vmatmul.bf16.gmra.mxu0 %v990
        %v1004 = vpop.f32.mrf.mxu0
        %v1005 = vadd.f32 0.0, %v1004
        %v1006 = vpop.f32.mrf.mxu0
        %1007 = vdwg.mxu0
        %vm1008 = vcmask 64512
        %v1009 = vsel %vm1008, %v981, -inf
        %1010 = vmax.xlane.f32.xlu0 %v1009
        %v1011 = vpop.xlane.xlu0 %1010
        %v1012 = vsel %vm1008, %v1005, -inf
        %1013 = vmax.xlane.f32.xlu0 %v1012
        %v1014 = vpop.xlane.xlu0 %1013
        %v1015 = vsub.f32 %v981, %v1011
        %v1016 = vsub.f32 %v1005, %v1014
        %v1017 = vmul.f32 %v1015, 1.442695
        %v1018 = vpow.pop %v1017
        %v1019 = vmul.f32 %v1016, 1.442695
        %v1020 = vpow.pop %v1019
        %v1021 = vsel %vm1008, %v1018, 0.0
        %1022 = vadd.xlane.f32.xlu0 %v1021
        %v1023 = vpop.xlane.xlu0 %1022
        %v1024 = vsel %vm1008, %v1020, 0.0
        %1025 = vadd.xlane.f32.xlu0 %v1024
        %v1026 = vpop.xlane.xlu0 %1025
        %v1027 = vrcp.pop %v1023
        %v1028 = vrcp.pop %v1026
        %v1029 = vmul.f32 %v1018, %v1027
        %v1030 = vmul.f32 %v1020, %v1028
        %v1031 = vpack.c.bf16 %v1029, %v1029
        %v1032 = vpack.c.bf16 %v1030, %v1030
        %1033 = vrot.lane.b32.xlu0 %v951, 64
        %v1034 = vpop.permute.xlu0 %1033
        %v1036 = vmul.f32 %v949, %v1034
        %v1037 = vmul.f32 %v950, %v1034
        %v1038 = vpack.c.bf16 %v1036, %v1036
        %v1039 = vpack.c.bf16 %v1037, %v1037
        %vm1040 = vcmp.ge.s32.totalorder %v942, 4
        %vm1041 = vcmp.lt.s32.totalorder %v942, 8
        %vm1042 = vmand %vm1040, %vm1041
        %v1043 = vsel %vm1042, 1, 0
        %v1044 = vcvt.s32.f32 %v1043
        %v1045 = vpack.c.bf16 %v1044, %v1044
        %v1046 = vunpack.c.l.bf16 %v1045
        %1048 = vrot.lane.b32.xlu0 %v1046, 32
        %v1049 = vpop.permute.xlu0 %1048
        %v1051 = vmul.f32 %v949, %v1049
        %v1052 = vmul.f32 %v950, %v1049
        %v1053 = vpack.c.bf16 %v1051, %v1051
        %v1054 = vpack.c.bf16 %v1052, %v1052
        %v1056 = vunpack.c.l.b16 %v1053
        %v1057 = vpack.c.b16 %v1056, %v1056
        %1058 = vrot.lane.b32.xlu0 %v1057, 96
        %v1059 = vpop.permute.xlu0 %1058
        %v1061 = vsel %vm830, %v1059, 0
        %1063 = vmatpush.bf16.xpose.msra.mxu0 0
        %1064 = vmatpush.bf16.xpose.msra.mxu0 0
        %1065 = vmatpush.bf16.xpose.msra.mxu0 0
        %1066 = vmatpush.bf16.xpose.msra.mxu0 0
        %1067 = vmatpush.bf16.xpose.msra.mxu0 0
        %1068 = vmatpush.bf16.xpose.msra.mxu0 0
        %1069 = vmatpush.bf16.xpose.msra.mxu0 0
        %1070 = vmatpush.bf16.xpose.msra.mxu0 %v1061
        %1071 = vmatmul.bf16.gmra.mxu0 %v966
        %v1072 = vpop.f32.mrf.mxu0
        %v1073 = vadd.f32 0.0, %v1072
        %v1074 = vpop.f32.mrf.mxu0
        %1075 = vdwg.mxu0
        %v1077 = vunpack.c.l.b16 %v1054
        %v1078 = vpack.c.b16 %v1077, %v1077
        %1079 = vrot.lane.b32.xlu0 %v1078, 96
        %v1080 = vpop.permute.xlu0 %1079
        %v1082 = vsel %vm830, %v1080, 0
        %1084 = vmatpush.bf16.xpose.msra.mxu0 0
        %1085 = vmatpush.bf16.xpose.msra.mxu0 0
        %1086 = vmatpush.bf16.xpose.msra.mxu0 0
        %1087 = vmatpush.bf16.xpose.msra.mxu0 0
        %1088 = vmatpush.bf16.xpose.msra.mxu0 0
        %1089 = vmatpush.bf16.xpose.msra.mxu0 0
        %1090 = vmatpush.bf16.xpose.msra.mxu0 0
        %1091 = vmatpush.bf16.xpose.msra.mxu0 %v1082
        %1092 = vmatmul.bf16.gmra.mxu0 %v990
        %v1093 = vpop.f32.mrf.mxu0
        %v1094 = vadd.f32 0.0, %v1093
        %v1095 = vpop.f32.mrf.mxu0
        %1096 = vdwg.mxu0
        %v1097 = vsel %vm1008, %v1073, -inf
        %1098 = vmax.xlane.f32.xlu0 %v1097
        %v1099 = vpop.xlane.xlu0 %1098
        %v1100 = vsel %vm1008, %v1094, -inf
        %1101 = vmax.xlane.f32.xlu0 %v1100
        %v1102 = vpop.xlane.xlu0 %1101
        %v1103 = vsub.f32 %v1073, %v1099
        %v1104 = vsub.f32 %v1094, %v1102
        %v1105 = vmul.f32 %v1103, 1.442695
        %v1106 = vpow.pop %v1105
        %v1107 = vmul.f32 %v1104, 1.442695
        %v1108 = vpow.pop %v1107
        %v1109 = vsel %vm1008, %v1106, 0.0
        %1110 = vadd.xlane.f32.xlu0 %v1109
        %v1111 = vpop.xlane.xlu0 %1110
        %v1112 = vsel %vm1008, %v1108, 0.0
        %1113 = vadd.xlane.f32.xlu0 %v1112
        %v1114 = vpop.xlane.xlu0 %1113
        %v1115 = vrcp.pop %v1111
        %v1116 = vrcp.pop %v1114
        %v1117 = vmul.f32 %v1106, %v1115
        %v1118 = vmul.f32 %v1108, %v1116
        %v1119 = vpack.c.bf16 %v1117, %v1117
        %v1120 = vpack.c.bf16 %v1118, %v1118
        %1121 = vrot.lane.b32.xlu0 %v1046, 64
        %v1122 = vpop.permute.xlu0 %1121
        %v1124 = vmul.f32 %v949, %v1122
        %v1125 = vmul.f32 %v950, %v1122
        %v1126 = vpack.c.bf16 %v1124, %v1124
        %v1127 = vpack.c.bf16 %v1125, %v1125
        %v1129 = vunpack.c.l.b16 %v1126
        %v1130 = vpack.c.b16 %v1129, %v1129
        %1131 = vrot.lane.b32.xlu0 %v1130, 64
        %v1132 = vpop.permute.xlu0 %1131
        %v1134 = vsel %vm1008, %v1119, 0
        %vm1136 = vcmask 1043456
        %v1138 = vsel %vm1136, %v1132, 0
        %1140 = vmatpush.bf16.msra.mxu0 0
        %1141 = vmatpush.bf16.msra.mxu0 0
        %1142 = vmatpush.bf16.msra.mxu0 0
        %1143 = vmatpush.bf16.msra.mxu0 0
        %1144 = vmatpush.bf16.msra.mxu0 0
        %1145 = vmatpush.bf16.msra.mxu0 0
        %1146 = vmatpush.bf16.msra.mxu0 0
        %1147 = vmatpush.bf16.msra.mxu0 %v1138
        %1148 = vmatmul.bf16.gmra.mxu0 %v1134
        %v1149 = vpop.f32.mrf.mxu0
        %v1150 = vadd.f32 0.0, %v1149
        %v1151 = vpop.f32.mrf.mxu0
        %1152 = vdwg.mxu0
        %v1154 = vunpack.c.l.b16 %v1127
        %v1155 = vpack.c.b16 %v1154, %v1154
        %1156 = vrot.lane.b32.xlu0 %v1155, 64
        %v1157 = vpop.permute.xlu0 %1156
        %v1159 = vsel %vm1008, %v1120, 0
        %v1162 = vsel %vm1136, %v1157, 0
        %1164 = vmatpush.bf16.msra.mxu0 0
        %1165 = vmatpush.bf16.msra.mxu0 0
        %1166 = vmatpush.bf16.msra.mxu0 0
        %1167 = vmatpush.bf16.msra.mxu0 0
        %1168 = vmatpush.bf16.msra.mxu0 0
        %1169 = vmatpush.bf16.msra.mxu0 0
        %1170 = vmatpush.bf16.msra.mxu0 0
        %1171 = vmatpush.bf16.msra.mxu0 %v1162
        %1172 = vmatmul.bf16.gmra.mxu0 %v1159
        %v1173 = vpop.f32.mrf.mxu0
        %v1174 = vadd.f32 0.0, %v1173
        %v1175 = vpop.f32.mrf.mxu0
        %1176 = vdwg.mxu0
        %v1178 = vunpack.c.l.b16 %v1038
        %v1179 = vpack.c.b16 %v1178, %v1178
        %1180 = vrot.lane.b32.xlu0 %v1179, 64
        %v1181 = vpop.permute.xlu0 %1180
        %v1183 = vsel %vm1008, %v1031, 0
        %v1186 = vsel %vm1136, %v1181, 0
        %1188 = vmatpush.bf16.msra.mxu0 0
        %1189 = vmatpush.bf16.msra.mxu0 0
        %1190 = vmatpush.bf16.msra.mxu0 0
        %1191 = vmatpush.bf16.msra.mxu0 0
        %1192 = vmatpush.bf16.msra.mxu0 0
        %1193 = vmatpush.bf16.msra.mxu0 0
        %1194 = vmatpush.bf16.msra.mxu0 0
        %1195 = vmatpush.bf16.msra.mxu0 %v1186
        %1196 = vmatmul.bf16.gmra.mxu0 %v1183
        %v1197 = vpop.f32.mrf.mxu0
        %v1198 = vadd.f32 %v1150, %v1197
        %v1199 = vpop.f32.mrf.mxu0
        %1200 = vdwg.mxu0
        %v1202 = vunpack.c.l.b16 %v1039
        %v1203 = vpack.c.b16 %v1202, %v1202
        %1204 = vrot.lane.b32.xlu0 %v1203, 64
        %v1205 = vpop.permute.xlu0 %1204
        %v1207 = vsel %vm1008, %v1032, 0
        %v1210 = vsel %vm1136, %v1205, 0
        %1212 = vmatpush.bf16.msra.mxu0 0
        %1213 = vmatpush.bf16.msra.mxu0 0
        %1214 = vmatpush.bf16.msra.mxu0 0
        %1215 = vmatpush.bf16.msra.mxu0 0
        %1216 = vmatpush.bf16.msra.mxu0 0
        %1217 = vmatpush.bf16.msra.mxu0 0
        %1218 = vmatpush.bf16.msra.mxu0 0
        %1219 = vmatpush.bf16.msra.mxu0 %v1210
        %1220 = vmatmul.bf16.gmra.mxu0 %v1207
        %v1221 = vpop.f32.mrf.mxu0
        %v1222 = vadd.f32 %v1174, %v1221
        %v1223 = vpop.f32.mrf.mxu0
        %1224 = vdwg.mxu0
        %vm1225 = vcmp.ge.s32.totalorder %v942, 8
        %vm1226 = vcmp.lt.s32.totalorder %v942, 12
        %vm1227 = vmand %vm1225, %vm1226
        %v1228 = vsel %vm1227, 1, 0
        %v1229 = vcvt.s32.f32 %v1228
        %v1230 = vpack.c.bf16 %v1229, %v1229
        %v1231 = vunpack.c.l.bf16 %v1230
        %1233 = vrot.lane.b32.xlu0 %v1231, 32
        %v1234 = vpop.permute.xlu0 %1233
        %v1236 = vmul.f32 %v949, %v1234
        %v1237 = vmul.f32 %v950, %v1234
        %v1238 = vpack.c.bf16 %v1236, %v1236
        %v1239 = vpack.c.bf16 %v1237, %v1237
        %v1241 = vunpack.c.l.b16 %v1238
        %v1242 = vpack.c.b16 %v1241, %v1241
        %1243 = vrot.lane.b32.xlu0 %v1242, 96
        %v1244 = vpop.permute.xlu0 %1243
        %v1246 = vsel %vm830, %v1244, 0
        %1248 = vmatpush.bf16.xpose.msra.mxu0 0
        %1249 = vmatpush.bf16.xpose.msra.mxu0 0
        %1250 = vmatpush.bf16.xpose.msra.mxu0 0
        %1251 = vmatpush.bf16.xpose.msra.mxu0 0
        %1252 = vmatpush.bf16.xpose.msra.mxu0 0
        %1253 = vmatpush.bf16.xpose.msra.mxu0 0
        %1254 = vmatpush.bf16.xpose.msra.mxu0 0
        %1255 = vmatpush.bf16.xpose.msra.mxu0 %v1246
        %1256 = vmatmul.bf16.gmra.mxu0 %v966
        %v1257 = vpop.f32.mrf.mxu0
        %v1258 = vadd.f32 0.0, %v1257
        %v1259 = vpop.f32.mrf.mxu0
        %1260 = vdwg.mxu0
        %v1262 = vunpack.c.l.b16 %v1239
        %v1263 = vpack.c.b16 %v1262, %v1262
        %1264 = vrot.lane.b32.xlu0 %v1263, 96
        %v1265 = vpop.permute.xlu0 %1264
        %v1267 = vsel %vm830, %v1265, 0
        %1269 = vmatpush.bf16.xpose.msra.mxu0 0
        %1270 = vmatpush.bf16.xpose.msra.mxu0 0
        %1271 = vmatpush.bf16.xpose.msra.mxu0 0
        %1272 = vmatpush.bf16.xpose.msra.mxu0 0
        %1273 = vmatpush.bf16.xpose.msra.mxu0 0
        %1274 = vmatpush.bf16.xpose.msra.mxu0 0
        %1275 = vmatpush.bf16.xpose.msra.mxu0 0
        %1276 = vmatpush.bf16.xpose.msra.mxu0 %v1267
        %1277 = vmatmul.bf16.gmra.mxu0 %v990
        %v1278 = vpop.f32.mrf.mxu0
        %v1279 = vadd.f32 0.0, %v1278
        %v1280 = vpop.f32.mrf.mxu0
        %1281 = vdwg.mxu0
        %v1282 = vsel %vm1008, %v1258, -inf
        %1283 = vmax.xlane.f32.xlu0 %v1282
        %v1284 = vpop.xlane.xlu0 %1283
        %v1285 = vsel %vm1008, %v1279, -inf
        %1286 = vmax.xlane.f32.xlu0 %v1285
        %v1287 = vpop.xlane.xlu0 %1286
        %v1288 = vsub.f32 %v1258, %v1284
        %v1289 = vsub.f32 %v1279, %v1287
        %v1290 = vmul.f32 %v1288, 1.442695
        %v1291 = vpow.pop %v1290
        %v1292 = vmul.f32 %v1289, 1.442695
        %v1293 = vpow.pop %v1292
        %v1294 = vsel %vm1008, %v1291, 0.0
        %1295 = vadd.xlane.f32.xlu0 %v1294
        %v1296 = vpop.xlane.xlu0 %1295
        %v1297 = vsel %vm1008, %v1293, 0.0
        %1298 = vadd.xlane.f32.xlu0 %v1297
        %v1299 = vpop.xlane.xlu0 %1298
        %v1300 = vrcp.pop %v1296
        %v1301 = vrcp.pop %v1299
        %v1302 = vmul.f32 %v1291, %v1300
        %v1303 = vmul.f32 %v1293, %v1301
        %v1304 = vpack.c.bf16 %v1302, %v1302
        %v1305 = vpack.c.bf16 %v1303, %v1303
        %1306 = vrot.lane.b32.xlu0 %v1231, 64
        %v1307 = vpop.permute.xlu0 %1306
        %v1309 = vmul.f32 %v949, %v1307
        %v1310 = vmul.f32 %v950, %v1307
        %v1311 = vpack.c.bf16 %v1309, %v1309
        %v1312 = vpack.c.bf16 %v1310, %v1310
        %v1314 = vunpack.c.l.b16 %v1311
        %v1315 = vpack.c.b16 %v1314, %v1314
        %1316 = vrot.lane.b32.xlu0 %v1315, 64
        %v1317 = vpop.permute.xlu0 %1316
        %v1319 = vsel %vm1008, %v1304, 0
        %v1322 = vsel %vm1136, %v1317, 0
        %1324 = vmatpush.bf16.msra.mxu0 0
        %1325 = vmatpush.bf16.msra.mxu0 0
        %1326 = vmatpush.bf16.msra.mxu0 0
        %1327 = vmatpush.bf16.msra.mxu0 0
        %1328 = vmatpush.bf16.msra.mxu0 0
        %1329 = vmatpush.bf16.msra.mxu0 0
        %1330 = vmatpush.bf16.msra.mxu0 0
        %1331 = vmatpush.bf16.msra.mxu0 %v1322
        %1332 = vmatmul.bf16.gmra.mxu0 %v1319
        %v1333 = vpop.f32.mrf.mxu0
        %v1334 = vadd.f32 0.0, %v1333
        %v1335 = vpop.f32.mrf.mxu0
        %1336 = vdwg.mxu0
        %v1338 = vunpack.c.l.b16 %v1312
        %v1339 = vpack.c.b16 %v1338, %v1338
        %1340 = vrot.lane.b32.xlu0 %v1339, 64
        %v1341 = vpop.permute.xlu0 %1340
        %v1343 = vsel %vm1008, %v1305, 0
        %v1346 = vsel %vm1136, %v1341, 0
        %1348 = vmatpush.bf16.msra.mxu0 0
        %1349 = vmatpush.bf16.msra.mxu0 0
        %1350 = vmatpush.bf16.msra.mxu0 0
        %1351 = vmatpush.bf16.msra.mxu0 0
        %1352 = vmatpush.bf16.msra.mxu0 0
        %1353 = vmatpush.bf16.msra.mxu0 0
        %1354 = vmatpush.bf16.msra.mxu0 0
        %1355 = vmatpush.bf16.msra.mxu0 %v1346
        %1356 = vmatmul.bf16.gmra.mxu0 %v1343
        %v1357 = vpop.f32.mrf.mxu0
        %v1358 = vadd.f32 0.0, %v1357
        %v1359 = vpop.f32.mrf.mxu0
        %1360 = vdwg.mxu0
        %v1361 = vadd.f32 %v1198, %v1334
        %v1362 = vadd.f32 %v1222, %v1358
        %vm1363 = vcmp.ge.s32.totalorder %v942, 12
        %vm1364 = vcmp.lt.s32.totalorder %v942, 16
        %vm1365 = vmand %vm1363, %vm1364
        %v1366 = vsel %vm1365, 1, 0
        %v1367 = vcvt.s32.f32 %v1366
        %v1368 = vpack.c.bf16 %v1367, %v1367
        %v1369 = vunpack.c.l.bf16 %v1368
        %1371 = vrot.lane.b32.xlu0 %v1369, 32
        %v1372 = vpop.permute.xlu0 %1371
        %v1374 = vmul.f32 %v949, %v1372
        %v1375 = vmul.f32 %v950, %v1372
        %v1376 = vpack.c.bf16 %v1374, %v1374
        %v1377 = vpack.c.bf16 %v1375, %v1375
        %v1379 = vunpack.c.l.b16 %v1376
        %v1380 = vpack.c.b16 %v1379, %v1379
        %1381 = vrot.lane.b32.xlu0 %v1380, 96
        %v1382 = vpop.permute.xlu0 %1381
        %v1384 = vsel %vm830, %v1382, 0
        %1386 = vmatpush.bf16.xpose.msra.mxu0 0
        %1387 = vmatpush.bf16.xpose.msra.mxu0 0
        %1388 = vmatpush.bf16.xpose.msra.mxu0 0
        %1389 = vmatpush.bf16.xpose.msra.mxu0 0
        %1390 = vmatpush.bf16.xpose.msra.mxu0 0
        %1391 = vmatpush.bf16.xpose.msra.mxu0 0
        %1392 = vmatpush.bf16.xpose.msra.mxu0 0
        %1393 = vmatpush.bf16.xpose.msra.mxu0 %v1384
        %1394 = vmatmul.bf16.gmra.mxu0 %v966
        %v1395 = vpop.f32.mrf.mxu0
        %v1396 = vadd.f32 0.0, %v1395
        %v1397 = vpop.f32.mrf.mxu0
        %1398 = vdwg.mxu0
        %v1400 = vunpack.c.l.b16 %v1377
        %v1401 = vpack.c.b16 %v1400, %v1400
        %1402 = vrot.lane.b32.xlu0 %v1401, 96
        %v1403 = vpop.permute.xlu0 %1402
        %v1405 = vsel %vm830, %v1403, 0
        %1407 = vmatpush.bf16.xpose.msra.mxu0 0
        %1408 = vmatpush.bf16.xpose.msra.mxu0 0
        %1409 = vmatpush.bf16.xpose.msra.mxu0 0
        %1410 = vmatpush.bf16.xpose.msra.mxu0 0
        %1411 = vmatpush.bf16.xpose.msra.mxu0 0
        %1412 = vmatpush.bf16.xpose.msra.mxu0 0
        %1413 = vmatpush.bf16.xpose.msra.mxu0 0
        %1414 = vmatpush.bf16.xpose.msra.mxu0 %v1405
        %1415 = vmatmul.bf16.gmra.mxu0 %v990
        %v1416 = vpop.f32.mrf.mxu0
        %v1417 = vadd.f32 0.0, %v1416
        %v1418 = vpop.f32.mrf.mxu0
        %1419 = vdwg.mxu0
        %v1420 = vsel %vm1008, %v1396, -inf
        %1421 = vmax.xlane.f32.xlu0 %v1420
        %v1422 = vpop.xlane.xlu0 %1421
        %v1423 = vsel %vm1008, %v1417, -inf
        %1424 = vmax.xlane.f32.xlu0 %v1423
        %v1425 = vpop.xlane.xlu0 %1424
        %v1426 = vsub.f32 %v1396, %v1422
        %v1427 = vsub.f32 %v1417, %v1425
        %v1428 = vmul.f32 %v1426, 1.442695
        %v1429 = vpow.pop %v1428
        %v1430 = vmul.f32 %v1427, 1.442695
        %v1431 = vpow.pop %v1430
        %v1432 = vsel %vm1008, %v1429, 0.0
        %1433 = vadd.xlane.f32.xlu0 %v1432
        %v1434 = vpop.xlane.xlu0 %1433
        %v1435 = vsel %vm1008, %v1431, 0.0
        %1436 = vadd.xlane.f32.xlu0 %v1435
        %v1437 = vpop.xlane.xlu0 %1436
        %v1438 = vrcp.pop %v1434
        %v1439 = vrcp.pop %v1437
        %v1440 = vmul.f32 %v1429, %v1438
        %v1441 = vmul.f32 %v1431, %v1439
        %v1442 = vpack.c.bf16 %v1440, %v1440
        %v1443 = vpack.c.bf16 %v1441, %v1441
        %1444 = vrot.lane.b32.xlu0 %v1369, 64
        %v1445 = vpop.permute.xlu0 %1444
        %v1447 = vmul.f32 %v949, %v1445
        %v1448 = vmul.f32 %v950, %v1445
        %v1449 = vpack.c.bf16 %v1447, %v1447
        %v1450 = vpack.c.bf16 %v1448, %v1448
        %v1452 = vunpack.c.l.b16 %v1449
        %v1453 = vpack.c.b16 %v1452, %v1452
        %1454 = vrot.lane.b32.xlu0 %v1453, 64
        %v1455 = vpop.permute.xlu0 %1454
        %v1457 = vsel %vm1008, %v1442, 0
        %v1460 = vsel %vm1136, %v1455, 0
        %1462 = vmatpush.bf16.msra.mxu0 0
        %1463 = vmatpush.bf16.msra.mxu0 0
        %1464 = vmatpush.bf16.msra.mxu0 0
        %1465 = vmatpush.bf16.msra.mxu0 0
        %1466 = vmatpush.bf16.msra.mxu0 0
        %1467 = vmatpush.bf16.msra.mxu0 0
        %1468 = vmatpush.bf16.msra.mxu0 0
        %1469 = vmatpush.bf16.msra.mxu0 %v1460
        %1470 = vmatmul.bf16.gmra.mxu0 %v1457
        %v1471 = vpop.f32.mrf.mxu0
        %v1472 = vadd.f32 0.0, %v1471
        %v1473 = vpop.f32.mrf.mxu0
        %1474 = vdwg.mxu0
        %v1476 = vunpack.c.l.b16 %v1450
        %v1477 = vpack.c.b16 %v1476, %v1476
        %1478 = vrot.lane.b32.xlu0 %v1477, 64
        %v1479 = vpop.permute.xlu0 %1478
        %v1481 = vsel %vm1008, %v1443, 0
        %v1484 = vsel %vm1136, %v1479, 0
        %1486 = vmatpush.bf16.msra.mxu0 0
        %1487 = vmatpush.bf16.msra.mxu0 0
        %1488 = vmatpush.bf16.msra.mxu0 0
        %1489 = vmatpush.bf16.msra.mxu0 0
        %1490 = vmatpush.bf16.msra.mxu0 0
        %1491 = vmatpush.bf16.msra.mxu0 0
        %1492 = vmatpush.bf16.msra.mxu0 0
        %1493 = vmatpush.bf16.msra.mxu0 %v1484
        %1494 = vmatmul.bf16.gmra.mxu0 %v1481
        %v1495 = vpop.f32.mrf.mxu0
        %v1496 = vadd.f32 0.0, %v1495
        %v1497 = vpop.f32.mrf.mxu0
        %1498 = vdwg.mxu0
        %v1499 = vadd.f32 %v1361, %v1472
        %v1500 = vadd.f32 %v1362, %v1496
        %vm1501 = vcmp.ge.s32.totalorder %v942, 16
        %vm1502 = vcmp.lt.s32.totalorder %v942, 20
        %vm1503 = vmand %vm1501, %vm1502
        %v1504 = vsel %vm1503, 1, 0
        %v1505 = vcvt.s32.f32 %v1504
        %v1506 = vpack.c.bf16 %v1505, %v1505
        %v1507 = vunpack.c.l.bf16 %v1506
        %1509 = vrot.lane.b32.xlu0 %v1507, 32
        %v1510 = vpop.permute.xlu0 %1509
        %v1512 = vmul.f32 %v949, %v1510
        %v1513 = vmul.f32 %v950, %v1510
        %v1514 = vpack.c.bf16 %v1512, %v1512
        %v1515 = vpack.c.bf16 %v1513, %v1513
        %v1517 = vunpack.c.l.b16 %v1514
        %v1518 = vpack.c.b16 %v1517, %v1517
        %1519 = vrot.lane.b32.xlu0 %v1518, 96
        %v1520 = vpop.permute.xlu0 %1519
        %v1522 = vsel %vm830, %v1520, 0
        %1524 = vmatpush.bf16.xpose.msra.mxu0 0
        %1525 = vmatpush.bf16.xpose.msra.mxu0 0
        %1526 = vmatpush.bf16.xpose.msra.mxu0 0
        %1527 = vmatpush.bf16.xpose.msra.mxu0 0
        %1528 = vmatpush.bf16.xpose.msra.mxu0 0
        %1529 = vmatpush.bf16.xpose.msra.mxu0 0
        %1530 = vmatpush.bf16.xpose.msra.mxu0 0
        %1531 = vmatpush.bf16.xpose.msra.mxu0 %v1522
        %1532 = vmatmul.bf16.gmra.mxu0 %v966
        %v1533 = vpop.f32.mrf.mxu0
        %v1534 = vadd.f32 0.0, %v1533
        %v1535 = vpop.f32.mrf.mxu0
        %1536 = vdwg.mxu0
        %v1538 = vunpack.c.l.b16 %v1515
        %v1539 = vpack.c.b16 %v1538, %v1538
        %1540 = vrot.lane.b32.xlu0 %v1539, 96
        %v1541 = vpop.permute.xlu0 %1540
        %v1543 = vsel %vm830, %v1541, 0
        %1545 = vmatpush.bf16.xpose.msra.mxu0 0
        %1546 = vmatpush.bf16.xpose.msra.mxu0 0
        %1547 = vmatpush.bf16.xpose.msra.mxu0 0
        %1548 = vmatpush.bf16.xpose.msra.mxu0 0
        %1549 = vmatpush.bf16.xpose.msra.mxu0 0
        %1550 = vmatpush.bf16.xpose.msra.mxu0 0
        %1551 = vmatpush.bf16.xpose.msra.mxu0 0
        %1552 = vmatpush.bf16.xpose.msra.mxu0 %v1543
        %1553 = vmatmul.bf16.gmra.mxu0 %v990
        %v1554 = vpop.f32.mrf.mxu0
        %v1555 = vadd.f32 0.0, %v1554
        %v1556 = vpop.f32.mrf.mxu0
        %1557 = vdwg.mxu0
        %v1558 = vsel %vm1008, %v1534, -inf
        %1559 = vmax.xlane.f32.xlu0 %v1558
        %v1560 = vpop.xlane.xlu0 %1559
        %v1561 = vsel %vm1008, %v1555, -inf
        %1562 = vmax.xlane.f32.xlu0 %v1561
        %v1563 = vpop.xlane.xlu0 %1562
        %v1564 = vsub.f32 %v1534, %v1560
        %v1565 = vsub.f32 %v1555, %v1563
        %v1566 = vmul.f32 %v1564, 1.442695
        %v1567 = vpow.pop %v1566
        %v1568 = vmul.f32 %v1565, 1.442695
        %v1569 = vpow.pop %v1568
        %v1570 = vsel %vm1008, %v1567, 0.0
        %1571 = vadd.xlane.f32.xlu0 %v1570
        %v1572 = vpop.xlane.xlu0 %1571
        %v1573 = vsel %vm1008, %v1569, 0.0
        %1574 = vadd.xlane.f32.xlu0 %v1573
        %v1575 = vpop.xlane.xlu0 %1574
        %v1576 = vrcp.pop %v1572
        %v1577 = vrcp.pop %v1575
        %v1578 = vmul.f32 %v1567, %v1576
        %v1579 = vmul.f32 %v1569, %v1577
        %v1580 = vpack.c.bf16 %v1578, %v1578
        %v1581 = vpack.c.bf16 %v1579, %v1579
        %1582 = vrot.lane.b32.xlu0 %v1507, 64
        %v1583 = vpop.permute.xlu0 %1582
        %v1585 = vmul.f32 %v949, %v1583
        %v1586 = vmul.f32 %v950, %v1583
        %v1587 = vpack.c.bf16 %v1585, %v1585
        %v1588 = vpack.c.bf16 %v1586, %v1586
        %v1590 = vunpack.c.l.b16 %v1587
        %v1591 = vpack.c.b16 %v1590, %v1590
        %1592 = vrot.lane.b32.xlu0 %v1591, 64
        %v1593 = vpop.permute.xlu0 %1592
        %v1595 = vsel %vm1008, %v1580, 0
        %v1598 = vsel %vm1136, %v1593, 0
        %1600 = vmatpush.bf16.msra.mxu0 0
        %1601 = vmatpush.bf16.msra.mxu0 0
        %1602 = vmatpush.bf16.msra.mxu0 0
        %1603 = vmatpush.bf16.msra.mxu0 0
        %1604 = vmatpush.bf16.msra.mxu0 0
        %1605 = vmatpush.bf16.msra.mxu0 0
        %1606 = vmatpush.bf16.msra.mxu0 0
        %1607 = vmatpush.bf16.msra.mxu0 %v1598
        %1608 = vmatmul.bf16.gmra.mxu0 %v1595
        %v1609 = vpop.f32.mrf.mxu0
        %v1610 = vadd.f32 0.0, %v1609
        %v1611 = vpop.f32.mrf.mxu0
        %1612 = vdwg.mxu0
        %v1614 = vunpack.c.l.b16 %v1588
        %v1615 = vpack.c.b16 %v1614, %v1614
        %1616 = vrot.lane.b32.xlu0 %v1615, 64
        %v1617 = vpop.permute.xlu0 %1616
        %v1619 = vsel %vm1008, %v1581, 0
        %v1622 = vsel %vm1136, %v1617, 0
        %1624 = vmatpush.bf16.msra.mxu0 0
        %1625 = vmatpush.bf16.msra.mxu0 0
        %1626 = vmatpush.bf16.msra.mxu0 0
        %1627 = vmatpush.bf16.msra.mxu0 0
        %1628 = vmatpush.bf16.msra.mxu0 0
        %1629 = vmatpush.bf16.msra.mxu0 0
        %1630 = vmatpush.bf16.msra.mxu0 0
        %1631 = vmatpush.bf16.msra.mxu0 %v1622
        %1632 = vmatmul.bf16.gmra.mxu0 %v1619
        %v1633 = vpop.f32.mrf.mxu0
        %v1634 = vadd.f32 0.0, %v1633
        %v1635 = vpop.f32.mrf.mxu0
        %1636 = vdwg.mxu0
        %v1637 = vadd.f32 %v1499, %v1610
        %v1638 = vadd.f32 %v1500, %v1634
        %vm1639 = vcmp.ge.s32.totalorder %v942, 20
        %vm1640 = vcmp.lt.s32.totalorder %v942, 24
        %vm1641 = vmand %vm1639, %vm1640
        %v1642 = vsel %vm1641, 1, 0
        %v1643 = vcvt.s32.f32 %v1642
        %v1644 = vpack.c.bf16 %v1643, %v1643
        %v1645 = vunpack.c.l.bf16 %v1644
        %1647 = vrot.lane.b32.xlu0 %v1645, 32
        %v1648 = vpop.permute.xlu0 %1647
        %v1650 = vmul.f32 %v949, %v1648
        %v1651 = vmul.f32 %v950, %v1648
        %v1652 = vpack.c.bf16 %v1650, %v1650
        %v1653 = vpack.c.bf16 %v1651, %v1651
        %v1655 = vunpack.c.l.b16 %v1652
        %v1656 = vpack.c.b16 %v1655, %v1655
        %1657 = vrot.lane.b32.xlu0 %v1656, 96
        %v1658 = vpop.permute.xlu0 %1657
        %v1660 = vsel %vm830, %v1658, 0
        %1662 = vmatpush.bf16.xpose.msra.mxu0 0
        %1663 = vmatpush.bf16.xpose.msra.mxu0 0
        %1664 = vmatpush.bf16.xpose.msra.mxu0 0
        %1665 = vmatpush.bf16.xpose.msra.mxu0 0
        %1666 = vmatpush.bf16.xpose.msra.mxu0 0
        %1667 = vmatpush.bf16.xpose.msra.mxu0 0
        %1668 = vmatpush.bf16.xpose.msra.mxu0 0
        %1669 = vmatpush.bf16.xpose.msra.mxu0 %v1660
        %1670 = vmatmul.bf16.gmra.mxu0 %v966
        %v1671 = vpop.f32.mrf.mxu0
        %v1672 = vadd.f32 0.0, %v1671
        %v1673 = vpop.f32.mrf.mxu0
        %1674 = vdwg.mxu0
        %v1676 = vunpack.c.l.b16 %v1653
        %v1677 = vpack.c.b16 %v1676, %v1676
        %1678 = vrot.lane.b32.xlu0 %v1677, 96
        %v1679 = vpop.permute.xlu0 %1678
        %v1681 = vsel %vm830, %v1679, 0
        %1683 = vmatpush.bf16.xpose.msra.mxu0 0
        %1684 = vmatpush.bf16.xpose.msra.mxu0 0
        %1685 = vmatpush.bf16.xpose.msra.mxu0 0
        %1686 = vmatpush.bf16.xpose.msra.mxu0 0
        %1687 = vmatpush.bf16.xpose.msra.mxu0 0
        %1688 = vmatpush.bf16.xpose.msra.mxu0 0
        %1689 = vmatpush.bf16.xpose.msra.mxu0 0
        %1690 = vmatpush.bf16.xpose.msra.mxu0 %v1681
        %1691 = vmatmul.bf16.gmra.mxu0 %v990
        %v1692 = vpop.f32.mrf.mxu0
        %v1693 = vadd.f32 0.0, %v1692
        %v1694 = vpop.f32.mrf.mxu0
        %1695 = vdwg.mxu0
        %v1696 = vsel %vm1008, %v1672, -inf
        %1697 = vmax.xlane.f32.xlu0 %v1696
        %v1698 = vpop.xlane.xlu0 %1697
        %v1699 = vsel %vm1008, %v1693, -inf
        %1700 = vmax.xlane.f32.xlu0 %v1699
        %v1701 = vpop.xlane.xlu0 %1700
        %v1702 = vsub.f32 %v1672, %v1698
        %v1703 = vsub.f32 %v1693, %v1701
        %v1704 = vmul.f32 %v1702, 1.442695
        %v1705 = vpow.pop %v1704
        %v1706 = vmul.f32 %v1703, 1.442695
        %v1707 = vpow.pop %v1706
        %v1708 = vsel %vm1008, %v1705, 0.0
        %1709 = vadd.xlane.f32.xlu0 %v1708
        %v1710 = vpop.xlane.xlu0 %1709
        %v1711 = vsel %vm1008, %v1707, 0.0
        %1712 = vadd.xlane.f32.xlu0 %v1711
        %v1713 = vpop.xlane.xlu0 %1712
        %v1714 = vrcp.pop %v1710
        %v1715 = vrcp.pop %v1713
        %v1716 = vmul.f32 %v1705, %v1714
        %v1717 = vmul.f32 %v1707, %v1715
        %v1718 = vpack.c.bf16 %v1716, %v1716
        %v1719 = vpack.c.bf16 %v1717, %v1717
        %1720 = vrot.lane.b32.xlu0 %v1645, 64
        %v1721 = vpop.permute.xlu0 %1720
        %v1723 = vmul.f32 %v949, %v1721
        %v1724 = vmul.f32 %v950, %v1721
        %v1725 = vpack.c.bf16 %v1723, %v1723
        %v1726 = vpack.c.bf16 %v1724, %v1724
        %v1728 = vunpack.c.l.b16 %v1725
        %v1729 = vpack.c.b16 %v1728, %v1728
        %1730 = vrot.lane.b32.xlu0 %v1729, 64
        %v1731 = vpop.permute.xlu0 %1730
        %v1733 = vsel %vm1008, %v1718, 0
        %v1736 = vsel %vm1136, %v1731, 0
        %1738 = vmatpush.bf16.msra.mxu0 0
        %1739 = vmatpush.bf16.msra.mxu0 0
        %1740 = vmatpush.bf16.msra.mxu0 0
        %1741 = vmatpush.bf16.msra.mxu0 0
        %1742 = vmatpush.bf16.msra.mxu0 0
        %1743 = vmatpush.bf16.msra.mxu0 0
        %1744 = vmatpush.bf16.msra.mxu0 0
        %1745 = vmatpush.bf16.msra.mxu0 %v1736
        %1746 = vmatmul.bf16.gmra.mxu0 %v1733
        %v1747 = vpop.f32.mrf.mxu0
        %v1748 = vadd.f32 0.0, %v1747
        %v1749 = vpop.f32.mrf.mxu0
        %1750 = vdwg.mxu0
        %v1752 = vunpack.c.l.b16 %v1726
        %v1753 = vpack.c.b16 %v1752, %v1752
        %1754 = vrot.lane.b32.xlu0 %v1753, 64
        %v1755 = vpop.permute.xlu0 %1754
        %v1757 = vsel %vm1008, %v1719, 0
        %v1760 = vsel %vm1136, %v1755, 0
        %1762 = vmatpush.bf16.msra.mxu0 0
        %1763 = vmatpush.bf16.msra.mxu0 0
        %1764 = vmatpush.bf16.msra.mxu0 0
        %1765 = vmatpush.bf16.msra.mxu0 0
        %1766 = vmatpush.bf16.msra.mxu0 0
        %1767 = vmatpush.bf16.msra.mxu0 0
        %1768 = vmatpush.bf16.msra.mxu0 0
        %1769 = vmatpush.bf16.msra.mxu0 %v1760
        %1770 = vmatmul.bf16.gmra.mxu0 %v1757
        %v1771 = vpop.f32.mrf.mxu0
        %v1772 = vadd.f32 0.0, %v1771
        %v1773 = vpop.f32.mrf.mxu0
        %1774 = vdwg.mxu0
        %v1775 = vadd.f32 %v1637, %v1748
        %v1776 = vadd.f32 %v1638, %v1772
        %vm1777 = vcmp.ge.s32.totalorder %v942, 24
        %vm1778 = vcmp.lt.s32.totalorder %v942, 28
        %vm1779 = vmand %vm1777, %vm1778
        %v1780 = vsel %vm1779, 1, 0
        %v1781 = vcvt.s32.f32 %v1780
        %v1782 = vpack.c.bf16 %v1781, %v1781
        %v1783 = vunpack.c.l.bf16 %v1782
        %1785 = vrot.lane.b32.xlu0 %v1783, 32
        %v1786 = vpop.permute.xlu0 %1785
        %v1788 = vmul.f32 %v949, %v1786
        %v1789 = vmul.f32 %v950, %v1786
        %v1790 = vpack.c.bf16 %v1788, %v1788
        %v1791 = vpack.c.bf16 %v1789, %v1789
        %v1793 = vunpack.c.l.b16 %v1790
        %v1794 = vpack.c.b16 %v1793, %v1793
        %1795 = vrot.lane.b32.xlu0 %v1794, 96
        %v1796 = vpop.permute.xlu0 %1795
        %v1798 = vsel %vm830, %v1796, 0
        %1800 = vmatpush.bf16.xpose.msra.mxu0 0
        %1801 = vmatpush.bf16.xpose.msra.mxu0 0
        %1802 = vmatpush.bf16.xpose.msra.mxu0 0
        %1803 = vmatpush.bf16.xpose.msra.mxu0 0
        %1804 = vmatpush.bf16.xpose.msra.mxu0 0
        %1805 = vmatpush.bf16.xpose.msra.mxu0 0
        %1806 = vmatpush.bf16.xpose.msra.mxu0 0
        %1807 = vmatpush.bf16.xpose.msra.mxu0 %v1798
        %1808 = vmatmul.bf16.gmra.mxu0 %v966
        %v1809 = vpop.f32.mrf.mxu0
        %v1810 = vadd.f32 0.0, %v1809
        %v1811 = vpop.f32.mrf.mxu0
        %1812 = vdwg.mxu0
        %v1814 = vunpack.c.l.b16 %v1791
        %v1815 = vpack.c.b16 %v1814, %v1814
        %1816 = vrot.lane.b32.xlu0 %v1815, 96
        %v1817 = vpop.permute.xlu0 %1816
        %v1819 = vsel %vm830, %v1817, 0
        %1821 = vmatpush.bf16.xpose.msra.mxu0 0
        %1822 = vmatpush.bf16.xpose.msra.mxu0 0
        %1823 = vmatpush.bf16.xpose.msra.mxu0 0
        %1824 = vmatpush.bf16.xpose.msra.mxu0 0
        %1825 = vmatpush.bf16.xpose.msra.mxu0 0
        %1826 = vmatpush.bf16.xpose.msra.mxu0 0
        %1827 = vmatpush.bf16.xpose.msra.mxu0 0
        %1828 = vmatpush.bf16.xpose.msra.mxu0 %v1819
        %1829 = vmatmul.bf16.gmra.mxu0 %v990
        %v1830 = vpop.f32.mrf.mxu0
        %v1831 = vadd.f32 0.0, %v1830
        %v1832 = vpop.f32.mrf.mxu0
        %1833 = vdwg.mxu0
        %v1834 = vsel %vm1008, %v1810, -inf
        %1835 = vmax.xlane.f32.xlu0 %v1834
        %v1836 = vpop.xlane.xlu0 %1835
        %v1837 = vsel %vm1008, %v1831, -inf
        %1838 = vmax.xlane.f32.xlu0 %v1837
        %v1839 = vpop.xlane.xlu0 %1838
        %v1840 = vsub.f32 %v1810, %v1836
        %v1841 = vsub.f32 %v1831, %v1839
        %v1842 = vmul.f32 %v1840, 1.442695
        %v1843 = vpow.pop %v1842
        %v1844 = vmul.f32 %v1841, 1.442695
        %v1845 = vpow.pop %v1844
        %v1846 = vsel %vm1008, %v1843, 0.0
        %1847 = vadd.xlane.f32.xlu0 %v1846
        %v1848 = vpop.xlane.xlu0 %1847
        %v1849 = vsel %vm1008, %v1845, 0.0
        %1850 = vadd.xlane.f32.xlu0 %v1849
        %v1851 = vpop.xlane.xlu0 %1850
        %v1852 = vrcp.pop %v1848
        %v1853 = vrcp.pop %v1851
        %v1854 = vmul.f32 %v1843, %v1852
        %v1855 = vmul.f32 %v1845, %v1853
        %v1856 = vpack.c.bf16 %v1854, %v1854
        %v1857 = vpack.c.bf16 %v1855, %v1855
        %1858 = vrot.lane.b32.xlu0 %v1783, 64
        %v1859 = vpop.permute.xlu0 %1858
        %v1861 = vmul.f32 %v949, %v1859
        %v1862 = vmul.f32 %v950, %v1859
        %v1863 = vpack.c.bf16 %v1861, %v1861
        %v1864 = vpack.c.bf16 %v1862, %v1862
        %v1866 = vunpack.c.l.b16 %v1863
        %v1867 = vpack.c.b16 %v1866, %v1866
        %1868 = vrot.lane.b32.xlu0 %v1867, 64
        %v1869 = vpop.permute.xlu0 %1868
        %v1871 = vsel %vm1008, %v1856, 0
        %v1874 = vsel %vm1136, %v1869, 0
        %1876 = vmatpush.bf16.msra.mxu0 0
        %1877 = vmatpush.bf16.msra.mxu0 0
        %1878 = vmatpush.bf16.msra.mxu0 0
        %1879 = vmatpush.bf16.msra.mxu0 0
        %1880 = vmatpush.bf16.msra.mxu0 0
        %1881 = vmatpush.bf16.msra.mxu0 0
        %1882 = vmatpush.bf16.msra.mxu0 0
        %1883 = vmatpush.bf16.msra.mxu0 %v1874
        %1884 = vmatmul.bf16.gmra.mxu0 %v1871
        %v1885 = vpop.f32.mrf.mxu0
        %v1886 = vadd.f32 0.0, %v1885
        %v1887 = vpop.f32.mrf.mxu0
        %1888 = vdwg.mxu0
        %v1890 = vunpack.c.l.b16 %v1864
        %v1891 = vpack.c.b16 %v1890, %v1890
        %1892 = vrot.lane.b32.xlu0 %v1891, 64
        %v1893 = vpop.permute.xlu0 %1892
        %v1895 = vsel %vm1008, %v1857, 0
        %v1898 = vsel %vm1136, %v1893, 0
        %1900 = vmatpush.bf16.msra.mxu0 0
        %1901 = vmatpush.bf16.msra.mxu0 0
        %1902 = vmatpush.bf16.msra.mxu0 0
        %1903 = vmatpush.bf16.msra.mxu0 0
        %1904 = vmatpush.bf16.msra.mxu0 0
        %1905 = vmatpush.bf16.msra.mxu0 0
        %1906 = vmatpush.bf16.msra.mxu0 0
        %1907 = vmatpush.bf16.msra.mxu0 %v1898
        %1908 = vmatmul.bf16.gmra.mxu0 %v1895
        %v1909 = vpop.f32.mrf.mxu0
        %v1910 = vadd.f32 0.0, %v1909
        %v1911 = vpop.f32.mrf.mxu0
        %1912 = vdwg.mxu0
        %v1913 = vadd.f32 %v1775, %v1886
        %v1914 = vadd.f32 %v1776, %v1910
        %vm1915 = vcmp.ge.s32.totalorder %v942, 28
        %vm1916 = vcmp.lt.s32.totalorder %v942, 32
        %vm1917 = vmand %vm1915, %vm1916
        %v1918 = vsel %vm1917, 1, 0
        %v1919 = vcvt.s32.f32 %v1918
        %v1920 = vpack.c.bf16 %v1919, %v1919
        %v1921 = vunpack.c.l.bf16 %v1920
        %1923 = vrot.lane.b32.xlu0 %v1921, 32
        %v1924 = vpop.permute.xlu0 %1923
        %v1926 = vmul.f32 %v949, %v1924
        %v1927 = vmul.f32 %v950, %v1924
        %v1928 = vpack.c.bf16 %v1926, %v1926
        %v1929 = vpack.c.bf16 %v1927, %v1927
        %v1931 = vunpack.c.l.b16 %v1928
        %v1932 = vpack.c.b16 %v1931, %v1931
        %1933 = vrot.lane.b32.xlu0 %v1932, 96
        %v1934 = vpop.permute.xlu0 %1933
        %v1936 = vsel %vm830, %v1934, 0
        %1938 = vmatpush.bf16.xpose.msra.mxu0 0
        %1939 = vmatpush.bf16.xpose.msra.mxu0 0
        %1940 = vmatpush.bf16.xpose.msra.mxu0 0
        %1941 = vmatpush.bf16.xpose.msra.mxu0 0
        %1942 = vmatpush.bf16.xpose.msra.mxu0 0
        %1943 = vmatpush.bf16.xpose.msra.mxu0 0
        %1944 = vmatpush.bf16.xpose.msra.mxu0 0
        %1945 = vmatpush.bf16.xpose.msra.mxu0 %v1936
        %1946 = vmatmul.bf16.gmra.mxu0 %v966
        %v1947 = vpop.f32.mrf.mxu0
        %v1948 = vadd.f32 0.0, %v1947
        %v1949 = vpop.f32.mrf.mxu0
        %1950 = vdwg.mxu0
        %v1952 = vunpack.c.l.b16 %v1929
        %v1953 = vpack.c.b16 %v1952, %v1952
        %1954 = vrot.lane.b32.xlu0 %v1953, 96
        %v1955 = vpop.permute.xlu0 %1954
        %v1957 = vsel %vm830, %v1955, 0
        %1959 = vmatpush.bf16.xpose.msra.mxu0 0
        %1960 = vmatpush.bf16.xpose.msra.mxu0 0
        %1961 = vmatpush.bf16.xpose.msra.mxu0 0
        %1962 = vmatpush.bf16.xpose.msra.mxu0 0
        %1963 = vmatpush.bf16.xpose.msra.mxu0 0
        %1964 = vmatpush.bf16.xpose.msra.mxu0 0
        %1965 = vmatpush.bf16.xpose.msra.mxu0 0
        %1966 = vmatpush.bf16.xpose.msra.mxu0 %v1957
        %1967 = vmatmul.bf16.gmra.mxu0 %v990
        %v1968 = vpop.f32.mrf.mxu0
        %v1969 = vadd.f32 0.0, %v1968
        %v1970 = vpop.f32.mrf.mxu0
        %1971 = vdwg.mxu0
        %v1972 = vsel %vm1008, %v1948, -inf
        %1973 = vmax.xlane.f32.xlu0 %v1972
        %v1974 = vpop.xlane.xlu0 %1973
        %v1975 = vsel %vm1008, %v1969, -inf
        %1976 = vmax.xlane.f32.xlu0 %v1975
        %v1977 = vpop.xlane.xlu0 %1976
        %v1978 = vsub.f32 %v1948, %v1974
        %v1979 = vsub.f32 %v1969, %v1977
        %v1980 = vmul.f32 %v1978, 1.442695
        %v1981 = vpow.pop %v1980
        %v1982 = vmul.f32 %v1979, 1.442695
        %v1983 = vpow.pop %v1982
        %v1984 = vsel %vm1008, %v1981, 0.0
        %1985 = vadd.xlane.f32.xlu0 %v1984
        %v1986 = vpop.xlane.xlu0 %1985
        %v1987 = vsel %vm1008, %v1983, 0.0
        %1988 = vadd.xlane.f32.xlu0 %v1987
        %v1989 = vpop.xlane.xlu0 %1988
        %v1990 = vrcp.pop %v1986
        %v1991 = vrcp.pop %v1989
        %v1992 = vmul.f32 %v1981, %v1990
        %v1993 = vmul.f32 %v1983, %v1991
        %v1994 = vpack.c.bf16 %v1992, %v1992
        %v1995 = vpack.c.bf16 %v1993, %v1993
        %1996 = vrot.lane.b32.xlu0 %v1921, 64
        %v1997 = vpop.permute.xlu0 %1996
        %v1999 = vmul.f32 %v949, %v1997
        %v2000 = vmul.f32 %v950, %v1997
        %v2001 = vpack.c.bf16 %v1999, %v1999
        %v2002 = vpack.c.bf16 %v2000, %v2000
        %v2004 = vunpack.c.l.b16 %v2001
        %v2005 = vpack.c.b16 %v2004, %v2004
        %2006 = vrot.lane.b32.xlu0 %v2005, 64
        %v2007 = vpop.permute.xlu0 %2006
        %v2009 = vsel %vm1008, %v1994, 0
        %v2012 = vsel %vm1136, %v2007, 0
        %2014 = vmatpush.bf16.msra.mxu0 0
        %2015 = vmatpush.bf16.msra.mxu0 0
        %2016 = vmatpush.bf16.msra.mxu0 0
        %2017 = vmatpush.bf16.msra.mxu0 0
        %2018 = vmatpush.bf16.msra.mxu0 0
        %2019 = vmatpush.bf16.msra.mxu0 0
        %2020 = vmatpush.bf16.msra.mxu0 0
        %2021 = vmatpush.bf16.msra.mxu0 %v2012
        %2022 = vmatmul.bf16.gmra.mxu0 %v2009
        %v2023 = vpop.f32.mrf.mxu0
        %v2024 = vadd.f32 0.0, %v2023
        %v2025 = vpop.f32.mrf.mxu0
        %2026 = vdwg.mxu0
        %v2028 = vunpack.c.l.b16 %v2002
        %v2029 = vpack.c.b16 %v2028, %v2028
        %2030 = vrot.lane.b32.xlu0 %v2029, 64
        %v2031 = vpop.permute.xlu0 %2030
        %v2033 = vsel %vm1008, %v1995, 0
        %v2036 = vsel %vm1136, %v2031, 0
        %2038 = vmatpush.bf16.msra.mxu0 0
        %2039 = vmatpush.bf16.msra.mxu0 0
        %2040 = vmatpush.bf16.msra.mxu0 0
        %2041 = vmatpush.bf16.msra.mxu0 0
        %2042 = vmatpush.bf16.msra.mxu0 0
        %2043 = vmatpush.bf16.msra.mxu0 0
        %2044 = vmatpush.bf16.msra.mxu0 0
        %2045 = vmatpush.bf16.msra.mxu0 %v2036
        %2046 = vmatmul.bf16.gmra.mxu0 %v2033
        %v2047 = vpop.f32.mrf.mxu0
        %v2048 = vadd.f32 0.0, %v2047
        %v2049 = vpop.f32.mrf.mxu0
        %2050 = vdwg.mxu0
        %v2051 = vadd.f32 %v1913, %v2024
        %v2052 = vadd.f32 %v1914, %v2048
        %v2053 = vpack.c.bf16 %v2052, %v2051
        %v2055 = vperm.slane %v901, 0
        %v2061 = vunpack.c.l.b16 %v897
        %v2062 = vunpack.c.l.b16 %v898
        %v2063 = vunpack.c.l.b16 %v899
        %v2064 = vunpack.c.l.b16 %v900
        %v2065 = vpack.c.b16 %v2062, %v2061
        %v2066 = vpack.c.b16 %v2064, %v2063
        %v2070 = vsel %vm830, %v2053, 0
        %2072 = vmatpush.bf16.msra.mxu0 0
        %2073 = vmatpush.bf16.msra.mxu0 0
        %2074 = vmatpush.bf16.msra.mxu0 0
        %2075 = vmatpush.bf16.msra.mxu0 0
        %2076 = vmatpush.bf16.msra.mxu0 0
        %2077 = vmatpush.bf16.msra.mxu0 0
        %2078 = vmatpush.bf16.msra.mxu0 %v2066
        %2079 = vmatpush.bf16.msra.mxu0 %v2065
        %2080 = vmatmul.bf16.gmra.mxu0 %v2070
        %v2081 = vpop.f32.mrf.mxu0
        %v2082 = vadd.f32 %v2055, %v2081
        %v2083 = vpop.f32.mrf.mxu0
        %v2084 = vadd.f32 %v2055, %v2083
        %2085 = vdwg.mxu0
        %v2086 = vadd.f32 %v826, %v2082
        %v2087 = vadd.f32 %v827, %v2084
        %v2088 = vld [vmem:[%s658] sm:$0x1]
        %v2089 = vld [vmem:[%s667] sm:$0x1]
        %v2090 = vsel %vm830, %v2086, 0.0
        %2091 = vadd.xlane.f32.xlu0 %v2090
        %v2092 = vpop.xlane.xlu0 %2091
        %v2093 = vsel %vm830, %v2087, 0.0
        %2094 = vadd.xlane.f32.xlu0 %v2093
        %v2095 = vpop.xlane.xlu0 %2094
        %v2096 = vmul.f32 %v2092, %v843
        %v2097 = vmul.f32 %v2095, %v843
        %v2098 = vsub.f32 %v2086, %v2096
        %v2099 = vsub.f32 %v2087, %v2097
        %v2100 = vmul.f32 %v2098, %v2098
        %v2101 = vmul.f32 %v2099, %v2099
        %v2102 = vsel %vm830, %v2100, 0.0
        %2103 = vadd.xlane.f32.xlu0 %v2102
        %v2104 = vpop.xlane.xlu0 %2103
        %v2105 = vsel %vm830, %v2101, 0.0
        %2106 = vadd.xlane.f32.xlu0 %v2105
        %v2107 = vpop.xlane.xlu0 %2106
        %v2108 = vmul.f32 %v2104, %v843
        %v2109 = vmul.f32 %v2107, %v843
        %v2110 = vadd.f32 %v2108, 1e-05
        %v2111 = vadd.f32 %v2109, 1e-05
        %v2112 = vrsqrt.pop %v2110
        %v2113 = vmul.f32 %v2112, %v2110
        %v2114 = vmul.f32 %v2113, %v2112
        %v2115 = vmul.f32 0.5, %v2114
        %v2116 = vsub.f32 1.5, %v2115
        %v2117 = vmul.f32 %v2112, %v2116
        %vm2118 = vweird.f32 %v2110
        %vm2119 = vweird.f32 %v2112
        %vm2120 = vmor %vm2118, %vm2119
        %v2121 = vsel %vm2120, %v2112, %v2117
        %v2122 = vrsqrt.pop %v2111
        %v2123 = vmul.f32 %v2122, %v2111
        %v2124 = vmul.f32 %v2123, %v2122
        %v2125 = vmul.f32 0.5, %v2124
        %v2126 = vsub.f32 1.5, %v2125
        %v2127 = vmul.f32 %v2122, %v2126
        %vm2128 = vweird.f32 %v2111
        %vm2129 = vweird.f32 %v2122
        %vm2130 = vmor %vm2128, %vm2129
        %v2131 = vsel %vm2130, %v2122, %v2127
        %v2132 = vmul.f32 %v2098, %v2121
        %v2133 = vmul.f32 %v2099, %v2131
        %v2135 = vperm.slane %v2088, 0
        %v2137 = vmul.f32 %v2132, %v2135
        %v2138 = vmul.f32 %v2133, %v2135
        %v2140 = vperm.slane %v2089, 0
        %v2142 = vadd.f32 %v2137, %v2140
        %v2143 = vadd.f32 %v2138, %v2140
        %v2144 = vld [vmem:[%s677] sm:$0xf]
        %v2145 = vld [vmem:[%s677 + $0x4] sm:$0xf]
        %v2146 = vld [vmem:[%s677 + $0x8] sm:$0xf]
        %v2147 = vld [vmem:[%s677 + $0xc] sm:$0xf]
        %v2148 = vld [vmem:[%s686] sm:$0x1]
        %v2149 = vld [vmem:[%s815] sm:$0xf]
        %v2150 = vld [vmem:[%s815 + $0x4] sm:$0xf]
        %v2151 = vld [vmem:[%s815 + $0x8] sm:$0xf]
        %v2152 = vld [vmem:[%s815 + $0xc] sm:$0xf]
        %v2153 = vld [vmem:[%s815 + $0x10] sm:$0xf]
        %v2154 = vld [vmem:[%s815 + $0x14] sm:$0xf]
        %v2155 = vld [vmem:[%s815 + $0x18] sm:$0xf]
        %v2156 = vld [vmem:[%s815 + $0x1c] sm:$0xf]
        %v2157 = vld [vmem:[%s695] sm:$0x1]
        %v2158 = vpack.c.bf16 %v2143, %v2142
        %v2160 = vperm.slane %v2148, 0
        %v2166 = vunpack.c.l.b16 %v2144
        %v2167 = vunpack.c.l.b16 %v2145
        %v2168 = vunpack.c.l.b16 %v2146
        %v2169 = vunpack.c.l.b16 %v2147
        %v2170 = vpack.c.b16 %v2167, %v2166
        %v2171 = vpack.c.b16 %v2169, %v2168
        %v2175 = vsel %vm830, %v2158, 0
        %2177 = vmatpush.bf16.msra.mxu0 0
        %2178 = vmatpush.bf16.msra.mxu0 0
        %2179 = vmatpush.bf16.msra.mxu0 0
        %2180 = vmatpush.bf16.msra.mxu0 0
        %2181 = vmatpush.bf16.msra.mxu0 0
        %2182 = vmatpush.bf16.msra.mxu0 0
        %2183 = vmatpush.bf16.msra.mxu0 %v2171
        %2184 = vmatpush.bf16.msra.mxu0 %v2170
        %2185 = vmatmul.bf16.gmra.mxu0 %v2175
        %v2186 = vpop.f32.mrf.mxu0
        %v2187 = vadd.f32 %v2160, %v2186
        %v2188 = vpop.f32.mrf.mxu0
        %v2189 = vadd.f32 %v2160, %v2188
        %2190 = vdwg.mxu0
        %v2191 = vmax.f32 %v2187, 0.0
        %v2192 = vmax.f32 %v2189, 0.0
        %v2193 = vpack.c.bf16 %v2192, %v2191
        %v2195 = vperm.slane %v2157, 0
        %v2205 = vunpack.c.l.b16 %v2149
        %v2206 = vunpack.c.l.b16 %v2150
        %v2207 = vunpack.c.l.b16 %v2151
        %v2208 = vunpack.c.l.b16 %v2152
        %v2209 = vunpack.c.l.b16 %v2153
        %v2210 = vunpack.c.l.b16 %v2154
        %v2211 = vunpack.c.l.b16 %v2155
        %v2212 = vunpack.c.l.b16 %v2156
        %v2213 = vpack.c.b16 %v2206, %v2205
        %v2214 = vpack.c.b16 %v2208, %v2207
        %v2215 = vpack.c.b16 %v2210, %v2209
        %v2216 = vpack.c.b16 %v2212, %v2211
        %vm2221 = vcmask 523264
        %v2223 = vsel %vm2221, %v2193, 0
        %2225 = vmatpush.bf16.msra.mxu0 0
        %2226 = vmatpush.bf16.msra.mxu0 0
        %2227 = vmatpush.bf16.msra.mxu0 0
        %2228 = vmatpush.bf16.msra.mxu0 0
        %2229 = vmatpush.bf16.msra.mxu0 %v2216
        %2230 = vmatpush.bf16.msra.mxu0 %v2215
        %2231 = vmatpush.bf16.msra.mxu0 %v2214
        %2232 = vmatpush.bf16.msra.mxu0 %v2213
        %2233 = vmatmul.bf16.gmra.mxu0 %v2223
        %v2234 = vpop.f32.mrf.mxu0
        %v2235 = vadd.f32 %v2195, %v2234
        %v2236 = vpop.f32.mrf.mxu0
        %v2237 = vadd.f32 %v2195, %v2236
        %2238 = vdwg.mxu0
        %v2239 = vadd.f32 %v2086, %v2235
        %v2240 = vadd.f32 %v2087, %v2237
        %2241 = vst.msk [vmem:[#allocation2] sm:$0xff] %vm830, %v2239
        %2242 = vst.msk [vmem:[#allocation2 + $0x8] sm:$0xff] %vm830, %v2240
        %p2243 = scmp.eq.s32.totalorder %s37, 1
        // Predicated region
        $region121: #{decision_forward.2} parent=79 // pred_check
          %p2244 = pneg %p2243
        $region122: #{decision_forward.2} parent=79 // pred_check_branch
          %2246 = sbr.rel (%p2244) target = $region124
        $region123: #{decision_forward.2} parent=79 // pred_region
          %v2247 = vld [vmem:[#allocation14] sm:$0x1]
          %v2248 = vld [vmem:[#allocation16] sm:$0x1]
          %v2249 = vsel %vm830, %v2239, 0.0
          %2250 = vadd.xlane.f32.xlu0 %v2249
          %v2251 = vpop.xlane.xlu0 %2250
          %v2252 = vsel %vm830, %v2240, 0.0
          %2253 = vadd.xlane.f32.xlu0 %v2252
          %v2254 = vpop.xlane.xlu0 %2253
          %v2255 = vmul.f32 %v2251, %v843
          %v2256 = vmul.f32 %v2254, %v843
          %v2257 = vsub.f32 %v2239, %v2255
          %v2258 = vsub.f32 %v2240, %v2256
          %v2259 = vmul.f32 %v2257, %v2257
          %v2260 = vmul.f32 %v2258, %v2258
          %v2261 = vsel %vm830, %v2259, 0.0
          %2262 = vadd.xlane.f32.xlu0 %v2261
          %v2263 = vpop.xlane.xlu0 %2262
          %v2264 = vsel %vm830, %v2260, 0.0
          %2265 = vadd.xlane.f32.xlu0 %v2264
          %v2266 = vpop.xlane.xlu0 %2265
          %v2267 = vmul.f32 %v2263, %v843
          %v2268 = vmul.f32 %v2266, %v843
          %v2269 = vadd.f32 %v2267, 1e-05
          %v2270 = vadd.f32 %v2268, 1e-05
          %v2271 = vrsqrt.pop %v2269
          %v2272 = vmul.f32 %v2271, %v2269
          %v2273 = vmul.f32 %v2272, %v2271
          %v2274 = vmul.f32 0.5, %v2273
          %v2275 = vsub.f32 1.5, %v2274
          %v2276 = vmul.f32 %v2271, %v2275
          %vm2277 = vweird.f32 %v2269
          %vm2278 = vweird.f32 %v2271
          %vm2279 = vmor %vm2277, %vm2278
          %v2280 = vsel %vm2279, %v2271, %v2276
          %v2281 = vrsqrt.pop %v2270
          %v2282 = vmul.f32 %v2281, %v2270
          %v2283 = vmul.f32 %v2282, %v2281
          %v2284 = vmul.f32 0.5, %v2283
          %v2285 = vsub.f32 1.5, %v2284
          %v2286 = vmul.f32 %v2281, %v2285
          %vm2287 = vweird.f32 %v2270
          %vm2288 = vweird.f32 %v2281
          %vm2289 = vmor %vm2287, %vm2288
          %v2290 = vsel %vm2289, %v2281, %v2286
          %v2291 = vmul.f32 %v2257, %v2280
          %v2292 = vmul.f32 %v2258, %v2290
          %v2294 = vperm.slane %v2247, 0
          %v2296 = vmul.f32 %v2291, %v2294
          %v2297 = vmul.f32 %v2292, %v2294
          %v2299 = vperm.slane %v2248, 0
          %v2301 = vadd.f32 %v2296, %v2299
          %v2302 = vadd.f32 %v2297, %v2299
          %2303 = vst.msk [vmem:[%s15] sm:$0xff] %vm830, %v2301
          %2304 = vst.msk [vmem:[%s15 + $0x8] sm:$0xff] %vm830, %v2302
        $region124: #{decision_forward.2} parent=79 // pred_fallthru
          _
        // Predicated region
        $region125: #{decision_forward.2} parent=79 // pred_check
          %p2305 = pneg %p425
        $region126: #{decision_forward.2} parent=79 // pred_check_branch
          %2307 = sbr.rel (%p2305) target = $region128
        $region127: #{decision_forward.2} parent=79 // pred_region
          _
        $region128: #{decision_forward.2} parent=79 // pred_fallthru
          _
        // Predicated region
        $region129: #{decision_forward.2} parent=79 // pred_check
          %p2308 = pneg %p425
        $region130: #{decision_forward.2} parent=79 // pred_check_branch
          %2310 = sbr.rel (%p2308) target = $region132
        $region131: #{decision_forward.2} parent=79 // pred_region
          _
        $region132: #{decision_forward.2} parent=79 // pred_fallthru
          _
      $region80: #{decision_forward.2} parent=5 // pred_fallthru
        _
      %p2311 = scmp.le.s32.totalorder 2, %s32
      // Predicated region
      $region133: #{decision_forward.2} parent=5 // pred_check
        %p2312 = pneg %p2311
      $region134: #{decision_forward.2} parent=5 // pred_check_branch
        %2314 = sbr.rel (%p2312) target = $region136
      $region135: #{decision_forward.2} parent=5 // pred_region
        %s2315 = ssub.s32 %s32, 2
      $region136: #{decision_forward.2} parent=5 // pred_fallthru
        _
    $region6: #{decision_forward.2} parent=1 // loop_footer
      %s36 = sadd.s32 1, %s32
    $region7: #{decision_forward.2} parent=1 // loop_footer_branch
      %31 = sbr.rel target = $region3
    $region8: #{decision_forward.2} parent=1 // loop_exit
      _
    %2316 = vsyncpa [#allocation4], 1
    %s2317 = scalar_lea.sflag [#allocation4], 1
    %2318 = vsyncpa %s2317, 1
    %2319 = vsyncpa [#allocation6], 1
    %s2320 = scalar_lea.sflag [#allocation6], 1
    %2321 = vsyncpa %s2320, 1
    %2322 = vsyncpa [#allocation9], 1
    %s2323 = scalar_lea.sflag [#allocation9], 1
    %2324 = vsyncpa %s2323, 1
    %2325 = vsyncpa [#allocation12], 1
    %s2326 = scalar_lea.sflag [#allocation12], 1
    %2327 = vsyncpa %s2326, 1
    %2328 = vsyncpa [#allocation15], 1

// kernel: decision_forward.3
$region0: #{decision_forward.3}
  #allocation0 [shape = 'u32[]', space=smem, size = 0x4, offset = 0x4, fixed_abs, tag = 'smem constant byte address 0x4 - core index']
  #allocation1 [shape = 'u32[72,128]{1,0:T(1,128)}', space=vmem, size = 0x9000, scoped, tag = 'internal scratch']
  #allocation2 [shape = 'f32[16,32]{1,0:T(8,128)}', space=vmem, size = 0x2000, scoped, tag = 'scratch operand']
  %s0 = inlined_call_operand.hbm [shape: f32[16,32], index: 0, kind: input, shape index: {}]
  %s1 = inlined_call_operand.vmem [shape: f32[16,32], index: 1, kind: input, shape index: {}]
  %s2 = inlined_call_operand.vmem [shape: f32[2,1,32], index: 2, kind: input, shape index: {}]
  %s3 = inlined_call_operand.hbm [shape: f32[2,1,32], index: 3, kind: input, shape index: {}]
  %s4 = inlined_call_operand.vmem [shape: bf16[2,32,96], index: 4, kind: input, shape index: {}]
  %s5 = inlined_call_operand.hbm [shape: f32[2,1,96], index: 5, kind: input, shape index: {}]
  %s6 = inlined_call_operand.vmem [shape: bf16[2,32,32], index: 6, kind: input, shape index: {}]
  %s7 = inlined_call_operand.hbm [shape: f32[2,1,32], index: 7, kind: input, shape index: {}]
  %s8 = inlined_call_operand.hbm [shape: f32[2,1,32], index: 8, kind: input, shape index: {}]
  %s9 = inlined_call_operand.hbm [shape: f32[2,1,32], index: 9, kind: input, shape index: {}]
  %s10 = inlined_call_operand.vmem [shape: bf16[2,32,32], index: 10, kind: input, shape index: {}]
  %s11 = inlined_call_operand.hbm [shape: f32[2,1,32], index: 11, kind: input, shape index: {}]
  %s12 = inlined_call_operand.hbm [shape: bf16[2,32,64], index: 12, kind: input, shape index: {}]
  %s13 = inlined_call_operand.hbm [shape: f32[2,1,64], index: 13, kind: input, shape index: {}]
  %s14 = inlined_call_operand.hbm [shape: bf16[2,32,32], index: 14, kind: input, shape index: {}]
  %s15 = inlined_call_operand.hbm [shape: f32[2,1,32], index: 15, kind: input, shape index: {}]
  %s16 = inlined_call_operand.hbm [shape: f32[2,1,32], index: 16, kind: input, shape index: {}]
  %s17 = inlined_call_operand.hbm [shape: f32[2,1,32], index: 17, kind: input, shape index: {}]
  %s18 = inlined_call_operand.hbm [shape: bf16[2,32,64], index: 18, kind: input, shape index: {}]
  %s19 = inlined_call_operand.hbm [shape: f32[2,1,64], index: 19, kind: input, shape index: {}]
  %s20 = inlined_call_operand.vmem [shape: bf16[2,64,32], index: 20, kind: input, shape index: {}]
  %s21 = inlined_call_operand.hbm [shape: f32[2,1,32], index: 21, kind: input, shape index: {}]
  %s22 = inlined_call_operand.hbm [shape: f32[1,32], index: 22, kind: input, shape index: {}]
  %s23 = inlined_call_operand.hbm [shape: f32[1,32], index: 23, kind: input, shape index: {}]
  %s24 = inlined_call_operand.hbm [shape: bf16[32,128], index: 24, kind: input, shape index: {}]
  %s25 = inlined_call_operand.hbm [shape: f32[1,128], index: 25, kind: input, shape index: {}]
  %s26 = inlined_call_operand.vmem [shape: f32[16,128], index: 26, kind: output, shape index: {}]
  %s27 = sld [smem:[#allocation0]]
  $region225: #{decision_forward.3} parent=0
    _
  %s29 = ssub.s32 1, %s27
  %s30 = scalar_select 0, %s29, %s27
  $region1: #{decision_forward.3} parent=0
    #allocation3 [shape = 'u8[8192]{0}', space=vmem, size = 0x2000, scoped, tag = 'input window, operand 0, single buffered']
    #allocation4 [shape = 's32[2]{0}', space=sflag, size = 0x8, scoped, tag = 'scoped memory for decision_forward.3']
    #allocation5 [shape = 'u8[1024]{0}', space=vmem, size = 0x400, scoped, tag = 'input window, operand 3']
    #allocation6 [shape = 's32[2]{0}', space=sflag, size = 0x8, scoped, tag = 'scoped memory for decision_forward.3']
    #allocation7 [shape = 'u8[1024]{0}', space=vmem, size = 0x400, scoped, tag = 'input window, operand 5']
    #allocation8 [shape = 'u8[1024]{0}', space=vmem, size = 0x400, scoped, tag = 'input window, operand 7']
    #allocation9 [shape = 's32[2]{0}', space=sflag, size = 0x8, scoped, tag = 'scoped memory for decision_forward.3']
    #allocation10 [shape = 'u8[1024]{0}', space=vmem, size = 0x400, scoped, tag = 'input window, operand 8']
    #allocation11 [shape = 'u8[1024]{0}', space=vmem, size = 0x400, scoped, tag = 'input window, operand 9']
    #allocation12 [shape = 's32[2]{0}', space=sflag, size = 0x8, scoped, tag = 'scoped memory for decision_forward.3']
    #allocation13 [shape = 'u8[1024]{0}', space=vmem, size = 0x400, scoped, tag = 'input window, operand 11']
    #allocation14 [shape = 'u8[16384]{0}', space=vmem, size = 0x4000, scoped, tag = 'input window, operand 12']
    #allocation15 [shape = 's32[2]{0}', space=sflag, size = 0x8, scoped, tag = 'scoped memory for decision_forward.3']
    #allocation16 [shape = 'u8[1024]{0}', space=vmem, size = 0x400, scoped, tag = 'input window, operand 13']
    #allocation17 [shape = 'u8[16384]{0}', space=vmem, size = 0x4000, scoped, tag = 'input window, operand 14']
    #allocation18 [shape = 's32[2]{0}', space=sflag, size = 0x8, scoped, tag = 'scoped memory for decision_forward.3']
    #allocation19 [shape = 'u8[1024]{0}', space=vmem, size = 0x400, scoped, tag = 'input window, operand 15']
    #allocation20 [shape = 'u8[1024]{0}', space=vmem, size = 0x400, scoped, tag = 'input window, operand 16']
    #allocation21 [shape = 's32[2]{0}', space=sflag, size = 0x8, scoped, tag = 'scoped memory for decision_forward.3']
    #allocation22 [shape = 'u8[1024]{0}', space=vmem, size = 0x400, scoped, tag = 'input window, operand 17']
    #allocation23 [shape = 'u8[16384]{0}', space=vmem, size = 0x4000, scoped, tag = 'input window, operand 18']
    #allocation24 [shape = 's32[2]{0}', space=sflag, size = 0x8, scoped, tag = 'scoped memory for decision_forward.3']
    #allocation25 [shape = 'u8[1024]{0}', space=vmem, size = 0x400, scoped, tag = 'input window, operand 19']
    #allocation26 [shape = 'u8[1024]{0}', space=vmem, size = 0x400, scoped, tag = 'input window, operand 21']
    #allocation27 [shape = 's32[2]{0}', space=sflag, size = 0x8, scoped, tag = 'scoped memory for decision_forward.3']
    #allocation28 [shape = 'u8[512]{0}', space=vmem, size = 0x400, scoped, tag = 'input window, operand 22, single buffered']
    #allocation29 [shape = 'u8[512]{0}', space=vmem, size = 0x400, scoped, tag = 'input window, operand 23, single buffered']
    #allocation30 [shape = 's32[1]{0}', space=sflag, size = 0x4, scoped, tag = 'scoped memory for decision_forward.3']
    #allocation31 [shape = 'u8[8192]{0}', space=vmem, size = 0x2000, scoped, tag = 'input window, operand 24, single buffered']
    #allocation32 [shape = 'u8[512]{0}', space=vmem, size = 0x400, scoped, tag = 'input window, operand 25, single buffered']
    #allocation33 [shape = 's32[1]{0}', space=sflag, size = 0x4, scoped, tag = 'scoped memory for decision_forward.3']
    %31 = vsyncpa [#allocation4], 0
    %32 = vsyncpa [#allocation6], 0
    %s33 = scalar_lea.sflag [#allocation6], 1
    %34 = vsyncpa %s33, 0
    %35 = vsyncpa [#allocation9], 0
    %s36 = scalar_lea.sflag [#allocation9], 1
    %37 = vsyncpa %s36, 0
    %38 = vsyncpa [#allocation12], 0
    %s39 = scalar_lea.sflag [#allocation12], 1
    %40 = vsyncpa %s39, 0
    %41 = vsyncpa [#allocation15], 0
    %s42 = scalar_lea.sflag [#allocation15], 1
    %43 = vsyncpa %s42, 0
    %44 = vsyncpa [#allocation18], 0
    %s45 = scalar_lea.sflag [#allocation18], 1
    %46 = vsyncpa %s45, 0
    %47 = vsyncpa [#allocation21], 0
    %s48 = scalar_lea.sflag [#allocation21], 1
    %49 = vsyncpa %s48, 0
    %50 = vsyncpa [#allocation24], 0
    %s51 = scalar_lea.sflag [#allocation24], 1
    %52 = vsyncpa %s51, 0
    %53 = vsyncpa [#allocation27], 0
    %s54 = scalar_lea.sflag [#allocation27], 1
    %55 = vsyncpa %s54, 0
    %56 = vsyncpa [#allocation30], 0
    %57 = vsyncpa [#allocation33], 0
    loop: start=0, step=1, limit=4
    $region2: #{decision_forward.3} parent=1 // loop_pre_header
      _
    $region3: #{decision_forward.3} parent=1 // loop_header
      %s59 = sphi 0, %s63
      %p60 = scmp.ge.s32.totalorder %s59, 4
      %s67 = sphi 0, %s67
      %s69 = sphi 0, %s67
      %s70 = sphi 0, %s69
      %s84 = sphi 0, %s70
      %s88 = sphi 0, %s88
      %s90 = sphi 0, %s88
      %s91 = sphi 0, %s90
      %s105 = sphi 0, %s91
      %s111 = sphi 0, %s113
      %s114 = sphi 0, %s111
      %s115 = sphi 0, %s114
      %s131 = sphi 0, %s115
      %s137 = sphi 0, %s139
      %s140 = sphi 0, %s137
      %s141 = sphi 0, %s140
      %s157 = sphi 0, %s141
      %s163 = sphi 0, %s165
      %s166 = sphi 0, %s163
      %s167 = sphi 0, %s166
      %s183 = sphi 0, %s167
      %s189 = sphi 0, %s191
      %s192 = sphi 0, %s189
      %s193 = sphi 0, %s192
      %s209 = sphi 0, %s193
      %s215 = sphi 0, %s217
      %s218 = sphi 0, %s215
      %s219 = sphi 0, %s218
      %s235 = sphi 0, %s219
      %s241 = sphi 0, %s243
      %s244 = sphi 0, %s241
      %s245 = sphi 0, %s244
      %s261 = sphi 0, %s245
      %s267 = sphi 0, %s269
      %s270 = sphi 0, %s267
      %s271 = sphi 0, %s270
      %s287 = sphi 0, %s271
      %s293 = sphi 0, %s295
      %s296 = sphi 0, %s293
      %s297 = sphi 0, %s296
      %s313 = sphi 0, %s297
      %s319 = sphi 0, %s321
      %s322 = sphi 0, %s319
      %s323 = sphi 0, %s322
      %s339 = sphi 0, %s323
      %s345 = sphi 0, %s347
      %s348 = sphi 0, %s345
      %s349 = sphi 0, %s348
      %s365 = sphi 0, %s349
      %s371 = sphi 0, %s373
      %s374 = sphi 0, %s371
      %s375 = sphi 0, %s374
      %s391 = sphi 0, %s375
      %s397 = sphi 0, %s399
      %s400 = sphi 0, %s397
      %s401 = sphi 0, %s400
      %s417 = sphi 0, %s401
      %s423 = sphi 0, %s425
      %s426 = sphi 0, %s423
      %s427 = sphi 0, %s426
      %s443 = sphi 0, %s427
      %s449 = sphi 0, %s451
      %s452 = sphi 0, %s449
      %s453 = sphi 0, %s452
      %s469 = sphi 0, %s453
      %s475 = sphi 0, %s477
      %s478 = sphi 0, %s475
      %s479 = sphi 0, %s478
      %s495 = sphi 0, %s479
      %s501 = sphi 0, %s503
      %s504 = sphi 0, %s501
      %s505 = sphi 0, %s504
      %s521 = sphi 0, %s505
      %s527 = sphi 0, %s529
      %s530 = sphi 0, %s527
      %s531 = sphi 0, %s530
      %s547 = sphi 0, %s531
      %s553 = sphi 0, %s555
      %s556 = sphi 0, %s553
      %s557 = sphi 0, %s556
      %s573 = sphi 0, %s557
      %s579 = sphi 0, %s581
      %s582 = sphi 0, %s579
      %s583 = sphi 0, %s582
      %s599 = sphi 0, %s583
      %s605 = sphi 0, %s607
      %s608 = sphi 0, %s605
      %s609 = sphi 0, %s608
      %s625 = sphi 0, %s609
      %s629 = sphi 0, %s629
      %s631 = sphi 0, %s629
      %s632 = sphi 0, %s631
      %s646 = sphi 0, %s632
      %s650 = sphi 0, %s650
      %s652 = sphi 0, %s650
      %s653 = sphi 0, %s652
      %s667 = sphi 0, %s653
      %s671 = sphi 0, %s671
      %s673 = sphi 0, %s671
      %s674 = sphi 0, %s673
      %s688 = sphi 0, %s674
      %s692 = sphi 0, %s692
      %s694 = sphi 0, %s692
      %s695 = sphi 0, %s694
      %s709 = sphi 0, %s695
      %s713 = sphi 0, %s713
      %s715 = sphi 0, %s713
      %s716 = sphi 0, %s715
      %s730 = sphi 0, %s716
    $region4: #{decision_forward.3} parent=1 // loop_header_branch
      %62 = sbr.rel (%p60) target = $region8
    $region5: #{decision_forward.3} parent=1 // loop_body
      %s64 = ssub.s32 %s59, 1
      %s65 = ssub.s32 %s59, 2
      %s66 = sadd.s32 %s59, 1
      %s68 = sadd.s32 %s67, 1
      %p71 = scmp.eq.s32.totalorder %s59, 1
      %p72 = scmp.ne.s32.totalorder %s67, %s69
      %p73 = scmp.eq.s32.totalorder %s59, 0
      %p74 = por %p72, %p73
      %p75 = scmp.ne.s32.totalorder %s67, %s69
      %p76 = scmp.eq.s32.totalorder %s64, 1
      %p77 = por %p75, %p76
      %p78 = scmp.ne.s32.totalorder %s69, %s70
      %p79 = scmp.eq.s32.totalorder %s64, 0
      %p80 = por %p78, %p79
      %p81 = scmp.ne.s32.totalorder %s69, %s70
      %p82 = scmp.eq.s32.totalorder %s65, 1
      %p83 = por %p81, %p82
      %p85 = scmp.ne.s32.totalorder %s70, %s84
      %p86 = scmp.eq.s32.totalorder %s65, 0
      %p87 = por %p85, %p86
      %s89 = sadd.s32 %s88, 1
      %p92 = scmp.eq.s32.totalorder %s59, 1
      %p93 = scmp.ne.s32.totalorder %s88, %s90
      %p94 = scmp.eq.s32.totalorder %s59, 0
      %p95 = por %p93, %p94
      %p96 = scmp.ne.s32.totalorder %s88, %s90
      %p97 = scmp.eq.s32.totalorder %s64, 1
      %p98 = por %p96, %p97
      %p99 = scmp.ne.s32.totalorder %s90, %s91
      %p100 = scmp.eq.s32.totalorder %s64, 0
      %p101 = por %p99, %p100
      %p102 = scmp.ne.s32.totalorder %s90, %s91
      %p103 = scmp.eq.s32.totalorder %s65, 1
      %p104 = por %p102, %p103
      %p106 = scmp.ne.s32.totalorder %s91, %s105
      %p107 = scmp.eq.s32.totalorder %s65, 0
      %p108 = por %p106, %p107
      %s109 = ssub.s32 %s59, %s66
      %p110 = scmp.eq.s32.totalorder %s109, 0
      %s112 = sadd.s32 %s111, 1
      %s113 = scalar_select %p110, %s111, %s112
      %p116 = pneg %p110
      %p117 = scmp.eq.s32.totalorder %s59, 1
      %p118 = por %p116, %p117
      %p119 = scmp.ne.s32.totalorder %s111, %s114
      %p120 = scmp.eq.s32.totalorder %s59, 0
      %p121 = por %p119, %p120
      %p122 = scmp.ne.s32.totalorder %s111, %s114
      %p123 = scmp.eq.s32.totalorder %s64, 1
      %p124 = por %p122, %p123
      %p125 = scmp.ne.s32.totalorder %s114, %s115
      %p126 = scmp.eq.s32.totalorder %s64, 0
      %p127 = por %p125, %p126
      %p128 = scmp.ne.s32.totalorder %s114, %s115
      %p129 = scmp.eq.s32.totalorder %s65, 1
      %p130 = por %p128, %p129
      %p132 = scmp.ne.s32.totalorder %s115, %s131
      %p133 = scmp.eq.s32.totalorder %s65, 0
      %p134 = por %p132, %p133
      %s135 = ssub.s32 %s59, %s66
      %p136 = scmp.eq.s32.totalorder %s135, 0
      %s138 = sadd.s32 %s137, 1
      %s139 = scalar_select %p136, %s137, %s138
      %p142 = pneg %p136
      %p143 = scmp.eq.s32.totalorder %s59, 1
      %p144 = por %p142, %p143
      %p145 = scmp.ne.s32.totalorder %s137, %s140
      %p146 = scmp.eq.s32.totalorder %s59, 0
      %p147 = por %p145, %p146
      %p148 = scmp.ne.s32.totalorder %s137, %s140
      %p149 = scmp.eq.s32.totalorder %s64, 1
      %p150 = por %p148, %p149
      %p151 = scmp.ne.s32.totalorder %s140, %s141
      %p152 = scmp.eq.s32.totalorder %s64, 0
      %p153 = por %p151, %p152
      %p154 = scmp.ne.s32.totalorder %s140, %s141
      %p155 = scmp.eq.s32.totalorder %s65, 1
      %p156 = por %p154, %p155
      %p158 = scmp.ne.s32.totalorder %s141, %s157
      %p159 = scmp.eq.s32.totalorder %s65, 0
      %p160 = por %p158, %p159
      %s161 = ssub.s32 %s59, %s66
      %p162 = scmp.eq.s32.totalorder %s161, 0
      %s164 = sadd.s32 %s163, 1
      %s165 = scalar_select %p162, %s163, %s164
      %p168 = pneg %p162
      %p169 = scmp.eq.s32.totalorder %s59, 1
      %p170 = por %p168, %p169
      %p171 = scmp.ne.s32.totalorder %s163, %s166
      %p172 = scmp.eq.s32.totalorder %s59, 0
      %p173 = por %p171, %p172
      %p174 = scmp.ne.s32.totalorder %s163, %s166
      %p175 = scmp.eq.s32.totalorder %s64, 1
      %p176 = por %p174, %p175
      %p177 = scmp.ne.s32.totalorder %s166, %s167
      %p178 = scmp.eq.s32.totalorder %s64, 0
      %p179 = por %p177, %p178
      %p180 = scmp.ne.s32.totalorder %s166, %s167
      %p181 = scmp.eq.s32.totalorder %s65, 1
      %p182 = por %p180, %p181
      %p184 = scmp.ne.s32.totalorder %s167, %s183
      %p185 = scmp.eq.s32.totalorder %s65, 0
      %p186 = por %p184, %p185
      %s187 = ssub.s32 %s59, %s66
      %p188 = scmp.eq.s32.totalorder %s187, 0
      %s190 = sadd.s32 %s189, 1
      %s191 = scalar_select %p188, %s189, %s190
      %p194 = pneg %p188
      %p195 = scmp.eq.s32.totalorder %s59, 1
      %p196 = por %p194, %p195
      %p197 = scmp.ne.s32.totalorder %s189, %s192
      %p198 = scmp.eq.s32.totalorder %s59, 0
      %p199 = por %p197, %p198
      %p200 = scmp.ne.s32.totalorder %s189, %s192
      %p201 = scmp.eq.s32.totalorder %s64, 1
      %p202 = por %p200, %p201
      %p203 = scmp.ne.s32.totalorder %s192, %s193
      %p204 = scmp.eq.s32.totalorder %s64, 0
      %p205 = por %p203, %p204
      %p206 = scmp.ne.s32.totalorder %s192, %s193
      %p207 = scmp.eq.s32.totalorder %s65, 1
      %p208 = por %p206, %p207
      %p210 = scmp.ne.s32.totalorder %s193, %s209
      %p211 = scmp.eq.s32.totalorder %s65, 0
      %p212 = por %p210, %p211
      %s213 = ssub.s32 %s59, %s66
      %p214 = scmp.eq.s32.totalorder %s213, 0
      %s216 = sadd.s32 %s215, 1
      %s217 = scalar_select %p214, %s215, %s216
      %p220 = pneg %p214
      %p221 = scmp.eq.s32.totalorder %s59, 1
      %p222 = por %p220, %p221
      %p223 = scmp.ne.s32.totalorder %s215, %s218
      %p224 = scmp.eq.s32.totalorder %s59, 0
      %p225 = por %p223, %p224
      %p226 = scmp.ne.s32.totalorder %s215, %s218
      %p227 = scmp.eq.s32.totalorder %s64, 1
      %p228 = por %p226, %p227
      %p229 = scmp.ne.s32.totalorder %s218, %s219
      %p230 = scmp.eq.s32.totalorder %s64, 0
      %p231 = por %p229, %p230
      %p232 = scmp.ne.s32.totalorder %s218, %s219
      %p233 = scmp.eq.s32.totalorder %s65, 1
      %p234 = por %p232, %p233
      %p236 = scmp.ne.s32.totalorder %s219, %s235
      %p237 = scmp.eq.s32.totalorder %s65, 0
      %p238 = por %p236, %p237
      %s239 = ssub.s32 %s59, %s66
      %p240 = scmp.eq.s32.totalorder %s239, 0
      %s242 = sadd.s32 %s241, 1
      %s243 = scalar_select %p240, %s241, %s242
      %p246 = pneg %p240
      %p247 = scmp.eq.s32.totalorder %s59, 1
      %p248 = por %p246, %p247
      %p249 = scmp.ne.s32.totalorder %s241, %s244
      %p250 = scmp.eq.s32.totalorder %s59, 0
      %p251 = por %p249, %p250
      %p252 = scmp.ne.s32.totalorder %s241, %s244
      %p253 = scmp.eq.s32.totalorder %s64, 1
      %p254 = por %p252, %p253
      %p255 = scmp.ne.s32.totalorder %s244, %s245
      %p256 = scmp.eq.s32.totalorder %s64, 0
      %p257 = por %p255, %p256
      %p258 = scmp.ne.s32.totalorder %s244, %s245
      %p259 = scmp.eq.s32.totalorder %s65, 1
      %p260 = por %p258, %p259
      %p262 = scmp.ne.s32.totalorder %s245, %s261
      %p263 = scmp.eq.s32.totalorder %s65, 0
      %p264 = por %p262, %p263
      %s265 = ssub.s32 %s59, %s66
      %p266 = scmp.eq.s32.totalorder %s265, 0
      %s268 = sadd.s32 %s267, 1
      %s269 = scalar_select %p266, %s267, %s268
      %p272 = pneg %p266
      %p273 = scmp.eq.s32.totalorder %s59, 1
      %p274 = por %p272, %p273
      %p275 = scmp.ne.s32.totalorder %s267, %s270
      %p276 = scmp.eq.s32.totalorder %s59, 0
      %p277 = por %p275, %p276
      %p278 = scmp.ne.s32.totalorder %s267, %s270
      %p279 = scmp.eq.s32.totalorder %s64, 1
      %p280 = por %p278, %p279
      %p281 = scmp.ne.s32.totalorder %s270, %s271
      %p282 = scmp.eq.s32.totalorder %s64, 0
      %p283 = por %p281, %p282
      %p284 = scmp.ne.s32.totalorder %s270, %s271
      %p285 = scmp.eq.s32.totalorder %s65, 1
      %p286 = por %p284, %p285
      %p288 = scmp.ne.s32.totalorder %s271, %s287
      %p289 = scmp.eq.s32.totalorder %s65, 0
      %p290 = por %p288, %p289
      %s291 = ssub.s32 %s59, %s66
      %p292 = scmp.eq.s32.totalorder %s291, 0
      %s294 = sadd.s32 %s293, 1
      %s295 = scalar_select %p292, %s293, %s294
      %p298 = pneg %p292
      %p299 = scmp.eq.s32.totalorder %s59, 1
      %p300 = por %p298, %p299
      %p301 = scmp.ne.s32.totalorder %s293, %s296
      %p302 = scmp.eq.s32.totalorder %s59, 0
      %p303 = por %p301, %p302
      %p304 = scmp.ne.s32.totalorder %s293, %s296
      %p305 = scmp.eq.s32.totalorder %s64, 1
      %p306 = por %p304, %p305
      %p307 = scmp.ne.s32.totalorder %s296, %s297
      %p308 = scmp.eq.s32.totalorder %s64, 0
      %p309 = por %p307, %p308
      %p310 = scmp.ne.s32.totalorder %s296, %s297
      %p311 = scmp.eq.s32.totalorder %s65, 1
      %p312 = por %p310, %p311
      %p314 = scmp.ne.s32.totalorder %s297, %s313
      %p315 = scmp.eq.s32.totalorder %s65, 0
      %p316 = por %p314, %p315
      %s317 = ssub.s32 %s59, %s66
      %p318 = scmp.eq.s32.totalorder %s317, 0
      %s320 = sadd.s32 %s319, 1
      %s321 = scalar_select %p318, %s319, %s320
      %p324 = pneg %p318
      %p325 = scmp.eq.s32.totalorder %s59, 1
      %p326 = por %p324, %p325
      %p327 = scmp.ne.s32.totalorder %s319, %s322
      %p328 = scmp.eq.s32.totalorder %s59, 0
      %p329 = por %p327, %p328
      %p330 = scmp.ne.s32.totalorder %s319, %s322
      %p331 = scmp.eq.s32.totalorder %s64, 1
      %p332 = por %p330, %p331
      %p333 = scmp.ne.s32.totalorder %s322, %s323
      %p334 = scmp.eq.s32.totalorder %s64, 0
      %p335 = por %p333, %p334
      %p336 = scmp.ne.s32.totalorder %s322, %s323
      %p337 = scmp.eq.s32.totalorder %s65, 1
      %p338 = por %p336, %p337
      %p340 = scmp.ne.s32.totalorder %s323, %s339
      %p341 = scmp.eq.s32.totalorder %s65, 0
      %p342 = por %p340, %p341
      %s343 = ssub.s32 %s59, %s66
      %p344 = scmp.eq.s32.totalorder %s343, 0
      %s346 = sadd.s32 %s345, 1
      %s347 = scalar_select %p344, %s345, %s346
      %p350 = pneg %p344
      %p351 = scmp.eq.s32.totalorder %s59, 1
      %p352 = por %p350, %p351
      %p353 = scmp.ne.s32.totalorder %s345, %s348
      %p354 = scmp.eq.s32.totalorder %s59, 0
      %p355 = por %p353, %p354
      %p356 = scmp.ne.s32.totalorder %s345, %s348
      %p357 = scmp.eq.s32.totalorder %s64, 1
      %p358 = por %p356, %p357
      %p359 = scmp.ne.s32.totalorder %s348, %s349
      %p360 = scmp.eq.s32.totalorder %s64, 0
      %p361 = por %p359, %p360
      %p362 = scmp.ne.s32.totalorder %s348, %s349
      %p363 = scmp.eq.s32.totalorder %s65, 1
      %p364 = por %p362, %p363
      %p366 = scmp.ne.s32.totalorder %s349, %s365
      %p367 = scmp.eq.s32.totalorder %s65, 0
      %p368 = por %p366, %p367
      %s369 = ssub.s32 %s59, %s66
      %p370 = scmp.eq.s32.totalorder %s369, 0
      %s372 = sadd.s32 %s371, 1
      %s373 = scalar_select %p370, %s371, %s372
      %p376 = pneg %p370
      %p377 = scmp.eq.s32.totalorder %s59, 1
      %p378 = por %p376, %p377
      %p379 = scmp.ne.s32.totalorder %s371, %s374
      %p380 = scmp.eq.s32.totalorder %s59, 0
      %p381 = por %p379, %p380
      %p382 = scmp.ne.s32.totalorder %s371, %s374
      %p383 = scmp.eq.s32.totalorder %s64, 1
      %p384 = por %p382, %p383
      %p385 = scmp.ne.s32.totalorder %s374, %s375
      %p386 = scmp.eq.s32.totalorder %s64, 0
      %p387 = por %p385, %p386
      %p388 = scmp.ne.s32.totalorder %s374, %s375
      %p389 = scmp.eq.s32.totalorder %s65, 1
      %p390 = por %p388, %p389
      %p392 = scmp.ne.s32.totalorder %s375, %s391
      %p393 = scmp.eq.s32.totalorder %s65, 0
      %p394 = por %p392, %p393
      %s395 = ssub.s32 %s59, %s66
      %p396 = scmp.eq.s32.totalorder %s395, 0
      %s398 = sadd.s32 %s397, 1
      %s399 = scalar_select %p396, %s397, %s398
      %p402 = pneg %p396
      %p403 = scmp.eq.s32.totalorder %s59, 1
      %p404 = por %p402, %p403
      %p405 = scmp.ne.s32.totalorder %s397, %s400
      %p406 = scmp.eq.s32.totalorder %s59, 0
      %p407 = por %p405, %p406
      %p408 = scmp.ne.s32.totalorder %s397, %s400
      %p409 = scmp.eq.s32.totalorder %s64, 1
      %p410 = por %p408, %p409
      %p411 = scmp.ne.s32.totalorder %s400, %s401
      %p412 = scmp.eq.s32.totalorder %s64, 0
      %p413 = por %p411, %p412
      %p414 = scmp.ne.s32.totalorder %s400, %s401
      %p415 = scmp.eq.s32.totalorder %s65, 1
      %p416 = por %p414, %p415
      %p418 = scmp.ne.s32.totalorder %s401, %s417
      %p419 = scmp.eq.s32.totalorder %s65, 0
      %p420 = por %p418, %p419
      %s421 = ssub.s32 %s59, %s66
      %p422 = scmp.eq.s32.totalorder %s421, 0
      %s424 = sadd.s32 %s423, 1
      %s425 = scalar_select %p422, %s423, %s424
      %p428 = pneg %p422
      %p429 = scmp.eq.s32.totalorder %s59, 1
      %p430 = por %p428, %p429
      %p431 = scmp.ne.s32.totalorder %s423, %s426
      %p432 = scmp.eq.s32.totalorder %s59, 0
      %p433 = por %p431, %p432
      %p434 = scmp.ne.s32.totalorder %s423, %s426
      %p435 = scmp.eq.s32.totalorder %s64, 1
      %p436 = por %p434, %p435
      %p437 = scmp.ne.s32.totalorder %s426, %s427
      %p438 = scmp.eq.s32.totalorder %s64, 0
      %p439 = por %p437, %p438
      %p440 = scmp.ne.s32.totalorder %s426, %s427
      %p441 = scmp.eq.s32.totalorder %s65, 1
      %p442 = por %p440, %p441
      %p444 = scmp.ne.s32.totalorder %s427, %s443
      %p445 = scmp.eq.s32.totalorder %s65, 0
      %p446 = por %p444, %p445
      %s447 = ssub.s32 %s59, %s66
      %p448 = scmp.eq.s32.totalorder %s447, 0
      %s450 = sadd.s32 %s449, 1
      %s451 = scalar_select %p448, %s449, %s450
      %p454 = pneg %p448
      %p455 = scmp.eq.s32.totalorder %s59, 1
      %p456 = por %p454, %p455
      %p457 = scmp.ne.s32.totalorder %s449, %s452
      %p458 = scmp.eq.s32.totalorder %s59, 0
      %p459 = por %p457, %p458
      %p460 = scmp.ne.s32.totalorder %s449, %s452
      %p461 = scmp.eq.s32.totalorder %s64, 1
      %p462 = por %p460, %p461
      %p463 = scmp.ne.s32.totalorder %s452, %s453
      %p464 = scmp.eq.s32.totalorder %s64, 0
      %p465 = por %p463, %p464
      %p466 = scmp.ne.s32.totalorder %s452, %s453
      %p467 = scmp.eq.s32.totalorder %s65, 1
      %p468 = por %p466, %p467
      %p470 = scmp.ne.s32.totalorder %s453, %s469
      %p471 = scmp.eq.s32.totalorder %s65, 0
      %p472 = por %p470, %p471
      %s473 = ssub.s32 %s59, %s66
      %p474 = scmp.eq.s32.totalorder %s473, 0
      %s476 = sadd.s32 %s475, 1
      %s477 = scalar_select %p474, %s475, %s476
      %p480 = pneg %p474
      %p481 = scmp.eq.s32.totalorder %s59, 1
      %p482 = por %p480, %p481
      %p483 = scmp.ne.s32.totalorder %s475, %s478
      %p484 = scmp.eq.s32.totalorder %s59, 0
      %p485 = por %p483, %p484
      %p486 = scmp.ne.s32.totalorder %s475, %s478
      %p487 = scmp.eq.s32.totalorder %s64, 1
      %p488 = por %p486, %p487
      %p489 = scmp.ne.s32.totalorder %s478, %s479
      %p490 = scmp.eq.s32.totalorder %s64, 0
      %p491 = por %p489, %p490
      %p492 = scmp.ne.s32.totalorder %s478, %s479
      %p493 = scmp.eq.s32.totalorder %s65, 1
      %p494 = por %p492, %p493
      %p496 = scmp.ne.s32.totalorder %s479, %s495
      %p497 = scmp.eq.s32.totalorder %s65, 0
      %p498 = por %p496, %p497
      %s499 = ssub.s32 %s59, %s66
      %p500 = scmp.eq.s32.totalorder %s499, 0
      %s502 = sadd.s32 %s501, 1
      %s503 = scalar_select %p500, %s501, %s502
      %p506 = pneg %p500
      %p507 = scmp.eq.s32.totalorder %s59, 1
      %p508 = por %p506, %p507
      %p509 = scmp.ne.s32.totalorder %s501, %s504
      %p510 = scmp.eq.s32.totalorder %s59, 0
      %p511 = por %p509, %p510
      %p512 = scmp.ne.s32.totalorder %s501, %s504
      %p513 = scmp.eq.s32.totalorder %s64, 1
      %p514 = por %p512, %p513
      %p515 = scmp.ne.s32.totalorder %s504, %s505
      %p516 = scmp.eq.s32.totalorder %s64, 0
      %p517 = por %p515, %p516
      %p518 = scmp.ne.s32.totalorder %s504, %s505
      %p519 = scmp.eq.s32.totalorder %s65, 1
      %p520 = por %p518, %p519
      %p522 = scmp.ne.s32.totalorder %s505, %s521
      %p523 = scmp.eq.s32.totalorder %s65, 0
      %p524 = por %p522, %p523
      %s525 = ssub.s32 %s59, %s66
      %p526 = scmp.eq.s32.totalorder %s525, 0
      %s528 = sadd.s32 %s527, 1
      %s529 = scalar_select %p526, %s527, %s528
      %p532 = pneg %p526
      %p533 = scmp.eq.s32.totalorder %s59, 1
      %p534 = por %p532, %p533
      %p535 = scmp.ne.s32.totalorder %s527, %s530
      %p536 = scmp.eq.s32.totalorder %s59, 0
      %p537 = por %p535, %p536
      %p538 = scmp.ne.s32.totalorder %s527, %s530
      %p539 = scmp.eq.s32.totalorder %s64, 1
      %p540 = por %p538, %p539
      %p541 = scmp.ne.s32.totalorder %s530, %s531
      %p542 = scmp.eq.s32.totalorder %s64, 0
      %p543 = por %p541, %p542
      %p544 = scmp.ne.s32.totalorder %s530, %s531
      %p545 = scmp.eq.s32.totalorder %s65, 1
      %p546 = por %p544, %p545
      %p548 = scmp.ne.s32.totalorder %s531, %s547
      %p549 = scmp.eq.s32.totalorder %s65, 0
      %p550 = por %p548, %p549
      %s551 = ssub.s32 %s59, %s66
      %p552 = scmp.eq.s32.totalorder %s551, 0
      %s554 = sadd.s32 %s553, 1
      %s555 = scalar_select %p552, %s553, %s554
      %p558 = pneg %p552
      %p559 = scmp.eq.s32.totalorder %s59, 1
      %p560 = por %p558, %p559
      %p561 = scmp.ne.s32.totalorder %s553, %s556
      %p562 = scmp.eq.s32.totalorder %s59, 0
      %p563 = por %p561, %p562
      %p564 = scmp.ne.s32.totalorder %s553, %s556
      %p565 = scmp.eq.s32.totalorder %s64, 1
      %p566 = por %p564, %p565
      %p567 = scmp.ne.s32.totalorder %s556, %s557
      %p568 = scmp.eq.s32.totalorder %s64, 0
      %p569 = por %p567, %p568
      %p570 = scmp.ne.s32.totalorder %s556, %s557
      %p571 = scmp.eq.s32.totalorder %s65, 1
      %p572 = por %p570, %p571
      %p574 = scmp.ne.s32.totalorder %s557, %s573
      %p575 = scmp.eq.s32.totalorder %s65, 0
      %p576 = por %p574, %p575
      %s577 = ssub.s32 %s59, %s66
      %p578 = scmp.eq.s32.totalorder %s577, 0
      %s580 = sadd.s32 %s579, 1
      %s581 = scalar_select %p578, %s579, %s580
      %p584 = pneg %p578
      %p585 = scmp.eq.s32.totalorder %s59, 1
      %p586 = por %p584, %p585
      %p587 = scmp.ne.s32.totalorder %s579, %s582
      %p588 = scmp.eq.s32.totalorder %s59, 0
      %p589 = por %p587, %p588
      %p590 = scmp.ne.s32.totalorder %s579, %s582
      %p591 = scmp.eq.s32.totalorder %s64, 1
      %p592 = por %p590, %p591
      %p593 = scmp.ne.s32.totalorder %s582, %s583
      %p594 = scmp.eq.s32.totalorder %s64, 0
      %p595 = por %p593, %p594
      %p596 = scmp.ne.s32.totalorder %s582, %s583
      %p597 = scmp.eq.s32.totalorder %s65, 1
      %p598 = por %p596, %p597
      %p600 = scmp.ne.s32.totalorder %s583, %s599
      %p601 = scmp.eq.s32.totalorder %s65, 0
      %p602 = por %p600, %p601
      %s603 = ssub.s32 %s59, %s66
      %p604 = scmp.eq.s32.totalorder %s603, 0
      %s606 = sadd.s32 %s605, 1
      %s607 = scalar_select %p604, %s605, %s606
      %p610 = pneg %p604
      %p611 = scmp.eq.s32.totalorder %s59, 1
      %p612 = por %p610, %p611
      %p613 = scmp.ne.s32.totalorder %s605, %s608
      %p614 = scmp.eq.s32.totalorder %s59, 0
      %p615 = por %p613, %p614
      %p616 = scmp.ne.s32.totalorder %s605, %s608
      %p617 = scmp.eq.s32.totalorder %s64, 1
      %p618 = por %p616, %p617
      %p619 = scmp.ne.s32.totalorder %s608, %s609
      %p620 = scmp.eq.s32.totalorder %s64, 0
      %p621 = por %p619, %p620
      %p622 = scmp.ne.s32.totalorder %s608, %s609
      %p623 = scmp.eq.s32.totalorder %s65, 1
      %p624 = por %p622, %p623
      %p626 = scmp.ne.s32.totalorder %s609, %s625
      %p627 = scmp.eq.s32.totalorder %s65, 0
      %p628 = por %p626, %p627
      %s630 = sadd.s32 %s629, 1
      %p633 = scmp.eq.s32.totalorder %s59, 1
      %p634 = scmp.ne.s32.totalorder %s629, %s631
      %p635 = scmp.eq.s32.totalorder %s59, 0
      %p636 = por %p634, %p635
      %p637 = scmp.ne.s32.totalorder %s629, %s631
      %p638 = scmp.eq.s32.totalorder %s64, 1
      %p639 = por %p637, %p638
      %p640 = scmp.ne.s32.totalorder %s631, %s632
      %p641 = scmp.eq.s32.totalorder %s64, 0
      %p642 = por %p640, %p641
      %p643 = scmp.ne.s32.totalorder %s631, %s632
      %p644 = scmp.eq.s32.totalorder %s65, 1
      %p645 = por %p643, %p644
      %p647 = scmp.ne.s32.totalorder %s632, %s646
      %p648 = scmp.eq.s32.totalorder %s65, 0
      %p649 = por %p647, %p648
      %s651 = sadd.s32 %s650, 1
      %p654 = scmp.eq.s32.totalorder %s59, 1
      %p655 = scmp.ne.s32.totalorder %s650, %s652
      %p656 = scmp.eq.s32.totalorder %s59, 0
      %p657 = por %p655, %p656
      %p658 = scmp.ne.s32.totalorder %s650, %s652
      %p659 = scmp.eq.s32.totalorder %s64, 1
      %p660 = por %p658, %p659
      %p661 = scmp.ne.s32.totalorder %s652, %s653
      %p662 = scmp.eq.s32.totalorder %s64, 0
      %p663 = por %p661, %p662
      %p664 = scmp.ne.s32.totalorder %s652, %s653
      %p665 = scmp.eq.s32.totalorder %s65, 1
      %p666 = por %p664, %p665
      %p668 = scmp.ne.s32.totalorder %s653, %s667
      %p669 = scmp.eq.s32.totalorder %s65, 0
      %p670 = por %p668, %p669
      %s672 = sadd.s32 %s671, 1
      %p675 = scmp.eq.s32.totalorder %s59, 1
      %p676 = scmp.ne.s32.totalorder %s671, %s673
      %p677 = scmp.eq.s32.totalorder %s59, 0
      %p678 = por %p676, %p677
      %p679 = scmp.ne.s32.totalorder %s671, %s673
      %p680 = scmp.eq.s32.totalorder %s64, 1
      %p681 = por %p679, %p680
      %p682 = scmp.ne.s32.totalorder %s673, %s674
      %p683 = scmp.eq.s32.totalorder %s64, 0
      %p684 = por %p682, %p683
      %p685 = scmp.ne.s32.totalorder %s673, %s674
      %p686 = scmp.eq.s32.totalorder %s65, 1
      %p687 = por %p685, %p686
      %p689 = scmp.ne.s32.totalorder %s674, %s688
      %p690 = scmp.eq.s32.totalorder %s65, 0
      %p691 = por %p689, %p690
      %s693 = sadd.s32 %s692, 1
      %p696 = scmp.eq.s32.totalorder %s59, 1
      %p697 = scmp.ne.s32.totalorder %s692, %s694
      %p698 = scmp.eq.s32.totalorder %s59, 0
      %p699 = por %p697, %p698
      %p700 = scmp.ne.s32.totalorder %s692, %s694
      %p701 = scmp.eq.s32.totalorder %s64, 1
      %p702 = por %p700, %p701
      %p703 = scmp.ne.s32.totalorder %s694, %s695
      %p704 = scmp.eq.s32.totalorder %s64, 0
      %p705 = por %p703, %p704
      %p706 = scmp.ne.s32.totalorder %s694, %s695
      %p707 = scmp.eq.s32.totalorder %s65, 1
      %p708 = por %p706, %p707
      %p710 = scmp.ne.s32.totalorder %s695, %s709
      %p711 = scmp.eq.s32.totalorder %s65, 0
      %p712 = por %p710, %p711
      %s714 = sadd.s32 %s713, 1
      %p717 = scmp.eq.s32.totalorder %s59, 1
      %p718 = scmp.ne.s32.totalorder %s713, %s715
      %p719 = scmp.eq.s32.totalorder %s59, 0
      %p720 = por %p718, %p719
      %p721 = scmp.ne.s32.totalorder %s713, %s715
      %p722 = scmp.eq.s32.totalorder %s64, 1
      %p723 = por %p721, %p722
      %p724 = scmp.ne.s32.totalorder %s715, %s716
      %p725 = scmp.eq.s32.totalorder %s64, 0
      %p726 = por %p724, %p725
      %p727 = scmp.ne.s32.totalorder %s715, %s716
      %p728 = scmp.eq.s32.totalorder %s65, 1
      %p729 = por %p727, %p728
      %p731 = scmp.ne.s32.totalorder %s716, %s730
      %p732 = scmp.eq.s32.totalorder %s65, 0
      %p733 = por %p731, %p732
      %p734 = scmp.le.s32.totalorder 1, %s59
      %p735 = scmp.lt.s32.totalorder %s59, 3
      %p736 = pnand %p734, %p735
      %p737 = pneg %p736
      // Predicated region
      $region9: #{decision_forward.3} parent=5 // pred_check
        _
      $region10: #{decision_forward.3} parent=5 // pred_check_branch
        %739 = sbr.rel (%p736) target = $region12
      $region11: #{decision_forward.3} parent=5 // pred_region
        %s740 = ssub.s32 %s59, 1
        // Predicated region
        $region13: #{decision_forward.3} parent=11 // pred_check
          %p741 = pneg %p80
        $region14: #{decision_forward.3} parent=11 // pred_check_branch
          %743 = sbr.rel (%p741) target = $region16
        $region15: #{decision_forward.3} parent=11 // pred_region
          %745 = vsyncadd [#allocation4], 0
          %s746 = sshll.u32 %s0, 4
          %s747 = int_to_ptr.hbm [resolvable:$true] %s746
          %s748 = sshll.u32 [#allocation3], 4
          %s749 = int_to_ptr.vmem [resolvable:$true] %s748
          %754 = dma.hbm_to_vmem [thread:$0]  %s747, 256, %s749, [#allocation4], 128, 128, 8
        $region16: #{decision_forward.3} parent=11 // pred_fallthru
          _
        // Predicated region
        $region17: #{decision_forward.3} parent=11 // pred_check
          %p755 = pneg %p101
        $region18: #{decision_forward.3} parent=11 // pred_check_branch
          %757 = sbr.rel (%p755) target = $region20
        $region19: #{decision_forward.3} parent=11 // pred_region
          _
        $region20: #{decision_forward.3} parent=11 // pred_fallthru
          _
        // Predicated region
        $region21: #{decision_forward.3} parent=11 // pred_check
          %p758 = pneg %p642
        $region22: #{decision_forward.3} parent=11 // pred_check_branch
          %760 = sbr.rel (%p758) target = $region24
        $region23: #{decision_forward.3} parent=11 // pred_region
          %762 = vsyncadd [#allocation27], 0
          %s764 = sshll.u32 %s22, 4
          %s765 = int_to_ptr.hbm [resolvable:$true] %s764
          %s766 = sshll.u32 [#allocation28], 4
          %s767 = int_to_ptr.vmem [resolvable:$true] %s766
          %769 = dma.hbm_to_vmem [thread:$0]  %s765, 16, %s767, [#allocation27]
        $region24: #{decision_forward.3} parent=11 // pred_fallthru
          _
        // Predicated region
        $region25: #{decision_forward.3} parent=11 // pred_check
          %p770 = pneg %p663
        $region26: #{decision_forward.3} parent=11 // pred_check_branch
          %772 = sbr.rel (%p770) target = $region28
        $region27: #{decision_forward.3} parent=11 // pred_region
          %774 = vsyncadd [#allocation30], 0
          %s776 = sshll.u32 %s23, 4
          %s777 = int_to_ptr.hbm [resolvable:$true] %s776
          %s778 = sshll.u32 [#allocation29], 4
          %s779 = int_to_ptr.vmem [resolvable:$true] %s778
          %781 = dma.hbm_to_vmem [thread:$0]  %s777, 16, %s779, [#allocation30]
        $region28: #{decision_forward.3} parent=11 // pred_fallthru
          _
        // Predicated region
        $region29: #{decision_forward.3} parent=11 // pred_check
          %p782 = pneg %p684
        $region30: #{decision_forward.3} parent=11 // pred_check_branch
          %784 = sbr.rel (%p782) target = $region32
        $region31: #{decision_forward.3} parent=11 // pred_region
          %786 = vsyncadd [#allocation30], 0
          %s787 = sshll.u32 %s24, 4
          %s788 = int_to_ptr.hbm [resolvable:$true] %s787
          %s789 = sshll.u32 [#allocation31], 4
          %s790 = int_to_ptr.vmem [resolvable:$true] %s789
          %795 = dma.hbm_to_vmem [thread:$0]  %s788, 256, %s790, [#allocation30], 64, 64, 4
        $region32: #{decision_forward.3} parent=11 // pred_fallthru
          _
        // Predicated region
        $region33: #{decision_forward.3} parent=11 // pred_check
          %p796 = pneg %p705
        $region34: #{decision_forward.3} parent=11 // pred_check_branch
          %798 = sbr.rel (%p796) target = $region36
        $region35: #{decision_forward.3} parent=11 // pred_region
          %800 = vsyncadd [#allocation33], 0
          %s802 = sshll.u32 %s25, 4
          %s803 = int_to_ptr.hbm [resolvable:$true] %s802
          %s804 = sshll.u32 [#allocation32], 4
          %s805 = int_to_ptr.vmem [resolvable:$true] %s804
          %807 = dma.hbm_to_vmem [thread:$0]  %s803, 16, %s805, [#allocation33]
        $region36: #{decision_forward.3} parent=11 // pred_fallthru
          _
      $region12: #{decision_forward.3} parent=5 // pred_fallthru
        _
      %p808 = scmp.lt.s32.totalorder %s59, 2
      // Predicated region
      $region37: #{decision_forward.3} parent=5 // pred_check
        %p809 = pneg %p808
      $region38: #{decision_forward.3} parent=5 // pred_check_branch
        %811 = sbr.rel (%p809) target = $region40
      $region39: #{decision_forward.3} parent=5 // pred_region
        // Predicated region
        $region41: #{decision_forward.3} parent=39 // pred_check
          %p812 = pneg %p121
        $region42: #{decision_forward.3} parent=39 // pred_check_branch
          %814 = sbr.rel (%p812) target = $region44
        $region43: #{decision_forward.3} parent=39 // pred_region
          %p815 = scmp.lt.s32.totalorder %s59, 1
          %s816 = scalar_select %p815, %s59, 1
          %s817 = scalar_lea.vmem %s2, %s816
        $region44: #{decision_forward.3} parent=39 // pred_fallthru
          _
        // Predicated region
        $region45: #{decision_forward.3} parent=39 // pred_check
          %p818 = pneg %p147
        $region46: #{decision_forward.3} parent=39 // pred_check_branch
          %820 = sbr.rel (%p818) target = $region48
        $region47: #{decision_forward.3} parent=39 // pred_region
          %s821 = sand.u32 %s59, 1
          %s822 = scalar_lea.sflag [#allocation6], %s821
          %s823 = sand.u32 %s137, 1
          %s824 = scalar_lea.vmem [#allocation5], %s823
          %826 = vsyncadd %s822, 0
          %s827 = scalar_lea.hbm %s3, %s59
          %s829 = sshll.u32 %s827, 4
          %s830 = int_to_ptr.hbm [resolvable:$true] %s829
          %s831 = sshll.u32 %s824, 4
          %s832 = int_to_ptr.vmem [resolvable:$true] %s831
          %834 = dma.hbm_to_vmem [thread:$0]  %s830, 16, %s832, %s822
        $region48: #{decision_forward.3} parent=39 // pred_fallthru
          _
        // Predicated region
        $region49: #{decision_forward.3} parent=39 // pred_check
          %p835 = pneg %p173
        $region50: #{decision_forward.3} parent=39 // pred_check_branch
          %837 = sbr.rel (%p835) target = $region52
        $region51: #{decision_forward.3} parent=39 // pred_region
          %p838 = scmp.lt.s32.totalorder %s59, 1
          %s839 = scalar_select %p838, %s59, 1
          %s840 = smul.addr %s839, 4
          %s841 = smul.addr %s840, 4
          %s842 = scalar_lea.vmem %s4, %s841
        $region52: #{decision_forward.3} parent=39 // pred_fallthru
          _
        // Predicated region
        $region53: #{decision_forward.3} parent=39 // pred_check
          %p843 = pneg %p199
        $region54: #{decision_forward.3} parent=39 // pred_check_branch
          %845 = sbr.rel (%p843) target = $region56
        $region55: #{decision_forward.3} parent=39 // pred_region
          %s846 = sand.u32 %s59, 1
          %s847 = scalar_lea.sflag [#allocation6], %s846
          %s848 = sand.u32 %s189, 1
          %s849 = scalar_lea.vmem [#allocation7], %s848
          %851 = vsyncadd %s847, 0
          %s852 = scalar_lea.hbm %s5, %s59
          %s854 = sshll.u32 %s852, 4
          %s855 = int_to_ptr.hbm [resolvable:$true] %s854
          %s856 = sshll.u32 %s849, 4
          %s857 = int_to_ptr.vmem [resolvable:$true] %s856
          %859 = dma.hbm_to_vmem [thread:$0]  %s855, 16, %s857, %s847
        $region56: #{decision_forward.3} parent=39 // pred_fallthru
          _
        // Predicated region
        $region57: #{decision_forward.3} parent=39 // pred_check
          %p860 = pneg %p225
        $region58: #{decision_forward.3} parent=39 // pred_check_branch
          %862 = sbr.rel (%p860) target = $region60
        $region59: #{decision_forward.3} parent=39 // pred_region
          %p863 = scmp.lt.s32.totalorder %s59, 1
          %s864 = scalar_select %p863, %s59, 1
          %s865 = smul.addr %s864, 4
          %s866 = smul.addr %s865, 4
          %s867 = scalar_lea.vmem %s6, %s866
        $region60: #{decision_forward.3} parent=39 // pred_fallthru
          _
        // Predicated region
        $region61: #{decision_forward.3} parent=39 // pred_check
          %p868 = pneg %p251
        $region62: #{decision_forward.3} parent=39 // pred_check_branch
          %870 = sbr.rel (%p868) target = $region64
        $region63: #{decision_forward.3} parent=39 // pred_region
          %s871 = sand.u32 %s59, 1
          %s872 = scalar_lea.sflag [#allocation9], %s871
          %s873 = sand.u32 %s241, 1
          %s874 = scalar_lea.vmem [#allocation8], %s873
          %876 = vsyncadd %s872, 0
          %s877 = scalar_lea.hbm %s7, %s59
          %s879 = sshll.u32 %s877, 4
          %s880 = int_to_ptr.hbm [resolvable:$true] %s879
          %s881 = sshll.u32 %s874, 4
          %s882 = int_to_ptr.vmem [resolvable:$true] %s881
          %884 = dma.hbm_to_vmem [thread:$0]  %s880, 16, %s882, %s872
        $region64: #{decision_forward.3} parent=39 // pred_fallthru
          _
        // Predicated region
        $region65: #{decision_forward.3} parent=39 // pred_check
          %p885 = pneg %p277
        $region66: #{decision_forward.3} parent=39 // pred_check_branch
          %887 = sbr.rel (%p885) target = $region68
        $region67: #{decision_forward.3} parent=39 // pred_region
          %s888 = sand.u32 %s59, 1
          %s889 = scalar_lea.sflag [#allocation9], %s888
          %s890 = sand.u32 %s267, 1
          %s891 = scalar_lea.vmem [#allocation10], %s890
          %893 = vsyncadd %s889, 0
          %s894 = scalar_lea.hbm %s8, %s59
          %s896 = sshll.u32 %s894, 4
          %s897 = int_to_ptr.hbm [resolvable:$true] %s896
          %s898 = sshll.u32 %s891, 4
          %s899 = int_to_ptr.vmem [resolvable:$true] %s898
          %901 = dma.hbm_to_vmem [thread:$0]  %s897, 16, %s899, %s889
        $region68: #{decision_forward.3} parent=39 // pred_fallthru
          _
        // Predicated region
        $region69: #{decision_forward.3} parent=39 // pred_check
          %p902 = pneg %p303
        $region70: #{decision_forward.3} parent=39 // pred_check_branch
          %904 = sbr.rel (%p902) target = $region72
        $region71: #{decision_forward.3} parent=39 // pred_region
          %s905 = sand.u32 %s59, 1
          %s906 = scalar_lea.sflag [#allocation12], %s905
          %s907 = sand.u32 %s293, 1
          %s908 = scalar_lea.vmem [#allocation11], %s907
          %910 = vsyncadd %s906, 0
          %s911 = scalar_lea.hbm %s9, %s59
          %s913 = sshll.u32 %s911, 4
          %s914 = int_to_ptr.hbm [resolvable:$true] %s913
          %s915 = sshll.u32 %s908, 4
          %s916 = int_to_ptr.vmem [resolvable:$true] %s915
          %918 = dma.hbm_to_vmem [thread:$0]  %s914, 16, %s916, %s906
        $region72: #{decision_forward.3} parent=39 // pred_fallthru
          _
        // Predicated region
        $region73: #{decision_forward.3} parent=39 // pred_check
          %p919 = pneg %p329
        $region74: #{decision_forward.3} parent=39 // pred_check_branch
          %921 = sbr.rel (%p919) target = $region76
        $region75: #{decision_forward.3} parent=39 // pred_region
          %p922 = scmp.lt.s32.totalorder %s59, 1
          %s923 = scalar_select %p922, %s59, 1
          %s924 = smul.addr %s923, 4
          %s925 = smul.addr %s924, 4
          %s926 = scalar_lea.vmem %s10, %s925
        $region76: #{decision_forward.3} parent=39 // pred_fallthru
          _
        // Predicated region
        $region77: #{decision_forward.3} parent=39 // pred_check
          %p927 = pneg %p355
        $region78: #{decision_forward.3} parent=39 // pred_check_branch
          %929 = sbr.rel (%p927) target = $region80
        $region79: #{decision_forward.3} parent=39 // pred_region
          %s930 = sand.u32 %s59, 1
          %s931 = scalar_lea.sflag [#allocation12], %s930
          %s932 = sand.u32 %s345, 1
          %s933 = scalar_lea.vmem [#allocation13], %s932
          %935 = vsyncadd %s931, 0
          %s936 = scalar_lea.hbm %s11, %s59
          %s938 = sshll.u32 %s936, 4
          %s939 = int_to_ptr.hbm [resolvable:$true] %s938
          %s940 = sshll.u32 %s933, 4
          %s941 = int_to_ptr.vmem [resolvable:$true] %s940
          %943 = dma.hbm_to_vmem [thread:$0]  %s939, 16, %s941, %s931
        $region80: #{decision_forward.3} parent=39 // pred_fallthru
          _
        // Predicated region
        $region81: #{decision_forward.3} parent=39 // pred_check
          %p944 = pneg %p381
        $region82: #{decision_forward.3} parent=39 // pred_check_branch
          %946 = sbr.rel (%p944) target = $region84
        $region83: #{decision_forward.3} parent=39 // pred_region
          %s947 = sand.u32 %s59, 1
          %s948 = scalar_lea.sflag [#allocation15], %s947
          %s949 = sand.u32 %s371, 1
          %s950 = smul.addr %s949, 16
          %s951 = scalar_lea.vmem [#allocation14], %s950
          %953 = vsyncadd %s948, 0
          %s954 = smul.addr %s59, 4
          %s955 = smul.addr %s954, 4
          %s956 = scalar_lea.hbm %s12, %s955
          %s957 = sshll.u32 %s956, 4
          %s958 = int_to_ptr.hbm [resolvable:$true] %s957
          %s959 = sshll.u32 %s951, 4
          %s960 = int_to_ptr.vmem [resolvable:$true] %s959
          %965 = dma.hbm_to_vmem [thread:$0]  %s958, 256, %s960, %s948, 64, 64, 4
        $region84: #{decision_forward.3} parent=39 // pred_fallthru
          _
        // Predicated region
        $region85: #{decision_forward.3} parent=39 // pred_check
          %p966 = pneg %p407
        $region86: #{decision_forward.3} parent=39 // pred_check_branch
          %968 = sbr.rel (%p966) target = $region88
        $region87: #{decision_forward.3} parent=39 // pred_region
          %s969 = sand.u32 %s59, 1
          %s970 = scalar_lea.sflag [#allocation15], %s969
          %s971 = sand.u32 %s397, 1
          %s972 = scalar_lea.vmem [#allocation16], %s971
          %974 = vsyncadd %s970, 0
          %s975 = scalar_lea.hbm %s13, %s59
          %s977 = sshll.u32 %s975, 4
          %s978 = int_to_ptr.hbm [resolvable:$true] %s977
          %s979 = sshll.u32 %s972, 4
          %s980 = int_to_ptr.vmem [resolvable:$true] %s979
          %982 = dma.hbm_to_vmem [thread:$0]  %s978, 16, %s980, %s970
        $region88: #{decision_forward.3} parent=39 // pred_fallthru
          _
        // Predicated region
        $region89: #{decision_forward.3} parent=39 // pred_check
          %p983 = pneg %p433
        $region90: #{decision_forward.3} parent=39 // pred_check_branch
          %985 = sbr.rel (%p983) target = $region92
        $region91: #{decision_forward.3} parent=39 // pred_region
          %s986 = sand.u32 %s59, 1
          %s987 = scalar_lea.sflag [#allocation18], %s986
          %s988 = sand.u32 %s423, 1
          %s989 = smul.addr %s988, 16
          %s990 = scalar_lea.vmem [#allocation17], %s989
          %992 = vsyncadd %s987, 0
          %s993 = smul.addr %s59, 4
          %s994 = smul.addr %s993, 4
          %s995 = scalar_lea.hbm %s14, %s994
          %s996 = sshll.u32 %s995, 4
          %s997 = int_to_ptr.hbm [resolvable:$true] %s996
          %s998 = sshll.u32 %s990, 4
          %s999 = int_to_ptr.vmem [resolvable:$true] %s998
          %1004 = dma.hbm_to_vmem [thread:$0]  %s997, 256, %s999, %s987, 64, 64, 4
        $region92: #{decision_forward.3} parent=39 // pred_fallthru
          _
        // Predicated region
        $region93: #{decision_forward.3} parent=39 // pred_check
          %p1005 = pneg %p459
        $region94: #{decision_forward.3} parent=39 // pred_check_branch
          %1007 = sbr.rel (%p1005) target = $region96
        $region95: #{decision_forward.3} parent=39 // pred_region
          %s1008 = sand.u32 %s59, 1
          %s1009 = scalar_lea.sflag [#allocation18], %s1008
          %s1010 = sand.u32 %s449, 1
          %s1011 = scalar_lea.vmem [#allocation19], %s1010
          %1013 = vsyncadd %s1009, 0
          %s1014 = scalar_lea.hbm %s15, %s59
          %s1016 = sshll.u32 %s1014, 4
          %s1017 = int_to_ptr.hbm [resolvable:$true] %s1016
          %s1018 = sshll.u32 %s1011, 4
          %s1019 = int_to_ptr.vmem [resolvable:$true] %s1018
          %1021 = dma.hbm_to_vmem [thread:$0]  %s1017, 16, %s1019, %s1009
        $region96: #{decision_forward.3} parent=39 // pred_fallthru
          _
        // Predicated region
        $region97: #{decision_forward.3} parent=39 // pred_check
          %p1022 = pneg %p485
        $region98: #{decision_forward.3} parent=39 // pred_check_branch
          %1024 = sbr.rel (%p1022) target = $region100
        $region99: #{decision_forward.3} parent=39 // pred_region
          %s1025 = sand.u32 %s59, 1
          %s1026 = scalar_lea.sflag [#allocation21], %s1025
          %s1027 = sand.u32 %s475, 1
          %s1028 = scalar_lea.vmem [#allocation20], %s1027
          %1030 = vsyncadd %s1026, 0
          %s1031 = scalar_lea.hbm %s16, %s59
          %s1033 = sshll.u32 %s1031, 4
          %s1034 = int_to_ptr.hbm [resolvable:$true] %s1033
          %s1035 = sshll.u32 %s1028, 4
          %s1036 = int_to_ptr.vmem [resolvable:$true] %s1035
          %1038 = dma.hbm_to_vmem [thread:$0]  %s1034, 16, %s1036, %s1026
        $region100: #{decision_forward.3} parent=39 // pred_fallthru
          _
        // Predicated region
        $region101: #{decision_forward.3} parent=39 // pred_check
          %p1039 = pneg %p511
        $region102: #{decision_forward.3} parent=39 // pred_check_branch
          %1041 = sbr.rel (%p1039) target = $region104
        $region103: #{decision_forward.3} parent=39 // pred_region
          %s1042 = sand.u32 %s59, 1
          %s1043 = scalar_lea.sflag [#allocation21], %s1042
          %s1044 = sand.u32 %s501, 1
          %s1045 = scalar_lea.vmem [#allocation22], %s1044
          %1047 = vsyncadd %s1043, 0
          %s1048 = scalar_lea.hbm %s17, %s59
          %s1050 = sshll.u32 %s1048, 4
          %s1051 = int_to_ptr.hbm [resolvable:$true] %s1050
          %s1052 = sshll.u32 %s1045, 4
          %s1053 = int_to_ptr.vmem [resolvable:$true] %s1052
          %1055 = dma.hbm_to_vmem [thread:$0]  %s1051, 16, %s1053, %s1043
        $region104: #{decision_forward.3} parent=39 // pred_fallthru
          _
        // Predicated region
        $region105: #{decision_forward.3} parent=39 // pred_check
          %p1056 = pneg %p537
        $region106: #{decision_forward.3} parent=39 // pred_check_branch
          %1058 = sbr.rel (%p1056) target = $region108
        $region107: #{decision_forward.3} parent=39 // pred_region
          %s1059 = sand.u32 %s59, 1
          %s1060 = scalar_lea.sflag [#allocation24], %s1059
          %s1061 = sand.u32 %s527, 1
          %s1062 = smul.addr %s1061, 16
          %s1063 = scalar_lea.vmem [#allocation23], %s1062
          %1065 = vsyncadd %s1060, 0
          %s1066 = smul.addr %s59, 4
          %s1067 = smul.addr %s1066, 4
          %s1068 = scalar_lea.hbm %s18, %s1067
          %s1069 = sshll.u32 %s1068, 4
          %s1070 = int_to_ptr.hbm [resolvable:$true] %s1069
          %s1071 = sshll.u32 %s1063, 4
          %s1072 = int_to_ptr.vmem [resolvable:$true] %s1071
          %1077 = dma.hbm_to_vmem [thread:$0]  %s1070, 256, %s1072, %s1060, 64, 64, 4
        $region108: #{decision_forward.3} parent=39 // pred_fallthru
          _
        // Predicated region
        $region109: #{decision_forward.3} parent=39 // pred_check
          %p1078 = pneg %p563
        $region110: #{decision_forward.3} parent=39 // pred_check_branch
          %1080 = sbr.rel (%p1078) target = $region112
        $region111: #{decision_forward.3} parent=39 // pred_region
          %s1081 = sand.u32 %s59, 1
          %s1082 = scalar_lea.sflag [#allocation24], %s1081
          %s1083 = sand.u32 %s553, 1
          %s1084 = scalar_lea.vmem [#allocation25], %s1083
          %1086 = vsyncadd %s1082, 0
          %s1087 = scalar_lea.hbm %s19, %s59
          %s1089 = sshll.u32 %s1087, 4
          %s1090 = int_to_ptr.hbm [resolvable:$true] %s1089
          %s1091 = sshll.u32 %s1084, 4
          %s1092 = int_to_ptr.vmem [resolvable:$true] %s1091
          %1094 = dma.hbm_to_vmem [thread:$0]  %s1090, 16, %s1092, %s1082
        $region112: #{decision_forward.3} parent=39 // pred_fallthru
          _
        // Predicated region
        $region113: #{decision_forward.3} parent=39 // pred_check
          %p1095 = pneg %p589
        $region114: #{decision_forward.3} parent=39 // pred_check_branch
          %1097 = sbr.rel (%p1095) target = $region116
        $region115: #{decision_forward.3} parent=39 // pred_region
          %p1098 = scmp.lt.s32.totalorder %s59, 1
          %s1099 = scalar_select %p1098, %s59, 1
          %s1100 = smul.addr %s1099, 8
          %s1101 = smul.addr %s1100, 4
          %s1102 = scalar_lea.vmem %s20, %s1101
        $region116: #{decision_forward.3} parent=39 // pred_fallthru
          _
        // Predicated region
        $region117: #{decision_forward.3} parent=39 // pred_check
          %p1103 = pneg %p615
        $region118: #{decision_forward.3} parent=39 // pred_check_branch
          %1105 = sbr.rel (%p1103) target = $region120
        $region119: #{decision_forward.3} parent=39 // pred_region
          %s1106 = sand.u32 %s59, 1
          %s1107 = scalar_lea.sflag [#allocation27], %s1106
          %s1108 = sand.u32 %s605, 1
          %s1109 = scalar_lea.vmem [#allocation26], %s1108
          %1111 = vsyncadd %s1107, 0
          %s1112 = scalar_lea.hbm %s21, %s59
          %s1114 = sshll.u32 %s1112, 4
          %s1115 = int_to_ptr.hbm [resolvable:$true] %s1114
          %s1116 = sshll.u32 %s1109, 4
          %s1117 = int_to_ptr.vmem [resolvable:$true] %s1116
          %1119 = dma.hbm_to_vmem [thread:$0]  %s1115, 16, %s1117, %s1107
        $region120: #{decision_forward.3} parent=39 // pred_fallthru
          _
      $region40: #{decision_forward.3} parent=5 // pred_fallthru
        _
      %p1120 = scmp.le.s32.totalorder 1, %s59
      %p1121 = scmp.lt.s32.totalorder %s59, 3
      %p1122 = pnand %p1120, %p1121
      %p1123 = pneg %p1122
      // Predicated region
      $region121: #{decision_forward.3} parent=5 // pred_check
        _
      $region122: #{decision_forward.3} parent=5 // pred_check_branch
        %1125 = sbr.rel (%p1122) target = $region124
      $region123: #{decision_forward.3} parent=5 // pred_region
        %s1126 = ssub.s32 %s59, 1
        // Predicated region
        $region125: #{decision_forward.3} parent=123 // pred_check
          %p1127 = pneg %p80
        $region126: #{decision_forward.3} parent=123 // pred_check_branch
          %1129 = sbr.rel (%p1127) target = $region128
        $region127: #{decision_forward.3} parent=123 // pred_region
          %1131 = dma.done [#allocation4], 256
        $region128: #{decision_forward.3} parent=123 // pred_fallthru
          _
        %s1132 = sand.u32 %s64, 1
        %s1133 = scalar_lea.sflag [#allocation6], %s1132
        %s1134 = sand.u32 %s140, 1
        %s1135 = scalar_lea.vmem [#allocation5], %s1134
        // Predicated region
        $region129: #{decision_forward.3} parent=123 // pred_check
          %p1136 = pneg %p153
        $region130: #{decision_forward.3} parent=123 // pred_check_branch
          %1138 = sbr.rel (%p1136) target = $region132
        $region131: #{decision_forward.3} parent=123 // pred_region
          %1140 = dma.done %s1133, 16
        $region132: #{decision_forward.3} parent=123 // pred_fallthru
          _
        %s1141 = sand.u32 %s64, 1
        %s1142 = scalar_lea.sflag [#allocation6], %s1141
        %s1143 = sand.u32 %s192, 1
        %s1144 = scalar_lea.vmem [#allocation7], %s1143
        // Predicated region
        $region133: #{decision_forward.3} parent=123 // pred_check
          %p1145 = pneg %p205
        $region134: #{decision_forward.3} parent=123 // pred_check_branch
          %1147 = sbr.rel (%p1145) target = $region136
        $region135: #{decision_forward.3} parent=123 // pred_region
          %1149 = dma.done %s1142, 16
        $region136: #{decision_forward.3} parent=123 // pred_fallthru
          _
        %s1150 = sand.u32 %s64, 1
        %s1151 = scalar_lea.sflag [#allocation9], %s1150
        %s1152 = sand.u32 %s244, 1
        %s1153 = scalar_lea.vmem [#allocation8], %s1152
        // Predicated region
        $region137: #{decision_forward.3} parent=123 // pred_check
          %p1154 = pneg %p257
        $region138: #{decision_forward.3} parent=123 // pred_check_branch
          %1156 = sbr.rel (%p1154) target = $region140
        $region139: #{decision_forward.3} parent=123 // pred_region
          %1158 = dma.done %s1151, 16
        $region140: #{decision_forward.3} parent=123 // pred_fallthru
          _
        %s1159 = sand.u32 %s64, 1
        %s1160 = scalar_lea.sflag [#allocation9], %s1159
        %s1161 = sand.u32 %s270, 1
        %s1162 = scalar_lea.vmem [#allocation10], %s1161
        // Predicated region
        $region141: #{decision_forward.3} parent=123 // pred_check
          %p1163 = pneg %p283
        $region142: #{decision_forward.3} parent=123 // pred_check_branch
          %1165 = sbr.rel (%p1163) target = $region144
        $region143: #{decision_forward.3} parent=123 // pred_region
          %1167 = dma.done %s1160, 16
        $region144: #{decision_forward.3} parent=123 // pred_fallthru
          _
        %s1168 = sand.u32 %s64, 1
        %s1169 = scalar_lea.sflag [#allocation12], %s1168
        %s1170 = sand.u32 %s296, 1
        %s1171 = scalar_lea.vmem [#allocation11], %s1170
        // Predicated region
        $region145: #{decision_forward.3} parent=123 // pred_check
          %p1172 = pneg %p309
        $region146: #{decision_forward.3} parent=123 // pred_check_branch
          %1174 = sbr.rel (%p1172) target = $region148
        $region147: #{decision_forward.3} parent=123 // pred_region
          %1176 = dma.done %s1169, 16
        $region148: #{decision_forward.3} parent=123 // pred_fallthru
          _
        %s1177 = sand.u32 %s64, 1
        %s1178 = scalar_lea.sflag [#allocation12], %s1177
        %s1179 = sand.u32 %s348, 1
        %s1180 = scalar_lea.vmem [#allocation13], %s1179
        // Predicated region
        $region149: #{decision_forward.3} parent=123 // pred_check
          %p1181 = pneg %p361
        $region150: #{decision_forward.3} parent=123 // pred_check_branch
          %1183 = sbr.rel (%p1181) target = $region152
        $region151: #{decision_forward.3} parent=123 // pred_region
          %1185 = dma.done %s1178, 16
        $region152: #{decision_forward.3} parent=123 // pred_fallthru
          _
        %s1186 = sand.u32 %s64, 1
        %s1187 = scalar_lea.sflag [#allocation15], %s1186
        %s1188 = sand.u32 %s374, 1
        %s1189 = smul.addr %s1188, 16
        %s1190 = scalar_lea.vmem [#allocation14], %s1189
        // Predicated region
        $region153: #{decision_forward.3} parent=123 // pred_check
          %p1191 = pneg %p387
        $region154: #{decision_forward.3} parent=123 // pred_check_branch
          %1193 = sbr.rel (%p1191) target = $region156
        $region155: #{decision_forward.3} parent=123 // pred_region
          %1195 = dma.done %s1187, 256
        $region156: #{decision_forward.3} parent=123 // pred_fallthru
          _
        %s1196 = sand.u32 %s64, 1
        %s1197 = scalar_lea.sflag [#allocation15], %s1196
        %s1198 = sand.u32 %s400, 1
        %s1199 = scalar_lea.vmem [#allocation16], %s1198
        // Predicated region
        $region157: #{decision_forward.3} parent=123 // pred_check
          %p1200 = pneg %p413
        $region158: #{decision_forward.3} parent=123 // pred_check_branch
          %1202 = sbr.rel (%p1200) target = $region160
        $region159: #{decision_forward.3} parent=123 // pred_region
          %1204 = dma.done %s1197, 16
        $region160: #{decision_forward.3} parent=123 // pred_fallthru
          _
        %s1205 = sand.u32 %s64, 1
        %s1206 = scalar_lea.sflag [#allocation18], %s1205
        %s1207 = sand.u32 %s426, 1
        %s1208 = smul.addr %s1207, 16
        %s1209 = scalar_lea.vmem [#allocation17], %s1208
        // Predicated region
        $region161: #{decision_forward.3} parent=123 // pred_check
          %p1210 = pneg %p439
        $region162: #{decision_forward.3} parent=123 // pred_check_branch
          %1212 = sbr.rel (%p1210) target = $region164
        $region163: #{decision_forward.3} parent=123 // pred_region
          %1214 = dma.done %s1206, 256
        $region164: #{decision_forward.3} parent=123 // pred_fallthru
          _
        %s1215 = sand.u32 %s64, 1
        %s1216 = scalar_lea.sflag [#allocation18], %s1215
        %s1217 = sand.u32 %s452, 1
        %s1218 = scalar_lea.vmem [#allocation19], %s1217
        // Predicated region
        $region165: #{decision_forward.3} parent=123 // pred_check
          %p1219 = pneg %p465
        $region166: #{decision_forward.3} parent=123 // pred_check_branch
          %1221 = sbr.rel (%p1219) target = $region168
        $region167: #{decision_forward.3} parent=123 // pred_region
          %1223 = dma.done %s1216, 16
        $region168: #{decision_forward.3} parent=123 // pred_fallthru
          _
        %s1224 = sand.u32 %s64, 1
        %s1225 = scalar_lea.sflag [#allocation21], %s1224
        %s1226 = sand.u32 %s478, 1
        %s1227 = scalar_lea.vmem [#allocation20], %s1226
        // Predicated region
        $region169: #{decision_forward.3} parent=123 // pred_check
          %p1228 = pneg %p491
        $region170: #{decision_forward.3} parent=123 // pred_check_branch
          %1230 = sbr.rel (%p1228) target = $region172
        $region171: #{decision_forward.3} parent=123 // pred_region
          %1232 = dma.done %s1225, 16
        $region172: #{decision_forward.3} parent=123 // pred_fallthru
          _
        %s1233 = sand.u32 %s64, 1
        %s1234 = scalar_lea.sflag [#allocation21], %s1233
        %s1235 = sand.u32 %s504, 1
        %s1236 = scalar_lea.vmem [#allocation22], %s1235
        // Predicated region
        $region173: #{decision_forward.3} parent=123 // pred_check
          %p1237 = pneg %p517
        $region174: #{decision_forward.3} parent=123 // pred_check_branch
          %1239 = sbr.rel (%p1237) target = $region176
        $region175: #{decision_forward.3} parent=123 // pred_region
          %1241 = dma.done %s1234, 16
        $region176: #{decision_forward.3} parent=123 // pred_fallthru
          _
        %s1242 = sand.u32 %s64, 1
        %s1243 = scalar_lea.sflag [#allocation24], %s1242
        %s1244 = sand.u32 %s530, 1
        %s1245 = smul.addr %s1244, 16
        %s1246 = scalar_lea.vmem [#allocation23], %s1245
        // Predicated region
        $region177: #{decision_forward.3} parent=123 // pred_check
          %p1247 = pneg %p543
        $region178: #{decision_forward.3} parent=123 // pred_check_branch
          %1249 = sbr.rel (%p1247) target = $region180
        $region179: #{decision_forward.3} parent=123 // pred_region
          %1251 = dma.done %s1243, 256
        $region180: #{decision_forward.3} parent=123 // pred_fallthru
          _
        %s1252 = sand.u32 %s64, 1
        %s1253 = scalar_lea.sflag [#allocation24], %s1252
        %s1254 = sand.u32 %s556, 1
        %s1255 = scalar_lea.vmem [#allocation25], %s1254
        // Predicated region
        $region181: #{decision_forward.3} parent=123 // pred_check
          %p1256 = pneg %p569
        $region182: #{decision_forward.3} parent=123 // pred_check_branch
          %1258 = sbr.rel (%p1256) target = $region184
        $region183: #{decision_forward.3} parent=123 // pred_region
          %1260 = dma.done %s1253, 16
        $region184: #{decision_forward.3} parent=123 // pred_fallthru
          _
        %s1261 = sand.u32 %s64, 1
        %s1262 = scalar_lea.sflag [#allocation27], %s1261
        %s1263 = sand.u32 %s608, 1
        %s1264 = scalar_lea.vmem [#allocation26], %s1263
        // Predicated region
        $region185: #{decision_forward.3} parent=123 // pred_check
          %p1265 = pneg %p621
        $region186: #{decision_forward.3} parent=123 // pred_check_branch
          %1267 = sbr.rel (%p1265) target = $region188
        $region187: #{decision_forward.3} parent=123 // pred_region
          %1269 = dma.done %s1262, 16
        $region188: #{decision_forward.3} parent=123 // pred_fallthru
          _
        // Predicated region
        $region189: #{decision_forward.3} parent=123 // pred_check
          %p1270 = pneg %p642
        $region190: #{decision_forward.3} parent=123 // pred_check_branch
          %1272 = sbr.rel (%p1270) target = $region192
        $region191: #{decision_forward.3} parent=123 // pred_region
          %1274 = dma.done [#allocation27], 16
        $region192: #{decision_forward.3} parent=123 // pred_fallthru
          _
        // Predicated region
        $region193: #{decision_forward.3} parent=123 // pred_check
          %p1275 = pneg %p663
        $region194: #{decision_forward.3} parent=123 // pred_check_branch
          %1277 = sbr.rel (%p1275) target = $region196
        $region195: #{decision_forward.3} parent=123 // pred_region
          %1279 = dma.done [#allocation30], 16
        $region196: #{decision_forward.3} parent=123 // pred_fallthru
          _
        // Predicated region
        $region197: #{decision_forward.3} parent=123 // pred_check
          %p1280 = pneg %p684
        $region198: #{decision_forward.3} parent=123 // pred_check_branch
          %1282 = sbr.rel (%p1280) target = $region200
        $region199: #{decision_forward.3} parent=123 // pred_region
          %1284 = dma.done [#allocation30], 256
        $region200: #{decision_forward.3} parent=123 // pred_fallthru
          _
        // Predicated region
        $region201: #{decision_forward.3} parent=123 // pred_check
          %p1285 = pneg %p705
        $region202: #{decision_forward.3} parent=123 // pred_check_branch
          %1287 = sbr.rel (%p1285) target = $region204
        $region203: #{decision_forward.3} parent=123 // pred_region
          %1289 = dma.done [#allocation33], 16
        $region204: #{decision_forward.3} parent=123 // pred_fallthru
          _
        %p1290 = pneg %p80
        %p1291 = pneg %p77
        %p1292 = pneg %p101
        %p1293 = pneg %p98
        %p1294 = scmp.lt.s32.totalorder %s64, 1
        %s1295 = scalar_select %p1294, %s64, 1
        %s1296 = scalar_lea.vmem %s2, %s1295
        %p1297 = pneg %p127
        %p1298 = pneg %p124
        %s1299 = sand.u32 %s64, 1
        %s1300 = scalar_lea.sflag [#allocation6], %s1299
        %s1301 = sand.u32 %s140, 1
        %s1302 = scalar_lea.vmem [#allocation5], %s1301
        %p1303 = pneg %p153
        %p1304 = pneg %p150
        %p1305 = scmp.lt.s32.totalorder %s64, 1
        %s1306 = scalar_select %p1305, %s64, 1
        %s1307 = smul.addr %s1306, 4
        %s1308 = smul.addr %s1307, 4
        %s1309 = scalar_lea.vmem %s4, %s1308
        %p1310 = pneg %p179
        %p1311 = pneg %p176
        %s1312 = sand.u32 %s64, 1
        %s1313 = scalar_lea.sflag [#allocation6], %s1312
        %s1314 = sand.u32 %s192, 1
        %s1315 = scalar_lea.vmem [#allocation7], %s1314
        %p1316 = pneg %p205
        %p1317 = pneg %p202
        %p1318 = scmp.lt.s32.totalorder %s64, 1
        %s1319 = scalar_select %p1318, %s64, 1
        %s1320 = smul.addr %s1319, 4
        %s1321 = smul.addr %s1320, 4
        %s1322 = scalar_lea.vmem %s6, %s1321
        %p1323 = pneg %p231
        %p1324 = pneg %p228
        %s1325 = sand.u32 %s64, 1
        %s1326 = scalar_lea.sflag [#allocation9], %s1325
        %s1327 = sand.u32 %s244, 1
        %s1328 = scalar_lea.vmem [#allocation8], %s1327
        %p1329 = pneg %p257
        %p1330 = pneg %p254
        %s1331 = sand.u32 %s64, 1
        %s1332 = scalar_lea.sflag [#allocation9], %s1331
        %s1333 = sand.u32 %s270, 1
        %s1334 = scalar_lea.vmem [#allocation10], %s1333
        %p1335 = pneg %p283
        %p1336 = pneg %p280
        %s1337 = sand.u32 %s64, 1
        %s1338 = scalar_lea.sflag [#allocation12], %s1337
        %s1339 = sand.u32 %s296, 1
        %s1340 = scalar_lea.vmem [#allocation11], %s1339
        %p1341 = pneg %p309
        %p1342 = pneg %p306
        %p1343 = scmp.lt.s32.totalorder %s64, 1
        %s1344 = scalar_select %p1343, %s64, 1
        %s1345 = smul.addr %s1344, 4
        %s1346 = smul.addr %s1345, 4
        %s1347 = scalar_lea.vmem %s10, %s1346
        %p1348 = pneg %p335
        %p1349 = pneg %p332
        %s1350 = sand.u32 %s64, 1
        %s1351 = scalar_lea.sflag [#allocation12], %s1350
        %s1352 = sand.u32 %s348, 1
        %s1353 = scalar_lea.vmem [#allocation13], %s1352
        %p1354 = pneg %p361
        %p1355 = pneg %p358
        %s1356 = sand.u32 %s64, 1
        %s1357 = scalar_lea.sflag [#allocation15], %s1356
        %s1358 = sand.u32 %s374, 1
        %s1359 = smul.addr %s1358, 16
        %s1360 = scalar_lea.vmem [#allocation14], %s1359
        %p1361 = pneg %p387
        %p1362 = pneg %p384
        %s1363 = sand.u32 %s64, 1
        %s1364 = scalar_lea.sflag [#allocation15], %s1363
        %s1365 = sand.u32 %s400, 1
        %s1366 = scalar_lea.vmem [#allocation16], %s1365
        %p1367 = pneg %p413
        %p1368 = pneg %p410
        %s1369 = sand.u32 %s64, 1
        %s1370 = scalar_lea.sflag [#allocation18], %s1369
        %s1371 = sand.u32 %s426, 1
        %s1372 = smul.addr %s1371, 16
        %s1373 = scalar_lea.vmem [#allocation17], %s1372
        %p1374 = pneg %p439
        %p1375 = pneg %p436
        %s1376 = sand.u32 %s64, 1
        %s1377 = scalar_lea.sflag [#allocation18], %s1376
        %s1378 = sand.u32 %s452, 1
        %s1379 = scalar_lea.vmem [#allocation19], %s1378
        %p1380 = pneg %p465
        %p1381 = pneg %p462
        %s1382 = sand.u32 %s64, 1
        %s1383 = scalar_lea.sflag [#allocation21], %s1382
        %s1384 = sand.u32 %s478, 1
        %s1385 = scalar_lea.vmem [#allocation20], %s1384
        %p1386 = pneg %p491
        %p1387 = pneg %p488
        %s1388 = sand.u32 %s64, 1
        %s1389 = scalar_lea.sflag [#allocation21], %s1388
        %s1390 = sand.u32 %s504, 1
        %s1391 = scalar_lea.vmem [#allocation22], %s1390
        %p1392 = pneg %p517
        %p1393 = pneg %p514
        %s1394 = sand.u32 %s64, 1
        %s1395 = scalar_lea.sflag [#allocation24], %s1394
        %s1396 = sand.u32 %s530, 1
        %s1397 = smul.addr %s1396, 16
        %s1398 = scalar_lea.vmem [#allocation23], %s1397
        %p1399 = pneg %p543
        %p1400 = pneg %p540
        %s1401 = sand.u32 %s64, 1
        %s1402 = scalar_lea.sflag [#allocation24], %s1401
        %s1403 = sand.u32 %s556, 1
        %s1404 = scalar_lea.vmem [#allocation25], %s1403
        %p1405 = pneg %p569
        %p1406 = pneg %p566
        %p1407 = scmp.lt.s32.totalorder %s64, 1
        %s1408 = scalar_select %p1407, %s64, 1
        %s1409 = smul.addr %s1408, 8
        %s1410 = smul.addr %s1409, 4
        %s1411 = scalar_lea.vmem %s20, %s1410
        %p1412 = pneg %p595
        %p1413 = pneg %p592
        %s1414 = sand.u32 %s64, 1
        %s1415 = scalar_lea.sflag [#allocation27], %s1414
        %s1416 = sand.u32 %s608, 1
        %s1417 = scalar_lea.vmem [#allocation26], %s1416
        %p1418 = pneg %p621
        %p1419 = pneg %p618
        %p1420 = pneg %p642
        %p1421 = pneg %p639
        %p1422 = pneg %p663
        %p1423 = pneg %p660
        %p1424 = pneg %p684
        %p1425 = pneg %p681
        %p1426 = pneg %p705
        %p1427 = pneg %p702
        %p1428 = pneg %p726
        %p1429 = pneg %p723
        %p1430 = scmp.lt.s32.totalorder %s64, 1
        %s1431 = scalar_select %p1430, %s64, 1
        %s1432 = scalar_lea.vmem %s2, %s1431
        %p1433 = scmp.lt.s32.totalorder %s64, 1
        %s1434 = scalar_select %p1433, %s64, 1
        %s1435 = smul.addr %s1434, 4
        %s1436 = smul.addr %s1435, 4
        %s1437 = scalar_lea.vmem %s4, %s1436
        %p1438 = scmp.lt.s32.totalorder %s64, 1
        %s1439 = scalar_select %p1438, %s64, 1
        %s1440 = smul.addr %s1439, 4
        %s1441 = smul.addr %s1440, 4
        %s1442 = scalar_lea.vmem %s6, %s1441
        %p1443 = scmp.lt.s32.totalorder %s64, 1
        %s1444 = scalar_select %p1443, %s64, 1
        %s1445 = smul.addr %s1444, 4
        %s1446 = smul.addr %s1445, 4
        %s1447 = scalar_lea.vmem %s10, %s1446
        %p1448 = scmp.lt.s32.totalorder %s64, 1
        %s1449 = scalar_select %p1448, %s64, 1
        %s1450 = smul.addr %s1449, 8
        %s1451 = smul.addr %s1450, 4
        %s1452 = scalar_lea.vmem %s20, %s1451
        %p1454 = scmp.eq.s32.totalorder %s64, 0
        // Predicated region
        $region205: #{decision_forward.3} parent=123 // pred_check
          %p1455 = pneg %p1454
        $region206: #{decision_forward.3} parent=123 // pred_check_branch
          %1457 = sbr.rel (%p1455) target = $region208
        $region207: #{decision_forward.3} parent=123 // pred_region
          %v1458 = vld [vmem:[#allocation3] sm:$0xff]
          %v1459 = vld [vmem:[#allocation3 + $0x8] sm:$0xff]
          %vm1460 = vcmask 261120
          %1461 = vst.msk [vmem:[#allocation2] sm:$0xff] %vm1460, %v1458
          %1462 = vst.msk [vmem:[#allocation2 + $0x8] sm:$0xff] %vm1460, %v1459
        $region208: #{decision_forward.3} parent=123 // pred_fallthru
          _
        %v1463 = vld [vmem:[#allocation2] sm:$0xff]
        %v1464 = vld [vmem:[#allocation2 + $0x8] sm:$0xff]
        %v1465 = vld [vmem:[%s1] sm:$0xff]
        %v1466 = vld [vmem:[%s1 + $0x8] sm:$0xff]
        %v1467 = vpack.c.bf16 %v1466, %v1465
        %v1468 = vld [vmem:[%s1432] sm:$0x1]
        %v1469 = vld [vmem:[%s1135] sm:$0x1]
        %vm1470 = vcmask 261120
        %v1471 = vsel %vm1470, %v1463, 0.0
        %1472 = vadd.xlane.f32.xlu0 %v1471
        %v1473 = vpop.xlane.xlu0 %1472
        %v1474 = vsel %vm1470, %v1464, 0.0
        %1475 = vadd.xlane.f32.xlu0 %v1474
        %v1476 = vpop.xlane.xlu0 %1475
        %v1477 = vrcp.pop 32.0
        %v1478 = vmul.f32 32.0, %v1477
        %v1479 = vsub.f32 1.0, %v1478
        %v1480 = vmul.f32 %v1477, %v1479
        %v1481 = vadd.f32 %v1477, %v1480
        %vm1482 = vweird.f32 %v1477
        %v1483 = vsel %vm1482, %v1477, %v1481
        %v1484 = vmul.f32 %v1473, %v1483
        %v1485 = vmul.f32 %v1476, %v1483
        %v1486 = vsub.f32 %v1463, %v1484
        %v1487 = vsub.f32 %v1464, %v1485
        %v1488 = vmul.f32 %v1486, %v1486
        %v1489 = vmul.f32 %v1487, %v1487
        %v1490 = vsel %vm1470, %v1488, 0.0
        %1491 = vadd.xlane.f32.xlu0 %v1490
        %v1492 = vpop.xlane.xlu0 %1491
        %v1493 = vsel %vm1470, %v1489, 0.0
        %1494 = vadd.xlane.f32.xlu0 %v1493
        %v1495 = vpop.xlane.xlu0 %1494
        %v1496 = vmul.f32 %v1492, %v1483
        %v1497 = vmul.f32 %v1495, %v1483
        %v1498 = vadd.f32 %v1496, 1e-05
        %v1499 = vadd.f32 %v1497, 1e-05
        %v1500 = vrsqrt.pop %v1498
        %v1501 = vmul.f32 %v1500, %v1498
        %v1502 = vmul.f32 %v1501, %v1500
        %v1503 = vmul.f32 0.5, %v1502
        %v1504 = vsub.f32 1.5, %v1503
        %v1505 = vmul.f32 %v1500, %v1504
        %vm1506 = vweird.f32 %v1498
        %vm1507 = vweird.f32 %v1500
        %vm1508 = vmor %vm1506, %vm1507
        %v1509 = vsel %vm1508, %v1500, %v1505
        %v1510 = vrsqrt.pop %v1499
        %v1511 = vmul.f32 %v1510, %v1499
        %v1512 = vmul.f32 %v1511, %v1510
        %v1513 = vmul.f32 0.5, %v1512
        %v1514 = vsub.f32 1.5, %v1513
        %v1515 = vmul.f32 %v1510, %v1514
        %vm1516 = vweird.f32 %v1499
        %vm1517 = vweird.f32 %v1510
        %vm1518 = vmor %vm1516, %vm1517
        %v1519 = vsel %vm1518, %v1510, %v1515
        %v1520 = vmul.f32 %v1486, %v1509
        %v1521 = vmul.f32 %v1487, %v1519
        %v1523 = vperm.slane %v1468, 0
        %v1525 = vmul.f32 %v1520, %v1523
        %v1526 = vmul.f32 %v1521, %v1523
        %v1528 = vperm.slane %v1469, 0
        %v1530 = vadd.f32 %v1525, %v1528
        %v1531 = vadd.f32 %v1526, %v1528
        %v1532 = vld [vmem:[%s1437] sm:$0xf]
        %v1533 = vld [vmem:[%s1437 + $0x4] sm:$0xf]
        %v1534 = vld [vmem:[%s1437 + $0x8] sm:$0xf]
        %v1535 = vld [vmem:[%s1437 + $0xc] sm:$0xf]
        %v1536 = vld [vmem:[%s1144] sm:$0x1]
        %v1537 = vld [vmem:[%s1442] sm:$0xf]
        %v1538 = vld [vmem:[%s1442 + $0x4] sm:$0xf]
        %v1539 = vld [vmem:[%s1442 + $0x8] sm:$0xf]
        %v1540 = vld [vmem:[%s1442 + $0xc] sm:$0xf]
        %v1541 = vld [vmem:[%s1153] sm:$0x1]
        %v1542 = vpack.c.bf16 %v1531, %v1530
        %v1544 = vperm.slane %v1536, 0
        %v1550 = vunpack.c.l.b16 %v1532
        %v1551 = vunpack.c.l.b16 %v1533
        %v1552 = vunpack.c.l.b16 %v1534
        %v1553 = vunpack.c.l.b16 %v1535
        %v1554 = vpack.c.b16 %v1551, %v1550
        %v1555 = vpack.c.b16 %v1553, %v1552
        %v1559 = vsel %vm1470, %v1542, 0
        %1561 = vmatpush.bf16.msra.mxu0 0
        %1562 = vmatpush.bf16.msra.mxu0 0
        %1563 = vmatpush.bf16.msra.mxu0 0
        %1564 = vmatpush.bf16.msra.mxu0 0
        %1565 = vmatpush.bf16.msra.mxu0 0
        %1566 = vmatpush.bf16.msra.mxu0 0
        %1567 = vmatpush.bf16.msra.mxu0 %v1555
        %1568 = vmatpush.bf16.msra.mxu0 %v1554
        %1569 = vmatmul.bf16.gmra.mxu0 %v1559
        %v1570 = vpop.f32.mrf.mxu0
        %v1571 = vadd.f32 %v1544, %v1570
        %v1572 = vpop.f32.mrf.mxu0
        %v1573 = vadd.f32 %v1544, %v1572
        %1574 = vdwg.mxu0
        %v1575 = vmul.f32 %v1571, 0.5
        %v1576 = vmul.f32 %v1573, 0.5
        %v1577 = vpack.c.bf16 %v1575, %v1575
        %v1578 = vpack.c.bf16 %v1576, %v1576
        %v1579 = vpack.c.bf16 %v1571, %v1571
        %v1580 = vpack.c.bf16 %v1573, %v1573
        %v1581 = vlaneseq
        %v1582 = vand.u32 %v1581, 127
        %vm1583 = vcmp.ge.s32.totalorder %v1582, 0
        %vm1584 = vcmp.lt.s32.totalorder %v1582, 4
        %vm1585 = vmand %vm1583, %vm1584
        %v1586 = vsel %vm1585, 1, 0
        %v1587 = vcvt.s32.f32 %v1586
        %v1588 = vpack.c.bf16 %v1587, %v1587
        %v1589 = vunpack.c.l.bf16 %v1579
        %v1590 = vunpack.c.l.bf16 %v1580
        %v1591 = vunpack.c.l.bf16 %v1588
        %1593 = vrot.lane.b32.xlu0 %v1591, 32
        %v1594 = vpop.permute.xlu0 %1593
        %v1596 = vmul.f32 %v1589, %v1594
        %v1597 = vmul.f32 %v1590, %v1594
        %v1598 = vpack.c.bf16 %v1596, %v1596
        %v1599 = vpack.c.bf16 %v1597, %v1597
        %v1601 = vunpack.c.l.b16 %v1598
        %v1602 = vpack.c.b16 %v1601, %v1601
        %1603 = vrot.lane.b32.xlu0 %v1602, 96
        %v1604 = vpop.permute.xlu0 %1603
        %v1606 = vsel %vm1470, %v1577, 0
        %v1609 = vsel %vm1470, %v1604, 0
        %1611 = vmatpush.bf16.xpose.msra.mxu0 0
        %1612 = vmatpush.bf16.xpose.msra.mxu0 0
        %1613 = vmatpush.bf16.xpose.msra.mxu0 0
        %1614 = vmatpush.bf16.xpose.msra.mxu0 0
        %1615 = vmatpush.bf16.xpose.msra.mxu0 0
        %1616 = vmatpush.bf16.xpose.msra.mxu0 0
        %1617 = vmatpush.bf16.xpose.msra.mxu0 0
        %1618 = vmatpush.bf16.xpose.msra.mxu0 %v1609
        %1619 = vmatmul.bf16.gmra.mxu0 %v1606
        %v1620 = vpop.f32.mrf.mxu0
        %v1621 = vadd.f32 0.0, %v1620
        %v1622 = vpop.f32.mrf.mxu0
        %1623 = vdwg.mxu0
        %v1625 = vunpack.c.l.b16 %v1599
        %v1626 = vpack.c.b16 %v1625, %v1625
        %1627 = vrot.lane.b32.xlu0 %v1626, 96
        %v1628 = vpop.permute.xlu0 %1627
        %v1630 = vsel %vm1470, %v1578, 0
        %v1633 = vsel %vm1470, %v1628, 0
        %1635 = vmatpush.bf16.xpose.msra.mxu0 0
        %1636 = vmatpush.bf16.xpose.msra.mxu0 0
        %1637 = vmatpush.bf16.xpose.msra.mxu0 0
        %1638 = vmatpush.bf16.xpose.msra.mxu0 0
        %1639 = vmatpush.bf16.xpose.msra.mxu0 0
        %1640 = vmatpush.bf16.xpose.msra.mxu0 0
        %1641 = vmatpush.bf16.xpose.msra.mxu0 0
        %1642 = vmatpush.bf16.xpose.msra.mxu0 %v1633
        %1643 = vmatmul.bf16.gmra.mxu0 %v1630
        %v1644 = vpop.f32.mrf.mxu0
        %v1645 = vadd.f32 0.0, %v1644
        %v1646 = vpop.f32.mrf.mxu0
        %1647 = vdwg.mxu0
        %vm1648 = vcmask 64512
        %v1649 = vsel %vm1648, %v1621, -inf
        %1650 = vmax.xlane.f32.xlu0 %v1649
        %v1651 = vpop.xlane.xlu0 %1650
        %v1652 = vsel %vm1648, %v1645, -inf
        %1653 = vmax.xlane.f32.xlu0 %v1652
        %v1654 = vpop.xlane.xlu0 %1653
        %v1655 = vsub.f32 %v1621, %v1651
        %v1656 = vsub.f32 %v1645, %v1654
        %v1657 = vmul.f32 %v1655, 1.442695
        %v1658 = vpow.pop %v1657
        %v1659 = vmul.f32 %v1656, 1.442695
        %v1660 = vpow.pop %v1659
        %v1661 = vsel %vm1648, %v1658, 0.0
        %1662 = vadd.xlane.f32.xlu0 %v1661
        %v1663 = vpop.xlane.xlu0 %1662
        %v1664 = vsel %vm1648, %v1660, 0.0
        %1665 = vadd.xlane.f32.xlu0 %v1664
        %v1666 = vpop.xlane.xlu0 %1665
        %v1667 = vrcp.pop %v1663
        %v1668 = vrcp.pop %v1666
        %v1669 = vmul.f32 %v1658, %v1667
        %v1670 = vmul.f32 %v1660, %v1668
        %v1671 = vpack.c.bf16 %v1669, %v1669
        %v1672 = vpack.c.bf16 %v1670, %v1670
        %1673 = vrot.lane.b32.xlu0 %v1591, 64
        %v1674 = vpop.permute.xlu0 %1673
        %v1676 = vmul.f32 %v1589, %v1674
        %v1677 = vmul.f32 %v1590, %v1674
        %v1678 = vpack.c.bf16 %v1676, %v1676
        %v1679 = vpack.c.bf16 %v1677, %v1677
        %vm1680 = vcmp.ge.s32.totalorder %v1582, 4
        %vm1681 = vcmp.lt.s32.totalorder %v1582, 8
        %vm1682 = vmand %vm1680, %vm1681
        %v1683 = vsel %vm1682, 1, 0
        %v1684 = vcvt.s32.f32 %v1683
        %v1685 = vpack.c.bf16 %v1684, %v1684
        %v1686 = vunpack.c.l.bf16 %v1685
        %1688 = vrot.lane.b32.xlu0 %v1686, 32
        %v1689 = vpop.permute.xlu0 %1688
        %v1691 = vmul.f32 %v1589, %v1689
        %v1692 = vmul.f32 %v1590, %v1689
        %v1693 = vpack.c.bf16 %v1691, %v1691
        %v1694 = vpack.c.bf16 %v1692, %v1692
        %v1696 = vunpack.c.l.b16 %v1693
        %v1697 = vpack.c.b16 %v1696, %v1696
        %1698 = vrot.lane.b32.xlu0 %v1697, 96
        %v1699 = vpop.permute.xlu0 %1698
        %v1701 = vsel %vm1470, %v1699, 0
        %1703 = vmatpush.bf16.xpose.msra.mxu0 0
        %1704 = vmatpush.bf16.xpose.msra.mxu0 0
        %1705 = vmatpush.bf16.xpose.msra.mxu0 0
        %1706 = vmatpush.bf16.xpose.msra.mxu0 0
        %1707 = vmatpush.bf16.xpose.msra.mxu0 0
        %1708 = vmatpush.bf16.xpose.msra.mxu0 0
        %1709 = vmatpush.bf16.xpose.msra.mxu0 0
        %1710 = vmatpush.bf16.xpose.msra.mxu0 %v1701
        %1711 = vmatmul.bf16.gmra.mxu0 %v1606
        %v1712 = vpop.f32.mrf.mxu0
        %v1713 = vadd.f32 0.0, %v1712
        %v1714 = vpop.f32.mrf.mxu0
        %1715 = vdwg.mxu0
        %v1717 = vunpack.c.l.b16 %v1694
        %v1718 = vpack.c.b16 %v1717, %v1717
        %1719 = vrot.lane.b32.xlu0 %v1718, 96
        %v1720 = vpop.permute.xlu0 %1719
        %v1722 = vsel %vm1470, %v1720, 0
        %1724 = vmatpush.bf16.xpose.msra.mxu0 0
        %1725 = vmatpush.bf16.xpose.msra.mxu0 0
        %1726 = vmatpush.bf16.xpose.msra.mxu0 0
        %1727 = vmatpush.bf16.xpose.msra.mxu0 0
        %1728 = vmatpush.bf16.xpose.msra.mxu0 0
        %1729 = vmatpush.bf16.xpose.msra.mxu0 0
        %1730 = vmatpush.bf16.xpose.msra.mxu0 0
        %1731 = vmatpush.bf16.xpose.msra.mxu0 %v1722
        %1732 = vmatmul.bf16.gmra.mxu0 %v1630
        %v1733 = vpop.f32.mrf.mxu0
        %v1734 = vadd.f32 0.0, %v1733
        %v1735 = vpop.f32.mrf.mxu0
        %1736 = vdwg.mxu0
        %v1737 = vsel %vm1648, %v1713, -inf
        %1738 = vmax.xlane.f32.xlu0 %v1737
        %v1739 = vpop.xlane.xlu0 %1738
        %v1740 = vsel %vm1648, %v1734, -inf
        %1741 = vmax.xlane.f32.xlu0 %v1740
        %v1742 = vpop.xlane.xlu0 %1741
        %v1743 = vsub.f32 %v1713, %v1739
        %v1744 = vsub.f32 %v1734, %v1742
        %v1745 = vmul.f32 %v1743, 1.442695
        %v1746 = vpow.pop %v1745
        %v1747 = vmul.f32 %v1744, 1.442695
        %v1748 = vpow.pop %v1747
        %v1749 = vsel %vm1648, %v1746, 0.0
        %1750 = vadd.xlane.f32.xlu0 %v1749
        %v1751 = vpop.xlane.xlu0 %1750
        %v1752 = vsel %vm1648, %v1748, 0.0
        %1753 = vadd.xlane.f32.xlu0 %v1752
        %v1754 = vpop.xlane.xlu0 %1753
        %v1755 = vrcp.pop %v1751
        %v1756 = vrcp.pop %v1754
        %v1757 = vmul.f32 %v1746, %v1755
        %v1758 = vmul.f32 %v1748, %v1756
        %v1759 = vpack.c.bf16 %v1757, %v1757
        %v1760 = vpack.c.bf16 %v1758, %v1758
        %1761 = vrot.lane.b32.xlu0 %v1686, 64
        %v1762 = vpop.permute.xlu0 %1761
        %v1764 = vmul.f32 %v1589, %v1762
        %v1765 = vmul.f32 %v1590, %v1762
        %v1766 = vpack.c.bf16 %v1764, %v1764
        %v1767 = vpack.c.bf16 %v1765, %v1765
        %v1769 = vunpack.c.l.b16 %v1766
        %v1770 = vpack.c.b16 %v1769, %v1769
        %1771 = vrot.lane.b32.xlu0 %v1770, 64
        %v1772 = vpop.permute.xlu0 %1771
        %v1774 = vsel %vm1648, %v1759, 0
        %vm1776 = vcmask 1043456
        %v1778 = vsel %vm1776, %v1772, 0
        %1780 = vmatpush.bf16.msra.mxu0 0
        %1781 = vmatpush.bf16.msra.mxu0 0
        %1782 = vmatpush.bf16.msra.mxu0 0
        %1783 = vmatpush.bf16.msra.mxu0 0
        %1784 = vmatpush.bf16.msra.mxu0 0
        %1785 = vmatpush.bf16.msra.mxu0 0
        %1786 = vmatpush.bf16.msra.mxu0 0
        %1787 = vmatpush.bf16.msra.mxu0 %v1778
        %1788 = vmatmul.bf16.gmra.mxu0 %v1774
        %v1789 = vpop.f32.mrf.mxu0
        %v1790 = vadd.f32 0.0, %v1789
        %v1791 = vpop.f32.mrf.mxu0
        %1792 = vdwg.mxu0
        %v1794 = vunpack.c.l.b16 %v1767
        %v1795 = vpack.c.b16 %v1794, %v1794
        %1796 = vrot.lane.b32.xlu0 %v1795, 64
        %v1797 = vpop.permute.xlu0 %1796
        %v1799 = vsel %vm1648, %v1760, 0
        %v1802 = vsel %vm1776, %v1797, 0
        %1804 = vmatpush.bf16.msra.mxu0 0
        %1805 = vmatpush.bf16.msra.mxu0 0
        %1806 = vmatpush.bf16.msra.mxu0 0
        %1807 = vmatpush.bf16.msra.mxu0 0
        %1808 = vmatpush.bf16.msra.mxu0 0
        %1809 = vmatpush.bf16.msra.mxu0 0
        %1810 = vmatpush.bf16.msra.mxu0 0
        %1811 = vmatpush.bf16.msra.mxu0 %v1802
        %1812 = vmatmul.bf16.gmra.mxu0 %v1799
        %v1813 = vpop.f32.mrf.mxu0
        %v1814 = vadd.f32 0.0, %v1813
        %v1815 = vpop.f32.mrf.mxu0
        %1816 = vdwg.mxu0
        %v1818 = vunpack.c.l.b16 %v1678
        %v1819 = vpack.c.b16 %v1818, %v1818
        %1820 = vrot.lane.b32.xlu0 %v1819, 64
        %v1821 = vpop.permute.xlu0 %1820
        %v1823 = vsel %vm1648, %v1671, 0
        %v1826 = vsel %vm1776, %v1821, 0
        %1828 = vmatpush.bf16.msra.mxu0 0
        %1829 = vmatpush.bf16.msra.mxu0 0
        %1830 = vmatpush.bf16.msra.mxu0 0
        %1831 = vmatpush.bf16.msra.mxu0 0
        %1832 = vmatpush.bf16.msra.mxu0 0
        %1833 = vmatpush.bf16.msra.mxu0 0
        %1834 = vmatpush.bf16.msra.mxu0 0
        %1835 = vmatpush.bf16.msra.mxu0 %v1826
        %1836 = vmatmul.bf16.gmra.mxu0 %v1823
        %v1837 = vpop.f32.mrf.mxu0
        %v1838 = vadd.f32 %v1790, %v1837
        %v1839 = vpop.f32.mrf.mxu0
        %1840 = vdwg.mxu0
        %v1842 = vunpack.c.l.b16 %v1679
        %v1843 = vpack.c.b16 %v1842, %v1842
        %1844 = vrot.lane.b32.xlu0 %v1843, 64
        %v1845 = vpop.permute.xlu0 %1844
        %v1847 = vsel %vm1648, %v1672, 0
        %v1850 = vsel %vm1776, %v1845, 0
        %1852 = vmatpush.bf16.msra.mxu0 0
        %1853 = vmatpush.bf16.msra.mxu0 0
        %1854 = vmatpush.bf16.msra.mxu0 0
        %1855 = vmatpush.bf16.msra.mxu0 0
        %1856 = vmatpush.bf16.msra.mxu0 0
        %1857 = vmatpush.bf16.msra.mxu0 0
        %1858 = vmatpush.bf16.msra.mxu0 0
        %1859 = vmatpush.bf16.msra.mxu0 %v1850
        %1860 = vmatmul.bf16.gmra.mxu0 %v1847
        %v1861 = vpop.f32.mrf.mxu0
        %v1862 = vadd.f32 %v1814, %v1861
        %v1863 = vpop.f32.mrf.mxu0
        %1864 = vdwg.mxu0
        %vm1865 = vcmp.ge.s32.totalorder %v1582, 8
        %vm1866 = vcmp.lt.s32.totalorder %v1582, 12
        %vm1867 = vmand %vm1865, %vm1866
        %v1868 = vsel %vm1867, 1, 0
        %v1869 = vcvt.s32.f32 %v1868
        %v1870 = vpack.c.bf16 %v1869, %v1869
        %v1871 = vunpack.c.l.bf16 %v1870
        %1873 = vrot.lane.b32.xlu0 %v1871, 32
        %v1874 = vpop.permute.xlu0 %1873
        %v1876 = vmul.f32 %v1589, %v1874
        %v1877 = vmul.f32 %v1590, %v1874
        %v1878 = vpack.c.bf16 %v1876, %v1876
        %v1879 = vpack.c.bf16 %v1877, %v1877
        %v1881 = vunpack.c.l.b16 %v1878
        %v1882 = vpack.c.b16 %v1881, %v1881
        %1883 = vrot.lane.b32.xlu0 %v1882, 96
        %v1884 = vpop.permute.xlu0 %1883
        %v1886 = vsel %vm1470, %v1884, 0
        %1888 = vmatpush.bf16.xpose.msra.mxu0 0
        %1889 = vmatpush.bf16.xpose.msra.mxu0 0
        %1890 = vmatpush.bf16.xpose.msra.mxu0 0
        %1891 = vmatpush.bf16.xpose.msra.mxu0 0
        %1892 = vmatpush.bf16.xpose.msra.mxu0 0
        %1893 = vmatpush.bf16.xpose.msra.mxu0 0
        %1894 = vmatpush.bf16.xpose.msra.mxu0 0
        %1895 = vmatpush.bf16.xpose.msra.mxu0 %v1886
        %1896 = vmatmul.bf16.gmra.mxu0 %v1606
        %v1897 = vpop.f32.mrf.mxu0
        %v1898 = vadd.f32 0.0, %v1897
        %v1899 = vpop.f32.mrf.mxu0
        %1900 = vdwg.mxu0
        %v1902 = vunpack.c.l.b16 %v1879
        %v1903 = vpack.c.b16 %v1902, %v1902
        %1904 = vrot.lane.b32.xlu0 %v1903, 96
        %v1905 = vpop.permute.xlu0 %1904
        %v1907 = vsel %vm1470, %v1905, 0
        %1909 = vmatpush.bf16.xpose.msra.mxu0 0
        %1910 = vmatpush.bf16.xpose.msra.mxu0 0
        %1911 = vmatpush.bf16.xpose.msra.mxu0 0
        %1912 = vmatpush.bf16.xpose.msra.mxu0 0
        %1913 = vmatpush.bf16.xpose.msra.mxu0 0
        %1914 = vmatpush.bf16.xpose.msra.mxu0 0
        %1915 = vmatpush.bf16.xpose.msra.mxu0 0
        %1916 = vmatpush.bf16.xpose.msra.mxu0 %v1907
        %1917 = vmatmul.bf16.gmra.mxu0 %v1630
        %v1918 = vpop.f32.mrf.mxu0
        %v1919 = vadd.f32 0.0, %v1918
        %v1920 = vpop.f32.mrf.mxu0
        %1921 = vdwg.mxu0
        %v1922 = vsel %vm1648, %v1898, -inf
        %1923 = vmax.xlane.f32.xlu0 %v1922
        %v1924 = vpop.xlane.xlu0 %1923
        %v1925 = vsel %vm1648, %v1919, -inf
        %1926 = vmax.xlane.f32.xlu0 %v1925
        %v1927 = vpop.xlane.xlu0 %1926
        %v1928 = vsub.f32 %v1898, %v1924
        %v1929 = vsub.f32 %v1919, %v1927
        %v1930 = vmul.f32 %v1928, 1.442695
        %v1931 = vpow.pop %v1930
        %v1932 = vmul.f32 %v1929, 1.442695
        %v1933 = vpow.pop %v1932
        %v1934 = vsel %vm1648, %v1931, 0.0
        %1935 = vadd.xlane.f32.xlu0 %v1934
        %v1936 = vpop.xlane.xlu0 %1935
        %v1937 = vsel %vm1648, %v1933, 0.0
        %1938 = vadd.xlane.f32.xlu0 %v1937
        %v1939 = vpop.xlane.xlu0 %1938
        %v1940 = vrcp.pop %v1936
        %v1941 = vrcp.pop %v1939
        %v1942 = vmul.f32 %v1931, %v1940
        %v1943 = vmul.f32 %v1933, %v1941
        %v1944 = vpack.c.bf16 %v1942, %v1942
        %v1945 = vpack.c.bf16 %v1943, %v1943
        %1946 = vrot.lane.b32.xlu0 %v1871, 64
        %v1947 = vpop.permute.xlu0 %1946
        %v1949 = vmul.f32 %v1589, %v1947
        %v1950 = vmul.f32 %v1590, %v1947
        %v1951 = vpack.c.bf16 %v1949, %v1949
        %v1952 = vpack.c.bf16 %v1950, %v1950
        %v1954 = vunpack.c.l.b16 %v1951
        %v1955 = vpack.c.b16 %v1954, %v1954
        %1956 = vrot.lane.b32.xlu0 %v1955, 64
        %v1957 = vpop.permute.xlu0 %1956
        %v1959 = vsel %vm1648, %v1944, 0
        %v1962 = vsel %vm1776, %v1957, 0
        %1964 = vmatpush.bf16.msra.mxu0 0
        %1965 = vmatpush.bf16.msra.mxu0 0
        %1966 = vmatpush.bf16.msra.mxu0 0
        %1967 = vmatpush.bf16.msra.mxu0 0
        %1968 = vmatpush.bf16.msra.mxu0 0
        %1969 = vmatpush.bf16.msra.mxu0 0
        %1970 = vmatpush.bf16.msra.mxu0 0
        %1971 = vmatpush.bf16.msra.mxu0 %v1962
        %1972 = vmatmul.bf16.gmra.mxu0 %v1959
        %v1973 = vpop.f32.mrf.mxu0
        %v1974 = vadd.f32 0.0, %v1973
        %v1975 = vpop.f32.mrf.mxu0
        %1976 = vdwg.mxu0
        %v1978 = vunpack.c.l.b16 %v1952
        %v1979 = vpack.c.b16 %v1978, %v1978
        %1980 = vrot.lane.b32.xlu0 %v1979, 64
        %v1981 = vpop.permute.xlu0 %1980
        %v1983 = vsel %vm1648, %v1945, 0
        %v1986 = vsel %vm1776, %v1981, 0
        %1988 = vmatpush.bf16.msra.mxu0 0
        %1989 = vmatpush.bf16.msra.mxu0 0
        %1990 = vmatpush.bf16.msra.mxu0 0
        %1991 = vmatpush.bf16.msra.mxu0 0
        %1992 = vmatpush.bf16.msra.mxu0 0
        %1993 = vmatpush.bf16.msra.mxu0 0
        %1994 = vmatpush.bf16.msra.mxu0 0
        %1995 = vmatpush.bf16.msra.mxu0 %v1986
        %1996 = vmatmul.bf16.gmra.mxu0 %v1983
        %v1997 = vpop.f32.mrf.mxu0
        %v1998 = vadd.f32 0.0, %v1997
        %v1999 = vpop.f32.mrf.mxu0
        %2000 = vdwg.mxu0
        %v2001 = vadd.f32 %v1838, %v1974
        %v2002 = vadd.f32 %v1862, %v1998
        %vm2003 = vcmp.ge.s32.totalorder %v1582, 12
        %vm2004 = vcmp.lt.s32.totalorder %v1582, 16
        %vm2005 = vmand %vm2003, %vm2004
        %v2006 = vsel %vm2005, 1, 0
        %v2007 = vcvt.s32.f32 %v2006
        %v2008 = vpack.c.bf16 %v2007, %v2007
        %v2009 = vunpack.c.l.bf16 %v2008
        %2011 = vrot.lane.b32.xlu0 %v2009, 32
        %v2012 = vpop.permute.xlu0 %2011
        %v2014 = vmul.f32 %v1589, %v2012
        %v2015 = vmul.f32 %v1590, %v2012
        %v2016 = vpack.c.bf16 %v2014, %v2014
        %v2017 = vpack.c.bf16 %v2015, %v2015
        %v2019 = vunpack.c.l.b16 %v2016
        %v2020 = vpack.c.b16 %v2019, %v2019
        %2021 = vrot.lane.b32.xlu0 %v2020, 96
        %v2022 = vpop.permute.xlu0 %2021
        %v2024 = vsel %vm1470, %v2022, 0
        %2026 = vmatpush.bf16.xpose.msra.mxu0 0
        %2027 = vmatpush.bf16.xpose.msra.mxu0 0
        %2028 = vmatpush.bf16.xpose.msra.mxu0 0
        %2029 = vmatpush.bf16.xpose.msra.mxu0 0
        %2030 = vmatpush.bf16.xpose.msra.mxu0 0
        %2031 = vmatpush.bf16.xpose.msra.mxu0 0
        %2032 = vmatpush.bf16.xpose.msra.mxu0 0
        %2033 = vmatpush.bf16.xpose.msra.mxu0 %v2024
        %2034 = vmatmul.bf16.gmra.mxu0 %v1606
        %v2035 = vpop.f32.mrf.mxu0
        %v2036 = vadd.f32 0.0, %v2035
        %v2037 = vpop.f32.mrf.mxu0
        %2038 = vdwg.mxu0
        %v2040 = vunpack.c.l.b16 %v2017
        %v2041 = vpack.c.b16 %v2040, %v2040
        %2042 = vrot.lane.b32.xlu0 %v2041, 96
        %v2043 = vpop.permute.xlu0 %2042
        %v2045 = vsel %vm1470, %v2043, 0
        %2047 = vmatpush.bf16.xpose.msra.mxu0 0
        %2048 = vmatpush.bf16.xpose.msra.mxu0 0
        %2049 = vmatpush.bf16.xpose.msra.mxu0 0
        %2050 = vmatpush.bf16.xpose.msra.mxu0 0
        %2051 = vmatpush.bf16.xpose.msra.mxu0 0
        %2052 = vmatpush.bf16.xpose.msra.mxu0 0
        %2053 = vmatpush.bf16.xpose.msra.mxu0 0
        %2054 = vmatpush.bf16.xpose.msra.mxu0 %v2045
        %2055 = vmatmul.bf16.gmra.mxu0 %v1630
        %v2056 = vpop.f32.mrf.mxu0
        %v2057 = vadd.f32 0.0, %v2056
        %v2058 = vpop.f32.mrf.mxu0
        %2059 = vdwg.mxu0
        %v2060 = vsel %vm1648, %v2036, -inf
        %2061 = vmax.xlane.f32.xlu0 %v2060
        %v2062 = vpop.xlane.xlu0 %2061
        %v2063 = vsel %vm1648, %v2057, -inf
        %2064 = vmax.xlane.f32.xlu0 %v2063
        %v2065 = vpop.xlane.xlu0 %2064
        %v2066 = vsub.f32 %v2036, %v2062
        %v2067 = vsub.f32 %v2057, %v2065
        %v2068 = vmul.f32 %v2066, 1.442695
        %v2069 = vpow.pop %v2068
        %v2070 = vmul.f32 %v2067, 1.442695
        %v2071 = vpow.pop %v2070
        %v2072 = vsel %vm1648, %v2069, 0.0
        %2073 = vadd.xlane.f32.xlu0 %v2072
        %v2074 = vpop.xlane.xlu0 %2073
        %v2075 = vsel %vm1648, %v2071, 0.0
        %2076 = vadd.xlane.f32.xlu0 %v2075
        %v2077 = vpop.xlane.xlu0 %2076
        %v2078 = vrcp.pop %v2074
        %v2079 = vrcp.pop %v2077
        %v2080 = vmul.f32 %v2069, %v2078
        %v2081 = vmul.f32 %v2071, %v2079
        %v2082 = vpack.c.bf16 %v2080, %v2080
        %v2083 = vpack.c.bf16 %v2081, %v2081
        %2084 = vrot.lane.b32.xlu0 %v2009, 64
        %v2085 = vpop.permute.xlu0 %2084
        %v2087 = vmul.f32 %v1589, %v2085
        %v2088 = vmul.f32 %v1590, %v2085
        %v2089 = vpack.c.bf16 %v2087, %v2087
        %v2090 = vpack.c.bf16 %v2088, %v2088
        %v2092 = vunpack.c.l.b16 %v2089
        %v2093 = vpack.c.b16 %v2092, %v2092
        %2094 = vrot.lane.b32.xlu0 %v2093, 64
        %v2095 = vpop.permute.xlu0 %2094
        %v2097 = vsel %vm1648, %v2082, 0
        %v2100 = vsel %vm1776, %v2095, 0
        %2102 = vmatpush.bf16.msra.mxu0 0
        %2103 = vmatpush.bf16.msra.mxu0 0
        %2104 = vmatpush.bf16.msra.mxu0 0
        %2105 = vmatpush.bf16.msra.mxu0 0
        %2106 = vmatpush.bf16.msra.mxu0 0
        %2107 = vmatpush.bf16.msra.mxu0 0
        %2108 = vmatpush.bf16.msra.mxu0 0
        %2109 = vmatpush.bf16.msra.mxu0 %v2100
        %2110 = vmatmul.bf16.gmra.mxu0 %v2097
        %v2111 = vpop.f32.mrf.mxu0
        %v2112 = vadd.f32 0.0, %v2111
        %v2113 = vpop.f32.mrf.mxu0
        %2114 = vdwg.mxu0
        %v2116 = vunpack.c.l.b16 %v2090
        %v2117 = vpack.c.b16 %v2116, %v2116
        %2118 = vrot.lane.b32.xlu0 %v2117, 64
        %v2119 = vpop.permute.xlu0 %2118
        %v2121 = vsel %vm1648, %v2083, 0
        %v2124 = vsel %vm1776, %v2119, 0
        %2126 = vmatpush.bf16.msra.mxu0 0
        %2127 = vmatpush.bf16.msra.mxu0 0
        %2128 = vmatpush.bf16.msra.mxu0 0
        %2129 = vmatpush.bf16.msra.mxu0 0
        %2130 = vmatpush.bf16.msra.mxu0 0
        %2131 = vmatpush.bf16.msra.mxu0 0
        %2132 = vmatpush.bf16.msra.mxu0 0
        %2133 = vmatpush.bf16.msra.mxu0 %v2124
        %2134 = vmatmul.bf16.gmra.mxu0 %v2121
        %v2135 = vpop.f32.mrf.mxu0
        %v2136 = vadd.f32 0.0, %v2135
        %v2137 = vpop.f32.mrf.mxu0
        %2138 = vdwg.mxu0
        %v2139 = vadd.f32 %v2001, %v2112
        %v2140 = vadd.f32 %v2002, %v2136
        %vm2141 = vcmp.ge.s32.totalorder %v1582, 16
        %vm2142 = vcmp.lt.s32.totalorder %v1582, 20
        %vm2143 = vmand %vm2141, %vm2142
        %v2144 = vsel %vm2143, 1, 0
        %v2145 = vcvt.s32.f32 %v2144
        %v2146 = vpack.c.bf16 %v2145, %v2145
        %v2147 = vunpack.c.l.bf16 %v2146
        %2149 = vrot.lane.b32.xlu0 %v2147, 32
        %v2150 = vpop.permute.xlu0 %2149
        %v2152 = vmul.f32 %v1589, %v2150
        %v2153 = vmul.f32 %v1590, %v2150
        %v2154 = vpack.c.bf16 %v2152, %v2152
        %v2155 = vpack.c.bf16 %v2153, %v2153
        %v2157 = vunpack.c.l.b16 %v2154
        %v2158 = vpack.c.b16 %v2157, %v2157
        %2159 = vrot.lane.b32.xlu0 %v2158, 96
        %v2160 = vpop.permute.xlu0 %2159
        %v2162 = vsel %vm1470, %v2160, 0
        %2164 = vmatpush.bf16.xpose.msra.mxu0 0
        %2165 = vmatpush.bf16.xpose.msra.mxu0 0
        %2166 = vmatpush.bf16.xpose.msra.mxu0 0
        %2167 = vmatpush.bf16.xpose.msra.mxu0 0
        %2168 = vmatpush.bf16.xpose.msra.mxu0 0
        %2169 = vmatpush.bf16.xpose.msra.mxu0 0
        %2170 = vmatpush.bf16.xpose.msra.mxu0 0
        %2171 = vmatpush.bf16.xpose.msra.mxu0 %v2162
        %2172 = vmatmul.bf16.gmra.mxu0 %v1606
        %v2173 = vpop.f32.mrf.mxu0
        %v2174 = vadd.f32 0.0, %v2173
        %v2175 = vpop.f32.mrf.mxu0
        %2176 = vdwg.mxu0
        %v2178 = vunpack.c.l.b16 %v2155
        %v2179 = vpack.c.b16 %v2178, %v2178
        %2180 = vrot.lane.b32.xlu0 %v2179, 96
        %v2181 = vpop.permute.xlu0 %2180
        %v2183 = vsel %vm1470, %v2181, 0
        %2185 = vmatpush.bf16.xpose.msra.mxu0 0
        %2186 = vmatpush.bf16.xpose.msra.mxu0 0
        %2187 = vmatpush.bf16.xpose.msra.mxu0 0
        %2188 = vmatpush.bf16.xpose.msra.mxu0 0
        %2189 = vmatpush.bf16.xpose.msra.mxu0 0
        %2190 = vmatpush.bf16.xpose.msra.mxu0 0
        %2191 = vmatpush.bf16.xpose.msra.mxu0 0
        %2192 = vmatpush.bf16.xpose.msra.mxu0 %v2183
        %2193 = vmatmul.bf16.gmra.mxu0 %v1630
        %v2194 = vpop.f32.mrf.mxu0
        %v2195 = vadd.f32 0.0, %v2194
        %v2196 = vpop.f32.mrf.mxu0
        %2197 = vdwg.mxu0
        %v2198 = vsel %vm1648, %v2174, -inf
        %2199 = vmax.xlane.f32.xlu0 %v2198
        %v2200 = vpop.xlane.xlu0 %2199
        %v2201 = vsel %vm1648, %v2195, -inf
        %2202 = vmax.xlane.f32.xlu0 %v2201
        %v2203 = vpop.xlane.xlu0 %2202
        %v2204 = vsub.f32 %v2174, %v2200
        %v2205 = vsub.f32 %v2195, %v2203
        %v2206 = vmul.f32 %v2204, 1.442695
        %v2207 = vpow.pop %v2206
        %v2208 = vmul.f32 %v2205, 1.442695
        %v2209 = vpow.pop %v2208
        %v2210 = vsel %vm1648, %v2207, 0.0
        %2211 = vadd.xlane.f32.xlu0 %v2210
        %v2212 = vpop.xlane.xlu0 %2211
        %v2213 = vsel %vm1648, %v2209, 0.0
        %2214 = vadd.xlane.f32.xlu0 %v2213
        %v2215 = vpop.xlane.xlu0 %2214
        %v2216 = vrcp.pop %v2212
        %v2217 = vrcp.pop %v2215
        %v2218 = vmul.f32 %v2207, %v2216
        %v2219 = vmul.f32 %v2209, %v2217
        %v2220 = vpack.c.bf16 %v2218, %v2218
        %v2221 = vpack.c.bf16 %v2219, %v2219
        %2222 = vrot.lane.b32.xlu0 %v2147, 64
        %v2223 = vpop.permute.xlu0 %2222
        %v2225 = vmul.f32 %v1589, %v2223
        %v2226 = vmul.f32 %v1590, %v2223
        %v2227 = vpack.c.bf16 %v2225, %v2225
        %v2228 = vpack.c.bf16 %v2226, %v2226
        %v2230 = vunpack.c.l.b16 %v2227
        %v2231 = vpack.c.b16 %v2230, %v2230
        %2232 = vrot.lane.b32.xlu0 %v2231, 64
        %v2233 = vpop.permute.xlu0 %2232
        %v2235 = vsel %vm1648, %v2220, 0
        %v2238 = vsel %vm1776, %v2233, 0
        %2240 = vmatpush.bf16.msra.mxu0 0
        %2241 = vmatpush.bf16.msra.mxu0 0
        %2242 = vmatpush.bf16.msra.mxu0 0
        %2243 = vmatpush.bf16.msra.mxu0 0
        %2244 = vmatpush.bf16.msra.mxu0 0
        %2245 = vmatpush.bf16.msra.mxu0 0
        %2246 = vmatpush.bf16.msra.mxu0 0
        %2247 = vmatpush.bf16.msra.mxu0 %v2238
        %2248 = vmatmul.bf16.gmra.mxu0 %v2235
        %v2249 = vpop.f32.mrf.mxu0
        %v2250 = vadd.f32 0.0, %v2249
        %v2251 = vpop.f32.mrf.mxu0
        %2252 = vdwg.mxu0
        %v2254 = vunpack.c.l.b16 %v2228
        %v2255 = vpack.c.b16 %v2254, %v2254
        %2256 = vrot.lane.b32.xlu0 %v2255, 64
        %v2257 = vpop.permute.xlu0 %2256
        %v2259 = vsel %vm1648, %v2221, 0
        %v2262 = vsel %vm1776, %v2257, 0
        %2264 = vmatpush.bf16.msra.mxu0 0
        %2265 = vmatpush.bf16.msra.mxu0 0
        %2266 = vmatpush.bf16.msra.mxu0 0
        %2267 = vmatpush.bf16.msra.mxu0 0
        %2268 = vmatpush.bf16.msra.mxu0 0
        %2269 = vmatpush.bf16.msra.mxu0 0
        %2270 = vmatpush.bf16.msra.mxu0 0
        %2271 = vmatpush.bf16.msra.mxu0 %v2262
        %2272 = vmatmul.bf16.gmra.mxu0 %v2259
        %v2273 = vpop.f32.mrf.mxu0
        %v2274 = vadd.f32 0.0, %v2273
        %v2275 = vpop.f32.mrf.mxu0
        %2276 = vdwg.mxu0
        %v2277 = vadd.f32 %v2139, %v2250
        %v2278 = vadd.f32 %v2140, %v2274
        %vm2279 = vcmp.ge.s32.totalorder %v1582, 20
        %vm2280 = vcmp.lt.s32.totalorder %v1582, 24
        %vm2281 = vmand %vm2279, %vm2280
        %v2282 = vsel %vm2281, 1, 0
        %v2283 = vcvt.s32.f32 %v2282
        %v2284 = vpack.c.bf16 %v2283, %v2283
        %v2285 = vunpack.c.l.bf16 %v2284
        %2287 = vrot.lane.b32.xlu0 %v2285, 32
        %v2288 = vpop.permute.xlu0 %2287
        %v2290 = vmul.f32 %v1589, %v2288
        %v2291 = vmul.f32 %v1590, %v2288
        %v2292 = vpack.c.bf16 %v2290, %v2290
        %v2293 = vpack.c.bf16 %v2291, %v2291
        %v2295 = vunpack.c.l.b16 %v2292
        %v2296 = vpack.c.b16 %v2295, %v2295
        %2297 = vrot.lane.b32.xlu0 %v2296, 96
        %v2298 = vpop.permute.xlu0 %2297
        %v2300 = vsel %vm1470, %v2298, 0
        %2302 = vmatpush.bf16.xpose.msra.mxu0 0
        %2303 = vmatpush.bf16.xpose.msra.mxu0 0
        %2304 = vmatpush.bf16.xpose.msra.mxu0 0
        %2305 = vmatpush.bf16.xpose.msra.mxu0 0
        %2306 = vmatpush.bf16.xpose.msra.mxu0 0
        %2307 = vmatpush.bf16.xpose.msra.mxu0 0
        %2308 = vmatpush.bf16.xpose.msra.mxu0 0
        %2309 = vmatpush.bf16.xpose.msra.mxu0 %v2300
        %2310 = vmatmul.bf16.gmra.mxu0 %v1606
        %v2311 = vpop.f32.mrf.mxu0
        %v2312 = vadd.f32 0.0, %v2311
        %v2313 = vpop.f32.mrf.mxu0
        %2314 = vdwg.mxu0
        %v2316 = vunpack.c.l.b16 %v2293
        %v2317 = vpack.c.b16 %v2316, %v2316
        %2318 = vrot.lane.b32.xlu0 %v2317, 96
        %v2319 = vpop.permute.xlu0 %2318
        %v2321 = vsel %vm1470, %v2319, 0
        %2323 = vmatpush.bf16.xpose.msra.mxu0 0
        %2324 = vmatpush.bf16.xpose.msra.mxu0 0
        %2325 = vmatpush.bf16.xpose.msra.mxu0 0
        %2326 = vmatpush.bf16.xpose.msra.mxu0 0
        %2327 = vmatpush.bf16.xpose.msra.mxu0 0
        %2328 = vmatpush.bf16.xpose.msra.mxu0 0
        %2329 = vmatpush.bf16.xpose.msra.mxu0 0
        %2330 = vmatpush.bf16.xpose.msra.mxu0 %v2321
        %2331 = vmatmul.bf16.gmra.mxu0 %v1630
        %v2332 = vpop.f32.mrf.mxu0
        %v2333 = vadd.f32 0.0, %v2332
        %v2334 = vpop.f32.mrf.mxu0
        %2335 = vdwg.mxu0
        %v2336 = vsel %vm1648, %v2312, -inf
        %2337 = vmax.xlane.f32.xlu0 %v2336
        %v2338 = vpop.xlane.xlu0 %2337
        %v2339 = vsel %vm1648, %v2333, -inf
        %2340 = vmax.xlane.f32.xlu0 %v2339
        %v2341 = vpop.xlane.xlu0 %2340
        %v2342 = vsub.f32 %v2312, %v2338
        %v2343 = vsub.f32 %v2333, %v2341
        %v2344 = vmul.f32 %v2342, 1.442695
        %v2345 = vpow.pop %v2344
        %v2346 = vmul.f32 %v2343, 1.442695
        %v2347 = vpow.pop %v2346
        %v2348 = vsel %vm1648, %v2345, 0.0
        %2349 = vadd.xlane.f32.xlu0 %v2348
        %v2350 = vpop.xlane.xlu0 %2349
        %v2351 = vsel %vm1648, %v2347, 0.0
        %2352 = vadd.xlane.f32.xlu0 %v2351
        %v2353 = vpop.xlane.xlu0 %2352
        %v2354 = vrcp.pop %v2350
        %v2355 = vrcp.pop %v2353
        %v2356 = vmul.f32 %v2345, %v2354
        %v2357 = vmul.f32 %v2347, %v2355
        %v2358 = vpack.c.bf16 %v2356, %v2356
        %v2359 = vpack.c.bf16 %v2357, %v2357
        %2360 = vrot.lane.b32.xlu0 %v2285, 64
        %v2361 = vpop.permute.xlu0 %2360
        %v2363 = vmul.f32 %v1589, %v2361
        %v2364 = vmul.f32 %v1590, %v2361
        %v2365 = vpack.c.bf16 %v2363, %v2363
        %v2366 = vpack.c.bf16 %v2364, %v2364
        %v2368 = vunpack.c.l.b16 %v2365
        %v2369 = vpack.c.b16 %v2368, %v2368
        %2370 = vrot.lane.b32.xlu0 %v2369, 64
        %v2371 = vpop.permute.xlu0 %2370
        %v2373 = vsel %vm1648, %v2358, 0
        %v2376 = vsel %vm1776, %v2371, 0
        %2378 = vmatpush.bf16.msra.mxu0 0
        %2379 = vmatpush.bf16.msra.mxu0 0
        %2380 = vmatpush.bf16.msra.mxu0 0
        %2381 = vmatpush.bf16.msra.mxu0 0
        %2382 = vmatpush.bf16.msra.mxu0 0
        %2383 = vmatpush.bf16.msra.mxu0 0
        %2384 = vmatpush.bf16.msra.mxu0 0
        %2385 = vmatpush.bf16.msra.mxu0 %v2376
        %2386 = vmatmul.bf16.gmra.mxu0 %v2373
        %v2387 = vpop.f32.mrf.mxu0
        %v2388 = vadd.f32 0.0, %v2387
        %v2389 = vpop.f32.mrf.mxu0
        %2390 = vdwg.mxu0
        %v2392 = vunpack.c.l.b16 %v2366
        %v2393 = vpack.c.b16 %v2392, %v2392
        %2394 = vrot.lane.b32.xlu0 %v2393, 64
        %v2395 = vpop.permute.xlu0 %2394
        %v2397 = vsel %vm1648, %v2359, 0
        %v2400 = vsel %vm1776, %v2395, 0
        %2402 = vmatpush.bf16.msra.mxu0 0
        %2403 = vmatpush.bf16.msra.mxu0 0
        %2404 = vmatpush.bf16.msra.mxu0 0
        %2405 = vmatpush.bf16.msra.mxu0 0
        %2406 = vmatpush.bf16.msra.mxu0 0
        %2407 = vmatpush.bf16.msra.mxu0 0
        %2408 = vmatpush.bf16.msra.mxu0 0
        %2409 = vmatpush.bf16.msra.mxu0 %v2400
        %2410 = vmatmul.bf16.gmra.mxu0 %v2397
        %v2411 = vpop.f32.mrf.mxu0
        %v2412 = vadd.f32 0.0, %v2411
        %v2413 = vpop.f32.mrf.mxu0
        %2414 = vdwg.mxu0
        %v2415 = vadd.f32 %v2277, %v2388
        %v2416 = vadd.f32 %v2278, %v2412
        %vm2417 = vcmp.ge.s32.totalorder %v1582, 24
        %vm2418 = vcmp.lt.s32.totalorder %v1582, 28
        %vm2419 = vmand %vm2417, %vm2418
        %v2420 = vsel %vm2419, 1, 0
        %v2421 = vcvt.s32.f32 %v2420
        %v2422 = vpack.c.bf16 %v2421, %v2421
        %v2423 = vunpack.c.l.bf16 %v2422
        %2425 = vrot.lane.b32.xlu0 %v2423, 32
        %v2426 = vpop.permute.xlu0 %2425
        %v2428 = vmul.f32 %v1589, %v2426
        %v2429 = vmul.f32 %v1590, %v2426
        %v2430 = vpack.c.bf16 %v2428, %v2428
        %v2431 = vpack.c.bf16 %v2429, %v2429
        %v2433 = vunpack.c.l.b16 %v2430
        %v2434 = vpack.c.b16 %v2433, %v2433
        %2435 = vrot.lane.b32.xlu0 %v2434, 96
        %v2436 = vpop.permute.xlu0 %2435
        %v2438 = vsel %vm1470, %v2436, 0
        %2440 = vmatpush.bf16.xpose.msra.mxu0 0
        %2441 = vmatpush.bf16.xpose.msra.mxu0 0
        %2442 = vmatpush.bf16.xpose.msra.mxu0 0
        %2443 = vmatpush.bf16.xpose.msra.mxu0 0
        %2444 = vmatpush.bf16.xpose.msra.mxu0 0
        %2445 = vmatpush.bf16.xpose.msra.mxu0 0
        %2446 = vmatpush.bf16.xpose.msra.mxu0 0
        %2447 = vmatpush.bf16.xpose.msra.mxu0 %v2438
        %2448 = vmatmul.bf16.gmra.mxu0 %v1606
        %v2449 = vpop.f32.mrf.mxu0
        %v2450 = vadd.f32 0.0, %v2449
        %v2451 = vpop.f32.mrf.mxu0
        %2452 = vdwg.mxu0
        %v2454 = vunpack.c.l.b16 %v2431
        %v2455 = vpack.c.b16 %v2454, %v2454
        %2456 = vrot.lane.b32.xlu0 %v2455, 96
        %v2457 = vpop.permute.xlu0 %2456
        %v2459 = vsel %vm1470, %v2457, 0
        %2461 = vmatpush.bf16.xpose.msra.mxu0 0
        %2462 = vmatpush.bf16.xpose.msra.mxu0 0
        %2463 = vmatpush.bf16.xpose.msra.mxu0 0
        %2464 = vmatpush.bf16.xpose.msra.mxu0 0
        %2465 = vmatpush.bf16.xpose.msra.mxu0 0
        %2466 = vmatpush.bf16.xpose.msra.mxu0 0
        %2467 = vmatpush.bf16.xpose.msra.mxu0 0
        %2468 = vmatpush.bf16.xpose.msra.mxu0 %v2459
        %2469 = vmatmul.bf16.gmra.mxu0 %v1630
        %v2470 = vpop.f32.mrf.mxu0
        %v2471 = vadd.f32 0.0, %v2470
        %v2472 = vpop.f32.mrf.mxu0
        %2473 = vdwg.mxu0
        %v2474 = vsel %vm1648, %v2450, -inf
        %2475 = vmax.xlane.f32.xlu0 %v2474
        %v2476 = vpop.xlane.xlu0 %2475
        %v2477 = vsel %vm1648, %v2471, -inf
        %2478 = vmax.xlane.f32.xlu0 %v2477
        %v2479 = vpop.xlane.xlu0 %2478
        %v2480 = vsub.f32 %v2450, %v2476
        %v2481 = vsub.f32 %v2471, %v2479
        %v2482 = vmul.f32 %v2480, 1.442695
        %v2483 = vpow.pop %v2482
        %v2484 = vmul.f32 %v2481, 1.442695
        %v2485 = vpow.pop %v2484
        %v2486 = vsel %vm1648, %v2483, 0.0
        %2487 = vadd.xlane.f32.xlu0 %v2486
        %v2488 = vpop.xlane.xlu0 %2487
        %v2489 = vsel %vm1648, %v2485, 0.0
        %2490 = vadd.xlane.f32.xlu0 %v2489
        %v2491 = vpop.xlane.xlu0 %2490
        %v2492 = vrcp.pop %v2488
        %v2493 = vrcp.pop %v2491
        %v2494 = vmul.f32 %v2483, %v2492
        %v2495 = vmul.f32 %v2485, %v2493
        %v2496 = vpack.c.bf16 %v2494, %v2494
        %v2497 = vpack.c.bf16 %v2495, %v2495
        %2498 = vrot.lane.b32.xlu0 %v2423, 64
        %v2499 = vpop.permute.xlu0 %2498
        %v2501 = vmul.f32 %v1589, %v2499
        %v2502 = vmul.f32 %v1590, %v2499
        %v2503 = vpack.c.bf16 %v2501, %v2501
        %v2504 = vpack.c.bf16 %v2502, %v2502
        %v2506 = vunpack.c.l.b16 %v2503
        %v2507 = vpack.c.b16 %v2506, %v2506
        %2508 = vrot.lane.b32.xlu0 %v2507, 64
        %v2509 = vpop.permute.xlu0 %2508
        %v2511 = vsel %vm1648, %v2496, 0
        %v2514 = vsel %vm1776, %v2509, 0
        %2516 = vmatpush.bf16.msra.mxu0 0
        %2517 = vmatpush.bf16.msra.mxu0 0
        %2518 = vmatpush.bf16.msra.mxu0 0
        %2519 = vmatpush.bf16.msra.mxu0 0
        %2520 = vmatpush.bf16.msra.mxu0 0
        %2521 = vmatpush.bf16.msra.mxu0 0
        %2522 = vmatpush.bf16.msra.mxu0 0
        %2523 = vmatpush.bf16.msra.mxu0 %v2514
        %2524 = vmatmul.bf16.gmra.mxu0 %v2511
        %v2525 = vpop.f32.mrf.mxu0
        %v2526 = vadd.f32 0.0, %v2525
        %v2527 = vpop.f32.mrf.mxu0
        %2528 = vdwg.mxu0
        %v2530 = vunpack.c.l.b16 %v2504
        %v2531 = vpack.c.b16 %v2530, %v2530
        %2532 = vrot.lane.b32.xlu0 %v2531, 64
        %v2533 = vpop.permute.xlu0 %2532
        %v2535 = vsel %vm1648, %v2497, 0
        %v2538 = vsel %vm1776, %v2533, 0
        %2540 = vmatpush.bf16.msra.mxu0 0
        %2541 = vmatpush.bf16.msra.mxu0 0
        %2542 = vmatpush.bf16.msra.mxu0 0
        %2543 = vmatpush.bf16.msra.mxu0 0
        %2544 = vmatpush.bf16.msra.mxu0 0
        %2545 = vmatpush.bf16.msra.mxu0 0
        %2546 = vmatpush.bf16.msra.mxu0 0
        %2547 = vmatpush.bf16.msra.mxu0 %v2538
        %2548 = vmatmul.bf16.gmra.mxu0 %v2535
        %v2549 = vpop.f32.mrf.mxu0
        %v2550 = vadd.f32 0.0, %v2549
        %v2551 = vpop.f32.mrf.mxu0
        %2552 = vdwg.mxu0
        %v2553 = vadd.f32 %v2415, %v2526
        %v2554 = vadd.f32 %v2416, %v2550
        %vm2555 = vcmp.ge.s32.totalorder %v1582, 28
        %vm2556 = vcmp.lt.s32.totalorder %v1582, 32
        %vm2557 = vmand %vm2555, %vm2556
        %v2558 = vsel %vm2557, 1, 0
        %v2559 = vcvt.s32.f32 %v2558
        %v2560 = vpack.c.bf16 %v2559, %v2559
        %v2561 = vunpack.c.l.bf16 %v2560
        %2563 = vrot.lane.b32.xlu0 %v2561, 32
        %v2564 = vpop.permute.xlu0 %2563
        %v2566 = vmul.f32 %v1589, %v2564
        %v2567 = vmul.f32 %v1590, %v2564
        %v2568 = vpack.c.bf16 %v2566, %v2566
        %v2569 = vpack.c.bf16 %v2567, %v2567
        %v2571 = vunpack.c.l.b16 %v2568
        %v2572 = vpack.c.b16 %v2571, %v2571
        %2573 = vrot.lane.b32.xlu0 %v2572, 96
        %v2574 = vpop.permute.xlu0 %2573
        %v2576 = vsel %vm1470, %v2574, 0
        %2578 = vmatpush.bf16.xpose.msra.mxu0 0
        %2579 = vmatpush.bf16.xpose.msra.mxu0 0
        %2580 = vmatpush.bf16.xpose.msra.mxu0 0
        %2581 = vmatpush.bf16.xpose.msra.mxu0 0
        %2582 = vmatpush.bf16.xpose.msra.mxu0 0
        %2583 = vmatpush.bf16.xpose.msra.mxu0 0
        %2584 = vmatpush.bf16.xpose.msra.mxu0 0
        %2585 = vmatpush.bf16.xpose.msra.mxu0 %v2576
        %2586 = vmatmul.bf16.gmra.mxu0 %v1606
        %v2587 = vpop.f32.mrf.mxu0
        %v2588 = vadd.f32 0.0, %v2587
        %v2589 = vpop.f32.mrf.mxu0
        %2590 = vdwg.mxu0
        %v2592 = vunpack.c.l.b16 %v2569
        %v2593 = vpack.c.b16 %v2592, %v2592
        %2594 = vrot.lane.b32.xlu0 %v2593, 96
        %v2595 = vpop.permute.xlu0 %2594
        %v2597 = vsel %vm1470, %v2595, 0
        %2599 = vmatpush.bf16.xpose.msra.mxu0 0
        %2600 = vmatpush.bf16.xpose.msra.mxu0 0
        %2601 = vmatpush.bf16.xpose.msra.mxu0 0
        %2602 = vmatpush.bf16.xpose.msra.mxu0 0
        %2603 = vmatpush.bf16.xpose.msra.mxu0 0
        %2604 = vmatpush.bf16.xpose.msra.mxu0 0
        %2605 = vmatpush.bf16.xpose.msra.mxu0 0
        %2606 = vmatpush.bf16.xpose.msra.mxu0 %v2597
        %2607 = vmatmul.bf16.gmra.mxu0 %v1630
        %v2608 = vpop.f32.mrf.mxu0
        %v2609 = vadd.f32 0.0, %v2608
        %v2610 = vpop.f32.mrf.mxu0
        %2611 = vdwg.mxu0
        %v2612 = vsel %vm1648, %v2588, -inf
        %2613 = vmax.xlane.f32.xlu0 %v2612
        %v2614 = vpop.xlane.xlu0 %2613
        %v2615 = vsel %vm1648, %v2609, -inf
        %2616 = vmax.xlane.f32.xlu0 %v2615
        %v2617 = vpop.xlane.xlu0 %2616
        %v2618 = vsub.f32 %v2588, %v2614
        %v2619 = vsub.f32 %v2609, %v2617
        %v2620 = vmul.f32 %v2618, 1.442695
        %v2621 = vpow.pop %v2620
        %v2622 = vmul.f32 %v2619, 1.442695
        %v2623 = vpow.pop %v2622
        %v2624 = vsel %vm1648, %v2621, 0.0
        %2625 = vadd.xlane.f32.xlu0 %v2624
        %v2626 = vpop.xlane.xlu0 %2625
        %v2627 = vsel %vm1648, %v2623, 0.0
        %2628 = vadd.xlane.f32.xlu0 %v2627
        %v2629 = vpop.xlane.xlu0 %2628
        %v2630 = vrcp.pop %v2626
        %v2631 = vrcp.pop %v2629
        %v2632 = vmul.f32 %v2621, %v2630
        %v2633 = vmul.f32 %v2623, %v2631
        %v2634 = vpack.c.bf16 %v2632, %v2632
        %v2635 = vpack.c.bf16 %v2633, %v2633
        %2636 = vrot.lane.b32.xlu0 %v2561, 64
        %v2637 = vpop.permute.xlu0 %2636
        %v2639 = vmul.f32 %v1589, %v2637
        %v2640 = vmul.f32 %v1590, %v2637
        %v2641 = vpack.c.bf16 %v2639, %v2639
        %v2642 = vpack.c.bf16 %v2640, %v2640
        %v2644 = vunpack.c.l.b16 %v2641
        %v2645 = vpack.c.b16 %v2644, %v2644
        %2646 = vrot.lane.b32.xlu0 %v2645, 64
        %v2647 = vpop.permute.xlu0 %2646
        %v2649 = vsel %vm1648, %v2634, 0
        %v2652 = vsel %vm1776, %v2647, 0
        %2654 = vmatpush.bf16.msra.mxu0 0
        %2655 = vmatpush.bf16.msra.mxu0 0
        %2656 = vmatpush.bf16.msra.mxu0 0
        %2657 = vmatpush.bf16.msra.mxu0 0
        %2658 = vmatpush.bf16.msra.mxu0 0
        %2659 = vmatpush.bf16.msra.mxu0 0
        %2660 = vmatpush.bf16.msra.mxu0 0
        %2661 = vmatpush.bf16.msra.mxu0 %v2652
        %2662 = vmatmul.bf16.gmra.mxu0 %v2649
        %v2663 = vpop.f32.mrf.mxu0
        %v2664 = vadd.f32 0.0, %v2663
        %v2665 = vpop.f32.mrf.mxu0
        %2666 = vdwg.mxu0
        %v2668 = vunpack.c.l.b16 %v2642
        %v2669 = vpack.c.b16 %v2668, %v2668
        %2670 = vrot.lane.b32.xlu0 %v2669, 64
        %v2671 = vpop.permute.xlu0 %2670
        %v2673 = vsel %vm1648, %v2635, 0
        %v2676 = vsel %vm1776, %v2671, 0
        %2678 = vmatpush.bf16.msra.mxu0 0
        %2679 = vmatpush.bf16.msra.mxu0 0
        %2680 = vmatpush.bf16.msra.mxu0 0
        %2681 = vmatpush.bf16.msra.mxu0 0
        %2682 = vmatpush.bf16.msra.mxu0 0
        %2683 = vmatpush.bf16.msra.mxu0 0
        %2684 = vmatpush.bf16.msra.mxu0 0
        %2685 = vmatpush.bf16.msra.mxu0 %v2676
        %2686 = vmatmul.bf16.gmra.mxu0 %v2673
        %v2687 = vpop.f32.mrf.mxu0
        %v2688 = vadd.f32 0.0, %v2687
        %v2689 = vpop.f32.mrf.mxu0
        %2690 = vdwg.mxu0
        %v2691 = vadd.f32 %v2553, %v2664
        %v2692 = vadd.f32 %v2554, %v2688
        %v2693 = vpack.c.bf16 %v2692, %v2691
        %v2695 = vperm.slane %v1541, 0
        %v2701 = vunpack.c.l.b16 %v1537
        %v2702 = vunpack.c.l.b16 %v1538
        %v2703 = vunpack.c.l.b16 %v1539
        %v2704 = vunpack.c.l.b16 %v1540
        %v2705 = vpack.c.b16 %v2702, %v2701
        %v2706 = vpack.c.b16 %v2704, %v2703
        %v2710 = vsel %vm1470, %v2693, 0
        %2712 = vmatpush.bf16.msra.mxu0 0
        %2713 = vmatpush.bf16.msra.mxu0 0
        %2714 = vmatpush.bf16.msra.mxu0 0
        %2715 = vmatpush.bf16.msra.mxu0 0
        %2716 = vmatpush.bf16.msra.mxu0 0
        %2717 = vmatpush.bf16.msra.mxu0 0
        %2718 = vmatpush.bf16.msra.mxu0 %v2706
        %2719 = vmatpush.bf16.msra.mxu0 %v2705
        %2720 = vmatmul.bf16.gmra.mxu0 %v2710
        %v2721 = vpop.f32.mrf.mxu0
        %v2722 = vadd.f32 %v2695, %v2721
        %v2723 = vpop.f32.mrf.mxu0
        %v2724 = vadd.f32 %v2695, %v2723
        %2725 = vdwg.mxu0
        %v2726 = vadd.f32 %v1463, %v2722
        %v2727 = vadd.f32 %v1464, %v2724
        %v2728 = vld [vmem:[%s1162] sm:$0x1]
        %v2729 = vld [vmem:[%s1171] sm:$0x1]
        %v2730 = vsel %vm1470, %v2726, 0.0
        %2731 = vadd.xlane.f32.xlu0 %v2730
        %v2732 = vpop.xlane.xlu0 %2731
        %v2733 = vsel %vm1470, %v2727, 0.0
        %2734 = vadd.xlane.f32.xlu0 %v2733
        %v2735 = vpop.xlane.xlu0 %2734
        %v2736 = vmul.f32 %v2732, %v1483
        %v2737 = vmul.f32 %v2735, %v1483
        %v2738 = vsub.f32 %v2726, %v2736
        %v2739 = vsub.f32 %v2727, %v2737
        %v2740 = vmul.f32 %v2738, %v2738
        %v2741 = vmul.f32 %v2739, %v2739
        %v2742 = vsel %vm1470, %v2740, 0.0
        %2743 = vadd.xlane.f32.xlu0 %v2742
        %v2744 = vpop.xlane.xlu0 %2743
        %v2745 = vsel %vm1470, %v2741, 0.0
        %2746 = vadd.xlane.f32.xlu0 %v2745
        %v2747 = vpop.xlane.xlu0 %2746
        %v2748 = vmul.f32 %v2744, %v1483
        %v2749 = vmul.f32 %v2747, %v1483
        %v2750 = vadd.f32 %v2748, 1e-05
        %v2751 = vadd.f32 %v2749, 1e-05
        %v2752 = vrsqrt.pop %v2750
        %v2753 = vmul.f32 %v2752, %v2750
        %v2754 = vmul.f32 %v2753, %v2752
        %v2755 = vmul.f32 0.5, %v2754
        %v2756 = vsub.f32 1.5, %v2755
        %v2757 = vmul.f32 %v2752, %v2756
        %vm2758 = vweird.f32 %v2750
        %vm2759 = vweird.f32 %v2752
        %vm2760 = vmor %vm2758, %vm2759
        %v2761 = vsel %vm2760, %v2752, %v2757
        %v2762 = vrsqrt.pop %v2751
        %v2763 = vmul.f32 %v2762, %v2751
        %v2764 = vmul.f32 %v2763, %v2762
        %v2765 = vmul.f32 0.5, %v2764
        %v2766 = vsub.f32 1.5, %v2765
        %v2767 = vmul.f32 %v2762, %v2766
        %vm2768 = vweird.f32 %v2751
        %vm2769 = vweird.f32 %v2762
        %vm2770 = vmor %vm2768, %vm2769
        %v2771 = vsel %vm2770, %v2762, %v2767
        %v2772 = vmul.f32 %v2738, %v2761
        %v2773 = vmul.f32 %v2739, %v2771
        %v2775 = vperm.slane %v2728, 0
        %v2777 = vmul.f32 %v2772, %v2775
        %v2778 = vmul.f32 %v2773, %v2775
        %v2780 = vperm.slane %v2729, 0
        %v2782 = vadd.f32 %v2777, %v2780
        %v2783 = vadd.f32 %v2778, %v2780
        %v2784 = vld [vmem:[%s1447] sm:$0xf]
        %v2785 = vld [vmem:[%s1447 + $0x4] sm:$0xf]
        %v2786 = vld [vmem:[%s1447 + $0x8] sm:$0xf]
        %v2787 = vld [vmem:[%s1447 + $0xc] sm:$0xf]
        %v2788 = vld [vmem:[%s1180] sm:$0x1]
        %v2789 = vld [vmem:[%s1190] sm:$0xf]
        %v2790 = vld [vmem:[%s1190 + $0x4] sm:$0xf]
        %v2791 = vld [vmem:[%s1190 + $0x8] sm:$0xf]
        %v2792 = vld [vmem:[%s1190 + $0xc] sm:$0xf]
        %v2793 = vld [vmem:[%s1199] sm:$0x1]
        %v2794 = vld [vmem:[%s1209] sm:$0xf]
        %v2795 = vld [vmem:[%s1209 + $0x4] sm:$0xf]
        %v2796 = vld [vmem:[%s1209 + $0x8] sm:$0xf]
        %v2797 = vld [vmem:[%s1209 + $0xc] sm:$0xf]
        %v2798 = vld [vmem:[%s1218] sm:$0x1]
        %v2799 = vpack.c.bf16 %v2783, %v2782
        %v2801 = vperm.slane %v2788, 0
        %v2807 = vunpack.c.l.b16 %v2784
        %v2808 = vunpack.c.l.b16 %v2785
        %v2809 = vunpack.c.l.b16 %v2786
        %v2810 = vunpack.c.l.b16 %v2787
        %v2811 = vpack.c.b16 %v2808, %v2807
        %v2812 = vpack.c.b16 %v2810, %v2809
        %v2816 = vsel %vm1470, %v2799, 0
        %2818 = vmatpush.bf16.msra.mxu0 0
        %2819 = vmatpush.bf16.msra.mxu0 0
        %2820 = vmatpush.bf16.msra.mxu0 0
        %2821 = vmatpush.bf16.msra.mxu0 0
        %2822 = vmatpush.bf16.msra.mxu0 0
        %2823 = vmatpush.bf16.msra.mxu0 0
        %2824 = vmatpush.bf16.msra.mxu0 %v2812
        %2825 = vmatpush.bf16.msra.mxu0 %v2811
        %2826 = vmatmul.bf16.gmra.mxu0 %v2816
        %v2827 = vpop.f32.mrf.mxu0
        %v2828 = vadd.f32 %v2801, %v2827
        %v2829 = vpop.f32.mrf.mxu0
        %v2830 = vadd.f32 %v2801, %v2829
        %2831 = vdwg.mxu0
        %v2832 = vmul.f32 %v2828, 0.5
        %v2833 = vmul.f32 %v2830, 0.5
        %v2835 = vperm.slane %v2793, 0
        %v2841 = vunpack.c.l.b16 %v2789
        %v2842 = vunpack.c.l.b16 %v2790
        %v2843 = vunpack.c.l.b16 %v2791
        %v2844 = vunpack.c.l.b16 %v2792
        %v2845 = vpack.c.b16 %v2842, %v2841
        %v2846 = vpack.c.b16 %v2844, %v2843
        %v2850 = vsel %vm1470, %v1467, 0
        %2852 = vmatpush.bf16.msra.mxu0 0
        %2853 = vmatpush.bf16.msra.mxu0 0
        %2854 = vmatpush.bf16.msra.mxu0 0
        %2855 = vmatpush.bf16.msra.mxu0 0
        %2856 = vmatpush.bf16.msra.mxu0 0
        %2857 = vmatpush.bf16.msra.mxu0 0
        %2858 = vmatpush.bf16.msra.mxu0 %v2846
        %2859 = vmatpush.bf16.msra.mxu0 %v2845
        %2860 = vmatmul.bf16.gmra.mxu0 %v2850
        %v2861 = vpop.f32.mrf.mxu0
        %v2862 = vadd.f32 %v2835, %v2861
        %v2863 = vpop.f32.mrf.mxu0
        %v2864 = vadd.f32 %v2835, %v2863
        %2865 = vdwg.mxu0
        %v2866 = vpack.c.bf16 %v2832, %v2832
        %v2867 = vpack.c.bf16 %v2833, %v2833
        %v2868 = vpack.c.bf16 %v2862, %v2862
        %v2869 = vpack.c.bf16 %v2864, %v2864
        %v2870 = vunpack.c.l.bf16 %v2868
        %v2871 = vunpack.c.l.bf16 %v2869
        %v2872 = vmul.f32 %v2870, %v1591
        %v2873 = vmul.f32 %v2871, %v1591
        %v2874 = vpack.c.bf16 %v2872, %v2872
        %v2875 = vpack.c.bf16 %v2873, %v2873
        %v2877 = vsel %vm1470, %v2866, 0
        %v2880 = vsel %vm1470, %v2874, 0
        %2882 = vmatpush.bf16.xpose.msra.mxu0 0
        %2883 = vmatpush.bf16.xpose.msra.mxu0 0
        %2884 = vmatpush.bf16.xpose.msra.mxu0 0
        %2885 = vmatpush.bf16.xpose.msra.mxu0 0
        %2886 = vmatpush.bf16.xpose.msra.mxu0 0
        %2887 = vmatpush.bf16.xpose.msra.mxu0 0
        %2888 = vmatpush.bf16.xpose.msra.mxu0 0
        %2889 = vmatpush.bf16.xpose.msra.mxu0 %v2880
        %2890 = vmatmul.bf16.gmra.mxu0 %v2877
        %v2891 = vpop.f32.mrf.mxu0
        %v2892 = vadd.f32 0.0, %v2891
        %v2893 = vpop.f32.mrf.mxu0
        %2894 = vdwg.mxu0
        %v2896 = vsel %vm1470, %v2867, 0
        %v2899 = vsel %vm1470, %v2875, 0
        %2901 = vmatpush.bf16.xpose.msra.mxu0 0
        %2902 = vmatpush.bf16.xpose.msra.mxu0 0
        %2903 = vmatpush.bf16.xpose.msra.mxu0 0
        %2904 = vmatpush.bf16.xpose.msra.mxu0 0
        %2905 = vmatpush.bf16.xpose.msra.mxu0 0
        %2906 = vmatpush.bf16.xpose.msra.mxu0 0
        %2907 = vmatpush.bf16.xpose.msra.mxu0 0
        %2908 = vmatpush.bf16.xpose.msra.mxu0 %v2899
        %2909 = vmatmul.bf16.gmra.mxu0 %v2896
        %v2910 = vpop.f32.mrf.mxu0
        %v2911 = vadd.f32 0.0, %v2910
        %v2912 = vpop.f32.mrf.mxu0
        %2913 = vdwg.mxu0
        %v2914 = vsel %vm1648, %v2892, -inf
        %2915 = vmax.xlane.f32.xlu0 %v2914
        %v2916 = vpop.xlane.xlu0 %2915
        %v2917 = vsel %vm1648, %v2911, -inf
        %2918 = vmax.xlane.f32.xlu0 %v2917
        %v2919 = vpop.xlane.xlu0 %2918
        %v2920 = vsub.f32 %v2892, %v2916
        %v2921 = vsub.f32 %v2911, %v2919
        %v2922 = vmul.f32 %v2920, 1.442695
        %v2923 = vpow.pop %v2922
        %v2924 = vmul.f32 %v2921, 1.442695
        %v2925 = vpow.pop %v2924
        %v2926 = vsel %vm1648, %v2923, 0.0
        %2927 = vadd.xlane.f32.xlu0 %v2926
        %v2928 = vpop.xlane.xlu0 %2927
        %v2929 = vsel %vm1648, %v2925, 0.0
        %2930 = vadd.xlane.f32.xlu0 %v2929
        %v2931 = vpop.xlane.xlu0 %2930
        %v2932 = vrcp.pop %v2928
        %v2933 = vrcp.pop %v2931
        %v2934 = vmul.f32 %v2923, %v2932
        %v2935 = vmul.f32 %v2925, %v2933
        %v2936 = vpack.c.bf16 %v2934, %v2934
        %v2937 = vpack.c.bf16 %v2935, %v2935
        %v2938 = vmul.f32 %v2870, %v1594
        %v2939 = vmul.f32 %v2871, %v1594
        %v2940 = vpack.c.bf16 %v2938, %v2938
        %v2941 = vpack.c.bf16 %v2939, %v2939
        %v2942 = vmul.f32 %v2870, %v1686
        %v2943 = vmul.f32 %v2871, %v1686
        %v2944 = vpack.c.bf16 %v2942, %v2942
        %v2945 = vpack.c.bf16 %v2943, %v2943
        %v2947 = vsel %vm1470, %v2944, 0
        %2949 = vmatpush.bf16.xpose.msra.mxu0 0
        %2950 = vmatpush.bf16.xpose.msra.mxu0 0
        %2951 = vmatpush.bf16.xpose.msra.mxu0 0
        %2952 = vmatpush.bf16.xpose.msra.mxu0 0
        %2953 = vmatpush.bf16.xpose.msra.mxu0 0
        %2954 = vmatpush.bf16.xpose.msra.mxu0 0
        %2955 = vmatpush.bf16.xpose.msra.mxu0 0
        %2956 = vmatpush.bf16.xpose.msra.mxu0 %v2947
        %2957 = vmatmul.bf16.gmra.mxu0 %v2877
        %v2958 = vpop.f32.mrf.mxu0
        %v2959 = vadd.f32 0.0, %v2958
        %v2960 = vpop.f32.mrf.mxu0
        %2961 = vdwg.mxu0
        %v2963 = vsel %vm1470, %v2945, 0
        %2965 = vmatpush.bf16.xpose.msra.mxu0 0
        %2966 = vmatpush.bf16.xpose.msra.mxu0 0
        %2967 = vmatpush.bf16.xpose.msra.mxu0 0
        %2968 = vmatpush.bf16.xpose.msra.mxu0 0
        %2969 = vmatpush.bf16.xpose.msra.mxu0 0
        %2970 = vmatpush.bf16.xpose.msra.mxu0 0
        %2971 = vmatpush.bf16.xpose.msra.mxu0 0
        %2972 = vmatpush.bf16.xpose.msra.mxu0 %v2963
        %2973 = vmatmul.bf16.gmra.mxu0 %v2896
        %v2974 = vpop.f32.mrf.mxu0
        %v2975 = vadd.f32 0.0, %v2974
        %v2976 = vpop.f32.mrf.mxu0
        %2977 = vdwg.mxu0
        %v2978 = vsel %vm1648, %v2959, -inf
        %2979 = vmax.xlane.f32.xlu0 %v2978
        %v2980 = vpop.xlane.xlu0 %2979
        %v2981 = vsel %vm1648, %v2975, -inf
        %2982 = vmax.xlane.f32.xlu0 %v2981
        %v2983 = vpop.xlane.xlu0 %2982
        %v2984 = vsub.f32 %v2959, %v2980
        %v2985 = vsub.f32 %v2975, %v2983
        %v2986 = vmul.f32 %v2984, 1.442695
        %v2987 = vpow.pop %v2986
        %v2988 = vmul.f32 %v2985, 1.442695
        %v2989 = vpow.pop %v2988
        %v2990 = vsel %vm1648, %v2987, 0.0
        %2991 = vadd.xlane.f32.xlu0 %v2990
        %v2992 = vpop.xlane.xlu0 %2991
        %v2993 = vsel %vm1648, %v2989, 0.0
        %2994 = vadd.xlane.f32.xlu0 %v2993
        %v2995 = vpop.xlane.xlu0 %2994
        %v2996 = vrcp.pop %v2992
        %v2997 = vrcp.pop %v2995
        %v2998 = vmul.f32 %v2987, %v2996
        %v2999 = vmul.f32 %v2989, %v2997
        %v3000 = vpack.c.bf16 %v2998, %v2998
        %v3001 = vpack.c.bf16 %v2999, %v2999
        %v3002 = vmul.f32 %v2870, %v1689
        %v3003 = vmul.f32 %v2871, %v1689
        %v3004 = vpack.c.bf16 %v3002, %v3002
        %v3005 = vpack.c.bf16 %v3003, %v3003
        %v3007 = vunpack.c.l.b16 %v3004
        %v3008 = vpack.c.b16 %v3007, %v3007
        %3009 = vrot.lane.b32.xlu0 %v3008, 96
        %v3010 = vpop.permute.xlu0 %3009
        %v3012 = vsel %vm1648, %v3000, 0
        %v3015 = vsel %vm1776, %v3010, 0
        %3017 = vmatpush.bf16.msra.mxu0 0
        %3018 = vmatpush.bf16.msra.mxu0 0
        %3019 = vmatpush.bf16.msra.mxu0 0
        %3020 = vmatpush.bf16.msra.mxu0 0
        %3021 = vmatpush.bf16.msra.mxu0 0
        %3022 = vmatpush.bf16.msra.mxu0 0
        %3023 = vmatpush.bf16.msra.mxu0 0
        %3024 = vmatpush.bf16.msra.mxu0 %v3015
        %3025 = vmatmul.bf16.gmra.mxu0 %v3012
        %v3026 = vpop.f32.mrf.mxu0
        %v3027 = vadd.f32 0.0, %v3026
        %v3028 = vpop.f32.mrf.mxu0
        %3029 = vdwg.mxu0
        %v3031 = vunpack.c.l.b16 %v3005
        %v3032 = vpack.c.b16 %v3031, %v3031
        %3033 = vrot.lane.b32.xlu0 %v3032, 96
        %v3034 = vpop.permute.xlu0 %3033
        %v3036 = vsel %vm1648, %v3001, 0
        %v3039 = vsel %vm1776, %v3034, 0
        %3041 = vmatpush.bf16.msra.mxu0 0
        %3042 = vmatpush.bf16.msra.mxu0 0
        %3043 = vmatpush.bf16.msra.mxu0 0
        %3044 = vmatpush.bf16.msra.mxu0 0
        %3045 = vmatpush.bf16.msra.mxu0 0
        %3046 = vmatpush.bf16.msra.mxu0 0
        %3047 = vmatpush.bf16.msra.mxu0 0
        %3048 = vmatpush.bf16.msra.mxu0 %v3039
        %3049 = vmatmul.bf16.gmra.mxu0 %v3036
        %v3050 = vpop.f32.mrf.mxu0
        %v3051 = vadd.f32 0.0, %v3050
        %v3052 = vpop.f32.mrf.mxu0
        %3053 = vdwg.mxu0
        %v3055 = vunpack.c.l.b16 %v2940
        %v3056 = vpack.c.b16 %v3055, %v3055
        %3057 = vrot.lane.b32.xlu0 %v3056, 96
        %v3058 = vpop.permute.xlu0 %3057
        %v3060 = vsel %vm1648, %v2936, 0
        %v3063 = vsel %vm1776, %v3058, 0
        %3065 = vmatpush.bf16.msra.mxu0 0
        %3066 = vmatpush.bf16.msra.mxu0 0
        %3067 = vmatpush.bf16.msra.mxu0 0
        %3068 = vmatpush.bf16.msra.mxu0 0
        %3069 = vmatpush.bf16.msra.mxu0 0
        %3070 = vmatpush.bf16.msra.mxu0 0
        %3071 = vmatpush.bf16.msra.mxu0 0
        %3072 = vmatpush.bf16.msra.mxu0 %v3063
        %3073 = vmatmul.bf16.gmra.mxu0 %v3060
        %v3074 = vpop.f32.mrf.mxu0
        %v3075 = vadd.f32 %v3027, %v3074
        %v3076 = vpop.f32.mrf.mxu0
        %3077 = vdwg.mxu0
        %v3079 = vunpack.c.l.b16 %v2941
        %v3080 = vpack.c.b16 %v3079, %v3079
        %3081 = vrot.lane.b32.xlu0 %v3080, 96
        %v3082 = vpop.permute.xlu0 %3081
        %v3084 = vsel %vm1648, %v2937, 0
        %v3087 = vsel %vm1776, %v3082, 0
        %3089 = vmatpush.bf16.msra.mxu0 0
        %3090 = vmatpush.bf16.msra.mxu0 0
        %3091 = vmatpush.bf16.msra.mxu0 0
        %3092 = vmatpush.bf16.msra.mxu0 0
        %3093 = vmatpush.bf16.msra.mxu0 0
        %3094 = vmatpush.bf16.msra.mxu0 0
        %3095 = vmatpush.bf16.msra.mxu0 0
        %3096 = vmatpush.bf16.msra.mxu0 %v3087
        %3097 = vmatmul.bf16.gmra.mxu0 %v3084
        %v3098 = vpop.f32.mrf.mxu0
        %v3099 = vadd.f32 %v3051, %v3098
        %v3100 = vpop.f32.mrf.mxu0
        %3101 = vdwg.mxu0
        %v3102 = vmul.f32 %v2870, %v1871
        %v3103 = vmul.f32 %v2871, %v1871
        %v3104 = vpack.c.bf16 %v3102, %v3102
        %v3105 = vpack.c.bf16 %v3103, %v3103
        %v3107 = vsel %vm1470, %v3104, 0
        %3109 = vmatpush.bf16.xpose.msra.mxu0 0
        %3110 = vmatpush.bf16.xpose.msra.mxu0 0
        %3111 = vmatpush.bf16.xpose.msra.mxu0 0
        %3112 = vmatpush.bf16.xpose.msra.mxu0 0
        %3113 = vmatpush.bf16.xpose.msra.mxu0 0
        %3114 = vmatpush.bf16.xpose.msra.mxu0 0
        %3115 = vmatpush.bf16.xpose.msra.mxu0 0
        %3116 = vmatpush.bf16.xpose.msra.mxu0 %v3107
        %3117 = vmatmul.bf16.gmra.mxu0 %v2877
        %v3118 = vpop.f32.mrf.mxu0
        %v3119 = vadd.f32 0.0, %v3118
        %v3120 = vpop.f32.mrf.mxu0
        %3121 = vdwg.mxu0
        %v3123 = vsel %vm1470, %v3105, 0
        %3125 = vmatpush.bf16.xpose.msra.mxu0 0
        %3126 = vmatpush.bf16.xpose.msra.mxu0 0
        %3127 = vmatpush.bf16.xpose.msra.mxu0 0
        %3128 = vmatpush.bf16.xpose.msra.mxu0 0
        %3129 = vmatpush.bf16.xpose.msra.mxu0 0
        %3130 = vmatpush.bf16.xpose.msra.mxu0 0
        %3131 = vmatpush.bf16.xpose.msra.mxu0 0
        %3132 = vmatpush.bf16.xpose.msra.mxu0 %v3123
        %3133 = vmatmul.bf16.gmra.mxu0 %v2896
        %v3134 = vpop.f32.mrf.mxu0
        %v3135 = vadd.f32 0.0, %v3134
        %v3136 = vpop.f32.mrf.mxu0
        %3137 = vdwg.mxu0
        %v3138 = vsel %vm1648, %v3119, -inf
        %3139 = vmax.xlane.f32.xlu0 %v3138
        %v3140 = vpop.xlane.xlu0 %3139
        %v3141 = vsel %vm1648, %v3135, -inf
        %3142 = vmax.xlane.f32.xlu0 %v3141
        %v3143 = vpop.xlane.xlu0 %3142
        %v3144 = vsub.f32 %v3119, %v3140
        %v3145 = vsub.f32 %v3135, %v3143
        %v3146 = vmul.f32 %v3144, 1.442695
        %v3147 = vpow.pop %v3146
        %v3148 = vmul.f32 %v3145, 1.442695
        %v3149 = vpow.pop %v3148
        %v3150 = vsel %vm1648, %v3147, 0.0
        %3151 = vadd.xlane.f32.xlu0 %v3150
        %v3152 = vpop.xlane.xlu0 %3151
        %v3153 = vsel %vm1648, %v3149, 0.0
        %3154 = vadd.xlane.f32.xlu0 %v3153
        %v3155 = vpop.xlane.xlu0 %3154
        %v3156 = vrcp.pop %v3152
        %v3157 = vrcp.pop %v3155
        %v3158 = vmul.f32 %v3147, %v3156
        %v3159 = vmul.f32 %v3149, %v3157
        %v3160 = vpack.c.bf16 %v3158, %v3158
        %v3161 = vpack.c.bf16 %v3159, %v3159
        %v3162 = vmul.f32 %v2870, %v1874
        %v3163 = vmul.f32 %v2871, %v1874
        %v3164 = vpack.c.bf16 %v3162, %v3162
        %v3165 = vpack.c.bf16 %v3163, %v3163
        %v3167 = vunpack.c.l.b16 %v3164
        %v3168 = vpack.c.b16 %v3167, %v3167
        %3169 = vrot.lane.b32.xlu0 %v3168, 96
        %v3170 = vpop.permute.xlu0 %3169
        %v3172 = vsel %vm1648, %v3160, 0
        %v3175 = vsel %vm1776, %v3170, 0
        %3177 = vmatpush.bf16.msra.mxu0 0
        %3178 = vmatpush.bf16.msra.mxu0 0
        %3179 = vmatpush.bf16.msra.mxu0 0
        %3180 = vmatpush.bf16.msra.mxu0 0
        %3181 = vmatpush.bf16.msra.mxu0 0
        %3182 = vmatpush.bf16.msra.mxu0 0
        %3183 = vmatpush.bf16.msra.mxu0 0
        %3184 = vmatpush.bf16.msra.mxu0 %v3175
        %3185 = vmatmul.bf16.gmra.mxu0 %v3172
        %v3186 = vpop.f32.mrf.mxu0
        %v3187 = vadd.f32 0.0, %v3186
        %v3188 = vpop.f32.mrf.mxu0
        %3189 = vdwg.mxu0
        %v3191 = vunpack.c.l.b16 %v3165
        %v3192 = vpack.c.b16 %v3191, %v3191
        %3193 = vrot.lane.b32.xlu0 %v3192, 96
        %v3194 = vpop.permute.xlu0 %3193
        %v3196 = vsel %vm1648, %v3161, 0
        %v3199 = vsel %vm1776, %v3194, 0
        %3201 = vmatpush.bf16.msra.mxu0 0
        %3202 = vmatpush.bf16.msra.mxu0 0
        %3203 = vmatpush.bf16.msra.mxu0 0
        %3204 = vmatpush.bf16.msra.mxu0 0
        %3205 = vmatpush.bf16.msra.mxu0 0
        %3206 = vmatpush.bf16.msra.mxu0 0
        %3207 = vmatpush.bf16.msra.mxu0 0
        %3208 = vmatpush.bf16.msra.mxu0 %v3199
        %3209 = vmatmul.bf16.gmra.mxu0 %v3196
        %v3210 = vpop.f32.mrf.mxu0
        %v3211 = vadd.f32 0.0, %v3210
        %v3212 = vpop.f32.mrf.mxu0
        %3213 = vdwg.mxu0
        %v3214 = vadd.f32 %v3075, %v3187
        %v3215 = vadd.f32 %v3099, %v3211
        %v3216 = vmul.f32 %v2870, %v2009
        %v3217 = vmul.f32 %v2871, %v2009
        %v3218 = vpack.c.bf16 %v3216, %v3216
        %v3219 = vpack.c.bf16 %v3217, %v3217
        %v3221 = vsel %vm1470, %v3218, 0
        %3223 = vmatpush.bf16.xpose.msra.mxu0 0
        %3224 = vmatpush.bf16.xpose.msra.mxu0 0
        %3225 = vmatpush.bf16.xpose.msra.mxu0 0
        %3226 = vmatpush.bf16.xpose.msra.mxu0 0
        %3227 = vmatpush.bf16.xpose.msra.mxu0 0
        %3228 = vmatpush.bf16.xpose.msra.mxu0 0
        %3229 = vmatpush.bf16.xpose.msra.mxu0 0
        %3230 = vmatpush.bf16.xpose.msra.mxu0 %v3221
        %3231 = vmatmul.bf16.gmra.mxu0 %v2877
        %v3232 = vpop.f32.mrf.mxu0
        %v3233 = vadd.f32 0.0, %v3232
        %v3234 = vpop.f32.mrf.mxu0
        %3235 = vdwg.mxu0
        %v3237 = vsel %vm1470, %v3219, 0
        %3239 = vmatpush.bf16.xpose.msra.mxu0 0
        %3240 = vmatpush.bf16.xpose.msra.mxu0 0
        %3241 = vmatpush.bf16.xpose.msra.mxu0 0
        %3242 = vmatpush.bf16.xpose.msra.mxu0 0
        %3243 = vmatpush.bf16.xpose.msra.mxu0 0
        %3244 = vmatpush.bf16.xpose.msra.mxu0 0
        %3245 = vmatpush.bf16.xpose.msra.mxu0 0
        %3246 = vmatpush.bf16.xpose.msra.mxu0 %v3237
        %3247 = vmatmul.bf16.gmra.mxu0 %v2896
        %v3248 = vpop.f32.mrf.mxu0
        %v3249 = vadd.f32 0.0, %v3248
        %v3250 = vpop.f32.mrf.mxu0
        %3251 = vdwg.mxu0
        %v3252 = vsel %vm1648, %v3233, -inf
        %3253 = vmax.xlane.f32.xlu0 %v3252
        %v3254 = vpop.xlane.xlu0 %3253
        %v3255 = vsel %vm1648, %v3249, -inf
        %3256 = vmax.xlane.f32.xlu0 %v3255
        %v3257 = vpop.xlane.xlu0 %3256
        %v3258 = vsub.f32 %v3233, %v3254
        %v3259 = vsub.f32 %v3249, %v3257
        %v3260 = vmul.f32 %v3258, 1.442695
        %v3261 = vpow.pop %v3260
        %v3262 = vmul.f32 %v3259, 1.442695
        %v3263 = vpow.pop %v3262
        %v3264 = vsel %vm1648, %v3261, 0.0
        %3265 = vadd.xlane.f32.xlu0 %v3264
        %v3266 = vpop.xlane.xlu0 %3265
        %v3267 = vsel %vm1648, %v3263, 0.0
        %3268 = vadd.xlane.f32.xlu0 %v3267
        %v3269 = vpop.xlane.xlu0 %3268
        %v3270 = vrcp.pop %v3266
        %v3271 = vrcp.pop %v3269
        %v3272 = vmul.f32 %v3261, %v3270
        %v3273 = vmul.f32 %v3263, %v3271
        %v3274 = vpack.c.bf16 %v3272, %v3272
        %v3275 = vpack.c.bf16 %v3273, %v3273
        %v3276 = vmul.f32 %v2870, %v2012
        %v3277 = vmul.f32 %v2871, %v2012
        %v3278 = vpack.c.bf16 %v3276, %v3276
        %v3279 = vpack.c.bf16 %v3277, %v3277
        %v3281 = vunpack.c.l.b16 %v3278
        %v3282 = vpack.c.b16 %v3281, %v3281
        %3283 = vrot.lane.b32.xlu0 %v3282, 96
        %v3284 = vpop.permute.xlu0 %3283
        %v3286 = vsel %vm1648, %v3274, 0
        %v3289 = vsel %vm1776, %v3284, 0
        %3291 = vmatpush.bf16.msra.mxu0 0
        %3292 = vmatpush.bf16.msra.mxu0 0
        %3293 = vmatpush.bf16.msra.mxu0 0
        %3294 = vmatpush.bf16.msra.mxu0 0
        %3295 = vmatpush.bf16.msra.mxu0 0
        %3296 = vmatpush.bf16.msra.mxu0 0
        %3297 = vmatpush.bf16.msra.mxu0 0
        %3298 = vmatpush.bf16.msra.mxu0 %v3289
        %3299 = vmatmul.bf16.gmra.mxu0 %v3286
        %v3300 = vpop.f32.mrf.mxu0
        %v3301 = vadd.f32 0.0, %v3300
        %v3302 = vpop.f32.mrf.mxu0
        %3303 = vdwg.mxu0
        %v3305 = vunpack.c.l.b16 %v3279
        %v3306 = vpack.c.b16 %v3305, %v3305
        %3307 = vrot.lane.b32.xlu0 %v3306, 96
        %v3308 = vpop.permute.xlu0 %3307
        %v3310 = vsel %vm1648, %v3275, 0
        %v3313 = vsel %vm1776, %v3308, 0
        %3315 = vmatpush.bf16.msra.mxu0 0
        %3316 = vmatpush.bf16.msra.mxu0 0
        %3317 = vmatpush.bf16.msra.mxu0 0
        %3318 = vmatpush.bf16.msra.mxu0 0
        %3319 = vmatpush.bf16.msra.mxu0 0
        %3320 = vmatpush.bf16.msra.mxu0 0
        %3321 = vmatpush.bf16.msra.mxu0 0
        %3322 = vmatpush.bf16.msra.mxu0 %v3313
        %3323 = vmatmul.bf16.gmra.mxu0 %v3310
        %v3324 = vpop.f32.mrf.mxu0
        %v3325 = vadd.f32 0.0, %v3324
        %v3326 = vpop.f32.mrf.mxu0
        %3327 = vdwg.mxu0
        %v3328 = vadd.f32 %v3214, %v3301
        %v3329 = vadd.f32 %v3215, %v3325
        %v3330 = vmul.f32 %v2870, %v2147
        %v3331 = vmul.f32 %v2871, %v2147
        %v3332 = vpack.c.bf16 %v3330, %v3330
        %v3333 = vpack.c.bf16 %v3331, %v3331
        %v3335 = vsel %vm1470, %v3332, 0
        %3337 = vmatpush.bf16.xpose.msra.mxu0 0
        %3338 = vmatpush.bf16.xpose.msra.mxu0 0
        %3339 = vmatpush.bf16.xpose.msra.mxu0 0
        %3340 = vmatpush.bf16.xpose.msra.mxu0 0
        %3341 = vmatpush.bf16.xpose.msra.mxu0 0
        %3342 = vmatpush.bf16.xpose.msra.mxu0 0
        %3343 = vmatpush.bf16.xpose.msra.mxu0 0
        %3344 = vmatpush.bf16.xpose.msra.mxu0 %v3335
        %3345 = vmatmul.bf16.gmra.mxu0 %v2877
        %v3346 = vpop.f32.mrf.mxu0
        %v3347 = vadd.f32 0.0, %v3346
        %v3348 = vpop.f32.mrf.mxu0
        %3349 = vdwg.mxu0
        %v3351 = vsel %vm1470, %v3333, 0
        %3353 = vmatpush.bf16.xpose.msra.mxu0 0
        %3354 = vmatpush.bf16.xpose.msra.mxu0 0
        %3355 = vmatpush.bf16.xpose.msra.mxu0 0
        %3356 = vmatpush.bf16.xpose.msra.mxu0 0
        %3357 = vmatpush.bf16.xpose.msra.mxu0 0
        %3358 = vmatpush.bf16.xpose.msra.mxu0 0
        %3359 = vmatpush.bf16.xpose.msra.mxu0 0
        %3360 = vmatpush.bf16.xpose.msra.mxu0 %v3351
        %3361 = vmatmul.bf16.gmra.mxu0 %v2896
        %v3362 = vpop.f32.mrf.mxu0
        %v3363 = vadd.f32 0.0, %v3362
        %v3364 = vpop.f32.mrf.mxu0
        %3365 = vdwg.mxu0
        %v3366 = vsel %vm1648, %v3347, -inf
        %3367 = vmax.xlane.f32.xlu0 %v3366
        %v3368 = vpop.xlane.xlu0 %3367
        %v3369 = vsel %vm1648, %v3363, -inf
        %3370 = vmax.xlane.f32.xlu0 %v3369
        %v3371 = vpop.xlane.xlu0 %3370
        %v3372 = vsub.f32 %v3347, %v3368
        %v3373 = vsub.f32 %v3363, %v3371
        %v3374 = vmul.f32 %v3372, 1.442695
        %v3375 = vpow.pop %v3374
        %v3376 = vmul.f32 %v3373, 1.442695
        %v3377 = vpow.pop %v3376
        %v3378 = vsel %vm1648, %v3375, 0.0
        %3379 = vadd.xlane.f32.xlu0 %v3378
        %v3380 = vpop.xlane.xlu0 %3379
        %v3381 = vsel %vm1648, %v3377, 0.0
        %3382 = vadd.xlane.f32.xlu0 %v3381
        %v3383 = vpop.xlane.xlu0 %3382
        %v3384 = vrcp.pop %v3380
        %v3385 = vrcp.pop %v3383
        %v3386 = vmul.f32 %v3375, %v3384
        %v3387 = vmul.f32 %v3377, %v3385
        %v3388 = vpack.c.bf16 %v3386, %v3386
        %v3389 = vpack.c.bf16 %v3387, %v3387
        %v3390 = vmul.f32 %v2870, %v2150
        %v3391 = vmul.f32 %v2871, %v2150
        %v3392 = vpack.c.bf16 %v3390, %v3390
        %v3393 = vpack.c.bf16 %v3391, %v3391
        %v3395 = vunpack.c.l.b16 %v3392
        %v3396 = vpack.c.b16 %v3395, %v3395
        %3397 = vrot.lane.b32.xlu0 %v3396, 96
        %v3398 = vpop.permute.xlu0 %3397
        %v3400 = vsel %vm1648, %v3388, 0
        %v3403 = vsel %vm1776, %v3398, 0
        %3405 = vmatpush.bf16.msra.mxu0 0
        %3406 = vmatpush.bf16.msra.mxu0 0
        %3407 = vmatpush.bf16.msra.mxu0 0
        %3408 = vmatpush.bf16.msra.mxu0 0
        %3409 = vmatpush.bf16.msra.mxu0 0
        %3410 = vmatpush.bf16.msra.mxu0 0
        %3411 = vmatpush.bf16.msra.mxu0 0
        %3412 = vmatpush.bf16.msra.mxu0 %v3403
        %3413 = vmatmul.bf16.gmra.mxu0 %v3400
        %v3414 = vpop.f32.mrf.mxu0
        %v3415 = vadd.f32 0.0, %v3414
        %v3416 = vpop.f32.mrf.mxu0
        %3417 = vdwg.mxu0
        %v3419 = vunpack.c.l.b16 %v3393
        %v3420 = vpack.c.b16 %v3419, %v3419
        %3421 = vrot.lane.b32.xlu0 %v3420, 96
        %v3422 = vpop.permute.xlu0 %3421
        %v3424 = vsel %vm1648, %v3389, 0
        %v3427 = vsel %vm1776, %v3422, 0
        %3429 = vmatpush.bf16.msra.mxu0 0
        %3430 = vmatpush.bf16.msra.mxu0 0
        %3431 = vmatpush.bf16.msra.mxu0 0
        %3432 = vmatpush.bf16.msra.mxu0 0
        %3433 = vmatpush.bf16.msra.mxu0 0
        %3434 = vmatpush.bf16.msra.mxu0 0
        %3435 = vmatpush.bf16.msra.mxu0 0
        %3436 = vmatpush.bf16.msra.mxu0 %v3427
        %3437 = vmatmul.bf16.gmra.mxu0 %v3424
        %v3438 = vpop.f32.mrf.mxu0
        %v3439 = vadd.f32 0.0, %v3438
        %v3440 = vpop.f32.mrf.mxu0
        %3441 = vdwg.mxu0
        %v3442 = vadd.f32 %v3328, %v3415
        %v3443 = vadd.f32 %v3329, %v3439
        %v3444 = vmul.f32 %v2870, %v2285
        %v3445 = vmul.f32 %v2871, %v2285
        %v3446 = vpack.c.bf16 %v3444, %v3444
        %v3447 = vpack.c.bf16 %v3445, %v3445
        %v3449 = vsel %vm1470, %v3446, 0
        %3451 = vmatpush.bf16.xpose.msra.mxu0 0
        %3452 = vmatpush.bf16.xpose.msra.mxu0 0
        %3453 = vmatpush.bf16.xpose.msra.mxu0 0
        %3454 = vmatpush.bf16.xpose.msra.mxu0 0
        %3455 = vmatpush.bf16.xpose.msra.mxu0 0
        %3456 = vmatpush.bf16.xpose.msra.mxu0 0
        %3457 = vmatpush.bf16.xpose.msra.mxu0 0
        %3458 = vmatpush.bf16.xpose.msra.mxu0 %v3449
        %3459 = vmatmul.bf16.gmra.mxu0 %v2877
        %v3460 = vpop.f32.mrf.mxu0
        %v3461 = vadd.f32 0.0, %v3460
        %v3462 = vpop.f32.mrf.mxu0
        %3463 = vdwg.mxu0
        %v3465 = vsel %vm1470, %v3447, 0
        %3467 = vmatpush.bf16.xpose.msra.mxu0 0
        %3468 = vmatpush.bf16.xpose.msra.mxu0 0
        %3469 = vmatpush.bf16.xpose.msra.mxu0 0
        %3470 = vmatpush.bf16.xpose.msra.mxu0 0
        %3471 = vmatpush.bf16.xpose.msra.mxu0 0
        %3472 = vmatpush.bf16.xpose.msra.mxu0 0
        %3473 = vmatpush.bf16.xpose.msra.mxu0 0
        %3474 = vmatpush.bf16.xpose.msra.mxu0 %v3465
        %3475 = vmatmul.bf16.gmra.mxu0 %v2896
        %v3476 = vpop.f32.mrf.mxu0
        %v3477 = vadd.f32 0.0, %v3476
        %v3478 = vpop.f32.mrf.mxu0
        %3479 = vdwg.mxu0
        %v3480 = vsel %vm1648, %v3461, -inf
        %3481 = vmax.xlane.f32.xlu0 %v3480
        %v3482 = vpop.xlane.xlu0 %3481
        %v3483 = vsel %vm1648, %v3477, -inf
        %3484 = vmax.xlane.f32.xlu0 %v3483
        %v3485 = vpop.xlane.xlu0 %3484
        %v3486 = vsub.f32 %v3461, %v3482
        %v3487 = vsub.f32 %v3477, %v3485
        %v3488 = vmul.f32 %v3486, 1.442695
        %v3489 = vpow.pop %v3488
        %v3490 = vmul.f32 %v3487, 1.442695
        %v3491 = vpow.pop %v3490
        %v3492 = vsel %vm1648, %v3489, 0.0
        %3493 = vadd.xlane.f32.xlu0 %v3492
        %v3494 = vpop.xlane.xlu0 %3493
        %v3495 = vsel %vm1648, %v3491, 0.0
        %3496 = vadd.xlane.f32.xlu0 %v3495
        %v3497 = vpop.xlane.xlu0 %3496
        %v3498 = vrcp.pop %v3494
        %v3499 = vrcp.pop %v3497
        %v3500 = vmul.f32 %v3489, %v3498
        %v3501 = vmul.f32 %v3491, %v3499
        %v3502 = vpack.c.bf16 %v3500, %v3500
        %v3503 = vpack.c.bf16 %v3501, %v3501
        %v3504 = vmul.f32 %v2870, %v2288
        %v3505 = vmul.f32 %v2871, %v2288
        %v3506 = vpack.c.bf16 %v3504, %v3504
        %v3507 = vpack.c.bf16 %v3505, %v3505
        %v3509 = vunpack.c.l.b16 %v3506
        %v3510 = vpack.c.b16 %v3509, %v3509
        %3511 = vrot.lane.b32.xlu0 %v3510, 96
        %v3512 = vpop.permute.xlu0 %3511
        %v3514 = vsel %vm1648, %v3502, 0
        %v3517 = vsel %vm1776, %v3512, 0
        %3519 = vmatpush.bf16.msra.mxu0 0
        %3520 = vmatpush.bf16.msra.mxu0 0
        %3521 = vmatpush.bf16.msra.mxu0 0
        %3522 = vmatpush.bf16.msra.mxu0 0
        %3523 = vmatpush.bf16.msra.mxu0 0
        %3524 = vmatpush.bf16.msra.mxu0 0
        %3525 = vmatpush.bf16.msra.mxu0 0
        %3526 = vmatpush.bf16.msra.mxu0 %v3517
        %3527 = vmatmul.bf16.gmra.mxu0 %v3514
        %v3528 = vpop.f32.mrf.mxu0
        %v3529 = vadd.f32 0.0, %v3528
        %v3530 = vpop.f32.mrf.mxu0
        %3531 = vdwg.mxu0
        %v3533 = vunpack.c.l.b16 %v3507
        %v3534 = vpack.c.b16 %v3533, %v3533
        %3535 = vrot.lane.b32.xlu0 %v3534, 96
        %v3536 = vpop.permute.xlu0 %3535
        %v3538 = vsel %vm1648, %v3503, 0
        %v3541 = vsel %vm1776, %v3536, 0
        %3543 = vmatpush.bf16.msra.mxu0 0
        %3544 = vmatpush.bf16.msra.mxu0 0
        %3545 = vmatpush.bf16.msra.mxu0 0
        %3546 = vmatpush.bf16.msra.mxu0 0
        %3547 = vmatpush.bf16.msra.mxu0 0
        %3548 = vmatpush.bf16.msra.mxu0 0
        %3549 = vmatpush.bf16.msra.mxu0 0
        %3550 = vmatpush.bf16.msra.mxu0 %v3541
        %3551 = vmatmul.bf16.gmra.mxu0 %v3538
        %v3552 = vpop.f32.mrf.mxu0
        %v3553 = vadd.f32 0.0, %v3552
        %v3554 = vpop.f32.mrf.mxu0
        %3555 = vdwg.mxu0
        %v3556 = vadd.f32 %v3442, %v3529
        %v3557 = vadd.f32 %v3443, %v3553
        %v3558 = vmul.f32 %v2870, %v2423
        %v3559 = vmul.f32 %v2871, %v2423
        %v3560 = vpack.c.bf16 %v3558, %v3558
        %v3561 = vpack.c.bf16 %v3559, %v3559
        %v3563 = vsel %vm1470, %v3560, 0
        %3565 = vmatpush.bf16.xpose.msra.mxu0 0
        %3566 = vmatpush.bf16.xpose.msra.mxu0 0
        %3567 = vmatpush.bf16.xpose.msra.mxu0 0
        %3568 = vmatpush.bf16.xpose.msra.mxu0 0
        %3569 = vmatpush.bf16.xpose.msra.mxu0 0
        %3570 = vmatpush.bf16.xpose.msra.mxu0 0
        %3571 = vmatpush.bf16.xpose.msra.mxu0 0
        %3572 = vmatpush.bf16.xpose.msra.mxu0 %v3563
        %3573 = vmatmul.bf16.gmra.mxu0 %v2877
        %v3574 = vpop.f32.mrf.mxu0
        %v3575 = vadd.f32 0.0, %v3574
        %v3576 = vpop.f32.mrf.mxu0
        %3577 = vdwg.mxu0
        %v3579 = vsel %vm1470, %v3561, 0
        %3581 = vmatpush.bf16.xpose.msra.mxu0 0
        %3582 = vmatpush.bf16.xpose.msra.mxu0 0
        %3583 = vmatpush.bf16.xpose.msra.mxu0 0
        %3584 = vmatpush.bf16.xpose.msra.mxu0 0
        %3585 = vmatpush.bf16.xpose.msra.mxu0 0
        %3586 = vmatpush.bf16.xpose.msra.mxu0 0
        %3587 = vmatpush.bf16.xpose.msra.mxu0 0
        %3588 = vmatpush.bf16.xpose.msra.mxu0 %v3579
        %3589 = vmatmul.bf16.gmra.mxu0 %v2896
        %v3590 = vpop.f32.mrf.mxu0
        %v3591 = vadd.f32 0.0, %v3590
        %v3592 = vpop.f32.mrf.mxu0
        %3593 = vdwg.mxu0
        %v3594 = vsel %vm1648, %v3575, -inf
        %3595 = vmax.xlane.f32.xlu0 %v3594
        %v3596 = vpop.xlane.xlu0 %3595
        %v3597 = vsel %vm1648, %v3591, -inf
        %3598 = vmax.xlane.f32.xlu0 %v3597
        %v3599 = vpop.xlane.xlu0 %3598
        %v3600 = vsub.f32 %v3575, %v3596
        %v3601 = vsub.f32 %v3591, %v3599
        %v3602 = vmul.f32 %v3600, 1.442695
        %v3603 = vpow.pop %v3602
        %v3604 = vmul.f32 %v3601, 1.442695
        %v3605 = vpow.pop %v3604
        %v3606 = vsel %vm1648, %v3603, 0.0
        %3607 = vadd.xlane.f32.xlu0 %v3606
        %v3608 = vpop.xlane.xlu0 %3607
        %v3609 = vsel %vm1648, %v3605, 0.0
        %3610 = vadd.xlane.f32.xlu0 %v3609
        %v3611 = vpop.xlane.xlu0 %3610
        %v3612 = vrcp.pop %v3608
        %v3613 = vrcp.pop %v3611
        %v3614 = vmul.f32 %v3603, %v3612
        %v3615 = vmul.f32 %v3605, %v3613
        %v3616 = vpack.c.bf16 %v3614, %v3614
        %v3617 = vpack.c.bf16 %v3615, %v3615
        %v3618 = vmul.f32 %v2870, %v2426
        %v3619 = vmul.f32 %v2871, %v2426
        %v3620 = vpack.c.bf16 %v3618, %v3618
        %v3621 = vpack.c.bf16 %v3619, %v3619
        %v3623 = vunpack.c.l.b16 %v3620
        %v3624 = vpack.c.b16 %v3623, %v3623
        %3625 = vrot.lane.b32.xlu0 %v3624, 96
        %v3626 = vpop.permute.xlu0 %3625
        %v3628 = vsel %vm1648, %v3616, 0
        %v3631 = vsel %vm1776, %v3626, 0
        %3633 = vmatpush.bf16.msra.mxu0 0
        %3634 = vmatpush.bf16.msra.mxu0 0
        %3635 = vmatpush.bf16.msra.mxu0 0
        %3636 = vmatpush.bf16.msra.mxu0 0
        %3637 = vmatpush.bf16.msra.mxu0 0
        %3638 = vmatpush.bf16.msra.mxu0 0
        %3639 = vmatpush.bf16.msra.mxu0 0
        %3640 = vmatpush.bf16.msra.mxu0 %v3631
        %3641 = vmatmul.bf16.gmra.mxu0 %v3628
        %v3642 = vpop.f32.mrf.mxu0
        %v3643 = vadd.f32 0.0, %v3642
        %v3644 = vpop.f32.mrf.mxu0
        %3645 = vdwg.mxu0
        %v3647 = vunpack.c.l.b16 %v3621
        %v3648 = vpack.c.b16 %v3647, %v3647
        %3649 = vrot.lane.b32.xlu0 %v3648, 96
        %v3650 = vpop.permute.xlu0 %3649
        %v3652 = vsel %vm1648, %v3617, 0
        %v3655 = vsel %vm1776, %v3650, 0
        %3657 = vmatpush.bf16.msra.mxu0 0
        %3658 = vmatpush.bf16.msra.mxu0 0
        %3659 = vmatpush.bf16.msra.mxu0 0
        %3660 = vmatpush.bf16.msra.mxu0 0
        %3661 = vmatpush.bf16.msra.mxu0 0
        %3662 = vmatpush.bf16.msra.mxu0 0
        %3663 = vmatpush.bf16.msra.mxu0 0
        %3664 = vmatpush.bf16.msra.mxu0 %v3655
        %3665 = vmatmul.bf16.gmra.mxu0 %v3652
        %v3666 = vpop.f32.mrf.mxu0
        %v3667 = vadd.f32 0.0, %v3666
        %v3668 = vpop.f32.mrf.mxu0
        %3669 = vdwg.mxu0
        %v3670 = vadd.f32 %v3556, %v3643
        %v3671 = vadd.f32 %v3557, %v3667
        %v3672 = vmul.f32 %v2870, %v2561
        %v3673 = vmul.f32 %v2871, %v2561
        %v3674 = vpack.c.bf16 %v3672, %v3672
        %v3675 = vpack.c.bf16 %v3673, %v3673
        %v3677 = vsel %vm1470, %v3674, 0
        %3679 = vmatpush.bf16.xpose.msra.mxu0 0
        %3680 = vmatpush.bf16.xpose.msra.mxu0 0
        %3681 = vmatpush.bf16.xpose.msra.mxu0 0
        %3682 = vmatpush.bf16.xpose.msra.mxu0 0
        %3683 = vmatpush.bf16.xpose.msra.mxu0 0
        %3684 = vmatpush.bf16.xpose.msra.mxu0 0
        %3685 = vmatpush.bf16.xpose.msra.mxu0 0
        %3686 = vmatpush.bf16.xpose.msra.mxu0 %v3677
        %3687 = vmatmul.bf16.gmra.mxu0 %v2877
        %v3688 = vpop.f32.mrf.mxu0
        %v3689 = vadd.f32 0.0, %v3688
        %v3690 = vpop.f32.mrf.mxu0
        %3691 = vdwg.mxu0
        %v3693 = vsel %vm1470, %v3675, 0
        %3695 = vmatpush.bf16.xpose.msra.mxu0 0
        %3696 = vmatpush.bf16.xpose.msra.mxu0 0
        %3697 = vmatpush.bf16.xpose.msra.mxu0 0
        %3698 = vmatpush.bf16.xpose.msra.mxu0 0
        %3699 = vmatpush.bf16.xpose.msra.mxu0 0
        %3700 = vmatpush.bf16.xpose.msra.mxu0 0
        %3701 = vmatpush.bf16.xpose.msra.mxu0 0
        %3702 = vmatpush.bf16.xpose.msra.mxu0 %v3693
        %3703 = vmatmul.bf16.gmra.mxu0 %v2896
        %v3704 = vpop.f32.mrf.mxu0
        %v3705 = vadd.f32 0.0, %v3704
        %v3706 = vpop.f32.mrf.mxu0
        %3707 = vdwg.mxu0
        %v3708 = vsel %vm1648, %v3689, -inf
        %3709 = vmax.xlane.f32.xlu0 %v3708
        %v3710 = vpop.xlane.xlu0 %3709
        %v3711 = vsel %vm1648, %v3705, -inf
        %3712 = vmax.xlane.f32.xlu0 %v3711
        %v3713 = vpop.xlane.xlu0 %3712
        %v3714 = vsub.f32 %v3689, %v3710
        %v3715 = vsub.f32 %v3705, %v3713
        %v3716 = vmul.f32 %v3714, 1.442695
        %v3717 = vpow.pop %v3716
        %v3718 = vmul.f32 %v3715, 1.442695
        %v3719 = vpow.pop %v3718
        %v3720 = vsel %vm1648, %v3717, 0.0
        %3721 = vadd.xlane.f32.xlu0 %v3720
        %v3722 = vpop.xlane.xlu0 %3721
        %v3723 = vsel %vm1648, %v3719, 0.0
        %3724 = vadd.xlane.f32.xlu0 %v3723
        %v3725 = vpop.xlane.xlu0 %3724
        %v3726 = vrcp.pop %v3722
        %v3727 = vrcp.pop %v3725
        %v3728 = vmul.f32 %v3717, %v3726
        %v3729 = vmul.f32 %v3719, %v3727
        %v3730 = vpack.c.bf16 %v3728, %v3728
        %v3731 = vpack.c.bf16 %v3729, %v3729
        %v3732 = vmul.f32 %v2870, %v2564
        %v3733 = vmul.f32 %v2871, %v2564
        %v3734 = vpack.c.bf16 %v3732, %v3732
        %v3735 = vpack.c.bf16 %v3733, %v3733
        %v3737 = vunpack.c.l.b16 %v3734
        %v3738 = vpack.c.b16 %v3737, %v3737
        %3739 = vrot.lane.b32.xlu0 %v3738, 96
        %v3740 = vpop.permute.xlu0 %3739
        %v3742 = vsel %vm1648, %v3730, 0
        %v3745 = vsel %vm1776, %v3740, 0
        %3747 = vmatpush.bf16.msra.mxu0 0
        %3748 = vmatpush.bf16.msra.mxu0 0
        %3749 = vmatpush.bf16.msra.mxu0 0
        %3750 = vmatpush.bf16.msra.mxu0 0
        %3751 = vmatpush.bf16.msra.mxu0 0
        %3752 = vmatpush.bf16.msra.mxu0 0
        %3753 = vmatpush.bf16.msra.mxu0 0
        %3754 = vmatpush.bf16.msra.mxu0 %v3745
        %3755 = vmatmul.bf16.gmra.mxu0 %v3742
        %v3756 = vpop.f32.mrf.mxu0
        %v3757 = vadd.f32 0.0, %v3756
        %v3758 = vpop.f32.mrf.mxu0
        %3759 = vdwg.mxu0
        %v3761 = vunpack.c.l.b16 %v3735
        %v3762 = vpack.c.b16 %v3761, %v3761
        %3763 = vrot.lane.b32.xlu0 %v3762, 96
        %v3764 = vpop.permute.xlu0 %3763
        %v3766 = vsel %vm1648, %v3731, 0
        %v3769 = vsel %vm1776, %v3764, 0
        %3771 = vmatpush.bf16.msra.mxu0 0
        %3772 = vmatpush.bf16.msra.mxu0 0
        %3773 = vmatpush.bf16.msra.mxu0 0
        %3774 = vmatpush.bf16.msra.mxu0 0
        %3775 = vmatpush.bf16.msra.mxu0 0
        %3776 = vmatpush.bf16.msra.mxu0 0
        %3777 = vmatpush.bf16.msra.mxu0 0
        %3778 = vmatpush.bf16.msra.mxu0 %v3769
        %3779 = vmatmul.bf16.gmra.mxu0 %v3766
        %v3780 = vpop.f32.mrf.mxu0
        %v3781 = vadd.f32 0.0, %v3780
        %v3782 = vpop.f32.mrf.mxu0
        %3783 = vdwg.mxu0
        %v3784 = vadd.f32 %v3670, %v3757
        %v3785 = vadd.f32 %v3671, %v3781
        %v3786 = vpack.c.bf16 %v3785, %v3784
        %v3788 = vperm.slane %v2798, 0
        %v3794 = vunpack.c.l.b16 %v2794
        %v3795 = vunpack.c.l.b16 %v2795
        %v3796 = vunpack.c.l.b16 %v2796
        %v3797 = vunpack.c.l.b16 %v2797
        %v3798 = vpack.c.b16 %v3795, %v3794
        %v3799 = vpack.c.b16 %v3797, %v3796
        %v3803 = vsel %vm1470, %v3786, 0
        %3805 = vmatpush.bf16.msra.mxu0 0
        %3806 = vmatpush.bf16.msra.mxu0 0
        %3807 = vmatpush.bf16.msra.mxu0 0
        %3808 = vmatpush.bf16.msra.mxu0 0
        %3809 = vmatpush.bf16.msra.mxu0 0
        %3810 = vmatpush.bf16.msra.mxu0 0
        %3811 = vmatpush.bf16.msra.mxu0 %v3799
        %3812 = vmatpush.bf16.msra.mxu0 %v3798
        %3813 = vmatmul.bf16.gmra.mxu0 %v3803
        %v3814 = vpop.f32.mrf.mxu0
        %v3815 = vadd.f32 %v3788, %v3814
        %v3816 = vpop.f32.mrf.mxu0
        %v3817 = vadd.f32 %v3788, %v3816
        %3818 = vdwg.mxu0
        %v3819 = vadd.f32 %v2726, %v3815
        %v3820 = vadd.f32 %v2727, %v3817
        %v3821 = vld [vmem:[%s1227] sm:$0x1]
        %v3822 = vld [vmem:[%s1236] sm:$0x1]
        %v3823 = vsel %vm1470, %v3819, 0.0
        %3824 = vadd.xlane.f32.xlu0 %v3823
        %v3825 = vpop.xlane.xlu0 %3824
        %v3826 = vsel %vm1470, %v3820, 0.0
        %3827 = vadd.xlane.f32.xlu0 %v3826
        %v3828 = vpop.xlane.xlu0 %3827
        %v3829 = vmul.f32 %v3825, %v1483
        %v3830 = vmul.f32 %v3828, %v1483
        %v3831 = vsub.f32 %v3819, %v3829
        %v3832 = vsub.f32 %v3820, %v3830
        %v3833 = vmul.f32 %v3831, %v3831
        %v3834 = vmul.f32 %v3832, %v3832
        %v3835 = vsel %vm1470, %v3833, 0.0
        %3836 = vadd.xlane.f32.xlu0 %v3835
        %v3837 = vpop.xlane.xlu0 %3836
        %v3838 = vsel %vm1470, %v3834, 0.0
        %3839 = vadd.xlane.f32.xlu0 %v3838
        %v3840 = vpop.xlane.xlu0 %3839
        %v3841 = vmul.f32 %v3837, %v1483
        %v3842 = vmul.f32 %v3840, %v1483
        %v3843 = vadd.f32 %v3841, 1e-05
        %v3844 = vadd.f32 %v3842, 1e-05
        %v3845 = vrsqrt.pop %v3843
        %v3846 = vmul.f32 %v3845, %v3843
        %v3847 = vmul.f32 %v3846, %v3845
        %v3848 = vmul.f32 0.5, %v3847
        %v3849 = vsub.f32 1.5, %v3848
        %v3850 = vmul.f32 %v3845, %v3849
        %vm3851 = vweird.f32 %v3843
        %vm3852 = vweird.f32 %v3845
        %vm3853 = vmor %vm3851, %vm3852
        %v3854 = vsel %vm3853, %v3845, %v3850
        %v3855 = vrsqrt.pop %v3844
        %v3856 = vmul.f32 %v3855, %v3844
        %v3857 = vmul.f32 %v3856, %v3855
        %v3858 = vmul.f32 0.5, %v3857
        %v3859 = vsub.f32 1.5, %v3858
        %v3860 = vmul.f32 %v3855, %v3859
        %vm3861 = vweird.f32 %v3844
        %vm3862 = vweird.f32 %v3855
        %vm3863 = vmor %vm3861, %vm3862
        %v3864 = vsel %vm3863, %v3855, %v3860
        %v3865 = vmul.f32 %v3831, %v3854
        %v3866 = vmul.f32 %v3832, %v3864
        %v3868 = vperm.slane %v3821, 0
        %v3870 = vmul.f32 %v3865, %v3868
        %v3871 = vmul.f32 %v3866, %v3868
        %v3873 = vperm.slane %v3822, 0
        %v3875 = vadd.f32 %v3870, %v3873
        %v3876 = vadd.f32 %v3871, %v3873
        %v3877 = vld [vmem:[%s1246] sm:$0xf]
        %v3878 = vld [vmem:[%s1246 + $0x4] sm:$0xf]
        %v3879 = vld [vmem:[%s1246 + $0x8] sm:$0xf]
        %v3880 = vld [vmem:[%s1246 + $0xc] sm:$0xf]
        %v3881 = vld [vmem:[%s1255] sm:$0x1]
        %v3882 = vld [vmem:[%s1452] sm:$0xf]
        %v3883 = vld [vmem:[%s1452 + $0x4] sm:$0xf]
        %v3884 = vld [vmem:[%s1452 + $0x8] sm:$0xf]
        %v3885 = vld [vmem:[%s1452 + $0xc] sm:$0xf]
        %v3886 = vld [vmem:[%s1452 + $0x10] sm:$0xf]
        %v3887 = vld [vmem:[%s1452 + $0x14] sm:$0xf]
        %v3888 = vld [vmem:[%s1452 + $0x18] sm:$0xf]
        %v3889 = vld [vmem:[%s1452 + $0x1c] sm:$0xf]
        %v3890 = vld [vmem:[%s1264] sm:$0x1]
        %v3891 = vpack.c.bf16 %v3876, %v3875
        %v3893 = vperm.slane %v3881, 0
        %v3899 = vunpack.c.l.b16 %v3877
        %v3900 = vunpack.c.l.b16 %v3878
        %v3901 = vunpack.c.l.b16 %v3879
        %v3902 = vunpack.c.l.b16 %v3880
        %v3903 = vpack.c.b16 %v3900, %v3899
        %v3904 = vpack.c.b16 %v3902, %v3901
        %v3908 = vsel %vm1470, %v3891, 0
        %3910 = vmatpush.bf16.msra.mxu0 0
        %3911 = vmatpush.bf16.msra.mxu0 0
        %3912 = vmatpush.bf16.msra.mxu0 0
        %3913 = vmatpush.bf16.msra.mxu0 0
        %3914 = vmatpush.bf16.msra.mxu0 0
        %3915 = vmatpush.bf16.msra.mxu0 0
        %3916 = vmatpush.bf16.msra.mxu0 %v3904
        %3917 = vmatpush.bf16.msra.mxu0 %v3903
        %3918 = vmatmul.bf16.gmra.mxu0 %v3908
        %v3919 = vpop.f32.mrf.mxu0
        %v3920 = vadd.f32 %v3893, %v3919
        %v3921 = vpop.f32.mrf.mxu0
        %v3922 = vadd.f32 %v3893, %v3921
        %3923 = vdwg.mxu0
        %v3924 = vmax.f32 %v3920, 0.0
        %v3925 = vmax.f32 %v3922, 0.0
        %v3926 = vpack.c.bf16 %v3925, %v3924
        %v3928 = vperm.slane %v3890, 0
        %v3938 = vunpack.c.l.b16 %v3882
        %v3939 = vunpack.c.l.b16 %v3883
        %v3940 = vunpack.c.l.b16 %v3884
        %v3941 = vunpack.c.l.b16 %v3885
        %v3942 = vunpack.c.l.b16 %v3886
        %v3943 = vunpack.c.l.b16 %v3887
        %v3944 = vunpack.c.l.b16 %v3888
        %v3945 = vunpack.c.l.b16 %v3889
        %v3946 = vpack.c.b16 %v3939, %v3938
        %v3947 = vpack.c.b16 %v3941, %v3940
        %v3948 = vpack.c.b16 %v3943, %v3942
        %v3949 = vpack.c.b16 %v3945, %v3944
        %vm3954 = vcmask 523264
        %v3956 = vsel %vm3954, %v3926, 0
        %3958 = vmatpush.bf16.msra.mxu0 0
        %3959 = vmatpush.bf16.msra.mxu0 0
        %3960 = vmatpush.bf16.msra.mxu0 0
        %3961 = vmatpush.bf16.msra.mxu0 0
        %3962 = vmatpush.bf16.msra.mxu0 %v3949
        %3963 = vmatpush.bf16.msra.mxu0 %v3948
        %3964 = vmatpush.bf16.msra.mxu0 %v3947
        %3965 = vmatpush.bf16.msra.mxu0 %v3946
        %3966 = vmatmul.bf16.gmra.mxu0 %v3956
        %v3967 = vpop.f32.mrf.mxu0
        %v3968 = vadd.f32 %v3928, %v3967
        %v3969 = vpop.f32.mrf.mxu0
        %v3970 = vadd.f32 %v3928, %v3969
        %3971 = vdwg.mxu0
        %v3972 = vadd.f32 %v3819, %v3968
        %v3973 = vadd.f32 %v3820, %v3970
        %3974 = vst.msk [vmem:[#allocation2] sm:$0xff] %vm1470, %v3972
        %3975 = vst.msk [vmem:[#allocation2 + $0x8] sm:$0xff] %vm1470, %v3973
        %p3976 = scmp.eq.s32.totalorder %s64, 1
        // Predicated region
        $region209: #{decision_forward.3} parent=123 // pred_check
          %p3977 = pneg %p3976
        $region210: #{decision_forward.3} parent=123 // pred_check_branch
          %3979 = sbr.rel (%p3977) target = $region212
        $region211: #{decision_forward.3} parent=123 // pred_region
          %v3980 = vld [vmem:[#allocation28] sm:$0x1]
          %v3981 = vld [vmem:[#allocation29] sm:$0x1]
          %v3982 = vsel %vm1470, %v3972, 0.0
          %3983 = vadd.xlane.f32.xlu0 %v3982
          %v3984 = vpop.xlane.xlu0 %3983
          %v3985 = vsel %vm1470, %v3973, 0.0
          %3986 = vadd.xlane.f32.xlu0 %v3985
          %v3987 = vpop.xlane.xlu0 %3986
          %v3988 = vmul.f32 %v3984, %v1483
          %v3989 = vmul.f32 %v3987, %v1483
          %v3990 = vsub.f32 %v3972, %v3988
          %v3991 = vsub.f32 %v3973, %v3989
          %v3992 = vmul.f32 %v3990, %v3990
          %v3993 = vmul.f32 %v3991, %v3991
          %v3994 = vsel %vm1470, %v3992, 0.0
          %3995 = vadd.xlane.f32.xlu0 %v3994
          %v3996 = vpop.xlane.xlu0 %3995
          %v3997 = vsel %vm1470, %v3993, 0.0
          %3998 = vadd.xlane.f32.xlu0 %v3997
          %v3999 = vpop.xlane.xlu0 %3998
          %v4000 = vmul.f32 %v3996, %v1483
          %v4001 = vmul.f32 %v3999, %v1483
          %v4002 = vadd.f32 %v4000, 1e-05
          %v4003 = vadd.f32 %v4001, 1e-05
          %v4004 = vrsqrt.pop %v4002
          %v4005 = vmul.f32 %v4004, %v4002
          %v4006 = vmul.f32 %v4005, %v4004
          %v4007 = vmul.f32 0.5, %v4006
          %v4008 = vsub.f32 1.5, %v4007
          %v4009 = vmul.f32 %v4004, %v4008
          %vm4010 = vweird.f32 %v4002
          %vm4011 = vweird.f32 %v4004
          %vm4012 = vmor %vm4010, %vm4011
          %v4013 = vsel %vm4012, %v4004, %v4009
          %v4014 = vrsqrt.pop %v4003
          %v4015 = vmul.f32 %v4014, %v4003
          %v4016 = vmul.f32 %v4015, %v4014
          %v4017 = vmul.f32 0.5, %v4016
          %v4018 = vsub.f32 1.5, %v4017
          %v4019 = vmul.f32 %v4014, %v4018
          %vm4020 = vweird.f32 %v4003
          %vm4021 = vweird.f32 %v4014
          %vm4022 = vmor %vm4020, %vm4021
          %v4023 = vsel %vm4022, %v4014, %v4019
          %v4024 = vmul.f32 %v3990, %v4013
          %v4025 = vmul.f32 %v3991, %v4023
          %v4027 = vperm.slane %v3980, 0
          %v4029 = vmul.f32 %v4024, %v4027
          %v4030 = vmul.f32 %v4025, %v4027
          %v4032 = vperm.slane %v3981, 0
          %v4034 = vadd.f32 %v4029, %v4032
          %v4035 = vadd.f32 %v4030, %v4032
          %v4036 = vpack.c.bf16 %v4035, %v4034
          %v4037 = vld [vmem:[#allocation31] sm:$0xf]
          %v4038 = vld [vmem:[#allocation31 + $0x4] sm:$0xf]
          %v4039 = vld [vmem:[#allocation31 + $0x8] sm:$0xf]
          %v4040 = vld [vmem:[#allocation31 + $0xc] sm:$0xf]
          %v4041 = vld [vmem:[#allocation32] sm:$0x1]
          %v4043 = vperm.slane %v4041, 0
          %v4049 = vunpack.c.l.b16 %v4037
          %v4050 = vunpack.c.l.b16 %v4038
          %v4051 = vunpack.c.l.b16 %v4039
          %v4052 = vunpack.c.l.b16 %v4040
          %v4053 = vpack.c.b16 %v4050, %v4049
          %v4054 = vpack.c.b16 %v4052, %v4051
          %v4058 = vsel %vm1470, %v4036, 0
          %4060 = vmatpush.bf16.msra.mxu0 0
          %4061 = vmatpush.bf16.msra.mxu0 0
          %4062 = vmatpush.bf16.msra.mxu0 0
          %4063 = vmatpush.bf16.msra.mxu0 0
          %4064 = vmatpush.bf16.msra.mxu0 0
          %4065 = vmatpush.bf16.msra.mxu0 0
          %4066 = vmatpush.bf16.msra.mxu0 %v4054
          %4067 = vmatpush.bf16.msra.mxu0 %v4053
          %4068 = vmatmul.bf16.gmra.mxu0 %v4058
          %v4069 = vpop.f32.mrf.mxu0
          %v4070 = vadd.f32 %v4043, %v4069
          %v4071 = vpop.f32.mrf.mxu0
          %v4072 = vadd.f32 %v4043, %v4071
          %4073 = vdwg.mxu0
          %4074 = vst [vmem:[%s26] sm:$0xff] %v4070
          %4075 = vst [vmem:[%s26 + $0x8] sm:$0xff] %v4072
        $region212: #{decision_forward.3} parent=123 // pred_fallthru
          _
        // Predicated region
        $region213: #{decision_forward.3} parent=123 // pred_check
          %p4076 = pneg %p723
        $region214: #{decision_forward.3} parent=123 // pred_check_branch
          %4078 = sbr.rel (%p4076) target = $region216
        $region215: #{decision_forward.3} parent=123 // pred_region
          _
        $region216: #{decision_forward.3} parent=123 // pred_fallthru
          _
        // Predicated region
        $region217: #{decision_forward.3} parent=123 // pred_check
          %p4079 = pneg %p723
        $region218: #{decision_forward.3} parent=123 // pred_check_branch
          %4081 = sbr.rel (%p4079) target = $region220
        $region219: #{decision_forward.3} parent=123 // pred_region
          _
        $region220: #{decision_forward.3} parent=123 // pred_fallthru
          _
      $region124: #{decision_forward.3} parent=5 // pred_fallthru
        _
      %p4082 = scmp.le.s32.totalorder 2, %s59
      // Predicated region
      $region221: #{decision_forward.3} parent=5 // pred_check
        %p4083 = pneg %p4082
      $region222: #{decision_forward.3} parent=5 // pred_check_branch
        %4085 = sbr.rel (%p4083) target = $region224
      $region223: #{decision_forward.3} parent=5 // pred_region
        %s4086 = ssub.s32 %s59, 2
      $region224: #{decision_forward.3} parent=5 // pred_fallthru
        _
    $region6: #{decision_forward.3} parent=1 // loop_footer
      %s63 = sadd.s32 1, %s59
    $region7: #{decision_forward.3} parent=1 // loop_footer_branch
      %58 = sbr.rel target = $region3
    $region8: #{decision_forward.3} parent=1 // loop_exit
      _
    %4087 = vsyncpa [#allocation4], 1
    %s4088 = scalar_lea.sflag [#allocation4], 1
    %4089 = vsyncpa %s4088, 1
    %4090 = vsyncpa [#allocation6], 1
    %s4091 = scalar_lea.sflag [#allocation6], 1
    %4092 = vsyncpa %s4091, 1
    %4093 = vsyncpa [#allocation9], 1
    %s4094 = scalar_lea.sflag [#allocation9], 1
    %4095 = vsyncpa %s4094, 1
    %4096 = vsyncpa [#allocation12], 1
    %s4097 = scalar_lea.sflag [#allocation12], 1
    %4098 = vsyncpa %s4097, 1
    %4099 = vsyncpa [#allocation15], 1
    %s4100 = scalar_lea.sflag [#allocation15], 1
    %4101 = vsyncpa %s4100, 1
    %4102 = vsyncpa [#allocation18], 1
    %s4103 = scalar_lea.sflag [#allocation18], 1
    %4104 = vsyncpa %s4103, 1
    %4105 = vsyncpa [#allocation21], 1
    %s4106 = scalar_lea.sflag [#allocation21], 1
    %4107 = vsyncpa %s4106, 1
    %4108 = vsyncpa [#allocation24], 1
    %s4109 = scalar_lea.sflag [#allocation24], 1
    %4110 = vsyncpa %s4109, 1
    %4111 = vsyncpa [#allocation27], 1
    %s4112 = scalar_lea.sflag [#allocation27], 1
    %4113 = vsyncpa %s4112, 1
    %4114 = vsyncpa [#allocation30], 1
    %4115 = vsyncpa [#allocation33], 1

</llo_original>
